<compile_context>
chip_gen: v6e
topology: v6e:2x2x1
jax: 0.10.0
libtpu: 0.0.40
codegen_flags: <defaults>
</compile_context>

<pallas_src>
import math

import jax
import jax.numpy as jnp
from jax import lax
from jax.experimental import pallas as pl
from jax.experimental.pallas import tpu as pltpu

# Small, module-consistent sizes.
BATCH = 2
SEQ_LEN = 8
NUM_HEADS = 4
HEAD_DIM = 32
HIDDEN = NUM_HEADS * HEAD_DIM     # 128
CONCAT_DIM = 128                  # wy(32) | wq(32) | wk(32) | wb(4) | pad(28)


def _single_tensorcore_chip():
    """True for chips with a single TensorCore (v5e / v6e): fold the batch."""
    try:
        kind = jax.devices()[0].device_kind.lower().replace(" ", "")
    except Exception:
        return False
    return any(tag in kind for tag in ("v5e", "v5lite", "v6e", "v6lite"))


# ---------------------------------------------------------------------------
# Fused kernel: input proj -> SRWM recurrence -> (last step only) output proj
# + residual + LayerNorm + predictor head.  One grid point per batch block.
#   xr_ref   : [BB, 1, L]  raw input row (time on lanes)
#   wir/bir  : [1, 128]    Linear(1, HIDDEN) weight/bias (row layout)
#   wih/bih  : [128, 1]    same weight/bias (column layout, head-major)
#   w0_ref   : [128, 128]  concatenated initial fast weights, rows = (h, e)
#   wo_ref   : [128, 128]  output_proj.weight.T  (rows = (h, m), cols = j)
#   g/bln    : [1, 128]    LayerNorm gamma/beta
#   wout/bout: [1, 128] / [1, 1]   predictor head Linear(128, 1)
#   out_ref  : [BB, 1, 1]  per-batch scalar prediction
# ---------------------------------------------------------------------------
def srwm_fused_kernel(xr_ref, wir_ref, bir_ref, wih_ref, bih_ref, w0_ref,
                      wo_ref, g_ref, bln_ref, wout_ref, bout_ref, out_ref):
    BB = xr_ref.shape[0]
    L = xr_ref.shape[2]
    C = w0_ref.shape[1]
    H, E = NUM_HEADS, HEAD_DIM
    M = E

    # Static lane masks over the concatenated fast-weight columns
    # (wy | wq | wk | wb(4) | pad) for the where-chain gate build.
    lane = lax.broadcasted_iota(jnp.int32, (1, C), 1)
    c_y = lane < M
    c_q = lane < 2 * M
    c_k = lane < 3 * M

    def softmax_col(v):                       # softmax over sublanes of [E, 1]
        mx = jnp.max(v, axis=0, keepdims=True)
        e = jnp.exp(v - mx)
        s = jnp.sum(e, axis=0, keepdims=True)
        return e * pl.reciprocal(s, approx=True)

    # Shared operands, loaded once.
    wir = wir_ref[...]
    bir = bir_ref[...]
    wih = wih_ref[...]                        # [F, 1]
    bih = bih_ref[...]
    w0 = w0_ref[...]                          # [F, C]

    y_rows, hid_rows = [], []
    for b in range(BB):                       # 1 or 2 independent batch chains
        x_row = xr_ref[b]                     # [1, L]
        # Residual path: only the last time step is consumed downstream.
        hid_rows.append(x_row[:, L - 1:L] * wir + bir)        # [1, F]

        y_pieces = []
        for h in range(H):                    # heads independent; fully unrolled
            r0, r1 = h * E, (h + 1) * E
            w = w0[r0:r1, :]                  # [E, C] live fast weights
            xh = wih[r0:r1, :] * x_row + bih[r0:r1, :]         # [E, L] head inputs
            rq = jnp.sum(w[:, M:2 * M], axis=1, keepdims=True)      # running row-sums
            rk = jnp.sum(w[:, 2 * M:3 * M], axis=1, keepdims=True)

            for t in range(L):                # fully unrolled recurrence
                x_col = xh[:, t:t + 1]                           # [E, 1] static slice
                px = jnp.sum(x_col * w, axis=0, keepdims=True)   # [1, C]

                q_col = softmax_col(x_col * rq)                  # [E, 1]
                k_col = softmax_col(x_col * rk)                  # [E, 1]
                d_col = q_col - k_col
                diff = jnp.sum(d_col * w, axis=0, keepdims=True)  # merged q/k reduce

                # Gate: beta[s] replicated across its 32-lane segment, one sigmoid.
                gate = jax.nn.sigmoid(
                    jnp.where(c_y, px[:, 3 * M:3 * M + 1],
                    jnp.where(c_q, px[:, 3 * M + 1:3 * M + 2],
                    jnp.where(c_k, px[:, 3 * M + 2:3 * M + 3],
                              px[:, 3 * M + 3:3 * M + 4]))))      # [1, C]
                ins = gate * diff                                 # [1, C]

                w = w + k_col * ins                               # fused rank-1 update
                rq = rq + k_col * jnp.sum(ins[:, M:2 * M], axis=1, keepdims=True)
                rk = rk + k_col * jnp.sum(ins[:, 2 * M:3 * M], axis=1, keepdims=True)

                if t == L - 1:                # only the last step feeds the head
                    y_pieces.append(px[:, 0:M])

        y_rows.append(jnp.concatenate(y_pieces, axis=1))          # [1, F]

    # Epilogue (last time step only): output proj + residual + LN + head.
    y_last = jnp.concatenate(y_rows, axis=0)                      # [BB, F]
    proj = jnp.dot(y_last, wo_ref[...], preferred_element_type=jnp.float32)
    g = g_ref[...]
    bln = bln_ref[...]
    wout = wout_ref[...]
    bout = bout_ref[...]
    for b in range(BB):
        y = hid_rows[b] + proj[b:b + 1, :]                        # [1, F]
        mu = jnp.mean(y, axis=-1, keepdims=True)
        d = y - mu
        var = jnp.mean(d * d, axis=-1, keepdims=True)
        yn = d * lax.rsqrt(var + 1e-5)
        sc = yn * g + bln
        pred = jnp.sum(sc * wout, axis=-1, keepdims=True) + bout  # [1, 1]
        out_ref[b] = pred


# ---------------------------------------------------------------------------
# Parameter setup (deterministic, shapes from SRWMPredictor.__init__).
# ---------------------------------------------------------------------------
def init_params(key):
    k = jax.random.split(key, 8)
    std = 1.0 / math.sqrt(HEAD_DIM)
    return dict(
        w_in=jax.random.normal(k[0], (HIDDEN, 1), jnp.float32) * 0.5,   # Linear(1, HIDDEN).weight
        b_in=jax.random.normal(k[1], (HIDDEN,), jnp.float32) * 0.1,     # Linear(1, HIDDEN).bias
        wy=jax.random.normal(k[2], (1, NUM_HEADS, HEAD_DIM, HEAD_DIM), jnp.float32) * std,
        wq=jax.random.normal(k[3], (1, NUM_HEADS, HEAD_DIM, HEAD_DIM), jnp.float32) * std,
        wk=jax.random.normal(k[4], (1, NUM_HEADS, HEAD_DIM, HEAD_DIM), jnp.float32) * std,
        wb=jax.random.normal(k[5], (1, NUM_HEADS, HEAD_DIM, 4), jnp.float32) * std - 1.0,
        w_o=jax.random.normal(k[6], (HIDDEN, HIDDEN), jnp.float32) * (1.0 / math.sqrt(HIDDEN)),
        ln_g=jnp.ones((HIDDEN,), jnp.float32),
        ln_b=jnp.zeros((HIDDEN,), jnp.float32),
        w_out=jax.random.normal(k[7], (1, HIDDEN), jnp.float32) * (1.0 / math.sqrt(HIDDEN)),
        b_out=jnp.zeros((1,), jnp.float32),
    )


# ---------------------------------------------------------------------------
# Full SRWMPredictor forward: one fused pallas_call, nothing left in glue.
# ---------------------------------------------------------------------------
def srwm_predictor_forward(x, p):
    B, L = x.shape
    H, E, F = NUM_HEADS, HEAD_DIM, HIDDEN
    C = CONCAT_DIM

    w_in_vec = p["w_in"][:, 0]                       # [F]
    xr = x.reshape(B, 1, L)                          # time on lanes
    wir = w_in_vec.reshape(1, F)
    bir = p["b_in"].reshape(1, F)
    wih = w_in_vec.reshape(F, 1)
    bih = p["b_in"].reshape(F, 1)
    pad = jnp.zeros((1, H, E, C - (3 * E + 4)), jnp.float32)
    w0 = jnp.concatenate([p["wy"], p["wq"], p["wk"], p["wb"], pad],
                         axis=-1).reshape(H * E, C)  # [128, 128], no batch broadcast
    wo = p["w_o"].T                                   # [128, 128]
    ln_g = p["ln_g"].reshape(1, F)
    ln_b = p["ln_b"].reshape(1, F)
    wout = p["w_out"].reshape(1, F)
    bout = p["b_out"].reshape(1, 1)

    # Generation-aware batching: fold B into one grid step on single-TC chips
    # (v5e/v6e), keep a parallel grid over B elsewhere (v7x / megacore).
    fold = _single_tensorcore_chip() and B > 1
    bb = B if fold else 1
    grid = (B // bb,)
    sem = ("arbitrary",) if fold else ("parallel",)

    bcast2 = lambda g: (0, 0)

    out = pl.pallas_call(
        srwm_fused_kernel,
        out_shape=jax.ShapeDtypeStruct((B, 1, 1), jnp.float32),
        grid_spec=pltpu.PrefetchScalarGridSpec(
            num_scalar_prefetch=0,
            grid=grid,
            in_specs=[
                pl.BlockSpec((bb, 1, L), lambda g: (g, 0, 0)),
                pl.BlockSpec((1, F), bcast2),
                pl.BlockSpec((1, F), bcast2),
                pl.BlockSpec((F, 1), bcast2),
                pl.BlockSpec((F, 1), bcast2),
                pl.BlockSpec((F, C), bcast2),
                pl.BlockSpec((F, F), bcast2),
                pl.BlockSpec((1, F), bcast2),
                pl.BlockSpec((1, F), bcast2),
                pl.BlockSpec((1, F), bcast2),
                pl.BlockSpec((1, 1), bcast2),
            ],
            out_specs=pl.BlockSpec((bb, 1, 1), lambda g: (g, 0, 0)),
        ),
        compiler_params=pltpu.CompilerParams(dimension_semantics=sem),
    )(xr, wir, bir, wih, bih, w0, wo, ln_g, ln_b, wout, bout)
    return out.reshape(B)


# ---------------------------------------------------------------------------
# Pure-JAX reference (mirrors the PyTorch code) for a correctness check.
# ---------------------------------------------------------------------------
def self_ref_forward_ref(inputs, wy, wq, wk, wb):
    def step(carry, x_t):
        wy, wq, wk, wb = carry
        y_out = jnp.einsum("nhe,nhem->nhm", x_t, wy)
        q_out = jnp.einsum("nhe,nhem->nhe", x_t, wq)
        k_out = jnp.einsum("nhe,nhem->nhe", x_t, wk)
        beta = jax.nn.sigmoid(jnp.einsum("nhe,nhef->nhf", x_t, wb))
        q = jax.nn.softmax(q_out, axis=-1)
        k = jax.nn.softmax(k_out, axis=-1)
        proj = lambda w, v: jnp.einsum("nhem,nhe->nhm", w, v)
        y_diff = proj(wy, q) - proj(wy, k)
        q_diff = proj(wq, q) - proj(wq, k)
        k_diff = proj(wk, q) - proj(wk, k)
        b_diff = proj(wb, q) - proj(wb, k)
        y_ins = beta[..., 0:1] * y_diff
        q_ins = beta[..., 1:2] * q_diff
        k_ins = beta[..., 2:3] * k_diff
        b_ins = beta[..., 3:4] * b_diff
        wy = wy + jnp.einsum("nhe,nhm->nhem", k, y_ins)
        wq = wq + jnp.einsum("nhe,nhm->nhem", k, q_ins)
        wk = wk + jnp.einsum("nhe,nhm->nhem", k, k_ins)
        wb = wb + jnp.einsum("nhe,nhf->nhef", k, b_ins)
        return (wy, wq, wk, wb), y_out

    xs = jnp.transpose(inputs, (2, 0, 1, 3))          # [L, N, H, E]
    _, ys = lax.scan(step, (wy, wq, wk, wb), xs)
    return jnp.transpose(ys, (1, 2, 0, 3))            # [N, H, L, M]


def srwm_predictor_reference(x, p):
    B, L = x.shape
    h_blh = x[..., None] * p["w_in"][:, 0].reshape(1, 1, HIDDEN) + p["b_in"]
    hidden = jnp.transpose(h_blh, (1, 0, 2))
    xh = jnp.transpose(hidden.reshape(L, B, NUM_HEADS, HEAD_DIM), (1, 2, 0, 3))
    bc = lambda w: jnp.broadcast_to(w, (B,) + w.shape[1:])
    out = self_ref_forward_ref(xh, bc(p["wy"]), bc(p["wq"]), bc(p["wk"]), bc(p["wb"]))
    out = jnp.transpose(jnp.transpose(out, (0, 2, 1, 3)).reshape(B, L, HIDDEN), (1, 0, 2))
    y = hidden + out @ p["w_o"].T
    mu = jnp.mean(y, axis=-1, keepdims=True)
    var = jnp.mean(jnp.square(y - mu), axis=-1, keepdims=True)
    y = (y - mu) / jnp.sqrt(var + 1e-5) * p["ln_g"] + p["ln_b"]
    last = y[-1]
    return (last @ p["w_out"].T + p["b_out"])[:, 0]


if __name__ == "__main__":
    key = jax.random.PRNGKey(0)
    pkey, xkey = jax.random.split(key)
    params = init_params(pkey)
    x = jax.random.normal(xkey, (BATCH, SEQ_LEN), jnp.float32)

    fwd = jax.jit(srwm_predictor_forward)
    out = jax.block_until_ready(fwd(x, params))
    assert out.shape == (BATCH,)

    ref = srwm_predictor_reference(x, params)
    err = float(jnp.max(jnp.abs(out - ref)))
    # approx reciprocal in the softmax shifts outputs by ~1e-4; keep margin.
    assert err < 2e-3, f"mismatch vs reference: {err}"

    print("KERNEL_OK")
</pallas_src>

<mosaic_0001>
module attributes {stable_mosaic.version = 11 : i64} {
  func.func @srwm_fused_kernel(%arg0: i32, %arg1: memref<1x1x8xf32, #tpu.memory_space<vmem>>, %arg2: memref<1x128xf32, #tpu.memory_space<vmem>>, %arg3: memref<1x128xf32, #tpu.memory_space<vmem>>, %arg4: memref<128x1xf32, #tpu.memory_space<vmem>>, %arg5: memref<128x1xf32, #tpu.memory_space<vmem>>, %arg6: memref<128x128xf32, #tpu.memory_space<vmem>>, %arg7: memref<128x128xf32, #tpu.memory_space<vmem>>, %arg8: memref<1x128xf32, #tpu.memory_space<vmem>>, %arg9: memref<1x128xf32, #tpu.memory_space<vmem>>, %arg10: memref<1x128xf32, #tpu.memory_space<vmem>>, %arg11: memref<1x1xf32, #tpu.memory_space<vmem>>, %arg12: memref<1x1x1xf32, #tpu.memory_space<vmem>>) attributes {dimension_semantics = [#tpu.dimension_semantics<parallel>], iteration_bounds = array<i64: 2>, scalar_prefetch = 0 : i64, scratch_operands = 0 : i64, tpu.core_type = #tpu.core_type<tc>, window_params = [{transform_indices = @transform_0, window_bounds = array<i64: 1, 1, 8>}, {pipeline_mode = #tpu.pipeline_mode<synchronous>, transform_indices = @transform_1, window_bounds = array<i64: 1, 128>}, {pipeline_mode = #tpu.pipeline_mode<synchronous>, transform_indices = @transform_2, window_bounds = array<i64: 1, 128>}, {pipeline_mode = #tpu.pipeline_mode<synchronous>, transform_indices = @transform_3, window_bounds = array<i64: 128, 1>}, {pipeline_mode = #tpu.pipeline_mode<synchronous>, transform_indices = @transform_4, window_bounds = array<i64: 128, 1>}, {pipeline_mode = #tpu.pipeline_mode<synchronous>, transform_indices = @transform_5, window_bounds = array<i64: 128, 128>}, {pipeline_mode = #tpu.pipeline_mode<synchronous>, transform_indices = @transform_6, window_bounds = array<i64: 128, 128>}, {pipeline_mode = #tpu.pipeline_mode<synchronous>, transform_indices = @transform_7, window_bounds = array<i64: 1, 128>}, {pipeline_mode = #tpu.pipeline_mode<synchronous>, transform_indices = @transform_8, window_bounds = array<i64: 1, 128>}, {pipeline_mode = #tpu.pipeline_mode<synchronous>, transform_indices = @transform_9, window_bounds = array<i64: 1, 128>}, {pipeline_mode = #tpu.pipeline_mode<synchronous>, transform_indices = @transform_10, window_bounds = array<i64: 1, 1>}, {transform_indices = @transform_11, window_bounds = array<i64: 1, 1, 1>}]} {
    %0 = tpu.iota {dimensions = array<i32: 1>} : vector<1x128xi32>
    %c32_i32 = arith.constant 32 : i32
    %1 = vector.broadcast %c32_i32 : i32 to vector<1x128xi32>
    %2 = arith.cmpi slt, %0, %1 : vector<1x128xi32>
    %c64_i32 = arith.constant 64 : i32
    %3 = vector.broadcast %c64_i32 : i32 to vector<1x128xi32>
    %4 = arith.cmpi slt, %0, %3 : vector<1x128xi32>
    %c96_i32 = arith.constant 96 : i32
    %5 = vector.broadcast %c96_i32 : i32 to vector<1x128xi32>
    %6 = arith.cmpi slt, %0, %5 : vector<1x128xi32>
    %c0 = arith.constant 0 : index
    %c0_0 = arith.constant 0 : index
    %7 = vector.load %arg2[%c0, %c0_0] : memref<1x128xf32, #tpu.memory_space<vmem>>, vector<1x128xf32>
    %c0_1 = arith.constant 0 : index
    %c0_2 = arith.constant 0 : index
    %8 = vector.load %arg3[%c0_1, %c0_2] : memref<1x128xf32, #tpu.memory_space<vmem>>, vector<1x128xf32>
    %c0_3 = arith.constant 0 : index
    %c0_4 = arith.constant 0 : index
    %9 = vector.load %arg4[%c0_3, %c0_4] : memref<128x1xf32, #tpu.memory_space<vmem>>, vector<128x1xf32>
    %c0_5 = arith.constant 0 : index
    %c0_6 = arith.constant 0 : index
    %10 = vector.load %arg5[%c0_5, %c0_6] : memref<128x1xf32, #tpu.memory_space<vmem>>, vector<128x1xf32>
    %c0_7 = arith.constant 0 : index
    %c0_8 = arith.constant 0 : index
    %11 = vector.load %arg6[%c0_7, %c0_8] : memref<128x128xf32, #tpu.memory_space<vmem>>, vector<128x128xf32>
    %c0_9 = arith.constant 0 : index
    %c0_10 = arith.constant 0 : index
    %c0_11 = arith.constant 0 : index
    %12 = vector.load %arg1[%c0_9, %c0_10, %c0_11] : memref<1x1x8xf32, #tpu.memory_space<vmem>>, vector<1x1x8xf32>
    %13 = vector.shape_cast %12 : vector<1x1x8xf32> to vector<1x8xf32>
    %14 = vector.extract_strided_slice %13 {offsets = [0, 7], sizes = [1, 1], strides = [1, 1]} : vector<1x8xf32> to vector<1x1xf32>
    %15 = vector.broadcast %14 : vector<1x1xf32> to vector<1x128xf32>
    %16 = arith.mulf %15, %7 : vector<1x128xf32>
    %17 = arith.addf %16, %8 : vector<1x128xf32>
    %18 = vector.extract_strided_slice %11 {offsets = [0, 0], sizes = [32, 128], strides = [1, 1]} : vector<128x128xf32> to vector<32x128xf32>
    %19 = vector.extract_strided_slice %9 {offsets = [0, 0], sizes = [32, 1], strides = [1, 1]} : vector<128x1xf32> to vector<32x1xf32>
    %20 = vector.broadcast %19 : vector<32x1xf32> to vector<32x8xf32>
    %21 = vector.broadcast %13 : vector<1x8xf32> to vector<32x8xf32>
    %22 = arith.mulf %20, %21 : vector<32x8xf32>
    %23 = vector.extract_strided_slice %10 {offsets = [0, 0], sizes = [32, 1], strides = [1, 1]} : vector<128x1xf32> to vector<32x1xf32>
    %24 = vector.broadcast %23 : vector<32x1xf32> to vector<32x8xf32>
    %25 = arith.addf %22, %24 : vector<32x8xf32>
    %26 = vector.extract_strided_slice %18 {offsets = [0, 32], sizes = [32, 32], strides = [1, 1]} : vector<32x128xf32> to vector<32x32xf32>
    %cst = arith.constant dense<0.000000e+00> : vector<32xf32>
    %27 = vector.multi_reduction <add>, %26, %cst [1] : vector<32x32xf32> to vector<32xf32>
    %28 = vector.shape_cast %27 : vector<32xf32> to vector<32x1xf32>
    %29 = vector.extract_strided_slice %18 {offsets = [0, 64], sizes = [32, 32], strides = [1, 1]} : vector<32x128xf32> to vector<32x32xf32>
    %cst_12 = arith.constant dense<0.000000e+00> : vector<32xf32>
    %30 = vector.multi_reduction <add>, %29, %cst_12 [1] : vector<32x32xf32> to vector<32xf32>
    %31 = vector.shape_cast %30 : vector<32xf32> to vector<32x1xf32>
    %32 = vector.extract_strided_slice %25 {offsets = [0, 0], sizes = [32, 1], strides = [1, 1]} : vector<32x8xf32> to vector<32x1xf32>
    %33 = vector.broadcast %32 : vector<32x1xf32> to vector<32x128xf32>
    %34 = arith.mulf %33, %18 : vector<32x128xf32>
    %cst_13 = arith.constant dense<0.000000e+00> : vector<128xf32>
    %35 = vector.multi_reduction <add>, %34, %cst_13 [0] : vector<32x128xf32> to vector<128xf32>
    %36 = vector.shape_cast %35 : vector<128xf32> to vector<1x128xf32>
    %37 = arith.mulf %32, %28 : vector<32x1xf32>
    %cst_14 = arith.constant dense<0xFF800000> : vector<1xf32>
    %38 = vector.multi_reduction <maximumf>, %37, %cst_14 [0] : vector<32x1xf32> to vector<1xf32>
    %39 = vector.shape_cast %38 : vector<1xf32> to vector<1x1xf32>
    %40 = vector.broadcast %39 : vector<1x1xf32> to vector<32x1xf32>
    %41 = arith.subf %37, %40 : vector<32x1xf32>
    %42 = math.exp %41 : vector<32x1xf32>
    %cst_15 = arith.constant dense<0.000000e+00> : vector<1xf32>
    %43 = vector.multi_reduction <add>, %42, %cst_15 [0] : vector<32x1xf32> to vector<1xf32>
    %44 = vector.shape_cast %43 : vector<1xf32> to vector<1x1xf32>
    %45 = tpu.reciprocal %44 {approx = true} : vector<1x1xf32> -> vector<1x1xf32>
    %46 = vector.broadcast %45 : vector<1x1xf32> to vector<32x1xf32>
    %47 = arith.mulf %42, %46 : vector<32x1xf32>
    %48 = arith.mulf %32, %31 : vector<32x1xf32>
    %cst_16 = arith.constant dense<0xFF800000> : vector<1xf32>
    %49 = vector.multi_reduction <maximumf>, %48, %cst_16 [0] : vector<32x1xf32> to vector<1xf32>
    %50 = vector.shape_cast %49 : vector<1xf32> to vector<1x1xf32>
    %51 = vector.broadcast %50 : vector<1x1xf32> to vector<32x1xf32>
    %52 = arith.subf %48, %51 : vector<32x1xf32>
    %53 = math.exp %52 : vector<32x1xf32>
    %cst_17 = arith.constant dense<0.000000e+00> : vector<1xf32>
    %54 = vector.multi_reduction <add>, %53, %cst_17 [0] : vector<32x1xf32> to vector<1xf32>
    %55 = vector.shape_cast %54 : vector<1xf32> to vector<1x1xf32>
    %56 = tpu.reciprocal %55 {approx = true} : vector<1x1xf32> -> vector<1x1xf32>
    %57 = vector.broadcast %56 : vector<1x1xf32> to vector<32x1xf32>
    %58 = arith.mulf %53, %57 : vector<32x1xf32>
    %59 = arith.subf %47, %58 : vector<32x1xf32>
    %60 = vector.broadcast %59 : vector<32x1xf32> to vector<32x128xf32>
    %61 = arith.mulf %60, %18 : vector<32x128xf32>
    %cst_18 = arith.constant dense<0.000000e+00> : vector<128xf32>
    %62 = vector.multi_reduction <add>, %61, %cst_18 [0] : vector<32x128xf32> to vector<128xf32>
    %63 = vector.shape_cast %62 : vector<128xf32> to vector<1x128xf32>
    %64 = vector.extract_strided_slice %36 {offsets = [0, 96], sizes = [1, 1], strides = [1, 1]} : vector<1x128xf32> to vector<1x1xf32>
    %65 = vector.extract_strided_slice %36 {offsets = [0, 97], sizes = [1, 1], strides = [1, 1]} : vector<1x128xf32> to vector<1x1xf32>
    %66 = vector.extract_strided_slice %36 {offsets = [0, 98], sizes = [1, 1], strides = [1, 1]} : vector<1x128xf32> to vector<1x1xf32>
    %67 = vector.extract_strided_slice %36 {offsets = [0, 99], sizes = [1, 1], strides = [1, 1]} : vector<1x128xf32> to vector<1x1xf32>
    %68 = vector.shape_cast %66 : vector<1x1xf32> to vector<1x1xf32>
    %69 = vector.broadcast %68 : vector<1x1xf32> to vector<1x128xf32>
    %70 = vector.shape_cast %67 : vector<1x1xf32> to vector<1x1xf32>
    %71 = vector.broadcast %70 : vector<1x1xf32> to vector<1x128xf32>
    %72 = arith.select %6, %69, %71 : vector<1x128xi1>, vector<1x128xf32>
    %73 = vector.shape_cast %65 : vector<1x1xf32> to vector<1x1xf32>
    %74 = vector.broadcast %73 : vector<1x1xf32> to vector<1x128xf32>
    %75 = arith.select %4, %74, %72 : vector<1x128xi1>, vector<1x128xf32>
    %76 = vector.shape_cast %64 : vector<1x1xf32> to vector<1x1xf32>
    %77 = vector.broadcast %76 : vector<1x1xf32> to vector<1x128xf32>
    %78 = arith.select %2, %77, %75 : vector<1x128xi1>, vector<1x128xf32>
    %79 = arith.negf %78 : vector<1x128xf32>
    %80 = math.exp %79 : vector<1x128xf32>
    %cst_19 = arith.constant 1.000000e+00 : f32
    %81 = vector.broadcast %cst_19 : f32 to vector<1x128xf32>
    %82 = arith.addf %81, %80 : vector<1x128xf32>
    %83 = arith.divf %81, %82 : vector<1x128xf32>
    %84 = arith.mulf %83, %63 : vector<1x128xf32>
    %85 = vector.broadcast %58 : vector<32x1xf32> to vector<32x128xf32>
    %86 = vector.broadcast %84 : vector<1x128xf32> to vector<32x128xf32>
    %87 = arith.mulf %85, %86 : vector<32x128xf32>
    %88 = arith.addf %18, %87 : vector<32x128xf32>
    %89 = vector.extract_strided_slice %84 {offsets = [0, 32], sizes = [1, 32], strides = [1, 1]} : vector<1x128xf32> to vector<1x32xf32>
    %cst_20 = arith.constant dense<0.000000e+00> : vector<1xf32>
    %90 = vector.multi_reduction <add>, %89, %cst_20 [1] : vector<1x32xf32> to vector<1xf32>
    %91 = vector.shape_cast %90 : vector<1xf32> to vector<1x1xf32>
    %92 = vector.broadcast %91 : vector<1x1xf32> to vector<32x1xf32>
    %93 = arith.mulf %58, %92 : vector<32x1xf32>
    %94 = arith.addf %28, %93 : vector<32x1xf32>
    %95 = vector.extract_strided_slice %84 {offsets = [0, 64], sizes = [1, 32], strides = [1, 1]} : vector<1x128xf32> to vector<1x32xf32>
    %cst_21 = arith.constant dense<0.000000e+00> : vector<1xf32>
    %96 = vector.multi_reduction <add>, %95, %cst_21 [1] : vector<1x32xf32> to vector<1xf32>
    %97 = vector.shape_cast %96 : vector<1xf32> to vector<1x1xf32>
    %98 = vector.broadcast %97 : vector<1x1xf32> to vector<32x1xf32>
    %99 = arith.mulf %58, %98 : vector<32x1xf32>
    %100 = arith.addf %31, %99 : vector<32x1xf32>
    %101 = vector.extract_strided_slice %25 {offsets = [0, 1], sizes = [32, 1], strides = [1, 1]} : vector<32x8xf32> to vector<32x1xf32>
    %102 = vector.broadcast %101 : vector<32x1xf32> to vector<32x128xf32>
    %103 = arith.mulf %102, %88 : vector<32x128xf32>
    %cst_22 = arith.constant dense<0.000000e+00> : vector<128xf32>
    %104 = vector.multi_reduction <add>, %103, %cst_22 [0] : vector<32x128xf32> to vector<128xf32>
    %105 = vector.shape_cast %104 : vector<128xf32> to vector<1x128xf32>
    %106 = arith.mulf %101, %94 : vector<32x1xf32>
    %cst_23 = arith.constant dense<0xFF800000> : vector<1xf32>
    %107 = vector.multi_reduction <maximumf>, %106, %cst_23 [0] : vector<32x1xf32> to vector<1xf32>
    %108 = vector.shape_cast %107 : vector<1xf32> to vector<1x1xf32>
    %109 = vector.broadcast %108 : vector<1x1xf32> to vector<32x1xf32>
    %110 = arith.subf %106, %109 : vector<32x1xf32>
    %111 = math.exp %110 : vector<32x1xf32>
    %cst_24 = arith.constant dense<0.000000e+00> : vector<1xf32>
    %112 = vector.multi_reduction <add>, %111, %cst_24 [0] : vector<32x1xf32> to vector<1xf32>
    %113 = vector.shape_cast %112 : vector<1xf32> to vector<1x1xf32>
    %114 = tpu.reciprocal %113 {approx = true} : vector<1x1xf32> -> vector<1x1xf32>
    %115 = vector.broadcast %114 : vector<1x1xf32> to vector<32x1xf32>
    %116 = arith.mulf %111, %115 : vector<32x1xf32>
    %117 = arith.mulf %101, %100 : vector<32x1xf32>
    %cst_25 = arith.constant dense<0xFF800000> : vector<1xf32>
    %118 = vector.multi_reduction <maximumf>, %117, %cst_25 [0] : vector<32x1xf32> to vector<1xf32>
    %119 = vector.shape_cast %118 : vector<1xf32> to vector<1x1xf32>
    %120 = vector.broadcast %119 : vector<1x1xf32> to vector<32x1xf32>
    %121 = arith.subf %117, %120 : vector<32x1xf32>
    %122 = math.exp %121 : vector<32x1xf32>
    %cst_26 = arith.constant dense<0.000000e+00> : vector<1xf32>
    %123 = vector.multi_reduction <add>, %122, %cst_26 [0] : vector<32x1xf32> to vector<1xf32>
    %124 = vector.shape_cast %123 : vector<1xf32> to vector<1x1xf32>
    %125 = tpu.reciprocal %124 {approx = true} : vector<1x1xf32> -> vector<1x1xf32>
    %126 = vector.broadcast %125 : vector<1x1xf32> to vector<32x1xf32>
    %127 = arith.mulf %122, %126 : vector<32x1xf32>
    %128 = arith.subf %116, %127 : vector<32x1xf32>
    %129 = vector.broadcast %128 : vector<32x1xf32> to vector<32x128xf32>
    %130 = arith.mulf %129, %88 : vector<32x128xf32>
    %cst_27 = arith.constant dense<0.000000e+00> : vector<128xf32>
    %131 = vector.multi_reduction <add>, %130, %cst_27 [0] : vector<32x128xf32> to vector<128xf32>
    %132 = vector.shape_cast %131 : vector<128xf32> to vector<1x128xf32>
    %133 = vector.extract_strided_slice %105 {offsets = [0, 96], sizes = [1, 1], strides = [1, 1]} : vector<1x128xf32> to vector<1x1xf32>
    %134 = vector.extract_strided_slice %105 {offsets = [0, 97], sizes = [1, 1], strides = [1, 1]} : vector<1x128xf32> to vector<1x1xf32>
    %135 = vector.extract_strided_slice %105 {offsets = [0, 98], sizes = [1, 1], strides = [1, 1]} : vector<1x128xf32> to vector<1x1xf32>
    %136 = vector.extract_strided_slice %105 {offsets = [0, 99], sizes = [1, 1], strides = [1, 1]} : vector<1x128xf32> to vector<1x1xf32>
    %137 = vector.shape_cast %135 : vector<1x1xf32> to vector<1x1xf32>
    %138 = vector.broadcast %137 : vector<1x1xf32> to vector<1x128xf32>
    %139 = vector.shape_cast %136 : vector<1x1xf32> to vector<1x1xf32>
    %140 = vector.broadcast %139 : vector<1x1xf32> to vector<1x128xf32>
    %141 = arith.select %6, %138, %140 : vector<1x128xi1>, vector<1x128xf32>
    %142 = vector.shape_cast %134 : vector<1x1xf32> to vector<1x1xf32>
    %143 = vector.broadcast %142 : vector<1x1xf32> to vector<1x128xf32>
    %144 = arith.select %4, %143, %141 : vector<1x128xi1>, vector<1x128xf32>
    %145 = vector.shape_cast %133 : vector<1x1xf32> to vector<1x1xf32>
    %146 = vector.broadcast %145 : vector<1x1xf32> to vector<1x128xf32>
    %147 = arith.select %2, %146, %144 : vector<1x128xi1>, vector<1x128xf32>
    %148 = arith.negf %147 : vector<1x128xf32>
    %149 = math.exp %148 : vector<1x128xf32>
    %cst_28 = arith.constant 1.000000e+00 : f32
    %150 = vector.broadcast %cst_28 : f32 to vector<1x128xf32>
    %151 = arith.addf %150, %149 : vector<1x128xf32>
    %152 = arith.divf %150, %151 : vector<1x128xf32>
    %153 = arith.mulf %152, %132 : vector<1x128xf32>
    %154 = vector.broadcast %127 : vector<32x1xf32> to vector<32x128xf32>
    %155 = vector.broadcast %153 : vector<1x128xf32> to vector<32x128xf32>
    %156 = arith.mulf %154, %155 : vector<32x128xf32>
    %157 = arith.addf %88, %156 : vector<32x128xf32>
    %158 = vector.extract_strided_slice %153 {offsets = [0, 32], sizes = [1, 32], strides = [1, 1]} : vector<1x128xf32> to vector<1x32xf32>
    %cst_29 = arith.constant dense<0.000000e+00> : vector<1xf32>
    %159 = vector.multi_reduction <add>, %158, %cst_29 [1] : vector<1x32xf32> to vector<1xf32>
    %160 = vector.shape_cast %159 : vector<1xf32> to vector<1x1xf32>
    %161 = vector.broadcast %160 : vector<1x1xf32> to vector<32x1xf32>
    %162 = arith.mulf %127, %161 : vector<32x1xf32>
    %163 = arith.addf %94, %162 : vector<32x1xf32>
    %164 = vector.extract_strided_slice %153 {offsets = [0, 64], sizes = [1, 32], strides = [1, 1]} : vector<1x128xf32> to vector<1x32xf32>
    %cst_30 = arith.constant dense<0.000000e+00> : vector<1xf32>
    %165 = vector.multi_reduction <add>, %164, %cst_30 [1] : vector<1x32xf32> to vector<1xf32>
    %166 = vector.shape_cast %165 : vector<1xf32> to vector<1x1xf32>
    %167 = vector.broadcast %166 : vector<1x1xf32> to vector<32x1xf32>
    %168 = arith.mulf %127, %167 : vector<32x1xf32>
    %169 = arith.addf %100, %168 : vector<32x1xf32>
    %170 = vector.extract_strided_slice %25 {offsets = [0, 2], sizes = [32, 1], strides = [1, 1]} : vector<32x8xf32> to vector<32x1xf32>
    %171 = vector.broadcast %170 : vector<32x1xf32> to vector<32x128xf32>
    %172 = arith.mulf %171, %157 : vector<32x128xf32>
    %cst_31 = arith.constant dense<0.000000e+00> : vector<128xf32>
    %173 = vector.multi_reduction <add>, %172, %cst_31 [0] : vector<32x128xf32> to vector<128xf32>
    %174 = vector.shape_cast %173 : vector<128xf32> to vector<1x128xf32>
    %175 = arith.mulf %170, %163 : vector<32x1xf32>
    %cst_32 = arith.constant dense<0xFF800000> : vector<1xf32>
    %176 = vector.multi_reduction <maximumf>, %175, %cst_32 [0] : vector<32x1xf32> to vector<1xf32>
    %177 = vector.shape_cast %176 : vector<1xf32> to vector<1x1xf32>
    %178 = vector.broadcast %177 : vector<1x1xf32> to vector<32x1xf32>
    %179 = arith.subf %175, %178 : vector<32x1xf32>
    %180 = math.exp %179 : vector<32x1xf32>
    %cst_33 = arith.constant dense<0.000000e+00> : vector<1xf32>
    %181 = vector.multi_reduction <add>, %180, %cst_33 [0] : vector<32x1xf32> to vector<1xf32>
    %182 = vector.shape_cast %181 : vector<1xf32> to vector<1x1xf32>
    %183 = tpu.reciprocal %182 {approx = true} : vector<1x1xf32> -> vector<1x1xf32>
    %184 = vector.broadcast %183 : vector<1x1xf32> to vector<32x1xf32>
    %185 = arith.mulf %180, %184 : vector<32x1xf32>
    %186 = arith.mulf %170, %169 : vector<32x1xf32>
    %cst_34 = arith.constant dense<0xFF800000> : vector<1xf32>
    %187 = vector.multi_reduction <maximumf>, %186, %cst_34 [0] : vector<32x1xf32> to vector<1xf32>
    %188 = vector.shape_cast %187 : vector<1xf32> to vector<1x1xf32>
    %189 = vector.broadcast %188 : vector<1x1xf32> to vector<32x1xf32>
    %190 = arith.subf %186, %189 : vector<32x1xf32>
    %191 = math.exp %190 : vector<32x1xf32>
    %cst_35 = arith.constant dense<0.000000e+00> : vector<1xf32>
    %192 = vector.multi_reduction <add>, %191, %cst_35 [0] : vector<32x1xf32> to vector<1xf32>
    %193 = vector.shape_cast %192 : vector<1xf32> to vector<1x1xf32>
    %194 = tpu.reciprocal %193 {approx = true} : vector<1x1xf32> -> vector<1x1xf32>
    %195 = vector.broadcast %194 : vector<1x1xf32> to vector<32x1xf32>
    %196 = arith.mulf %191, %195 : vector<32x1xf32>
    %197 = arith.subf %185, %196 : vector<32x1xf32>
    %198 = vector.broadcast %197 : vector<32x1xf32> to vector<32x128xf32>
    %199 = arith.mulf %198, %157 : vector<32x128xf32>
    %cst_36 = arith.constant dense<0.000000e+00> : vector<128xf32>
    %200 = vector.multi_reduction <add>, %199, %cst_36 [0] : vector<32x128xf32> to vector<128xf32>
    %201 = vector.shape_cast %200 : vector<128xf32> to vector<1x128xf32>
    %202 = vector.extract_strided_slice %174 {offsets = [0, 96], sizes = [1, 1], strides = [1, 1]} : vector<1x128xf32> to vector<1x1xf32>
    %203 = vector.extract_strided_slice %174 {offsets = [0, 97], sizes = [1, 1], strides = [1, 1]} : vector<1x128xf32> to vector<1x1xf32>
    %204 = vector.extract_strided_slice %174 {offsets = [0, 98], sizes = [1, 1], strides = [1, 1]} : vector<1x128xf32> to vector<1x1xf32>
    %205 = vector.extract_strided_slice %174 {offsets = [0, 99], sizes = [1, 1], strides = [1, 1]} : vector<1x128xf32> to vector<1x1xf32>
    %206 = vector.shape_cast %204 : vector<1x1xf32> to vector<1x1xf32>
    %207 = vector.broadcast %206 : vector<1x1xf32> to vector<1x128xf32>
    %208 = vector.shape_cast %205 : vector<1x1xf32> to vector<1x1xf32>
    %209 = vector.broadcast %208 : vector<1x1xf32> to vector<1x128xf32>
    %210 = arith.select %6, %207, %209 : vector<1x128xi1>, vector<1x128xf32>
    %211 = vector.shape_cast %203 : vector<1x1xf32> to vector<1x1xf32>
    %212 = vector.broadcast %211 : vector<1x1xf32> to vector<1x128xf32>
    %213 = arith.select %4, %212, %210 : vector<1x128xi1>, vector<1x128xf32>
    %214 = vector.shape_cast %202 : vector<1x1xf32> to vector<1x1xf32>
    %215 = vector.broadcast %214 : vector<1x1xf32> to vector<1x128xf32>
    %216 = arith.select %2, %215, %213 : vector<1x128xi1>, vector<1x128xf32>
    %217 = arith.negf %216 : vector<1x128xf32>
    %218 = math.exp %217 : vector<1x128xf32>
    %cst_37 = arith.constant 1.000000e+00 : f32
    %219 = vector.broadcast %cst_37 : f32 to vector<1x128xf32>
    %220 = arith.addf %219, %218 : vector<1x128xf32>
    %221 = arith.divf %219, %220 : vector<1x128xf32>
    %222 = arith.mulf %221, %201 : vector<1x128xf32>
    %223 = vector.broadcast %196 : vector<32x1xf32> to vector<32x128xf32>
    %224 = vector.broadcast %222 : vector<1x128xf32> to vector<32x128xf32>
    %225 = arith.mulf %223, %224 : vector<32x128xf32>
    %226 = arith.addf %157, %225 : vector<32x128xf32>
    %227 = vector.extract_strided_slice %222 {offsets = [0, 32], sizes = [1, 32], strides = [1, 1]} : vector<1x128xf32> to vector<1x32xf32>
    %cst_38 = arith.constant dense<0.000000e+00> : vector<1xf32>
    %228 = vector.multi_reduction <add>, %227, %cst_38 [1] : vector<1x32xf32> to vector<1xf32>
    %229 = vector.shape_cast %228 : vector<1xf32> to vector<1x1xf32>
    %230 = vector.broadcast %229 : vector<1x1xf32> to vector<32x1xf32>
    %231 = arith.mulf %196, %230 : vector<32x1xf32>
    %232 = arith.addf %163, %231 : vector<32x1xf32>
    %233 = vector.extract_strided_slice %222 {offsets = [0, 64], sizes = [1, 32], strides = [1, 1]} : vector<1x128xf32> to vector<1x32xf32>
    %cst_39 = arith.constant dense<0.000000e+00> : vector<1xf32>
    %234 = vector.multi_reduction <add>, %233, %cst_39 [1] : vector<1x32xf32> to vector<1xf32>
    %235 = vector.shape_cast %234 : vector<1xf32> to vector<1x1xf32>
    %236 = vector.broadcast %235 : vector<1x1xf32> to vector<32x1xf32>
    %237 = arith.mulf %196, %236 : vector<32x1xf32>
    %238 = arith.addf %169, %237 : vector<32x1xf32>
    %239 = vector.extract_strided_slice %25 {offsets = [0, 3], sizes = [32, 1], strides = [1, 1]} : vector<32x8xf32> to vector<32x1xf32>
    %240 = vector.broadcast %239 : vector<32x1xf32> to vector<32x128xf32>
    %241 = arith.mulf %240, %226 : vector<32x128xf32>
    %cst_40 = arith.constant dense<0.000000e+00> : vector<128xf32>
    %242 = vector.multi_reduction <add>, %241, %cst_40 [0] : vector<32x128xf32> to vector<128xf32>
    %243 = vector.shape_cast %242 : vector<128xf32> to vector<1x128xf32>
    %244 = arith.mulf %239, %232 : vector<32x1xf32>
    %cst_41 = arith.constant dense<0xFF800000> : vector<1xf32>
    %245 = vector.multi_reduction <maximumf>, %244, %cst_41 [0] : vector<32x1xf32> to vector<1xf32>
    %246 = vector.shape_cast %245 : vector<1xf32> to vector<1x1xf32>
    %247 = vector.broadcast %246 : vector<1x1xf32> to vector<32x1xf32>
    %248 = arith.subf %244, %247 : vector<32x1xf32>
    %249 = math.exp %248 : vector<32x1xf32>
    %cst_42 = arith.constant dense<0.000000e+00> : vector<1xf32>
    %250 = vector.multi_reduction <add>, %249, %cst_42 [0] : vector<32x1xf32> to vector<1xf32>
    %251 = vector.shape_cast %250 : vector<1xf32> to vector<1x1xf32>
    %252 = tpu.reciprocal %251 {approx = true} : vector<1x1xf32> -> vector<1x1xf32>
    %253 = vector.broadcast %252 : vector<1x1xf32> to vector<32x1xf32>
    %254 = arith.mulf %249, %253 : vector<32x1xf32>
    %255 = arith.mulf %239, %238 : vector<32x1xf32>
    %cst_43 = arith.constant dense<0xFF800000> : vector<1xf32>
    %256 = vector.multi_reduction <maximumf>, %255, %cst_43 [0] : vector<32x1xf32> to vector<1xf32>
    %257 = vector.shape_cast %256 : vector<1xf32> to vector<1x1xf32>
    %258 = vector.broadcast %257 : vector<1x1xf32> to vector<32x1xf32>
    %259 = arith.subf %255, %258 : vector<32x1xf32>
    %260 = math.exp %259 : vector<32x1xf32>
    %cst_44 = arith.constant dense<0.000000e+00> : vector<1xf32>
    %261 = vector.multi_reduction <add>, %260, %cst_44 [0] : vector<32x1xf32> to vector<1xf32>
    %262 = vector.shape_cast %261 : vector<1xf32> to vector<1x1xf32>
    %263 = tpu.reciprocal %262 {approx = true} : vector<1x1xf32> -> vector<1x1xf32>
    %264 = vector.broadcast %263 : vector<1x1xf32> to vector<32x1xf32>
    %265 = arith.mulf %260, %264 : vector<32x1xf32>
    %266 = arith.subf %254, %265 : vector<32x1xf32>
    %267 = vector.broadcast %266 : vector<32x1xf32> to vector<32x128xf32>
    %268 = arith.mulf %267, %226 : vector<32x128xf32>
    %cst_45 = arith.constant dense<0.000000e+00> : vector<128xf32>
    %269 = vector.multi_reduction <add>, %268, %cst_45 [0] : vector<32x128xf32> to vector<128xf32>
    %270 = vector.shape_cast %269 : vector<128xf32> to vector<1x128xf32>
    %271 = vector.extract_strided_slice %243 {offsets = [0, 96], sizes = [1, 1], strides = [1, 1]} : vector<1x128xf32> to vector<1x1xf32>
    %272 = vector.extract_strided_slice %243 {offsets = [0, 97], sizes = [1, 1], strides = [1, 1]} : vector<1x128xf32> to vector<1x1xf32>
    %273 = vector.extract_strided_slice %243 {offsets = [0, 98], sizes = [1, 1], strides = [1, 1]} : vector<1x128xf32> to vector<1x1xf32>
    %274 = vector.extract_strided_slice %243 {offsets = [0, 99], sizes = [1, 1], strides = [1, 1]} : vector<1x128xf32> to vector<1x1xf32>
    %275 = vector.shape_cast %273 : vector<1x1xf32> to vector<1x1xf32>
    %276 = vector.broadcast %275 : vector<1x1xf32> to vector<1x128xf32>
    %277 = vector.shape_cast %274 : vector<1x1xf32> to vector<1x1xf32>
    %278 = vector.broadcast %277 : vector<1x1xf32> to vector<1x128xf32>
    %279 = arith.select %6, %276, %278 : vector<1x128xi1>, vector<1x128xf32>
    %280 = vector.shape_cast %272 : vector<1x1xf32> to vector<1x1xf32>
    %281 = vector.broadcast %280 : vector<1x1xf32> to vector<1x128xf32>
    %282 = arith.select %4, %281, %279 : vector<1x128xi1>, vector<1x128xf32>
    %283 = vector.shape_cast %271 : vector<1x1xf32> to vector<1x1xf32>
    %284 = vector.broadcast %283 : vector<1x1xf32> to vector<1x128xf32>
    %285 = arith.select %2, %284, %282 : vector<1x128xi1>, vector<1x128xf32>
    %286 = arith.negf %285 : vector<1x128xf32>
    %287 = math.exp %286 : vector<1x128xf32>
    %cst_46 = arith.constant 1.000000e+00 : f32
    %288 = vector.broadcast %cst_46 : f32 to vector<1x128xf32>
    %289 = arith.addf %288, %287 : vector<1x128xf32>
    %290 = arith.divf %288, %289 : vector<1x128xf32>
    %291 = arith.mulf %290, %270 : vector<1x128xf32>
    %292 = vector.broadcast %265 : vector<32x1xf32> to vector<32x128xf32>
    %293 = vector.broadcast %291 : vector<1x128xf32> to vector<32x128xf32>
    %294 = arith.mulf %292, %293 : vector<32x128xf32>
    %295 = arith.addf %226, %294 : vector<32x128xf32>
    %296 = vector.extract_strided_slice %291 {offsets = [0, 32], sizes = [1, 32], strides = [1, 1]} : vector<1x128xf32> to vector<1x32xf32>
    %cst_47 = arith.constant dense<0.000000e+00> : vector<1xf32>
    %297 = vector.multi_reduction <add>, %296, %cst_47 [1] : vector<1x32xf32> to vector<1xf32>
    %298 = vector.shape_cast %297 : vector<1xf32> to vector<1x1xf32>
    %299 = vector.broadcast %298 : vector<1x1xf32> to vector<32x1xf32>
    %300 = arith.mulf %265, %299 : vector<32x1xf32>
    %301 = arith.addf %232, %300 : vector<32x1xf32>
    %302 = vector.extract_strided_slice %291 {offsets = [0, 64], sizes = [1, 32], strides = [1, 1]} : vector<1x128xf32> to vector<1x32xf32>
    %cst_48 = arith.constant dense<0.000000e+00> : vector<1xf32>
    %303 = vector.multi_reduction <add>, %302, %cst_48 [1] : vector<1x32xf32> to vector<1xf32>
    %304 = vector.shape_cast %303 : vector<1xf32> to vector<1x1xf32>
    %305 = vector.broadcast %304 : vector<1x1xf32> to vector<32x1xf32>
    %306 = arith.mulf %265, %305 : vector<32x1xf32>
    %307 = arith.addf %238, %306 : vector<32x1xf32>
    %308 = vector.extract_strided_slice %25 {offsets = [0, 4], sizes = [32, 1], strides = [1, 1]} : vector<32x8xf32> to vector<32x1xf32>
    %309 = vector.broadcast %308 : vector<32x1xf32> to vector<32x128xf32>
    %310 = arith.mulf %309, %295 : vector<32x128xf32>
    %cst_49 = arith.constant dense<0.000000e+00> : vector<128xf32>
    %311 = vector.multi_reduction <add>, %310, %cst_49 [0] : vector<32x128xf32> to vector<128xf32>
    %312 = vector.shape_cast %311 : vector<128xf32> to vector<1x128xf32>
    %313 = arith.mulf %308, %301 : vector<32x1xf32>
    %cst_50 = arith.constant dense<0xFF800000> : vector<1xf32>
    %314 = vector.multi_reduction <maximumf>, %313, %cst_50 [0] : vector<32x1xf32> to vector<1xf32>
    %315 = vector.shape_cast %314 : vector<1xf32> to vector<1x1xf32>
    %316 = vector.broadcast %315 : vector<1x1xf32> to vector<32x1xf32>
    %317 = arith.subf %313, %316 : vector<32x1xf32>
    %318 = math.exp %317 : vector<32x1xf32>
    %cst_51 = arith.constant dense<0.000000e+00> : vector<1xf32>
    %319 = vector.multi_reduction <add>, %318, %cst_51 [0] : vector<32x1xf32> to vector<1xf32>
    %320 = vector.shape_cast %319 : vector<1xf32> to vector<1x1xf32>
    %321 = tpu.reciprocal %320 {approx = true} : vector<1x1xf32> -> vector<1x1xf32>
    %322 = vector.broadcast %321 : vector<1x1xf32> to vector<32x1xf32>
    %323 = arith.mulf %318, %322 : vector<32x1xf32>
    %324 = arith.mulf %308, %307 : vector<32x1xf32>
    %cst_52 = arith.constant dense<0xFF800000> : vector<1xf32>
    %325 = vector.multi_reduction <maximumf>, %324, %cst_52 [0] : vector<32x1xf32> to vector<1xf32>
    %326 = vector.shape_cast %325 : vector<1xf32> to vector<1x1xf32>
    %327 = vector.broadcast %326 : vector<1x1xf32> to vector<32x1xf32>
    %328 = arith.subf %324, %327 : vector<32x1xf32>
    %329 = math.exp %328 : vector<32x1xf32>
    %cst_53 = arith.constant dense<0.000000e+00> : vector<1xf32>
    %330 = vector.multi_reduction <add>, %329, %cst_53 [0] : vector<32x1xf32> to vector<1xf32>
    %331 = vector.shape_cast %330 : vector<1xf32> to vector<1x1xf32>
    %332 = tpu.reciprocal %331 {approx = true} : vector<1x1xf32> -> vector<1x1xf32>
    %333 = vector.broadcast %332 : vector<1x1xf32> to vector<32x1xf32>
    %334 = arith.mulf %329, %333 : vector<32x1xf32>
    %335 = arith.subf %323, %334 : vector<32x1xf32>
    %336 = vector.broadcast %335 : vector<32x1xf32> to vector<32x128xf32>
    %337 = arith.mulf %336, %295 : vector<32x128xf32>
    %cst_54 = arith.constant dense<0.000000e+00> : vector<128xf32>
    %338 = vector.multi_reduction <add>, %337, %cst_54 [0] : vector<32x128xf32> to vector<128xf32>
    %339 = vector.shape_cast %338 : vector<128xf32> to vector<1x128xf32>
    %340 = vector.extract_strided_slice %312 {offsets = [0, 96], sizes = [1, 1], strides = [1, 1]} : vector<1x128xf32> to vector<1x1xf32>
    %341 = vector.extract_strided_slice %312 {offsets = [0, 97], sizes = [1, 1], strides = [1, 1]} : vector<1x128xf32> to vector<1x1xf32>
    %342 = vector.extract_strided_slice %312 {offsets = [0, 98], sizes = [1, 1], strides = [1, 1]} : vector<1x128xf32> to vector<1x1xf32>
    %343 = vector.extract_strided_slice %312 {offsets = [0, 99], sizes = [1, 1], strides = [1, 1]} : vector<1x128xf32> to vector<1x1xf32>
    %344 = vector.shape_cast %342 : vector<1x1xf32> to vector<1x1xf32>
    %345 = vector.broadcast %344 : vector<1x1xf32> to vector<1x128xf32>
    %346 = vector.shape_cast %343 : vector<1x1xf32> to vector<1x1xf32>
    %347 = vector.broadcast %346 : vector<1x1xf32> to vector<1x128xf32>
    %348 = arith.select %6, %345, %347 : vector<1x128xi1>, vector<1x128xf32>
    %349 = vector.shape_cast %341 : vector<1x1xf32> to vector<1x1xf32>
    %350 = vector.broadcast %349 : vector<1x1xf32> to vector<1x128xf32>
    %351 = arith.select %4, %350, %348 : vector<1x128xi1>, vector<1x128xf32>
    %352 = vector.shape_cast %340 : vector<1x1xf32> to vector<1x1xf32>
    %353 = vector.broadcast %352 : vector<1x1xf32> to vector<1x128xf32>
    %354 = arith.select %2, %353, %351 : vector<1x128xi1>, vector<1x128xf32>
    %355 = arith.negf %354 : vector<1x128xf32>
    %356 = math.exp %355 : vector<1x128xf32>
    %cst_55 = arith.constant 1.000000e+00 : f32
    %357 = vector.broadcast %cst_55 : f32 to vector<1x128xf32>
    %358 = arith.addf %357, %356 : vector<1x128xf32>
    %359 = arith.divf %357, %358 : vector<1x128xf32>
    %360 = arith.mulf %359, %339 : vector<1x128xf32>
    %361 = vector.broadcast %334 : vector<32x1xf32> to vector<32x128xf32>
    %362 = vector.broadcast %360 : vector<1x128xf32> to vector<32x128xf32>
    %363 = arith.mulf %361, %362 : vector<32x128xf32>
    %364 = arith.addf %295, %363 : vector<32x128xf32>
    %365 = vector.extract_strided_slice %360 {offsets = [0, 32], sizes = [1, 32], strides = [1, 1]} : vector<1x128xf32> to vector<1x32xf32>
    %cst_56 = arith.constant dense<0.000000e+00> : vector<1xf32>
    %366 = vector.multi_reduction <add>, %365, %cst_56 [1] : vector<1x32xf32> to vector<1xf32>
    %367 = vector.shape_cast %366 : vector<1xf32> to vector<1x1xf32>
    %368 = vector.broadcast %367 : vector<1x1xf32> to vector<32x1xf32>
    %369 = arith.mulf %334, %368 : vector<32x1xf32>
    %370 = arith.addf %301, %369 : vector<32x1xf32>
    %371 = vector.extract_strided_slice %360 {offsets = [0, 64], sizes = [1, 32], strides = [1, 1]} : vector<1x128xf32> to vector<1x32xf32>
    %cst_57 = arith.constant dense<0.000000e+00> : vector<1xf32>
    %372 = vector.multi_reduction <add>, %371, %cst_57 [1] : vector<1x32xf32> to vector<1xf32>
    %373 = vector.shape_cast %372 : vector<1xf32> to vector<1x1xf32>
    %374 = vector.broadcast %373 : vector<1x1xf32> to vector<32x1xf32>
    %375 = arith.mulf %334, %374 : vector<32x1xf32>
    %376 = arith.addf %307, %375 : vector<32x1xf32>
    %377 = vector.extract_strided_slice %25 {offsets = [0, 5], sizes = [32, 1], strides = [1, 1]} : vector<32x8xf32> to vector<32x1xf32>
    %378 = vector.broadcast %377 : vector<32x1xf32> to vector<32x128xf32>
    %379 = arith.mulf %378, %364 : vector<32x128xf32>
    %cst_58 = arith.constant dense<0.000000e+00> : vector<128xf32>
    %380 = vector.multi_reduction <add>, %379, %cst_58 [0] : vector<32x128xf32> to vector<128xf32>
    %381 = vector.shape_cast %380 : vector<128xf32> to vector<1x128xf32>
    %382 = arith.mulf %377, %370 : vector<32x1xf32>
    %cst_59 = arith.constant dense<0xFF800000> : vector<1xf32>
    %383 = vector.multi_reduction <maximumf>, %382, %cst_59 [0] : vector<32x1xf32> to vector<1xf32>
    %384 = vector.shape_cast %383 : vector<1xf32> to vector<1x1xf32>
    %385 = vector.broadcast %384 : vector<1x1xf32> to vector<32x1xf32>
    %386 = arith.subf %382, %385 : vector<32x1xf32>
    %387 = math.exp %386 : vector<32x1xf32>
    %cst_60 = arith.constant dense<0.000000e+00> : vector<1xf32>
    %388 = vector.multi_reduction <add>, %387, %cst_60 [0] : vector<32x1xf32> to vector<1xf32>
    %389 = vector.shape_cast %388 : vector<1xf32> to vector<1x1xf32>
    %390 = tpu.reciprocal %389 {approx = true} : vector<1x1xf32> -> vector<1x1xf32>
    %391 = vector.broadcast %390 : vector<1x1xf32> to vector<32x1xf32>
    %392 = arith.mulf %387, %391 : vector<32x1xf32>
    %393 = arith.mulf %377, %376 : vector<32x1xf32>
    %cst_61 = arith.constant dense<0xFF800000> : vector<1xf32>
    %394 = vector.multi_reduction <maximumf>, %393, %cst_61 [0] : vector<32x1xf32> to vector<1xf32>
    %395 = vector.shape_cast %394 : vector<1xf32> to vector<1x1xf32>
    %396 = vector.broadcast %395 : vector<1x1xf32> to vector<32x1xf32>
    %397 = arith.subf %393, %396 : vector<32x1xf32>
    %398 = math.exp %397 : vector<32x1xf32>
    %cst_62 = arith.constant dense<0.000000e+00> : vector<1xf32>
    %399 = vector.multi_reduction <add>, %398, %cst_62 [0] : vector<32x1xf32> to vector<1xf32>
    %400 = vector.shape_cast %399 : vector<1xf32> to vector<1x1xf32>
    %401 = tpu.reciprocal %400 {approx = true} : vector<1x1xf32> -> vector<1x1xf32>
    %402 = vector.broadcast %401 : vector<1x1xf32> to vector<32x1xf32>
    %403 = arith.mulf %398, %402 : vector<32x1xf32>
    %404 = arith.subf %392, %403 : vector<32x1xf32>
    %405 = vector.broadcast %404 : vector<32x1xf32> to vector<32x128xf32>
    %406 = arith.mulf %405, %364 : vector<32x128xf32>
    %cst_63 = arith.constant dense<0.000000e+00> : vector<128xf32>
    %407 = vector.multi_reduction <add>, %406, %cst_63 [0] : vector<32x128xf32> to vector<128xf32>
    %408 = vector.shape_cast %407 : vector<128xf32> to vector<1x128xf32>
    %409 = vector.extract_strided_slice %381 {offsets = [0, 96], sizes = [1, 1], strides = [1, 1]} : vector<1x128xf32> to vector<1x1xf32>
    %410 = vector.extract_strided_slice %381 {offsets = [0, 97], sizes = [1, 1], strides = [1, 1]} : vector<1x128xf32> to vector<1x1xf32>
    %411 = vector.extract_strided_slice %381 {offsets = [0, 98], sizes = [1, 1], strides = [1, 1]} : vector<1x128xf32> to vector<1x1xf32>
    %412 = vector.extract_strided_slice %381 {offsets = [0, 99], sizes = [1, 1], strides = [1, 1]} : vector<1x128xf32> to vector<1x1xf32>
    %413 = vector.shape_cast %411 : vector<1x1xf32> to vector<1x1xf32>
    %414 = vector.broadcast %413 : vector<1x1xf32> to vector<1x128xf32>
    %415 = vector.shape_cast %412 : vector<1x1xf32> to vector<1x1xf32>
    %416 = vector.broadcast %415 : vector<1x1xf32> to vector<1x128xf32>
    %417 = arith.select %6, %414, %416 : vector<1x128xi1>, vector<1x128xf32>
    %418 = vector.shape_cast %410 : vector<1x1xf32> to vector<1x1xf32>
    %419 = vector.broadcast %418 : vector<1x1xf32> to vector<1x128xf32>
    %420 = arith.select %4, %419, %417 : vector<1x128xi1>, vector<1x128xf32>
    %421 = vector.shape_cast %409 : vector<1x1xf32> to vector<1x1xf32>
    %422 = vector.broadcast %421 : vector<1x1xf32> to vector<1x128xf32>
    %423 = arith.select %2, %422, %420 : vector<1x128xi1>, vector<1x128xf32>
    %424 = arith.negf %423 : vector<1x128xf32>
    %425 = math.exp %424 : vector<1x128xf32>
    %cst_64 = arith.constant 1.000000e+00 : f32
    %426 = vector.broadcast %cst_64 : f32 to vector<1x128xf32>
    %427 = arith.addf %426, %425 : vector<1x128xf32>
    %428 = arith.divf %426, %427 : vector<1x128xf32>
    %429 = arith.mulf %428, %408 : vector<1x128xf32>
    %430 = vector.broadcast %403 : vector<32x1xf32> to vector<32x128xf32>
    %431 = vector.broadcast %429 : vector<1x128xf32> to vector<32x128xf32>
    %432 = arith.mulf %430, %431 : vector<32x128xf32>
    %433 = arith.addf %364, %432 : vector<32x128xf32>
    %434 = vector.extract_strided_slice %429 {offsets = [0, 32], sizes = [1, 32], strides = [1, 1]} : vector<1x128xf32> to vector<1x32xf32>
    %cst_65 = arith.constant dense<0.000000e+00> : vector<1xf32>
    %435 = vector.multi_reduction <add>, %434, %cst_65 [1] : vector<1x32xf32> to vector<1xf32>
    %436 = vector.shape_cast %435 : vector<1xf32> to vector<1x1xf32>
    %437 = vector.broadcast %436 : vector<1x1xf32> to vector<32x1xf32>
    %438 = arith.mulf %403, %437 : vector<32x1xf32>
    %439 = arith.addf %370, %438 : vector<32x1xf32>
    %440 = vector.extract_strided_slice %429 {offsets = [0, 64], sizes = [1, 32], strides = [1, 1]} : vector<1x128xf32> to vector<1x32xf32>
    %cst_66 = arith.constant dense<0.000000e+00> : vector<1xf32>
    %441 = vector.multi_reduction <add>, %440, %cst_66 [1] : vector<1x32xf32> to vector<1xf32>
    %442 = vector.shape_cast %441 : vector<1xf32> to vector<1x1xf32>
    %443 = vector.broadcast %442 : vector<1x1xf32> to vector<32x1xf32>
    %444 = arith.mulf %403, %443 : vector<32x1xf32>
    %445 = arith.addf %376, %444 : vector<32x1xf32>
    %446 = vector.extract_strided_slice %25 {offsets = [0, 6], sizes = [32, 1], strides = [1, 1]} : vector<32x8xf32> to vector<32x1xf32>
    %447 = vector.broadcast %446 : vector<32x1xf32> to vector<32x128xf32>
    %448 = arith.mulf %447, %433 : vector<32x128xf32>
    %cst_67 = arith.constant dense<0.000000e+00> : vector<128xf32>
    %449 = vector.multi_reduction <add>, %448, %cst_67 [0] : vector<32x128xf32> to vector<128xf32>
    %450 = vector.shape_cast %449 : vector<128xf32> to vector<1x128xf32>
    %451 = arith.mulf %446, %439 : vector<32x1xf32>
    %cst_68 = arith.constant dense<0xFF800000> : vector<1xf32>
    %452 = vector.multi_reduction <maximumf>, %451, %cst_68 [0] : vector<32x1xf32> to vector<1xf32>
    %453 = vector.shape_cast %452 : vector<1xf32> to vector<1x1xf32>
    %454 = vector.broadcast %453 : vector<1x1xf32> to vector<32x1xf32>
    %455 = arith.subf %451, %454 : vector<32x1xf32>
    %456 = math.exp %455 : vector<32x1xf32>
    %cst_69 = arith.constant dense<0.000000e+00> : vector<1xf32>
    %457 = vector.multi_reduction <add>, %456, %cst_69 [0] : vector<32x1xf32> to vector<1xf32>
    %458 = vector.shape_cast %457 : vector<1xf32> to vector<1x1xf32>
    %459 = tpu.reciprocal %458 {approx = true} : vector<1x1xf32> -> vector<1x1xf32>
    %460 = vector.broadcast %459 : vector<1x1xf32> to vector<32x1xf32>
    %461 = arith.mulf %456, %460 : vector<32x1xf32>
    %462 = arith.mulf %446, %445 : vector<32x1xf32>
    %cst_70 = arith.constant dense<0xFF800000> : vector<1xf32>
    %463 = vector.multi_reduction <maximumf>, %462, %cst_70 [0] : vector<32x1xf32> to vector<1xf32>
    %464 = vector.shape_cast %463 : vector<1xf32> to vector<1x1xf32>
    %465 = vector.broadcast %464 : vector<1x1xf32> to vector<32x1xf32>
    %466 = arith.subf %462, %465 : vector<32x1xf32>
    %467 = math.exp %466 : vector<32x1xf32>
    %cst_71 = arith.constant dense<0.000000e+00> : vector<1xf32>
    %468 = vector.multi_reduction <add>, %467, %cst_71 [0] : vector<32x1xf32> to vector<1xf32>
    %469 = vector.shape_cast %468 : vector<1xf32> to vector<1x1xf32>
    %470 = tpu.reciprocal %469 {approx = true} : vector<1x1xf32> -> vector<1x1xf32>
    %471 = vector.broadcast %470 : vector<1x1xf32> to vector<32x1xf32>
    %472 = arith.mulf %467, %471 : vector<32x1xf32>
    %473 = arith.subf %461, %472 : vector<32x1xf32>
    %474 = vector.broadcast %473 : vector<32x1xf32> to vector<32x128xf32>
    %475 = arith.mulf %474, %433 : vector<32x128xf32>
    %cst_72 = arith.constant dense<0.000000e+00> : vector<128xf32>
    %476 = vector.multi_reduction <add>, %475, %cst_72 [0] : vector<32x128xf32> to vector<128xf32>
    %477 = vector.shape_cast %476 : vector<128xf32> to vector<1x128xf32>
    %478 = vector.extract_strided_slice %450 {offsets = [0, 96], sizes = [1, 1], strides = [1, 1]} : vector<1x128xf32> to vector<1x1xf32>
    %479 = vector.extract_strided_slice %450 {offsets = [0, 97], sizes = [1, 1], strides = [1, 1]} : vector<1x128xf32> to vector<1x1xf32>
    %480 = vector.extract_strided_slice %450 {offsets = [0, 98], sizes = [1, 1], strides = [1, 1]} : vector<1x128xf32> to vector<1x1xf32>
    %481 = vector.extract_strided_slice %450 {offsets = [0, 99], sizes = [1, 1], strides = [1, 1]} : vector<1x128xf32> to vector<1x1xf32>
    %482 = vector.shape_cast %480 : vector<1x1xf32> to vector<1x1xf32>
    %483 = vector.broadcast %482 : vector<1x1xf32> to vector<1x128xf32>
    %484 = vector.shape_cast %481 : vector<1x1xf32> to vector<1x1xf32>
    %485 = vector.broadcast %484 : vector<1x1xf32> to vector<1x128xf32>
    %486 = arith.select %6, %483, %485 : vector<1x128xi1>, vector<1x128xf32>
    %487 = vector.shape_cast %479 : vector<1x1xf32> to vector<1x1xf32>
    %488 = vector.broadcast %487 : vector<1x1xf32> to vector<1x128xf32>
    %489 = arith.select %4, %488, %486 : vector<1x128xi1>, vector<1x128xf32>
    %490 = vector.shape_cast %478 : vector<1x1xf32> to vector<1x1xf32>
    %491 = vector.broadcast %490 : vector<1x1xf32> to vector<1x128xf32>
    %492 = arith.select %2, %491, %489 : vector<1x128xi1>, vector<1x128xf32>
    %493 = arith.negf %492 : vector<1x128xf32>
    %494 = math.exp %493 : vector<1x128xf32>
    %cst_73 = arith.constant 1.000000e+00 : f32
    %495 = vector.broadcast %cst_73 : f32 to vector<1x128xf32>
    %496 = arith.addf %495, %494 : vector<1x128xf32>
    %497 = arith.divf %495, %496 : vector<1x128xf32>
    %498 = arith.mulf %497, %477 : vector<1x128xf32>
    %499 = vector.broadcast %472 : vector<32x1xf32> to vector<32x128xf32>
    %500 = vector.broadcast %498 : vector<1x128xf32> to vector<32x128xf32>
    %501 = arith.mulf %499, %500 : vector<32x128xf32>
    %502 = arith.addf %433, %501 : vector<32x128xf32>
    %503 = vector.extract_strided_slice %25 {offsets = [0, 7], sizes = [32, 1], strides = [1, 1]} : vector<32x8xf32> to vector<32x1xf32>
    %504 = vector.broadcast %503 : vector<32x1xf32> to vector<32x128xf32>
    %505 = arith.mulf %504, %502 : vector<32x128xf32>
    %cst_74 = arith.constant dense<0.000000e+00> : vector<128xf32>
    %506 = vector.multi_reduction <add>, %505, %cst_74 [0] : vector<32x128xf32> to vector<128xf32>
    %507 = vector.shape_cast %506 : vector<128xf32> to vector<1x128xf32>
    %508 = vector.extract_strided_slice %507 {offsets = [0, 0], sizes = [1, 32], strides = [1, 1]} : vector<1x128xf32> to vector<1x32xf32>
    %509 = vector.extract_strided_slice %11 {offsets = [32, 0], sizes = [32, 128], strides = [1, 1]} : vector<128x128xf32> to vector<32x128xf32>
    %510 = vector.extract_strided_slice %9 {offsets = [32, 0], sizes = [32, 1], strides = [1, 1]} : vector<128x1xf32> to vector<32x1xf32>
    %511 = vector.broadcast %510 : vector<32x1xf32> to vector<32x8xf32>
    %512 = vector.broadcast %13 : vector<1x8xf32> to vector<32x8xf32>
    %513 = arith.mulf %511, %512 : vector<32x8xf32>
    %514 = vector.extract_strided_slice %10 {offsets = [32, 0], sizes = [32, 1], strides = [1, 1]} : vector<128x1xf32> to vector<32x1xf32>
    %515 = vector.broadcast %514 : vector<32x1xf32> to vector<32x8xf32>
    %516 = arith.addf %513, %515 : vector<32x8xf32>
    %517 = vector.extract_strided_slice %509 {offsets = [0, 32], sizes = [32, 32], strides = [1, 1]} : vector<32x128xf32> to vector<32x32xf32>
    %cst_75 = arith.constant dense<0.000000e+00> : vector<32xf32>
    %518 = vector.multi_reduction <add>, %517, %cst_75 [1] : vector<32x32xf32> to vector<32xf32>
    %519 = vector.shape_cast %518 : vector<32xf32> to vector<32x1xf32>
    %520 = vector.extract_strided_slice %509 {offsets = [0, 64], sizes = [32, 32], strides = [1, 1]} : vector<32x128xf32> to vector<32x32xf32>
    %cst_76 = arith.constant dense<0.000000e+00> : vector<32xf32>
    %521 = vector.multi_reduction <add>, %520, %cst_76 [1] : vector<32x32xf32> to vector<32xf32>
    %522 = vector.shape_cast %521 : vector<32xf32> to vector<32x1xf32>
    %523 = vector.extract_strided_slice %516 {offsets = [0, 0], sizes = [32, 1], strides = [1, 1]} : vector<32x8xf32> to vector<32x1xf32>
    %524 = vector.broadcast %523 : vector<32x1xf32> to vector<32x128xf32>
    %525 = arith.mulf %524, %509 : vector<32x128xf32>
    %cst_77 = arith.constant dense<0.000000e+00> : vector<128xf32>
    %526 = vector.multi_reduction <add>, %525, %cst_77 [0] : vector<32x128xf32> to vector<128xf32>
    %527 = vector.shape_cast %526 : vector<128xf32> to vector<1x128xf32>
    %528 = arith.mulf %523, %519 : vector<32x1xf32>
    %cst_78 = arith.constant dense<0xFF800000> : vector<1xf32>
    %529 = vector.multi_reduction <maximumf>, %528, %cst_78 [0] : vector<32x1xf32> to vector<1xf32>
    %530 = vector.shape_cast %529 : vector<1xf32> to vector<1x1xf32>
    %531 = vector.broadcast %530 : vector<1x1xf32> to vector<32x1xf32>
    %532 = arith.subf %528, %531 : vector<32x1xf32>
    %533 = math.exp %532 : vector<32x1xf32>
    %cst_79 = arith.constant dense<0.000000e+00> : vector<1xf32>
    %534 = vector.multi_reduction <add>, %533, %cst_79 [0] : vector<32x1xf32> to vector<1xf32>
    %535 = vector.shape_cast %534 : vector<1xf32> to vector<1x1xf32>
    %536 = tpu.reciprocal %535 {approx = true} : vector<1x1xf32> -> vector<1x1xf32>
    %537 = vector.broadcast %536 : vector<1x1xf32> to vector<32x1xf32>
    %538 = arith.mulf %533, %537 : vector<32x1xf32>
    %539 = arith.mulf %523, %522 : vector<32x1xf32>
    %cst_80 = arith.constant dense<0xFF800000> : vector<1xf32>
    %540 = vector.multi_reduction <maximumf>, %539, %cst_80 [0] : vector<32x1xf32> to vector<1xf32>
    %541 = vector.shape_cast %540 : vector<1xf32> to vector<1x1xf32>
    %542 = vector.broadcast %541 : vector<1x1xf32> to vector<32x1xf32>
    %543 = arith.subf %539, %542 : vector<32x1xf32>
    %544 = math.exp %543 : vector<32x1xf32>
    %cst_81 = arith.constant dense<0.000000e+00> : vector<1xf32>
    %545 = vector.multi_reduction <add>, %544, %cst_81 [0] : vector<32x1xf32> to vector<1xf32>
    %546 = vector.shape_cast %545 : vector<1xf32> to vector<1x1xf32>
    %547 = tpu.reciprocal %546 {approx = true} : vector<1x1xf32> -> vector<1x1xf32>
    %548 = vector.broadcast %547 : vector<1x1xf32> to vector<32x1xf32>
    %549 = arith.mulf %544, %548 : vector<32x1xf32>
    %550 = arith.subf %538, %549 : vector<32x1xf32>
    %551 = vector.broadcast %550 : vector<32x1xf32> to vector<32x128xf32>
    %552 = arith.mulf %551, %509 : vector<32x128xf32>
    %cst_82 = arith.constant dense<0.000000e+00> : vector<128xf32>
    %553 = vector.multi_reduction <add>, %552, %cst_82 [0] : vector<32x128xf32> to vector<128xf32>
    %554 = vector.shape_cast %553 : vector<128xf32> to vector<1x128xf32>
    %555 = vector.extract_strided_slice %527 {offsets = [0, 96], sizes = [1, 1], strides = [1, 1]} : vector<1x128xf32> to vector<1x1xf32>
    %556 = vector.extract_strided_slice %527 {offsets = [0, 97], sizes = [1, 1], strides = [1, 1]} : vector<1x128xf32> to vector<1x1xf32>
    %557 = vector.extract_strided_slice %527 {offsets = [0, 98], sizes = [1, 1], strides = [1, 1]} : vector<1x128xf32> to vector<1x1xf32>
    %558 = vector.extract_strided_slice %527 {offsets = [0, 99], sizes = [1, 1], strides = [1, 1]} : vector<1x128xf32> to vector<1x1xf32>
    %559 = vector.shape_cast %557 : vector<1x1xf32> to vector<1x1xf32>
    %560 = vector.broadcast %559 : vector<1x1xf32> to vector<1x128xf32>
    %561 = vector.shape_cast %558 : vector<1x1xf32> to vector<1x1xf32>
    %562 = vector.broadcast %561 : vector<1x1xf32> to vector<1x128xf32>
    %563 = arith.select %6, %560, %562 : vector<1x128xi1>, vector<1x128xf32>
    %564 = vector.shape_cast %556 : vector<1x1xf32> to vector<1x1xf32>
    %565 = vector.broadcast %564 : vector<1x1xf32> to vector<1x128xf32>
    %566 = arith.select %4, %565, %563 : vector<1x128xi1>, vector<1x128xf32>
    %567 = vector.shape_cast %555 : vector<1x1xf32> to vector<1x1xf32>
    %568 = vector.broadcast %567 : vector<1x1xf32> to vector<1x128xf32>
    %569 = arith.select %2, %568, %566 : vector<1x128xi1>, vector<1x128xf32>
    %570 = arith.negf %569 : vector<1x128xf32>
    %571 = math.exp %570 : vector<1x128xf32>
    %cst_83 = arith.constant 1.000000e+00 : f32
    %572 = vector.broadcast %cst_83 : f32 to vector<1x128xf32>
    %573 = arith.addf %572, %571 : vector<1x128xf32>
    %574 = arith.divf %572, %573 : vector<1x128xf32>
    %575 = arith.mulf %574, %554 : vector<1x128xf32>
    %576 = vector.broadcast %549 : vector<32x1xf32> to vector<32x128xf32>
    %577 = vector.broadcast %575 : vector<1x128xf32> to vector<32x128xf32>
    %578 = arith.mulf %576, %577 : vector<32x128xf32>
    %579 = arith.addf %509, %578 : vector<32x128xf32>
    %580 = vector.extract_strided_slice %575 {offsets = [0, 32], sizes = [1, 32], strides = [1, 1]} : vector<1x128xf32> to vector<1x32xf32>
    %cst_84 = arith.constant dense<0.000000e+00> : vector<1xf32>
    %581 = vector.multi_reduction <add>, %580, %cst_84 [1] : vector<1x32xf32> to vector<1xf32>
    %582 = vector.shape_cast %581 : vector<1xf32> to vector<1x1xf32>
    %583 = vector.broadcast %582 : vector<1x1xf32> to vector<32x1xf32>
    %584 = arith.mulf %549, %583 : vector<32x1xf32>
    %585 = arith.addf %519, %584 : vector<32x1xf32>
    %586 = vector.extract_strided_slice %575 {offsets = [0, 64], sizes = [1, 32], strides = [1, 1]} : vector<1x128xf32> to vector<1x32xf32>
    %cst_85 = arith.constant dense<0.000000e+00> : vector<1xf32>
    %587 = vector.multi_reduction <add>, %586, %cst_85 [1] : vector<1x32xf32> to vector<1xf32>
    %588 = vector.shape_cast %587 : vector<1xf32> to vector<1x1xf32>
    %589 = vector.broadcast %588 : vector<1x1xf32> to vector<32x1xf32>
    %590 = arith.mulf %549, %589 : vector<32x1xf32>
    %591 = arith.addf %522, %590 : vector<32x1xf32>
    %592 = vector.extract_strided_slice %516 {offsets = [0, 1], sizes = [32, 1], strides = [1, 1]} : vector<32x8xf32> to vector<32x1xf32>
    %593 = vector.broadcast %592 : vector<32x1xf32> to vector<32x128xf32>
    %594 = arith.mulf %593, %579 : vector<32x128xf32>
    %cst_86 = arith.constant dense<0.000000e+00> : vector<128xf32>
    %595 = vector.multi_reduction <add>, %594, %cst_86 [0] : vector<32x128xf32> to vector<128xf32>
    %596 = vector.shape_cast %595 : vector<128xf32> to vector<1x128xf32>
    %597 = arith.mulf %592, %585 : vector<32x1xf32>
    %cst_87 = arith.constant dense<0xFF800000> : vector<1xf32>
    %598 = vector.multi_reduction <maximumf>, %597, %cst_87 [0] : vector<32x1xf32> to vector<1xf32>
    %599 = vector.shape_cast %598 : vector<1xf32> to vector<1x1xf32>
    %600 = vector.broadcast %599 : vector<1x1xf32> to vector<32x1xf32>
    %601 = arith.subf %597, %600 : vector<32x1xf32>
    %602 = math.exp %601 : vector<32x1xf32>
    %cst_88 = arith.constant dense<0.000000e+00> : vector<1xf32>
    %603 = vector.multi_reduction <add>, %602, %cst_88 [0] : vector<32x1xf32> to vector<1xf32>
    %604 = vector.shape_cast %603 : vector<1xf32> to vector<1x1xf32>
    %605 = tpu.reciprocal %604 {approx = true} : vector<1x1xf32> -> vector<1x1xf32>
    %606 = vector.broadcast %605 : vector<1x1xf32> to vector<32x1xf32>
    %607 = arith.mulf %602, %606 : vector<32x1xf32>
    %608 = arith.mulf %592, %591 : vector<32x1xf32>
    %cst_89 = arith.constant dense<0xFF800000> : vector<1xf32>
    %609 = vector.multi_reduction <maximumf>, %608, %cst_89 [0] : vector<32x1xf32> to vector<1xf32>
    %610 = vector.shape_cast %609 : vector<1xf32> to vector<1x1xf32>
    %611 = vector.broadcast %610 : vector<1x1xf32> to vector<32x1xf32>
    %612 = arith.subf %608, %611 : vector<32x1xf32>
    %613 = math.exp %612 : vector<32x1xf32>
    %cst_90 = arith.constant dense<0.000000e+00> : vector<1xf32>
    %614 = vector.multi_reduction <add>, %613, %cst_90 [0] : vector<32x1xf32> to vector<1xf32>
    %615 = vector.shape_cast %614 : vector<1xf32> to vector<1x1xf32>
    %616 = tpu.reciprocal %615 {approx = true} : vector<1x1xf32> -> vector<1x1xf32>
    %617 = vector.broadcast %616 : vector<1x1xf32> to vector<32x1xf32>
    %618 = arith.mulf %613, %617 : vector<32x1xf32>
    %619 = arith.subf %607, %618 : vector<32x1xf32>
    %620 = vector.broadcast %619 : vector<32x1xf32> to vector<32x128xf32>
    %621 = arith.mulf %620, %579 : vector<32x128xf32>
    %cst_91 = arith.constant dense<0.000000e+00> : vector<128xf32>
    %622 = vector.multi_reduction <add>, %621, %cst_91 [0] : vector<32x128xf32> to vector<128xf32>
    %623 = vector.shape_cast %622 : vector<128xf32> to vector<1x128xf32>
    %624 = vector.extract_strided_slice %596 {offsets = [0, 96], sizes = [1, 1], strides = [1, 1]} : vector<1x128xf32> to vector<1x1xf32>
    %625 = vector.extract_strided_slice %596 {offsets = [0, 97], sizes = [1, 1], strides = [1, 1]} : vector<1x128xf32> to vector<1x1xf32>
    %626 = vector.extract_strided_slice %596 {offsets = [0, 98], sizes = [1, 1], strides = [1, 1]} : vector<1x128xf32> to vector<1x1xf32>
    %627 = vector.extract_strided_slice %596 {offsets = [0, 99], sizes = [1, 1], strides = [1, 1]} : vector<1x128xf32> to vector<1x1xf32>
    %628 = vector.shape_cast %626 : vector<1x1xf32> to vector<1x1xf32>
    %629 = vector.broadcast %628 : vector<1x1xf32> to vector<1x128xf32>
    %630 = vector.shape_cast %627 : vector<1x1xf32> to vector<1x1xf32>
    %631 = vector.broadcast %630 : vector<1x1xf32> to vector<1x128xf32>
    %632 = arith.select %6, %629, %631 : vector<1x128xi1>, vector<1x128xf32>
    %633 = vector.shape_cast %625 : vector<1x1xf32> to vector<1x1xf32>
    %634 = vector.broadcast %633 : vector<1x1xf32> to vector<1x128xf32>
    %635 = arith.select %4, %634, %632 : vector<1x128xi1>, vector<1x128xf32>
    %636 = vector.shape_cast %624 : vector<1x1xf32> to vector<1x1xf32>
    %637 = vector.broadcast %636 : vector<1x1xf32> to vector<1x128xf32>
    %638 = arith.select %2, %637, %635 : vector<1x128xi1>, vector<1x128xf32>
    %639 = arith.negf %638 : vector<1x128xf32>
    %640 = math.exp %639 : vector<1x128xf32>
    %cst_92 = arith.constant 1.000000e+00 : f32
    %641 = vector.broadcast %cst_92 : f32 to vector<1x128xf32>
    %642 = arith.addf %641, %640 : vector<1x128xf32>
    %643 = arith.divf %641, %642 : vector<1x128xf32>
    %644 = arith.mulf %643, %623 : vector<1x128xf32>
    %645 = vector.broadcast %618 : vector<32x1xf32> to vector<32x128xf32>
    %646 = vector.broadcast %644 : vector<1x128xf32> to vector<32x128xf32>
    %647 = arith.mulf %645, %646 : vector<32x128xf32>
    %648 = arith.addf %579, %647 : vector<32x128xf32>
    %649 = vector.extract_strided_slice %644 {offsets = [0, 32], sizes = [1, 32], strides = [1, 1]} : vector<1x128xf32> to vector<1x32xf32>
    %cst_93 = arith.constant dense<0.000000e+00> : vector<1xf32>
    %650 = vector.multi_reduction <add>, %649, %cst_93 [1] : vector<1x32xf32> to vector<1xf32>
    %651 = vector.shape_cast %650 : vector<1xf32> to vector<1x1xf32>
    %652 = vector.broadcast %651 : vector<1x1xf32> to vector<32x1xf32>
    %653 = arith.mulf %618, %652 : vector<32x1xf32>
    %654 = arith.addf %585, %653 : vector<32x1xf32>
    %655 = vector.extract_strided_slice %644 {offsets = [0, 64], sizes = [1, 32], strides = [1, 1]} : vector<1x128xf32> to vector<1x32xf32>
    %cst_94 = arith.constant dense<0.000000e+00> : vector<1xf32>
    %656 = vector.multi_reduction <add>, %655, %cst_94 [1] : vector<1x32xf32> to vector<1xf32>
    %657 = vector.shape_cast %656 : vector<1xf32> to vector<1x1xf32>
    %658 = vector.broadcast %657 : vector<1x1xf32> to vector<32x1xf32>
    %659 = arith.mulf %618, %658 : vector<32x1xf32>
    %660 = arith.addf %591, %659 : vector<32x1xf32>
    %661 = vector.extract_strided_slice %516 {offsets = [0, 2], sizes = [32, 1], strides = [1, 1]} : vector<32x8xf32> to vector<32x1xf32>
    %662 = vector.broadcast %661 : vector<32x1xf32> to vector<32x128xf32>
    %663 = arith.mulf %662, %648 : vector<32x128xf32>
    %cst_95 = arith.constant dense<0.000000e+00> : vector<128xf32>
    %664 = vector.multi_reduction <add>, %663, %cst_95 [0] : vector<32x128xf32> to vector<128xf32>
    %665 = vector.shape_cast %664 : vector<128xf32> to vector<1x128xf32>
    %666 = arith.mulf %661, %654 : vector<32x1xf32>
    %cst_96 = arith.constant dense<0xFF800000> : vector<1xf32>
    %667 = vector.multi_reduction <maximumf>, %666, %cst_96 [0] : vector<32x1xf32> to vector<1xf32>
    %668 = vector.shape_cast %667 : vector<1xf32> to vector<1x1xf32>
    %669 = vector.broadcast %668 : vector<1x1xf32> to vector<32x1xf32>
    %670 = arith.subf %666, %669 : vector<32x1xf32>
    %671 = math.exp %670 : vector<32x1xf32>
    %cst_97 = arith.constant dense<0.000000e+00> : vector<1xf32>
    %672 = vector.multi_reduction <add>, %671, %cst_97 [0] : vector<32x1xf32> to vector<1xf32>
    %673 = vector.shape_cast %672 : vector<1xf32> to vector<1x1xf32>
    %674 = tpu.reciprocal %673 {approx = true} : vector<1x1xf32> -> vector<1x1xf32>
    %675 = vector.broadcast %674 : vector<1x1xf32> to vector<32x1xf32>
    %676 = arith.mulf %671, %675 : vector<32x1xf32>
    %677 = arith.mulf %661, %660 : vector<32x1xf32>
    %cst_98 = arith.constant dense<0xFF800000> : vector<1xf32>
    %678 = vector.multi_reduction <maximumf>, %677, %cst_98 [0] : vector<32x1xf32> to vector<1xf32>
    %679 = vector.shape_cast %678 : vector<1xf32> to vector<1x1xf32>
    %680 = vector.broadcast %679 : vector<1x1xf32> to vector<32x1xf32>
    %681 = arith.subf %677, %680 : vector<32x1xf32>
    %682 = math.exp %681 : vector<32x1xf32>
    %cst_99 = arith.constant dense<0.000000e+00> : vector<1xf32>
    %683 = vector.multi_reduction <add>, %682, %cst_99 [0] : vector<32x1xf32> to vector<1xf32>
    %684 = vector.shape_cast %683 : vector<1xf32> to vector<1x1xf32>
    %685 = tpu.reciprocal %684 {approx = true} : vector<1x1xf32> -> vector<1x1xf32>
    %686 = vector.broadcast %685 : vector<1x1xf32> to vector<32x1xf32>
    %687 = arith.mulf %682, %686 : vector<32x1xf32>
    %688 = arith.subf %676, %687 : vector<32x1xf32>
    %689 = vector.broadcast %688 : vector<32x1xf32> to vector<32x128xf32>
    %690 = arith.mulf %689, %648 : vector<32x128xf32>
    %cst_100 = arith.constant dense<0.000000e+00> : vector<128xf32>
    %691 = vector.multi_reduction <add>, %690, %cst_100 [0] : vector<32x128xf32> to vector<128xf32>
    %692 = vector.shape_cast %691 : vector<128xf32> to vector<1x128xf32>
    %693 = vector.extract_strided_slice %665 {offsets = [0, 96], sizes = [1, 1], strides = [1, 1]} : vector<1x128xf32> to vector<1x1xf32>
    %694 = vector.extract_strided_slice %665 {offsets = [0, 97], sizes = [1, 1], strides = [1, 1]} : vector<1x128xf32> to vector<1x1xf32>
    %695 = vector.extract_strided_slice %665 {offsets = [0, 98], sizes = [1, 1], strides = [1, 1]} : vector<1x128xf32> to vector<1x1xf32>
    %696 = vector.extract_strided_slice %665 {offsets = [0, 99], sizes = [1, 1], strides = [1, 1]} : vector<1x128xf32> to vector<1x1xf32>
    %697 = vector.shape_cast %695 : vector<1x1xf32> to vector<1x1xf32>
    %698 = vector.broadcast %697 : vector<1x1xf32> to vector<1x128xf32>
    %699 = vector.shape_cast %696 : vector<1x1xf32> to vector<1x1xf32>
    %700 = vector.broadcast %699 : vector<1x1xf32> to vector<1x128xf32>
    %701 = arith.select %6, %698, %700 : vector<1x128xi1>, vector<1x128xf32>
    %702 = vector.shape_cast %694 : vector<1x1xf32> to vector<1x1xf32>
    %703 = vector.broadcast %702 : vector<1x1xf32> to vector<1x128xf32>
    %704 = arith.select %4, %703, %701 : vector<1x128xi1>, vector<1x128xf32>
    %705 = vector.shape_cast %693 : vector<1x1xf32> to vector<1x1xf32>
    %706 = vector.broadcast %705 : vector<1x1xf32> to vector<1x128xf32>
    %707 = arith.select %2, %706, %704 : vector<1x128xi1>, vector<1x128xf32>
    %708 = arith.negf %707 : vector<1x128xf32>
    %709 = math.exp %708 : vector<1x128xf32>
    %cst_101 = arith.constant 1.000000e+00 : f32
    %710 = vector.broadcast %cst_101 : f32 to vector<1x128xf32>
    %711 = arith.addf %710, %709 : vector<1x128xf32>
    %712 = arith.divf %710, %711 : vector<1x128xf32>
    %713 = arith.mulf %712, %692 : vector<1x128xf32>
    %714 = vector.broadcast %687 : vector<32x1xf32> to vector<32x128xf32>
    %715 = vector.broadcast %713 : vector<1x128xf32> to vector<32x128xf32>
    %716 = arith.mulf %714, %715 : vector<32x128xf32>
    %717 = arith.addf %648, %716 : vector<32x128xf32>
    %718 = vector.extract_strided_slice %713 {offsets = [0, 32], sizes = [1, 32], strides = [1, 1]} : vector<1x128xf32> to vector<1x32xf32>
    %cst_102 = arith.constant dense<0.000000e+00> : vector<1xf32>
    %719 = vector.multi_reduction <add>, %718, %cst_102 [1] : vector<1x32xf32> to vector<1xf32>
    %720 = vector.shape_cast %719 : vector<1xf32> to vector<1x1xf32>
    %721 = vector.broadcast %720 : vector<1x1xf32> to vector<32x1xf32>
    %722 = arith.mulf %687, %721 : vector<32x1xf32>
    %723 = arith.addf %654, %722 : vector<32x1xf32>
    %724 = vector.extract_strided_slice %713 {offsets = [0, 64], sizes = [1, 32], strides = [1, 1]} : vector<1x128xf32> to vector<1x32xf32>
    %cst_103 = arith.constant dense<0.000000e+00> : vector<1xf32>
    %725 = vector.multi_reduction <add>, %724, %cst_103 [1] : vector<1x32xf32> to vector<1xf32>
    %726 = vector.shape_cast %725 : vector<1xf32> to vector<1x1xf32>
    %727 = vector.broadcast %726 : vector<1x1xf32> to vector<32x1xf32>
    %728 = arith.mulf %687, %727 : vector<32x1xf32>
    %729 = arith.addf %660, %728 : vector<32x1xf32>
    %730 = vector.extract_strided_slice %516 {offsets = [0, 3], sizes = [32, 1], strides = [1, 1]} : vector<32x8xf32> to vector<32x1xf32>
    %731 = vector.broadcast %730 : vector<32x1xf32> to vector<32x128xf32>
    %732 = arith.mulf %731, %717 : vector<32x128xf32>
    %cst_104 = arith.constant dense<0.000000e+00> : vector<128xf32>
    %733 = vector.multi_reduction <add>, %732, %cst_104 [0] : vector<32x128xf32> to vector<128xf32>
    %734 = vector.shape_cast %733 : vector<128xf32> to vector<1x128xf32>
    %735 = arith.mulf %730, %723 : vector<32x1xf32>
    %cst_105 = arith.constant dense<0xFF800000> : vector<1xf32>
    %736 = vector.multi_reduction <maximumf>, %735, %cst_105 [0] : vector<32x1xf32> to vector<1xf32>
    %737 = vector.shape_cast %736 : vector<1xf32> to vector<1x1xf32>
    %738 = vector.broadcast %737 : vector<1x1xf32> to vector<32x1xf32>
    %739 = arith.subf %735, %738 : vector<32x1xf32>
    %740 = math.exp %739 : vector<32x1xf32>
    %cst_106 = arith.constant dense<0.000000e+00> : vector<1xf32>
    %741 = vector.multi_reduction <add>, %740, %cst_106 [0] : vector<32x1xf32> to vector<1xf32>
    %742 = vector.shape_cast %741 : vector<1xf32> to vector<1x1xf32>
    %743 = tpu.reciprocal %742 {approx = true} : vector<1x1xf32> -> vector<1x1xf32>
    %744 = vector.broadcast %743 : vector<1x1xf32> to vector<32x1xf32>
    %745 = arith.mulf %740, %744 : vector<32x1xf32>
    %746 = arith.mulf %730, %729 : vector<32x1xf32>
    %cst_107 = arith.constant dense<0xFF800000> : vector<1xf32>
    %747 = vector.multi_reduction <maximumf>, %746, %cst_107 [0] : vector<32x1xf32> to vector<1xf32>
    %748 = vector.shape_cast %747 : vector<1xf32> to vector<1x1xf32>
    %749 = vector.broadcast %748 : vector<1x1xf32> to vector<32x1xf32>
    %750 = arith.subf %746, %749 : vector<32x1xf32>
    %751 = math.exp %750 : vector<32x1xf32>
    %cst_108 = arith.constant dense<0.000000e+00> : vector<1xf32>
    %752 = vector.multi_reduction <add>, %751, %cst_108 [0] : vector<32x1xf32> to vector<1xf32>
    %753 = vector.shape_cast %752 : vector<1xf32> to vector<1x1xf32>
    %754 = tpu.reciprocal %753 {approx = true} : vector<1x1xf32> -> vector<1x1xf32>
    %755 = vector.broadcast %754 : vector<1x1xf32> to vector<32x1xf32>
    %756 = arith.mulf %751, %755 : vector<32x1xf32>
    %757 = arith.subf %745, %756 : vector<32x1xf32>
    %758 = vector.broadcast %757 : vector<32x1xf32> to vector<32x128xf32>
    %759 = arith.mulf %758, %717 : vector<32x128xf32>
    %cst_109 = arith.constant dense<0.000000e+00> : vector<128xf32>
    %760 = vector.multi_reduction <add>, %759, %cst_109 [0] : vector<32x128xf32> to vector<128xf32>
    %761 = vector.shape_cast %760 : vector<128xf32> to vector<1x128xf32>
    %762 = vector.extract_strided_slice %734 {offsets = [0, 96], sizes = [1, 1], strides = [1, 1]} : vector<1x128xf32> to vector<1x1xf32>
    %763 = vector.extract_strided_slice %734 {offsets = [0, 97], sizes = [1, 1], strides = [1, 1]} : vector<1x128xf32> to vector<1x1xf32>
    %764 = vector.extract_strided_slice %734 {offsets = [0, 98], sizes = [1, 1], strides = [1, 1]} : vector<1x128xf32> to vector<1x1xf32>
    %765 = vector.extract_strided_slice %734 {offsets = [0, 99], sizes = [1, 1], strides = [1, 1]} : vector<1x128xf32> to vector<1x1xf32>
    %766 = vector.shape_cast %764 : vector<1x1xf32> to vector<1x1xf32>
    %767 = vector.broadcast %766 : vector<1x1xf32> to vector<1x128xf32>
    %768 = vector.shape_cast %765 : vector<1x1xf32> to vector<1x1xf32>
    %769 = vector.broadcast %768 : vector<1x1xf32> to vector<1x128xf32>
    %770 = arith.select %6, %767, %769 : vector<1x128xi1>, vector<1x128xf32>
    %771 = vector.shape_cast %763 : vector<1x1xf32> to vector<1x1xf32>
    %772 = vector.broadcast %771 : vector<1x1xf32> to vector<1x128xf32>
    %773 = arith.select %4, %772, %770 : vector<1x128xi1>, vector<1x128xf32>
    %774 = vector.shape_cast %762 : vector<1x1xf32> to vector<1x1xf32>
    %775 = vector.broadcast %774 : vector<1x1xf32> to vector<1x128xf32>
    %776 = arith.select %2, %775, %773 : vector<1x128xi1>, vector<1x128xf32>
    %777 = arith.negf %776 : vector<1x128xf32>
    %778 = math.exp %777 : vector<1x128xf32>
    %cst_110 = arith.constant 1.000000e+00 : f32
    %779 = vector.broadcast %cst_110 : f32 to vector<1x128xf32>
    %780 = arith.addf %779, %778 : vector<1x128xf32>
    %781 = arith.divf %779, %780 : vector<1x128xf32>
    %782 = arith.mulf %781, %761 : vector<1x128xf32>
    %783 = vector.broadcast %756 : vector<32x1xf32> to vector<32x128xf32>
    %784 = vector.broadcast %782 : vector<1x128xf32> to vector<32x128xf32>
    %785 = arith.mulf %783, %784 : vector<32x128xf32>
    %786 = arith.addf %717, %785 : vector<32x128xf32>
    %787 = vector.extract_strided_slice %782 {offsets = [0, 32], sizes = [1, 32], strides = [1, 1]} : vector<1x128xf32> to vector<1x32xf32>
    %cst_111 = arith.constant dense<0.000000e+00> : vector<1xf32>
    %788 = vector.multi_reduction <add>, %787, %cst_111 [1] : vector<1x32xf32> to vector<1xf32>
    %789 = vector.shape_cast %788 : vector<1xf32> to vector<1x1xf32>
    %790 = vector.broadcast %789 : vector<1x1xf32> to vector<32x1xf32>
    %791 = arith.mulf %756, %790 : vector<32x1xf32>
    %792 = arith.addf %723, %791 : vector<32x1xf32>
    %793 = vector.extract_strided_slice %782 {offsets = [0, 64], sizes = [1, 32], strides = [1, 1]} : vector<1x128xf32> to vector<1x32xf32>
    %cst_112 = arith.constant dense<0.000000e+00> : vector<1xf32>
    %794 = vector.multi_reduction <add>, %793, %cst_112 [1] : vector<1x32xf32> to vector<1xf32>
    %795 = vector.shape_cast %794 : vector<1xf32> to vector<1x1xf32>
    %796 = vector.broadcast %795 : vector<1x1xf32> to vector<32x1xf32>
    %797 = arith.mulf %756, %796 : vector<32x1xf32>
    %798 = arith.addf %729, %797 : vector<32x1xf32>
    %799 = vector.extract_strided_slice %516 {offsets = [0, 4], sizes = [32, 1], strides = [1, 1]} : vector<32x8xf32> to vector<32x1xf32>
    %800 = vector.broadcast %799 : vector<32x1xf32> to vector<32x128xf32>
    %801 = arith.mulf %800, %786 : vector<32x128xf32>
    %cst_113 = arith.constant dense<0.000000e+00> : vector<128xf32>
    %802 = vector.multi_reduction <add>, %801, %cst_113 [0] : vector<32x128xf32> to vector<128xf32>
    %803 = vector.shape_cast %802 : vector<128xf32> to vector<1x128xf32>
    %804 = arith.mulf %799, %792 : vector<32x1xf32>
    %cst_114 = arith.constant dense<0xFF800000> : vector<1xf32>
    %805 = vector.multi_reduction <maximumf>, %804, %cst_114 [0] : vector<32x1xf32> to vector<1xf32>
    %806 = vector.shape_cast %805 : vector<1xf32> to vector<1x1xf32>
    %807 = vector.broadcast %806 : vector<1x1xf32> to vector<32x1xf32>
    %808 = arith.subf %804, %807 : vector<32x1xf32>
    %809 = math.exp %808 : vector<32x1xf32>
    %cst_115 = arith.constant dense<0.000000e+00> : vector<1xf32>
    %810 = vector.multi_reduction <add>, %809, %cst_115 [0] : vector<32x1xf32> to vector<1xf32>
    %811 = vector.shape_cast %810 : vector<1xf32> to vector<1x1xf32>
    %812 = tpu.reciprocal %811 {approx = true} : vector<1x1xf32> -> vector<1x1xf32>
    %813 = vector.broadcast %812 : vector<1x1xf32> to vector<32x1xf32>
    %814 = arith.mulf %809, %813 : vector<32x1xf32>
    %815 = arith.mulf %799, %798 : vector<32x1xf32>
    %cst_116 = arith.constant dense<0xFF800000> : vector<1xf32>
    %816 = vector.multi_reduction <maximumf>, %815, %cst_116 [0] : vector<32x1xf32> to vector<1xf32>
    %817 = vector.shape_cast %816 : vector<1xf32> to vector<1x1xf32>
    %818 = vector.broadcast %817 : vector<1x1xf32> to vector<32x1xf32>
    %819 = arith.subf %815, %818 : vector<32x1xf32>
    %820 = math.exp %819 : vector<32x1xf32>
    %cst_117 = arith.constant dense<0.000000e+00> : vector<1xf32>
    %821 = vector.multi_reduction <add>, %820, %cst_117 [0] : vector<32x1xf32> to vector<1xf32>
    %822 = vector.shape_cast %821 : vector<1xf32> to vector<1x1xf32>
    %823 = tpu.reciprocal %822 {approx = true} : vector<1x1xf32> -> vector<1x1xf32>
    %824 = vector.broadcast %823 : vector<1x1xf32> to vector<32x1xf32>
    %825 = arith.mulf %820, %824 : vector<32x1xf32>
    %826 = arith.subf %814, %825 : vector<32x1xf32>
    %827 = vector.broadcast %826 : vector<32x1xf32> to vector<32x128xf32>
    %828 = arith.mulf %827, %786 : vector<32x128xf32>
    %cst_118 = arith.constant dense<0.000000e+00> : vector<128xf32>
    %829 = vector.multi_reduction <add>, %828, %cst_118 [0] : vector<32x128xf32> to vector<128xf32>
    %830 = vector.shape_cast %829 : vector<128xf32> to vector<1x128xf32>
    %831 = vector.extract_strided_slice %803 {offsets = [0, 96], sizes = [1, 1], strides = [1, 1]} : vector<1x128xf32> to vector<1x1xf32>
    %832 = vector.extract_strided_slice %803 {offsets = [0, 97], sizes = [1, 1], strides = [1, 1]} : vector<1x128xf32> to vector<1x1xf32>
    %833 = vector.extract_strided_slice %803 {offsets = [0, 98], sizes = [1, 1], strides = [1, 1]} : vector<1x128xf32> to vector<1x1xf32>
    %834 = vector.extract_strided_slice %803 {offsets = [0, 99], sizes = [1, 1], strides = [1, 1]} : vector<1x128xf32> to vector<1x1xf32>
    %835 = vector.shape_cast %833 : vector<1x1xf32> to vector<1x1xf32>
    %836 = vector.broadcast %835 : vector<1x1xf32> to vector<1x128xf32>
    %837 = vector.shape_cast %834 : vector<1x1xf32> to vector<1x1xf32>
    %838 = vector.broadcast %837 : vector<1x1xf32> to vector<1x128xf32>
    %839 = arith.select %6, %836, %838 : vector<1x128xi1>, vector<1x128xf32>
    %840 = vector.shape_cast %832 : vector<1x1xf32> to vector<1x1xf32>
    %841 = vector.broadcast %840 : vector<1x1xf32> to vector<1x128xf32>
    %842 = arith.select %4, %841, %839 : vector<1x128xi1>, vector<1x128xf32>
    %843 = vector.shape_cast %831 : vector<1x1xf32> to vector<1x1xf32>
    %844 = vector.broadcast %843 : vector<1x1xf32> to vector<1x128xf32>
    %845 = arith.select %2, %844, %842 : vector<1x128xi1>, vector<1x128xf32>
    %846 = arith.negf %845 : vector<1x128xf32>
    %847 = math.exp %846 : vector<1x128xf32>
    %cst_119 = arith.constant 1.000000e+00 : f32
    %848 = vector.broadcast %cst_119 : f32 to vector<1x128xf32>
    %849 = arith.addf %848, %847 : vector<1x128xf32>
    %850 = arith.divf %848, %849 : vector<1x128xf32>
    %851 = arith.mulf %850, %830 : vector<1x128xf32>
    %852 = vector.broadcast %825 : vector<32x1xf32> to vector<32x128xf32>
    %853 = vector.broadcast %851 : vector<1x128xf32> to vector<32x128xf32>
    %854 = arith.mulf %852, %853 : vector<32x128xf32>
    %855 = arith.addf %786, %854 : vector<32x128xf32>
    %856 = vector.extract_strided_slice %851 {offsets = [0, 32], sizes = [1, 32], strides = [1, 1]} : vector<1x128xf32> to vector<1x32xf32>
    %cst_120 = arith.constant dense<0.000000e+00> : vector<1xf32>
    %857 = vector.multi_reduction <add>, %856, %cst_120 [1] : vector<1x32xf32> to vector<1xf32>
    %858 = vector.shape_cast %857 : vector<1xf32> to vector<1x1xf32>
    %859 = vector.broadcast %858 : vector<1x1xf32> to vector<32x1xf32>
    %860 = arith.mulf %825, %859 : vector<32x1xf32>
    %861 = arith.addf %792, %860 : vector<32x1xf32>
    %862 = vector.extract_strided_slice %851 {offsets = [0, 64], sizes = [1, 32], strides = [1, 1]} : vector<1x128xf32> to vector<1x32xf32>
    %cst_121 = arith.constant dense<0.000000e+00> : vector<1xf32>
    %863 = vector.multi_reduction <add>, %862, %cst_121 [1] : vector<1x32xf32> to vector<1xf32>
    %864 = vector.shape_cast %863 : vector<1xf32> to vector<1x1xf32>
    %865 = vector.broadcast %864 : vector<1x1xf32> to vector<32x1xf32>
    %866 = arith.mulf %825, %865 : vector<32x1xf32>
    %867 = arith.addf %798, %866 : vector<32x1xf32>
    %868 = vector.extract_strided_slice %516 {offsets = [0, 5], sizes = [32, 1], strides = [1, 1]} : vector<32x8xf32> to vector<32x1xf32>
    %869 = vector.broadcast %868 : vector<32x1xf32> to vector<32x128xf32>
    %870 = arith.mulf %869, %855 : vector<32x128xf32>
    %cst_122 = arith.constant dense<0.000000e+00> : vector<128xf32>
    %871 = vector.multi_reduction <add>, %870, %cst_122 [0] : vector<32x128xf32> to vector<128xf32>
    %872 = vector.shape_cast %871 : vector<128xf32> to vector<1x128xf32>
    %873 = arith.mulf %868, %861 : vector<32x1xf32>
    %cst_123 = arith.constant dense<0xFF800000> : vector<1xf32>
    %874 = vector.multi_reduction <maximumf>, %873, %cst_123 [0] : vector<32x1xf32> to vector<1xf32>
    %875 = vector.shape_cast %874 : vector<1xf32> to vector<1x1xf32>
    %876 = vector.broadcast %875 : vector<1x1xf32> to vector<32x1xf32>
    %877 = arith.subf %873, %876 : vector<32x1xf32>
    %878 = math.exp %877 : vector<32x1xf32>
    %cst_124 = arith.constant dense<0.000000e+00> : vector<1xf32>
    %879 = vector.multi_reduction <add>, %878, %cst_124 [0] : vector<32x1xf32> to vector<1xf32>
    %880 = vector.shape_cast %879 : vector<1xf32> to vector<1x1xf32>
    %881 = tpu.reciprocal %880 {approx = true} : vector<1x1xf32> -> vector<1x1xf32>
    %882 = vector.broadcast %881 : vector<1x1xf32> to vector<32x1xf32>
    %883 = arith.mulf %878, %882 : vector<32x1xf32>
    %884 = arith.mulf %868, %867 : vector<32x1xf32>
    %cst_125 = arith.constant dense<0xFF800000> : vector<1xf32>
    %885 = vector.multi_reduction <maximumf>, %884, %cst_125 [0] : vector<32x1xf32> to vector<1xf32>
    %886 = vector.shape_cast %885 : vector<1xf32> to vector<1x1xf32>
    %887 = vector.broadcast %886 : vector<1x1xf32> to vector<32x1xf32>
    %888 = arith.subf %884, %887 : vector<32x1xf32>
    %889 = math.exp %888 : vector<32x1xf32>
    %cst_126 = arith.constant dense<0.000000e+00> : vector<1xf32>
    %890 = vector.multi_reduction <add>, %889, %cst_126 [0] : vector<32x1xf32> to vector<1xf32>
    %891 = vector.shape_cast %890 : vector<1xf32> to vector<1x1xf32>
    %892 = tpu.reciprocal %891 {approx = true} : vector<1x1xf32> -> vector<1x1xf32>
    %893 = vector.broadcast %892 : vector<1x1xf32> to vector<32x1xf32>
    %894 = arith.mulf %889, %893 : vector<32x1xf32>
    %895 = arith.subf %883, %894 : vector<32x1xf32>
    %896 = vector.broadcast %895 : vector<32x1xf32> to vector<32x128xf32>
    %897 = arith.mulf %896, %855 : vector<32x128xf32>
    %cst_127 = arith.constant dense<0.000000e+00> : vector<128xf32>
    %898 = vector.multi_reduction <add>, %897, %cst_127 [0] : vector<32x128xf32> to vector<128xf32>
    %899 = vector.shape_cast %898 : vector<128xf32> to vector<1x128xf32>
    %900 = vector.extract_strided_slice %872 {offsets = [0, 96], sizes = [1, 1], strides = [1, 1]} : vector<1x128xf32> to vector<1x1xf32>
    %901 = vector.extract_strided_slice %872 {offsets = [0, 97], sizes = [1, 1], strides = [1, 1]} : vector<1x128xf32> to vector<1x1xf32>
    %902 = vector.extract_strided_slice %872 {offsets = [0, 98], sizes = [1, 1], strides = [1, 1]} : vector<1x128xf32> to vector<1x1xf32>
    %903 = vector.extract_strided_slice %872 {offsets = [0, 99], sizes = [1, 1], strides = [1, 1]} : vector<1x128xf32> to vector<1x1xf32>
    %904 = vector.shape_cast %902 : vector<1x1xf32> to vector<1x1xf32>
    %905 = vector.broadcast %904 : vector<1x1xf32> to vector<1x128xf32>
    %906 = vector.shape_cast %903 : vector<1x1xf32> to vector<1x1xf32>
    %907 = vector.broadcast %906 : vector<1x1xf32> to vector<1x128xf32>
    %908 = arith.select %6, %905, %907 : vector<1x128xi1>, vector<1x128xf32>
    %909 = vector.shape_cast %901 : vector<1x1xf32> to vector<1x1xf32>
    %910 = vector.broadcast %909 : vector<1x1xf32> to vector<1x128xf32>
    %911 = arith.select %4, %910, %908 : vector<1x128xi1>, vector<1x128xf32>
    %912 = vector.shape_cast %900 : vector<1x1xf32> to vector<1x1xf32>
    %913 = vector.broadcast %912 : vector<1x1xf32> to vector<1x128xf32>
    %914 = arith.select %2, %913, %911 : vector<1x128xi1>, vector<1x128xf32>
    %915 = arith.negf %914 : vector<1x128xf32>
    %916 = math.exp %915 : vector<1x128xf32>
    %cst_128 = arith.constant 1.000000e+00 : f32
    %917 = vector.broadcast %cst_128 : f32 to vector<1x128xf32>
    %918 = arith.addf %917, %916 : vector<1x128xf32>
    %919 = arith.divf %917, %918 : vector<1x128xf32>
    %920 = arith.mulf %919, %899 : vector<1x128xf32>
    %921 = vector.broadcast %894 : vector<32x1xf32> to vector<32x128xf32>
    %922 = vector.broadcast %920 : vector<1x128xf32> to vector<32x128xf32>
    %923 = arith.mulf %921, %922 : vector<32x128xf32>
    %924 = arith.addf %855, %923 : vector<32x128xf32>
    %925 = vector.extract_strided_slice %920 {offsets = [0, 32], sizes = [1, 32], strides = [1, 1]} : vector<1x128xf32> to vector<1x32xf32>
    %cst_129 = arith.constant dense<0.000000e+00> : vector<1xf32>
    %926 = vector.multi_reduction <add>, %925, %cst_129 [1] : vector<1x32xf32> to vector<1xf32>
    %927 = vector.shape_cast %926 : vector<1xf32> to vector<1x1xf32>
    %928 = vector.broadcast %927 : vector<1x1xf32> to vector<32x1xf32>
    %929 = arith.mulf %894, %928 : vector<32x1xf32>
    %930 = arith.addf %861, %929 : vector<32x1xf32>
    %931 = vector.extract_strided_slice %920 {offsets = [0, 64], sizes = [1, 32], strides = [1, 1]} : vector<1x128xf32> to vector<1x32xf32>
    %cst_130 = arith.constant dense<0.000000e+00> : vector<1xf32>
    %932 = vector.multi_reduction <add>, %931, %cst_130 [1] : vector<1x32xf32> to vector<1xf32>
    %933 = vector.shape_cast %932 : vector<1xf32> to vector<1x1xf32>
    %934 = vector.broadcast %933 : vector<1x1xf32> to vector<32x1xf32>
    %935 = arith.mulf %894, %934 : vector<32x1xf32>
    %936 = arith.addf %867, %935 : vector<32x1xf32>
    %937 = vector.extract_strided_slice %516 {offsets = [0, 6], sizes = [32, 1], strides = [1, 1]} : vector<32x8xf32> to vector<32x1xf32>
    %938 = vector.broadcast %937 : vector<32x1xf32> to vector<32x128xf32>
    %939 = arith.mulf %938, %924 : vector<32x128xf32>
    %cst_131 = arith.constant dense<0.000000e+00> : vector<128xf32>
    %940 = vector.multi_reduction <add>, %939, %cst_131 [0] : vector<32x128xf32> to vector<128xf32>
    %941 = vector.shape_cast %940 : vector<128xf32> to vector<1x128xf32>
    %942 = arith.mulf %937, %930 : vector<32x1xf32>
    %cst_132 = arith.constant dense<0xFF800000> : vector<1xf32>
    %943 = vector.multi_reduction <maximumf>, %942, %cst_132 [0] : vector<32x1xf32> to vector<1xf32>
    %944 = vector.shape_cast %943 : vector<1xf32> to vector<1x1xf32>
    %945 = vector.broadcast %944 : vector<1x1xf32> to vector<32x1xf32>
    %946 = arith.subf %942, %945 : vector<32x1xf32>
    %947 = math.exp %946 : vector<32x1xf32>
    %cst_133 = arith.constant dense<0.000000e+00> : vector<1xf32>
    %948 = vector.multi_reduction <add>, %947, %cst_133 [0] : vector<32x1xf32> to vector<1xf32>
    %949 = vector.shape_cast %948 : vector<1xf32> to vector<1x1xf32>
    %950 = tpu.reciprocal %949 {approx = true} : vector<1x1xf32> -> vector<1x1xf32>
    %951 = vector.broadcast %950 : vector<1x1xf32> to vector<32x1xf32>
    %952 = arith.mulf %947, %951 : vector<32x1xf32>
    %953 = arith.mulf %937, %936 : vector<32x1xf32>
    %cst_134 = arith.constant dense<0xFF800000> : vector<1xf32>
    %954 = vector.multi_reduction <maximumf>, %953, %cst_134 [0] : vector<32x1xf32> to vector<1xf32>
    %955 = vector.shape_cast %954 : vector<1xf32> to vector<1x1xf32>
    %956 = vector.broadcast %955 : vector<1x1xf32> to vector<32x1xf32>
    %957 = arith.subf %953, %956 : vector<32x1xf32>
    %958 = math.exp %957 : vector<32x1xf32>
    %cst_135 = arith.constant dense<0.000000e+00> : vector<1xf32>
    %959 = vector.multi_reduction <add>, %958, %cst_135 [0] : vector<32x1xf32> to vector<1xf32>
    %960 = vector.shape_cast %959 : vector<1xf32> to vector<1x1xf32>
    %961 = tpu.reciprocal %960 {approx = true} : vector<1x1xf32> -> vector<1x1xf32>
    %962 = vector.broadcast %961 : vector<1x1xf32> to vector<32x1xf32>
    %963 = arith.mulf %958, %962 : vector<32x1xf32>
    %964 = arith.subf %952, %963 : vector<32x1xf32>
    %965 = vector.broadcast %964 : vector<32x1xf32> to vector<32x128xf32>
    %966 = arith.mulf %965, %924 : vector<32x128xf32>
    %cst_136 = arith.constant dense<0.000000e+00> : vector<128xf32>
    %967 = vector.multi_reduction <add>, %966, %cst_136 [0] : vector<32x128xf32> to vector<128xf32>
    %968 = vector.shape_cast %967 : vector<128xf32> to vector<1x128xf32>
    %969 = vector.extract_strided_slice %941 {offsets = [0, 96], sizes = [1, 1], strides = [1, 1]} : vector<1x128xf32> to vector<1x1xf32>
    %970 = vector.extract_strided_slice %941 {offsets = [0, 97], sizes = [1, 1], strides = [1, 1]} : vector<1x128xf32> to vector<1x1xf32>
    %971 = vector.extract_strided_slice %941 {offsets = [0, 98], sizes = [1, 1], strides = [1, 1]} : vector<1x128xf32> to vector<1x1xf32>
    %972 = vector.extract_strided_slice %941 {offsets = [0, 99], sizes = [1, 1], strides = [1, 1]} : vector<1x128xf32> to vector<1x1xf32>
    %973 = vector.shape_cast %971 : vector<1x1xf32> to vector<1x1xf32>
    %974 = vector.broadcast %973 : vector<1x1xf32> to vector<1x128xf32>
    %975 = vector.shape_cast %972 : vector<1x1xf32> to vector<1x1xf32>
    %976 = vector.broadcast %975 : vector<1x1xf32> to vector<1x128xf32>
    %977 = arith.select %6, %974, %976 : vector<1x128xi1>, vector<1x128xf32>
    %978 = vector.shape_cast %970 : vector<1x1xf32> to vector<1x1xf32>
    %979 = vector.broadcast %978 : vector<1x1xf32> to vector<1x128xf32>
    %980 = arith.select %4, %979, %977 : vector<1x128xi1>, vector<1x128xf32>
    %981 = vector.shape_cast %969 : vector<1x1xf32> to vector<1x1xf32>
    %982 = vector.broadcast %981 : vector<1x1xf32> to vector<1x128xf32>
    %983 = arith.select %2, %982, %980 : vector<1x128xi1>, vector<1x128xf32>
    %984 = arith.negf %983 : vector<1x128xf32>
    %985 = math.exp %984 : vector<1x128xf32>
    %cst_137 = arith.constant 1.000000e+00 : f32
    %986 = vector.broadcast %cst_137 : f32 to vector<1x128xf32>
    %987 = arith.addf %986, %985 : vector<1x128xf32>
    %988 = arith.divf %986, %987 : vector<1x128xf32>
    %989 = arith.mulf %988, %968 : vector<1x128xf32>
    %990 = vector.broadcast %963 : vector<32x1xf32> to vector<32x128xf32>
    %991 = vector.broadcast %989 : vector<1x128xf32> to vector<32x128xf32>
    %992 = arith.mulf %990, %991 : vector<32x128xf32>
    %993 = arith.addf %924, %992 : vector<32x128xf32>
    %994 = vector.extract_strided_slice %516 {offsets = [0, 7], sizes = [32, 1], strides = [1, 1]} : vector<32x8xf32> to vector<32x1xf32>
    %995 = vector.broadcast %994 : vector<32x1xf32> to vector<32x128xf32>
    %996 = arith.mulf %995, %993 : vector<32x128xf32>
    %cst_138 = arith.constant dense<0.000000e+00> : vector<128xf32>
    %997 = vector.multi_reduction <add>, %996, %cst_138 [0] : vector<32x128xf32> to vector<128xf32>
    %998 = vector.shape_cast %997 : vector<128xf32> to vector<1x128xf32>
    %999 = vector.extract_strided_slice %998 {offsets = [0, 0], sizes = [1, 32], strides = [1, 1]} : vector<1x128xf32> to vector<1x32xf32>
    %1000 = vector.extract_strided_slice %11 {offsets = [64, 0], sizes = [32, 128], strides = [1, 1]} : vector<128x128xf32> to vector<32x128xf32>
    %1001 = vector.extract_strided_slice %9 {offsets = [64, 0], sizes = [32, 1], strides = [1, 1]} : vector<128x1xf32> to vector<32x1xf32>
    %1002 = vector.broadcast %1001 : vector<32x1xf32> to vector<32x8xf32>
    %1003 = vector.broadcast %13 : vector<1x8xf32> to vector<32x8xf32>
    %1004 = arith.mulf %1002, %1003 : vector<32x8xf32>
    %1005 = vector.extract_strided_slice %10 {offsets = [64, 0], sizes = [32, 1], strides = [1, 1]} : vector<128x1xf32> to vector<32x1xf32>
    %1006 = vector.broadcast %1005 : vector<32x1xf32> to vector<32x8xf32>
    %1007 = arith.addf %1004, %1006 : vector<32x8xf32>
    %1008 = vector.extract_strided_slice %1000 {offsets = [0, 32], sizes = [32, 32], strides = [1, 1]} : vector<32x128xf32> to vector<32x32xf32>
    %cst_139 = arith.constant dense<0.000000e+00> : vector<32xf32>
    %1009 = vector.multi_reduction <add>, %1008, %cst_139 [1] : vector<32x32xf32> to vector<32xf32>
    %1010 = vector.shape_cast %1009 : vector<32xf32> to vector<32x1xf32>
    %1011 = vector.extract_strided_slice %1000 {offsets = [0, 64], sizes = [32, 32], strides = [1, 1]} : vector<32x128xf32> to vector<32x32xf32>
    %cst_140 = arith.constant dense<0.000000e+00> : vector<32xf32>
    %1012 = vector.multi_reduction <add>, %1011, %cst_140 [1] : vector<32x32xf32> to vector<32xf32>
    %1013 = vector.shape_cast %1012 : vector<32xf32> to vector<32x1xf32>
    %1014 = vector.extract_strided_slice %1007 {offsets = [0, 0], sizes = [32, 1], strides = [1, 1]} : vector<32x8xf32> to vector<32x1xf32>
    %1015 = vector.broadcast %1014 : vector<32x1xf32> to vector<32x128xf32>
    %1016 = arith.mulf %1015, %1000 : vector<32x128xf32>
    %cst_141 = arith.constant dense<0.000000e+00> : vector<128xf32>
    %1017 = vector.multi_reduction <add>, %1016, %cst_141 [0] : vector<32x128xf32> to vector<128xf32>
    %1018 = vector.shape_cast %1017 : vector<128xf32> to vector<1x128xf32>
    %1019 = arith.mulf %1014, %1010 : vector<32x1xf32>
    %cst_142 = arith.constant dense<0xFF800000> : vector<1xf32>
    %1020 = vector.multi_reduction <maximumf>, %1019, %cst_142 [0] : vector<32x1xf32> to vector<1xf32>
    %1021 = vector.shape_cast %1020 : vector<1xf32> to vector<1x1xf32>
    %1022 = vector.broadcast %1021 : vector<1x1xf32> to vector<32x1xf32>
    %1023 = arith.subf %1019, %1022 : vector<32x1xf32>
    %1024 = math.exp %1023 : vector<32x1xf32>
    %cst_143 = arith.constant dense<0.000000e+00> : vector<1xf32>
    %1025 = vector.multi_reduction <add>, %1024, %cst_143 [0] : vector<32x1xf32> to vector<1xf32>
    %1026 = vector.shape_cast %1025 : vector<1xf32> to vector<1x1xf32>
    %1027 = tpu.reciprocal %1026 {approx = true} : vector<1x1xf32> -> vector<1x1xf32>
    %1028 = vector.broadcast %1027 : vector<1x1xf32> to vector<32x1xf32>
    %1029 = arith.mulf %1024, %1028 : vector<32x1xf32>
    %1030 = arith.mulf %1014, %1013 : vector<32x1xf32>
    %cst_144 = arith.constant dense<0xFF800000> : vector<1xf32>
    %1031 = vector.multi_reduction <maximumf>, %1030, %cst_144 [0] : vector<32x1xf32> to vector<1xf32>
    %1032 = vector.shape_cast %1031 : vector<1xf32> to vector<1x1xf32>
    %1033 = vector.broadcast %1032 : vector<1x1xf32> to vector<32x1xf32>
    %1034 = arith.subf %1030, %1033 : vector<32x1xf32>
    %1035 = math.exp %1034 : vector<32x1xf32>
    %cst_145 = arith.constant dense<0.000000e+00> : vector<1xf32>
    %1036 = vector.multi_reduction <add>, %1035, %cst_145 [0] : vector<32x1xf32> to vector<1xf32>
    %1037 = vector.shape_cast %1036 : vector<1xf32> to vector<1x1xf32>
    %1038 = tpu.reciprocal %1037 {approx = true} : vector<1x1xf32> -> vector<1x1xf32>
    %1039 = vector.broadcast %1038 : vector<1x1xf32> to vector<32x1xf32>
    %1040 = arith.mulf %1035, %1039 : vector<32x1xf32>
    %1041 = arith.subf %1029, %1040 : vector<32x1xf32>
    %1042 = vector.broadcast %1041 : vector<32x1xf32> to vector<32x128xf32>
    %1043 = arith.mulf %1042, %1000 : vector<32x128xf32>
    %cst_146 = arith.constant dense<0.000000e+00> : vector<128xf32>
    %1044 = vector.multi_reduction <add>, %1043, %cst_146 [0] : vector<32x128xf32> to vector<128xf32>
    %1045 = vector.shape_cast %1044 : vector<128xf32> to vector<1x128xf32>
    %1046 = vector.extract_strided_slice %1018 {offsets = [0, 96], sizes = [1, 1], strides = [1, 1]} : vector<1x128xf32> to vector<1x1xf32>
    %1047 = vector.extract_strided_slice %1018 {offsets = [0, 97], sizes = [1, 1], strides = [1, 1]} : vector<1x128xf32> to vector<1x1xf32>
    %1048 = vector.extract_strided_slice %1018 {offsets = [0, 98], sizes = [1, 1], strides = [1, 1]} : vector<1x128xf32> to vector<1x1xf32>
    %1049 = vector.extract_strided_slice %1018 {offsets = [0, 99], sizes = [1, 1], strides = [1, 1]} : vector<1x128xf32> to vector<1x1xf32>
    %1050 = vector.shape_cast %1048 : vector<1x1xf32> to vector<1x1xf32>
    %1051 = vector.broadcast %1050 : vector<1x1xf32> to vector<1x128xf32>
    %1052 = vector.shape_cast %1049 : vector<1x1xf32> to vector<1x1xf32>
    %1053 = vector.broadcast %1052 : vector<1x1xf32> to vector<1x128xf32>
    %1054 = arith.select %6, %1051, %1053 : vector<1x128xi1>, vector<1x128xf32>
    %1055 = vector.shape_cast %1047 : vector<1x1xf32> to vector<1x1xf32>
    %1056 = vector.broadcast %1055 : vector<1x1xf32> to vector<1x128xf32>
    %1057 = arith.select %4, %1056, %1054 : vector<1x128xi1>, vector<1x128xf32>
    %1058 = vector.shape_cast %1046 : vector<1x1xf32> to vector<1x1xf32>
    %1059 = vector.broadcast %1058 : vector<1x1xf32> to vector<1x128xf32>
    %1060 = arith.select %2, %1059, %1057 : vector<1x128xi1>, vector<1x128xf32>
    %1061 = arith.negf %1060 : vector<1x128xf32>
    %1062 = math.exp %1061 : vector<1x128xf32>
    %cst_147 = arith.constant 1.000000e+00 : f32
    %1063 = vector.broadcast %cst_147 : f32 to vector<1x128xf32>
    %1064 = arith.addf %1063, %1062 : vector<1x128xf32>
    %1065 = arith.divf %1063, %1064 : vector<1x128xf32>
    %1066 = arith.mulf %1065, %1045 : vector<1x128xf32>
    %1067 = vector.broadcast %1040 : vector<32x1xf32> to vector<32x128xf32>
    %1068 = vector.broadcast %1066 : vector<1x128xf32> to vector<32x128xf32>
    %1069 = arith.mulf %1067, %1068 : vector<32x128xf32>
    %1070 = arith.addf %1000, %1069 : vector<32x128xf32>
    %1071 = vector.extract_strided_slice %1066 {offsets = [0, 32], sizes = [1, 32], strides = [1, 1]} : vector<1x128xf32> to vector<1x32xf32>
    %cst_148 = arith.constant dense<0.000000e+00> : vector<1xf32>
    %1072 = vector.multi_reduction <add>, %1071, %cst_148 [1] : vector<1x32xf32> to vector<1xf32>
    %1073 = vector.shape_cast %1072 : vector<1xf32> to vector<1x1xf32>
    %1074 = vector.broadcast %1073 : vector<1x1xf32> to vector<32x1xf32>
    %1075 = arith.mulf %1040, %1074 : vector<32x1xf32>
    %1076 = arith.addf %1010, %1075 : vector<32x1xf32>
    %1077 = vector.extract_strided_slice %1066 {offsets = [0, 64], sizes = [1, 32], strides = [1, 1]} : vector<1x128xf32> to vector<1x32xf32>
    %cst_149 = arith.constant dense<0.000000e+00> : vector<1xf32>
    %1078 = vector.multi_reduction <add>, %1077, %cst_149 [1] : vector<1x32xf32> to vector<1xf32>
    %1079 = vector.shape_cast %1078 : vector<1xf32> to vector<1x1xf32>
    %1080 = vector.broadcast %1079 : vector<1x1xf32> to vector<32x1xf32>
    %1081 = arith.mulf %1040, %1080 : vector<32x1xf32>
    %1082 = arith.addf %1013, %1081 : vector<32x1xf32>
    %1083 = vector.extract_strided_slice %1007 {offsets = [0, 1], sizes = [32, 1], strides = [1, 1]} : vector<32x8xf32> to vector<32x1xf32>
    %1084 = vector.broadcast %1083 : vector<32x1xf32> to vector<32x128xf32>
    %1085 = arith.mulf %1084, %1070 : vector<32x128xf32>
    %cst_150 = arith.constant dense<0.000000e+00> : vector<128xf32>
    %1086 = vector.multi_reduction <add>, %1085, %cst_150 [0] : vector<32x128xf32> to vector<128xf32>
    %1087 = vector.shape_cast %1086 : vector<128xf32> to vector<1x128xf32>
    %1088 = arith.mulf %1083, %1076 : vector<32x1xf32>
    %cst_151 = arith.constant dense<0xFF800000> : vector<1xf32>
    %1089 = vector.multi_reduction <maximumf>, %1088, %cst_151 [0] : vector<32x1xf32> to vector<1xf32>
    %1090 = vector.shape_cast %1089 : vector<1xf32> to vector<1x1xf32>
    %1091 = vector.broadcast %1090 : vector<1x1xf32> to vector<32x1xf32>
    %1092 = arith.subf %1088, %1091 : vector<32x1xf32>
    %1093 = math.exp %1092 : vector<32x1xf32>
    %cst_152 = arith.constant dense<0.000000e+00> : vector<1xf32>
    %1094 = vector.multi_reduction <add>, %1093, %cst_152 [0] : vector<32x1xf32> to vector<1xf32>
    %1095 = vector.shape_cast %1094 : vector<1xf32> to vector<1x1xf32>
    %1096 = tpu.reciprocal %1095 {approx = true} : vector<1x1xf32> -> vector<1x1xf32>
    %1097 = vector.broadcast %1096 : vector<1x1xf32> to vector<32x1xf32>
    %1098 = arith.mulf %1093, %1097 : vector<32x1xf32>
    %1099 = arith.mulf %1083, %1082 : vector<32x1xf32>
    %cst_153 = arith.constant dense<0xFF800000> : vector<1xf32>
    %1100 = vector.multi_reduction <maximumf>, %1099, %cst_153 [0] : vector<32x1xf32> to vector<1xf32>
    %1101 = vector.shape_cast %1100 : vector<1xf32> to vector<1x1xf32>
    %1102 = vector.broadcast %1101 : vector<1x1xf32> to vector<32x1xf32>
    %1103 = arith.subf %1099, %1102 : vector<32x1xf32>
    %1104 = math.exp %1103 : vector<32x1xf32>
    %cst_154 = arith.constant dense<0.000000e+00> : vector<1xf32>
    %1105 = vector.multi_reduction <add>, %1104, %cst_154 [0] : vector<32x1xf32> to vector<1xf32>
    %1106 = vector.shape_cast %1105 : vector<1xf32> to vector<1x1xf32>
    %1107 = tpu.reciprocal %1106 {approx = true} : vector<1x1xf32> -> vector<1x1xf32>
    %1108 = vector.broadcast %1107 : vector<1x1xf32> to vector<32x1xf32>
    %1109 = arith.mulf %1104, %1108 : vector<32x1xf32>
    %1110 = arith.subf %1098, %1109 : vector<32x1xf32>
    %1111 = vector.broadcast %1110 : vector<32x1xf32> to vector<32x128xf32>
    %1112 = arith.mulf %1111, %1070 : vector<32x128xf32>
    %cst_155 = arith.constant dense<0.000000e+00> : vector<128xf32>
    %1113 = vector.multi_reduction <add>, %1112, %cst_155 [0] : vector<32x128xf32> to vector<128xf32>
    %1114 = vector.shape_cast %1113 : vector<128xf32> to vector<1x128xf32>
    %1115 = vector.extract_strided_slice %1087 {offsets = [0, 96], sizes = [1, 1], strides = [1, 1]} : vector<1x128xf32> to vector<1x1xf32>
    %1116 = vector.extract_strided_slice %1087 {offsets = [0, 97], sizes = [1, 1], strides = [1, 1]} : vector<1x128xf32> to vector<1x1xf32>
    %1117 = vector.extract_strided_slice %1087 {offsets = [0, 98], sizes = [1, 1], strides = [1, 1]} : vector<1x128xf32> to vector<1x1xf32>
    %1118 = vector.extract_strided_slice %1087 {offsets = [0, 99], sizes = [1, 1], strides = [1, 1]} : vector<1x128xf32> to vector<1x1xf32>
    %1119 = vector.shape_cast %1117 : vector<1x1xf32> to vector<1x1xf32>
    %1120 = vector.broadcast %1119 : vector<1x1xf32> to vector<1x128xf32>
    %1121 = vector.shape_cast %1118 : vector<1x1xf32> to vector<1x1xf32>
    %1122 = vector.broadcast %1121 : vector<1x1xf32> to vector<1x128xf32>
    %1123 = arith.select %6, %1120, %1122 : vector<1x128xi1>, vector<1x128xf32>
    %1124 = vector.shape_cast %1116 : vector<1x1xf32> to vector<1x1xf32>
    %1125 = vector.broadcast %1124 : vector<1x1xf32> to vector<1x128xf32>
    %1126 = arith.select %4, %1125, %1123 : vector<1x128xi1>, vector<1x128xf32>
    %1127 = vector.shape_cast %1115 : vector<1x1xf32> to vector<1x1xf32>
    %1128 = vector.broadcast %1127 : vector<1x1xf32> to vector<1x128xf32>
    %1129 = arith.select %2, %1128, %1126 : vector<1x128xi1>, vector<1x128xf32>
    %1130 = arith.negf %1129 : vector<1x128xf32>
    %1131 = math.exp %1130 : vector<1x128xf32>
    %cst_156 = arith.constant 1.000000e+00 : f32
    %1132 = vector.broadcast %cst_156 : f32 to vector<1x128xf32>
    %1133 = arith.addf %1132, %1131 : vector<1x128xf32>
    %1134 = arith.divf %1132, %1133 : vector<1x128xf32>
    %1135 = arith.mulf %1134, %1114 : vector<1x128xf32>
    %1136 = vector.broadcast %1109 : vector<32x1xf32> to vector<32x128xf32>
    %1137 = vector.broadcast %1135 : vector<1x128xf32> to vector<32x128xf32>
    %1138 = arith.mulf %1136, %1137 : vector<32x128xf32>
    %1139 = arith.addf %1070, %1138 : vector<32x128xf32>
    %1140 = vector.extract_strided_slice %1135 {offsets = [0, 32], sizes = [1, 32], strides = [1, 1]} : vector<1x128xf32> to vector<1x32xf32>
    %cst_157 = arith.constant dense<0.000000e+00> : vector<1xf32>
    %1141 = vector.multi_reduction <add>, %1140, %cst_157 [1] : vector<1x32xf32> to vector<1xf32>
    %1142 = vector.shape_cast %1141 : vector<1xf32> to vector<1x1xf32>
    %1143 = vector.broadcast %1142 : vector<1x1xf32> to vector<32x1xf32>
    %1144 = arith.mulf %1109, %1143 : vector<32x1xf32>
    %1145 = arith.addf %1076, %1144 : vector<32x1xf32>
    %1146 = vector.extract_strided_slice %1135 {offsets = [0, 64], sizes = [1, 32], strides = [1, 1]} : vector<1x128xf32> to vector<1x32xf32>
    %cst_158 = arith.constant dense<0.000000e+00> : vector<1xf32>
    %1147 = vector.multi_reduction <add>, %1146, %cst_158 [1] : vector<1x32xf32> to vector<1xf32>
    %1148 = vector.shape_cast %1147 : vector<1xf32> to vector<1x1xf32>
    %1149 = vector.broadcast %1148 : vector<1x1xf32> to vector<32x1xf32>
    %1150 = arith.mulf %1109, %1149 : vector<32x1xf32>
    %1151 = arith.addf %1082, %1150 : vector<32x1xf32>
    %1152 = vector.extract_strided_slice %1007 {offsets = [0, 2], sizes = [32, 1], strides = [1, 1]} : vector<32x8xf32> to vector<32x1xf32>
    %1153 = vector.broadcast %1152 : vector<32x1xf32> to vector<32x128xf32>
    %1154 = arith.mulf %1153, %1139 : vector<32x128xf32>
    %cst_159 = arith.constant dense<0.000000e+00> : vector<128xf32>
    %1155 = vector.multi_reduction <add>, %1154, %cst_159 [0] : vector<32x128xf32> to vector<128xf32>
    %1156 = vector.shape_cast %1155 : vector<128xf32> to vector<1x128xf32>
    %1157 = arith.mulf %1152, %1145 : vector<32x1xf32>
    %cst_160 = arith.constant dense<0xFF800000> : vector<1xf32>
    %1158 = vector.multi_reduction <maximumf>, %1157, %cst_160 [0] : vector<32x1xf32> to vector<1xf32>
    %1159 = vector.shape_cast %1158 : vector<1xf32> to vector<1x1xf32>
    %1160 = vector.broadcast %1159 : vector<1x1xf32> to vector<32x1xf32>
    %1161 = arith.subf %1157, %1160 : vector<32x1xf32>
    %1162 = math.exp %1161 : vector<32x1xf32>
    %cst_161 = arith.constant dense<0.000000e+00> : vector<1xf32>
    %1163 = vector.multi_reduction <add>, %1162, %cst_161 [0] : vector<32x1xf32> to vector<1xf32>
    %1164 = vector.shape_cast %1163 : vector<1xf32> to vector<1x1xf32>
    %1165 = tpu.reciprocal %1164 {approx = true} : vector<1x1xf32> -> vector<1x1xf32>
    %1166 = vector.broadcast %1165 : vector<1x1xf32> to vector<32x1xf32>
    %1167 = arith.mulf %1162, %1166 : vector<32x1xf32>
    %1168 = arith.mulf %1152, %1151 : vector<32x1xf32>
    %cst_162 = arith.constant dense<0xFF800000> : vector<1xf32>
    %1169 = vector.multi_reduction <maximumf>, %1168, %cst_162 [0] : vector<32x1xf32> to vector<1xf32>
    %1170 = vector.shape_cast %1169 : vector<1xf32> to vector<1x1xf32>
    %1171 = vector.broadcast %1170 : vector<1x1xf32> to vector<32x1xf32>
    %1172 = arith.subf %1168, %1171 : vector<32x1xf32>
    %1173 = math.exp %1172 : vector<32x1xf32>
    %cst_163 = arith.constant dense<0.000000e+00> : vector<1xf32>
    %1174 = vector.multi_reduction <add>, %1173, %cst_163 [0] : vector<32x1xf32> to vector<1xf32>
    %1175 = vector.shape_cast %1174 : vector<1xf32> to vector<1x1xf32>
    %1176 = tpu.reciprocal %1175 {approx = true} : vector<1x1xf32> -> vector<1x1xf32>
    %1177 = vector.broadcast %1176 : vector<1x1xf32> to vector<32x1xf32>
    %1178 = arith.mulf %1173, %1177 : vector<32x1xf32>
    %1179 = arith.subf %1167, %1178 : vector<32x1xf32>
    %1180 = vector.broadcast %1179 : vector<32x1xf32> to vector<32x128xf32>
    %1181 = arith.mulf %1180, %1139 : vector<32x128xf32>
    %cst_164 = arith.constant dense<0.000000e+00> : vector<128xf32>
    %1182 = vector.multi_reduction <add>, %1181, %cst_164 [0] : vector<32x128xf32> to vector<128xf32>
    %1183 = vector.shape_cast %1182 : vector<128xf32> to vector<1x128xf32>
    %1184 = vector.extract_strided_slice %1156 {offsets = [0, 96], sizes = [1, 1], strides = [1, 1]} : vector<1x128xf32> to vector<1x1xf32>
    %1185 = vector.extract_strided_slice %1156 {offsets = [0, 97], sizes = [1, 1], strides = [1, 1]} : vector<1x128xf32> to vector<1x1xf32>
    %1186 = vector.extract_strided_slice %1156 {offsets = [0, 98], sizes = [1, 1], strides = [1, 1]} : vector<1x128xf32> to vector<1x1xf32>
    %1187 = vector.extract_strided_slice %1156 {offsets = [0, 99], sizes = [1, 1], strides = [1, 1]} : vector<1x128xf32> to vector<1x1xf32>
    %1188 = vector.shape_cast %1186 : vector<1x1xf32> to vector<1x1xf32>
    %1189 = vector.broadcast %1188 : vector<1x1xf32> to vector<1x128xf32>
    %1190 = vector.shape_cast %1187 : vector<1x1xf32> to vector<1x1xf32>
    %1191 = vector.broadcast %1190 : vector<1x1xf32> to vector<1x128xf32>
    %1192 = arith.select %6, %1189, %1191 : vector<1x128xi1>, vector<1x128xf32>
    %1193 = vector.shape_cast %1185 : vector<1x1xf32> to vector<1x1xf32>
    %1194 = vector.broadcast %1193 : vector<1x1xf32> to vector<1x128xf32>
    %1195 = arith.select %4, %1194, %1192 : vector<1x128xi1>, vector<1x128xf32>
    %1196 = vector.shape_cast %1184 : vector<1x1xf32> to vector<1x1xf32>
    %1197 = vector.broadcast %1196 : vector<1x1xf32> to vector<1x128xf32>
    %1198 = arith.select %2, %1197, %1195 : vector<1x128xi1>, vector<1x128xf32>
    %1199 = arith.negf %1198 : vector<1x128xf32>
    %1200 = math.exp %1199 : vector<1x128xf32>
    %cst_165 = arith.constant 1.000000e+00 : f32
    %1201 = vector.broadcast %cst_165 : f32 to vector<1x128xf32>
    %1202 = arith.addf %1201, %1200 : vector<1x128xf32>
    %1203 = arith.divf %1201, %1202 : vector<1x128xf32>
    %1204 = arith.mulf %1203, %1183 : vector<1x128xf32>
    %1205 = vector.broadcast %1178 : vector<32x1xf32> to vector<32x128xf32>
    %1206 = vector.broadcast %1204 : vector<1x128xf32> to vector<32x128xf32>
    %1207 = arith.mulf %1205, %1206 : vector<32x128xf32>
    %1208 = arith.addf %1139, %1207 : vector<32x128xf32>
    %1209 = vector.extract_strided_slice %1204 {offsets = [0, 32], sizes = [1, 32], strides = [1, 1]} : vector<1x128xf32> to vector<1x32xf32>
    %cst_166 = arith.constant dense<0.000000e+00> : vector<1xf32>
    %1210 = vector.multi_reduction <add>, %1209, %cst_166 [1] : vector<1x32xf32> to vector<1xf32>
    %1211 = vector.shape_cast %1210 : vector<1xf32> to vector<1x1xf32>
    %1212 = vector.broadcast %1211 : vector<1x1xf32> to vector<32x1xf32>
    %1213 = arith.mulf %1178, %1212 : vector<32x1xf32>
    %1214 = arith.addf %1145, %1213 : vector<32x1xf32>
    %1215 = vector.extract_strided_slice %1204 {offsets = [0, 64], sizes = [1, 32], strides = [1, 1]} : vector<1x128xf32> to vector<1x32xf32>
    %cst_167 = arith.constant dense<0.000000e+00> : vector<1xf32>
    %1216 = vector.multi_reduction <add>, %1215, %cst_167 [1] : vector<1x32xf32> to vector<1xf32>
    %1217 = vector.shape_cast %1216 : vector<1xf32> to vector<1x1xf32>
    %1218 = vector.broadcast %1217 : vector<1x1xf32> to vector<32x1xf32>
    %1219 = arith.mulf %1178, %1218 : vector<32x1xf32>
    %1220 = arith.addf %1151, %1219 : vector<32x1xf32>
    %1221 = vector.extract_strided_slice %1007 {offsets = [0, 3], sizes = [32, 1], strides = [1, 1]} : vector<32x8xf32> to vector<32x1xf32>
    %1222 = vector.broadcast %1221 : vector<32x1xf32> to vector<32x128xf32>
    %1223 = arith.mulf %1222, %1208 : vector<32x128xf32>
    %cst_168 = arith.constant dense<0.000000e+00> : vector<128xf32>
    %1224 = vector.multi_reduction <add>, %1223, %cst_168 [0] : vector<32x128xf32> to vector<128xf32>
    %1225 = vector.shape_cast %1224 : vector<128xf32> to vector<1x128xf32>
    %1226 = arith.mulf %1221, %1214 : vector<32x1xf32>
    %cst_169 = arith.constant dense<0xFF800000> : vector<1xf32>
    %1227 = vector.multi_reduction <maximumf>, %1226, %cst_169 [0] : vector<32x1xf32> to vector<1xf32>
    %1228 = vector.shape_cast %1227 : vector<1xf32> to vector<1x1xf32>
    %1229 = vector.broadcast %1228 : vector<1x1xf32> to vector<32x1xf32>
    %1230 = arith.subf %1226, %1229 : vector<32x1xf32>
    %1231 = math.exp %1230 : vector<32x1xf32>
    %cst_170 = arith.constant dense<0.000000e+00> : vector<1xf32>
    %1232 = vector.multi_reduction <add>, %1231, %cst_170 [0] : vector<32x1xf32> to vector<1xf32>
    %1233 = vector.shape_cast %1232 : vector<1xf32> to vector<1x1xf32>
    %1234 = tpu.reciprocal %1233 {approx = true} : vector<1x1xf32> -> vector<1x1xf32>
    %1235 = vector.broadcast %1234 : vector<1x1xf32> to vector<32x1xf32>
    %1236 = arith.mulf %1231, %1235 : vector<32x1xf32>
    %1237 = arith.mulf %1221, %1220 : vector<32x1xf32>
    %cst_171 = arith.constant dense<0xFF800000> : vector<1xf32>
    %1238 = vector.multi_reduction <maximumf>, %1237, %cst_171 [0] : vector<32x1xf32> to vector<1xf32>
    %1239 = vector.shape_cast %1238 : vector<1xf32> to vector<1x1xf32>
    %1240 = vector.broadcast %1239 : vector<1x1xf32> to vector<32x1xf32>
    %1241 = arith.subf %1237, %1240 : vector<32x1xf32>
    %1242 = math.exp %1241 : vector<32x1xf32>
    %cst_172 = arith.constant dense<0.000000e+00> : vector<1xf32>
    %1243 = vector.multi_reduction <add>, %1242, %cst_172 [0] : vector<32x1xf32> to vector<1xf32>
    %1244 = vector.shape_cast %1243 : vector<1xf32> to vector<1x1xf32>
    %1245 = tpu.reciprocal %1244 {approx = true} : vector<1x1xf32> -> vector<1x1xf32>
    %1246 = vector.broadcast %1245 : vector<1x1xf32> to vector<32x1xf32>
    %1247 = arith.mulf %1242, %1246 : vector<32x1xf32>
    %1248 = arith.subf %1236, %1247 : vector<32x1xf32>
    %1249 = vector.broadcast %1248 : vector<32x1xf32> to vector<32x128xf32>
    %1250 = arith.mulf %1249, %1208 : vector<32x128xf32>
    %cst_173 = arith.constant dense<0.000000e+00> : vector<128xf32>
    %1251 = vector.multi_reduction <add>, %1250, %cst_173 [0] : vector<32x128xf32> to vector<128xf32>
    %1252 = vector.shape_cast %1251 : vector<128xf32> to vector<1x128xf32>
    %1253 = vector.extract_strided_slice %1225 {offsets = [0, 96], sizes = [1, 1], strides = [1, 1]} : vector<1x128xf32> to vector<1x1xf32>
    %1254 = vector.extract_strided_slice %1225 {offsets = [0, 97], sizes = [1, 1], strides = [1, 1]} : vector<1x128xf32> to vector<1x1xf32>
    %1255 = vector.extract_strided_slice %1225 {offsets = [0, 98], sizes = [1, 1], strides = [1, 1]} : vector<1x128xf32> to vector<1x1xf32>
    %1256 = vector.extract_strided_slice %1225 {offsets = [0, 99], sizes = [1, 1], strides = [1, 1]} : vector<1x128xf32> to vector<1x1xf32>
    %1257 = vector.shape_cast %1255 : vector<1x1xf32> to vector<1x1xf32>
    %1258 = vector.broadcast %1257 : vector<1x1xf32> to vector<1x128xf32>
    %1259 = vector.shape_cast %1256 : vector<1x1xf32> to vector<1x1xf32>
    %1260 = vector.broadcast %1259 : vector<1x1xf32> to vector<1x128xf32>
    %1261 = arith.select %6, %1258, %1260 : vector<1x128xi1>, vector<1x128xf32>
    %1262 = vector.shape_cast %1254 : vector<1x1xf32> to vector<1x1xf32>
    %1263 = vector.broadcast %1262 : vector<1x1xf32> to vector<1x128xf32>
    %1264 = arith.select %4, %1263, %1261 : vector<1x128xi1>, vector<1x128xf32>
    %1265 = vector.shape_cast %1253 : vector<1x1xf32> to vector<1x1xf32>
    %1266 = vector.broadcast %1265 : vector<1x1xf32> to vector<1x128xf32>
    %1267 = arith.select %2, %1266, %1264 : vector<1x128xi1>, vector<1x128xf32>
    %1268 = arith.negf %1267 : vector<1x128xf32>
    %1269 = math.exp %1268 : vector<1x128xf32>
    %cst_174 = arith.constant 1.000000e+00 : f32
    %1270 = vector.broadcast %cst_174 : f32 to vector<1x128xf32>
    %1271 = arith.addf %1270, %1269 : vector<1x128xf32>
    %1272 = arith.divf %1270, %1271 : vector<1x128xf32>
    %1273 = arith.mulf %1272, %1252 : vector<1x128xf32>
    %1274 = vector.broadcast %1247 : vector<32x1xf32> to vector<32x128xf32>
    %1275 = vector.broadcast %1273 : vector<1x128xf32> to vector<32x128xf32>
    %1276 = arith.mulf %1274, %1275 : vector<32x128xf32>
    %1277 = arith.addf %1208, %1276 : vector<32x128xf32>
    %1278 = vector.extract_strided_slice %1273 {offsets = [0, 32], sizes = [1, 32], strides = [1, 1]} : vector<1x128xf32> to vector<1x32xf32>
    %cst_175 = arith.constant dense<0.000000e+00> : vector<1xf32>
    %1279 = vector.multi_reduction <add>, %1278, %cst_175 [1] : vector<1x32xf32> to vector<1xf32>
    %1280 = vector.shape_cast %1279 : vector<1xf32> to vector<1x1xf32>
    %1281 = vector.broadcast %1280 : vector<1x1xf32> to vector<32x1xf32>
    %1282 = arith.mulf %1247, %1281 : vector<32x1xf32>
    %1283 = arith.addf %1214, %1282 : vector<32x1xf32>
    %1284 = vector.extract_strided_slice %1273 {offsets = [0, 64], sizes = [1, 32], strides = [1, 1]} : vector<1x128xf32> to vector<1x32xf32>
    %cst_176 = arith.constant dense<0.000000e+00> : vector<1xf32>
    %1285 = vector.multi_reduction <add>, %1284, %cst_176 [1] : vector<1x32xf32> to vector<1xf32>
    %1286 = vector.shape_cast %1285 : vector<1xf32> to vector<1x1xf32>
    %1287 = vector.broadcast %1286 : vector<1x1xf32> to vector<32x1xf32>
    %1288 = arith.mulf %1247, %1287 : vector<32x1xf32>
    %1289 = arith.addf %1220, %1288 : vector<32x1xf32>
    %1290 = vector.extract_strided_slice %1007 {offsets = [0, 4], sizes = [32, 1], strides = [1, 1]} : vector<32x8xf32> to vector<32x1xf32>
    %1291 = vector.broadcast %1290 : vector<32x1xf32> to vector<32x128xf32>
    %1292 = arith.mulf %1291, %1277 : vector<32x128xf32>
    %cst_177 = arith.constant dense<0.000000e+00> : vector<128xf32>
    %1293 = vector.multi_reduction <add>, %1292, %cst_177 [0] : vector<32x128xf32> to vector<128xf32>
    %1294 = vector.shape_cast %1293 : vector<128xf32> to vector<1x128xf32>
    %1295 = arith.mulf %1290, %1283 : vector<32x1xf32>
    %cst_178 = arith.constant dense<0xFF800000> : vector<1xf32>
    %1296 = vector.multi_reduction <maximumf>, %1295, %cst_178 [0] : vector<32x1xf32> to vector<1xf32>
    %1297 = vector.shape_cast %1296 : vector<1xf32> to vector<1x1xf32>
    %1298 = vector.broadcast %1297 : vector<1x1xf32> to vector<32x1xf32>
    %1299 = arith.subf %1295, %1298 : vector<32x1xf32>
    %1300 = math.exp %1299 : vector<32x1xf32>
    %cst_179 = arith.constant dense<0.000000e+00> : vector<1xf32>
    %1301 = vector.multi_reduction <add>, %1300, %cst_179 [0] : vector<32x1xf32> to vector<1xf32>
    %1302 = vector.shape_cast %1301 : vector<1xf32> to vector<1x1xf32>
    %1303 = tpu.reciprocal %1302 {approx = true} : vector<1x1xf32> -> vector<1x1xf32>
    %1304 = vector.broadcast %1303 : vector<1x1xf32> to vector<32x1xf32>
    %1305 = arith.mulf %1300, %1304 : vector<32x1xf32>
    %1306 = arith.mulf %1290, %1289 : vector<32x1xf32>
    %cst_180 = arith.constant dense<0xFF800000> : vector<1xf32>
    %1307 = vector.multi_reduction <maximumf>, %1306, %cst_180 [0] : vector<32x1xf32> to vector<1xf32>
    %1308 = vector.shape_cast %1307 : vector<1xf32> to vector<1x1xf32>
    %1309 = vector.broadcast %1308 : vector<1x1xf32> to vector<32x1xf32>
    %1310 = arith.subf %1306, %1309 : vector<32x1xf32>
    %1311 = math.exp %1310 : vector<32x1xf32>
    %cst_181 = arith.constant dense<0.000000e+00> : vector<1xf32>
    %1312 = vector.multi_reduction <add>, %1311, %cst_181 [0] : vector<32x1xf32> to vector<1xf32>
    %1313 = vector.shape_cast %1312 : vector<1xf32> to vector<1x1xf32>
    %1314 = tpu.reciprocal %1313 {approx = true} : vector<1x1xf32> -> vector<1x1xf32>
    %1315 = vector.broadcast %1314 : vector<1x1xf32> to vector<32x1xf32>
    %1316 = arith.mulf %1311, %1315 : vector<32x1xf32>
    %1317 = arith.subf %1305, %1316 : vector<32x1xf32>
    %1318 = vector.broadcast %1317 : vector<32x1xf32> to vector<32x128xf32>
    %1319 = arith.mulf %1318, %1277 : vector<32x128xf32>
    %cst_182 = arith.constant dense<0.000000e+00> : vector<128xf32>
    %1320 = vector.multi_reduction <add>, %1319, %cst_182 [0] : vector<32x128xf32> to vector<128xf32>
    %1321 = vector.shape_cast %1320 : vector<128xf32> to vector<1x128xf32>
    %1322 = vector.extract_strided_slice %1294 {offsets = [0, 96], sizes = [1, 1], strides = [1, 1]} : vector<1x128xf32> to vector<1x1xf32>
    %1323 = vector.extract_strided_slice %1294 {offsets = [0, 97], sizes = [1, 1], strides = [1, 1]} : vector<1x128xf32> to vector<1x1xf32>
    %1324 = vector.extract_strided_slice %1294 {offsets = [0, 98], sizes = [1, 1], strides = [1, 1]} : vector<1x128xf32> to vector<1x1xf32>
    %1325 = vector.extract_strided_slice %1294 {offsets = [0, 99], sizes = [1, 1], strides = [1, 1]} : vector<1x128xf32> to vector<1x1xf32>
    %1326 = vector.shape_cast %1324 : vector<1x1xf32> to vector<1x1xf32>
    %1327 = vector.broadcast %1326 : vector<1x1xf32> to vector<1x128xf32>
    %1328 = vector.shape_cast %1325 : vector<1x1xf32> to vector<1x1xf32>
    %1329 = vector.broadcast %1328 : vector<1x1xf32> to vector<1x128xf32>
    %1330 = arith.select %6, %1327, %1329 : vector<1x128xi1>, vector<1x128xf32>
    %1331 = vector.shape_cast %1323 : vector<1x1xf32> to vector<1x1xf32>
    %1332 = vector.broadcast %1331 : vector<1x1xf32> to vector<1x128xf32>
    %1333 = arith.select %4, %1332, %1330 : vector<1x128xi1>, vector<1x128xf32>
    %1334 = vector.shape_cast %1322 : vector<1x1xf32> to vector<1x1xf32>
    %1335 = vector.broadcast %1334 : vector<1x1xf32> to vector<1x128xf32>
    %1336 = arith.select %2, %1335, %1333 : vector<1x128xi1>, vector<1x128xf32>
    %1337 = arith.negf %1336 : vector<1x128xf32>
    %1338 = math.exp %1337 : vector<1x128xf32>
    %cst_183 = arith.constant 1.000000e+00 : f32
    %1339 = vector.broadcast %cst_183 : f32 to vector<1x128xf32>
    %1340 = arith.addf %1339, %1338 : vector<1x128xf32>
    %1341 = arith.divf %1339, %1340 : vector<1x128xf32>
    %1342 = arith.mulf %1341, %1321 : vector<1x128xf32>
    %1343 = vector.broadcast %1316 : vector<32x1xf32> to vector<32x128xf32>
    %1344 = vector.broadcast %1342 : vector<1x128xf32> to vector<32x128xf32>
    %1345 = arith.mulf %1343, %1344 : vector<32x128xf32>
    %1346 = arith.addf %1277, %1345 : vector<32x128xf32>
    %1347 = vector.extract_strided_slice %1342 {offsets = [0, 32], sizes = [1, 32], strides = [1, 1]} : vector<1x128xf32> to vector<1x32xf32>
    %cst_184 = arith.constant dense<0.000000e+00> : vector<1xf32>
    %1348 = vector.multi_reduction <add>, %1347, %cst_184 [1] : vector<1x32xf32> to vector<1xf32>
    %1349 = vector.shape_cast %1348 : vector<1xf32> to vector<1x1xf32>
    %1350 = vector.broadcast %1349 : vector<1x1xf32> to vector<32x1xf32>
    %1351 = arith.mulf %1316, %1350 : vector<32x1xf32>
    %1352 = arith.addf %1283, %1351 : vector<32x1xf32>
    %1353 = vector.extract_strided_slice %1342 {offsets = [0, 64], sizes = [1, 32], strides = [1, 1]} : vector<1x128xf32> to vector<1x32xf32>
    %cst_185 = arith.constant dense<0.000000e+00> : vector<1xf32>
    %1354 = vector.multi_reduction <add>, %1353, %cst_185 [1] : vector<1x32xf32> to vector<1xf32>
    %1355 = vector.shape_cast %1354 : vector<1xf32> to vector<1x1xf32>
    %1356 = vector.broadcast %1355 : vector<1x1xf32> to vector<32x1xf32>
    %1357 = arith.mulf %1316, %1356 : vector<32x1xf32>
    %1358 = arith.addf %1289, %1357 : vector<32x1xf32>
    %1359 = vector.extract_strided_slice %1007 {offsets = [0, 5], sizes = [32, 1], strides = [1, 1]} : vector<32x8xf32> to vector<32x1xf32>
    %1360 = vector.broadcast %1359 : vector<32x1xf32> to vector<32x128xf32>
    %1361 = arith.mulf %1360, %1346 : vector<32x128xf32>
    %cst_186 = arith.constant dense<0.000000e+00> : vector<128xf32>
    %1362 = vector.multi_reduction <add>, %1361, %cst_186 [0] : vector<32x128xf32> to vector<128xf32>
    %1363 = vector.shape_cast %1362 : vector<128xf32> to vector<1x128xf32>
    %1364 = arith.mulf %1359, %1352 : vector<32x1xf32>
    %cst_187 = arith.constant dense<0xFF800000> : vector<1xf32>
    %1365 = vector.multi_reduction <maximumf>, %1364, %cst_187 [0] : vector<32x1xf32> to vector<1xf32>
    %1366 = vector.shape_cast %1365 : vector<1xf32> to vector<1x1xf32>
    %1367 = vector.broadcast %1366 : vector<1x1xf32> to vector<32x1xf32>
    %1368 = arith.subf %1364, %1367 : vector<32x1xf32>
    %1369 = math.exp %1368 : vector<32x1xf32>
    %cst_188 = arith.constant dense<0.000000e+00> : vector<1xf32>
    %1370 = vector.multi_reduction <add>, %1369, %cst_188 [0] : vector<32x1xf32> to vector<1xf32>
    %1371 = vector.shape_cast %1370 : vector<1xf32> to vector<1x1xf32>
    %1372 = tpu.reciprocal %1371 {approx = true} : vector<1x1xf32> -> vector<1x1xf32>
    %1373 = vector.broadcast %1372 : vector<1x1xf32> to vector<32x1xf32>
    %1374 = arith.mulf %1369, %1373 : vector<32x1xf32>
    %1375 = arith.mulf %1359, %1358 : vector<32x1xf32>
    %cst_189 = arith.constant dense<0xFF800000> : vector<1xf32>
    %1376 = vector.multi_reduction <maximumf>, %1375, %cst_189 [0] : vector<32x1xf32> to vector<1xf32>
    %1377 = vector.shape_cast %1376 : vector<1xf32> to vector<1x1xf32>
    %1378 = vector.broadcast %1377 : vector<1x1xf32> to vector<32x1xf32>
    %1379 = arith.subf %1375, %1378 : vector<32x1xf32>
    %1380 = math.exp %1379 : vector<32x1xf32>
    %cst_190 = arith.constant dense<0.000000e+00> : vector<1xf32>
    %1381 = vector.multi_reduction <add>, %1380, %cst_190 [0] : vector<32x1xf32> to vector<1xf32>
    %1382 = vector.shape_cast %1381 : vector<1xf32> to vector<1x1xf32>
    %1383 = tpu.reciprocal %1382 {approx = true} : vector<1x1xf32> -> vector<1x1xf32>
    %1384 = vector.broadcast %1383 : vector<1x1xf32> to vector<32x1xf32>
    %1385 = arith.mulf %1380, %1384 : vector<32x1xf32>
    %1386 = arith.subf %1374, %1385 : vector<32x1xf32>
    %1387 = vector.broadcast %1386 : vector<32x1xf32> to vector<32x128xf32>
    %1388 = arith.mulf %1387, %1346 : vector<32x128xf32>
    %cst_191 = arith.constant dense<0.000000e+00> : vector<128xf32>
    %1389 = vector.multi_reduction <add>, %1388, %cst_191 [0] : vector<32x128xf32> to vector<128xf32>
    %1390 = vector.shape_cast %1389 : vector<128xf32> to vector<1x128xf32>
    %1391 = vector.extract_strided_slice %1363 {offsets = [0, 96], sizes = [1, 1], strides = [1, 1]} : vector<1x128xf32> to vector<1x1xf32>
    %1392 = vector.extract_strided_slice %1363 {offsets = [0, 97], sizes = [1, 1], strides = [1, 1]} : vector<1x128xf32> to vector<1x1xf32>
    %1393 = vector.extract_strided_slice %1363 {offsets = [0, 98], sizes = [1, 1], strides = [1, 1]} : vector<1x128xf32> to vector<1x1xf32>
    %1394 = vector.extract_strided_slice %1363 {offsets = [0, 99], sizes = [1, 1], strides = [1, 1]} : vector<1x128xf32> to vector<1x1xf32>
    %1395 = vector.shape_cast %1393 : vector<1x1xf32> to vector<1x1xf32>
    %1396 = vector.broadcast %1395 : vector<1x1xf32> to vector<1x128xf32>
    %1397 = vector.shape_cast %1394 : vector<1x1xf32> to vector<1x1xf32>
    %1398 = vector.broadcast %1397 : vector<1x1xf32> to vector<1x128xf32>
    %1399 = arith.select %6, %1396, %1398 : vector<1x128xi1>, vector<1x128xf32>
    %1400 = vector.shape_cast %1392 : vector<1x1xf32> to vector<1x1xf32>
    %1401 = vector.broadcast %1400 : vector<1x1xf32> to vector<1x128xf32>
    %1402 = arith.select %4, %1401, %1399 : vector<1x128xi1>, vector<1x128xf32>
    %1403 = vector.shape_cast %1391 : vector<1x1xf32> to vector<1x1xf32>
    %1404 = vector.broadcast %1403 : vector<1x1xf32> to vector<1x128xf32>
    %1405 = arith.select %2, %1404, %1402 : vector<1x128xi1>, vector<1x128xf32>
    %1406 = arith.negf %1405 : vector<1x128xf32>
    %1407 = math.exp %1406 : vector<1x128xf32>
    %cst_192 = arith.constant 1.000000e+00 : f32
    %1408 = vector.broadcast %cst_192 : f32 to vector<1x128xf32>
    %1409 = arith.addf %1408, %1407 : vector<1x128xf32>
    %1410 = arith.divf %1408, %1409 : vector<1x128xf32>
    %1411 = arith.mulf %1410, %1390 : vector<1x128xf32>
    %1412 = vector.broadcast %1385 : vector<32x1xf32> to vector<32x128xf32>
    %1413 = vector.broadcast %1411 : vector<1x128xf32> to vector<32x128xf32>
    %1414 = arith.mulf %1412, %1413 : vector<32x128xf32>
    %1415 = arith.addf %1346, %1414 : vector<32x128xf32>
    %1416 = vector.extract_strided_slice %1411 {offsets = [0, 32], sizes = [1, 32], strides = [1, 1]} : vector<1x128xf32> to vector<1x32xf32>
    %cst_193 = arith.constant dense<0.000000e+00> : vector<1xf32>
    %1417 = vector.multi_reduction <add>, %1416, %cst_193 [1] : vector<1x32xf32> to vector<1xf32>
    %1418 = vector.shape_cast %1417 : vector<1xf32> to vector<1x1xf32>
    %1419 = vector.broadcast %1418 : vector<1x1xf32> to vector<32x1xf32>
    %1420 = arith.mulf %1385, %1419 : vector<32x1xf32>
    %1421 = arith.addf %1352, %1420 : vector<32x1xf32>
    %1422 = vector.extract_strided_slice %1411 {offsets = [0, 64], sizes = [1, 32], strides = [1, 1]} : vector<1x128xf32> to vector<1x32xf32>
    %cst_194 = arith.constant dense<0.000000e+00> : vector<1xf32>
    %1423 = vector.multi_reduction <add>, %1422, %cst_194 [1] : vector<1x32xf32> to vector<1xf32>
    %1424 = vector.shape_cast %1423 : vector<1xf32> to vector<1x1xf32>
    %1425 = vector.broadcast %1424 : vector<1x1xf32> to vector<32x1xf32>
    %1426 = arith.mulf %1385, %1425 : vector<32x1xf32>
    %1427 = arith.addf %1358, %1426 : vector<32x1xf32>
    %1428 = vector.extract_strided_slice %1007 {offsets = [0, 6], sizes = [32, 1], strides = [1, 1]} : vector<32x8xf32> to vector<32x1xf32>
    %1429 = vector.broadcast %1428 : vector<32x1xf32> to vector<32x128xf32>
    %1430 = arith.mulf %1429, %1415 : vector<32x128xf32>
    %cst_195 = arith.constant dense<0.000000e+00> : vector<128xf32>
    %1431 = vector.multi_reduction <add>, %1430, %cst_195 [0] : vector<32x128xf32> to vector<128xf32>
    %1432 = vector.shape_cast %1431 : vector<128xf32> to vector<1x128xf32>
    %1433 = arith.mulf %1428, %1421 : vector<32x1xf32>
    %cst_196 = arith.constant dense<0xFF800000> : vector<1xf32>
    %1434 = vector.multi_reduction <maximumf>, %1433, %cst_196 [0] : vector<32x1xf32> to vector<1xf32>
    %1435 = vector.shape_cast %1434 : vector<1xf32> to vector<1x1xf32>
    %1436 = vector.broadcast %1435 : vector<1x1xf32> to vector<32x1xf32>
    %1437 = arith.subf %1433, %1436 : vector<32x1xf32>
    %1438 = math.exp %1437 : vector<32x1xf32>
    %cst_197 = arith.constant dense<0.000000e+00> : vector<1xf32>
    %1439 = vector.multi_reduction <add>, %1438, %cst_197 [0] : vector<32x1xf32> to vector<1xf32>
    %1440 = vector.shape_cast %1439 : vector<1xf32> to vector<1x1xf32>
    %1441 = tpu.reciprocal %1440 {approx = true} : vector<1x1xf32> -> vector<1x1xf32>
    %1442 = vector.broadcast %1441 : vector<1x1xf32> to vector<32x1xf32>
    %1443 = arith.mulf %1438, %1442 : vector<32x1xf32>
    %1444 = arith.mulf %1428, %1427 : vector<32x1xf32>
    %cst_198 = arith.constant dense<0xFF800000> : vector<1xf32>
    %1445 = vector.multi_reduction <maximumf>, %1444, %cst_198 [0] : vector<32x1xf32> to vector<1xf32>
    %1446 = vector.shape_cast %1445 : vector<1xf32> to vector<1x1xf32>
    %1447 = vector.broadcast %1446 : vector<1x1xf32> to vector<32x1xf32>
    %1448 = arith.subf %1444, %1447 : vector<32x1xf32>
    %1449 = math.exp %1448 : vector<32x1xf32>
    %cst_199 = arith.constant dense<0.000000e+00> : vector<1xf32>
    %1450 = vector.multi_reduction <add>, %1449, %cst_199 [0] : vector<32x1xf32> to vector<1xf32>
    %1451 = vector.shape_cast %1450 : vector<1xf32> to vector<1x1xf32>
    %1452 = tpu.reciprocal %1451 {approx = true} : vector<1x1xf32> -> vector<1x1xf32>
    %1453 = vector.broadcast %1452 : vector<1x1xf32> to vector<32x1xf32>
    %1454 = arith.mulf %1449, %1453 : vector<32x1xf32>
    %1455 = arith.subf %1443, %1454 : vector<32x1xf32>
    %1456 = vector.broadcast %1455 : vector<32x1xf32> to vector<32x128xf32>
    %1457 = arith.mulf %1456, %1415 : vector<32x128xf32>
    %cst_200 = arith.constant dense<0.000000e+00> : vector<128xf32>
    %1458 = vector.multi_reduction <add>, %1457, %cst_200 [0] : vector<32x128xf32> to vector<128xf32>
    %1459 = vector.shape_cast %1458 : vector<128xf32> to vector<1x128xf32>
    %1460 = vector.extract_strided_slice %1432 {offsets = [0, 96], sizes = [1, 1], strides = [1, 1]} : vector<1x128xf32> to vector<1x1xf32>
    %1461 = vector.extract_strided_slice %1432 {offsets = [0, 97], sizes = [1, 1], strides = [1, 1]} : vector<1x128xf32> to vector<1x1xf32>
    %1462 = vector.extract_strided_slice %1432 {offsets = [0, 98], sizes = [1, 1], strides = [1, 1]} : vector<1x128xf32> to vector<1x1xf32>
    %1463 = vector.extract_strided_slice %1432 {offsets = [0, 99], sizes = [1, 1], strides = [1, 1]} : vector<1x128xf32> to vector<1x1xf32>
    %1464 = vector.shape_cast %1462 : vector<1x1xf32> to vector<1x1xf32>
    %1465 = vector.broadcast %1464 : vector<1x1xf32> to vector<1x128xf32>
    %1466 = vector.shape_cast %1463 : vector<1x1xf32> to vector<1x1xf32>
    %1467 = vector.broadcast %1466 : vector<1x1xf32> to vector<1x128xf32>
    %1468 = arith.select %6, %1465, %1467 : vector<1x128xi1>, vector<1x128xf32>
    %1469 = vector.shape_cast %1461 : vector<1x1xf32> to vector<1x1xf32>
    %1470 = vector.broadcast %1469 : vector<1x1xf32> to vector<1x128xf32>
    %1471 = arith.select %4, %1470, %1468 : vector<1x128xi1>, vector<1x128xf32>
    %1472 = vector.shape_cast %1460 : vector<1x1xf32> to vector<1x1xf32>
    %1473 = vector.broadcast %1472 : vector<1x1xf32> to vector<1x128xf32>
    %1474 = arith.select %2, %1473, %1471 : vector<1x128xi1>, vector<1x128xf32>
    %1475 = arith.negf %1474 : vector<1x128xf32>
    %1476 = math.exp %1475 : vector<1x128xf32>
    %cst_201 = arith.constant 1.000000e+00 : f32
    %1477 = vector.broadcast %cst_201 : f32 to vector<1x128xf32>
    %1478 = arith.addf %1477, %1476 : vector<1x128xf32>
    %1479 = arith.divf %1477, %1478 : vector<1x128xf32>
    %1480 = arith.mulf %1479, %1459 : vector<1x128xf32>
    %1481 = vector.broadcast %1454 : vector<32x1xf32> to vector<32x128xf32>
    %1482 = vector.broadcast %1480 : vector<1x128xf32> to vector<32x128xf32>
    %1483 = arith.mulf %1481, %1482 : vector<32x128xf32>
    %1484 = arith.addf %1415, %1483 : vector<32x128xf32>
    %1485 = vector.extract_strided_slice %1007 {offsets = [0, 7], sizes = [32, 1], strides = [1, 1]} : vector<32x8xf32> to vector<32x1xf32>
    %1486 = vector.broadcast %1485 : vector<32x1xf32> to vector<32x128xf32>
    %1487 = arith.mulf %1486, %1484 : vector<32x128xf32>
    %cst_202 = arith.constant dense<0.000000e+00> : vector<128xf32>
    %1488 = vector.multi_reduction <add>, %1487, %cst_202 [0] : vector<32x128xf32> to vector<128xf32>
    %1489 = vector.shape_cast %1488 : vector<128xf32> to vector<1x128xf32>
    %1490 = vector.extract_strided_slice %1489 {offsets = [0, 0], sizes = [1, 32], strides = [1, 1]} : vector<1x128xf32> to vector<1x32xf32>
    %1491 = vector.extract_strided_slice %11 {offsets = [96, 0], sizes = [32, 128], strides = [1, 1]} : vector<128x128xf32> to vector<32x128xf32>
    %1492 = vector.extract_strided_slice %9 {offsets = [96, 0], sizes = [32, 1], strides = [1, 1]} : vector<128x1xf32> to vector<32x1xf32>
    %1493 = vector.broadcast %1492 : vector<32x1xf32> to vector<32x8xf32>
    %1494 = vector.broadcast %13 : vector<1x8xf32> to vector<32x8xf32>
    %1495 = arith.mulf %1493, %1494 : vector<32x8xf32>
    %1496 = vector.extract_strided_slice %10 {offsets = [96, 0], sizes = [32, 1], strides = [1, 1]} : vector<128x1xf32> to vector<32x1xf32>
    %1497 = vector.broadcast %1496 : vector<32x1xf32> to vector<32x8xf32>
    %1498 = arith.addf %1495, %1497 : vector<32x8xf32>
    %1499 = vector.extract_strided_slice %1491 {offsets = [0, 32], sizes = [32, 32], strides = [1, 1]} : vector<32x128xf32> to vector<32x32xf32>
    %cst_203 = arith.constant dense<0.000000e+00> : vector<32xf32>
    %1500 = vector.multi_reduction <add>, %1499, %cst_203 [1] : vector<32x32xf32> to vector<32xf32>
    %1501 = vector.shape_cast %1500 : vector<32xf32> to vector<32x1xf32>
    %1502 = vector.extract_strided_slice %1491 {offsets = [0, 64], sizes = [32, 32], strides = [1, 1]} : vector<32x128xf32> to vector<32x32xf32>
    %cst_204 = arith.constant dense<0.000000e+00> : vector<32xf32>
    %1503 = vector.multi_reduction <add>, %1502, %cst_204 [1] : vector<32x32xf32> to vector<32xf32>
    %1504 = vector.shape_cast %1503 : vector<32xf32> to vector<32x1xf32>
    %1505 = vector.extract_strided_slice %1498 {offsets = [0, 0], sizes = [32, 1], strides = [1, 1]} : vector<32x8xf32> to vector<32x1xf32>
    %1506 = vector.broadcast %1505 : vector<32x1xf32> to vector<32x128xf32>
    %1507 = arith.mulf %1506, %1491 : vector<32x128xf32>
    %cst_205 = arith.constant dense<0.000000e+00> : vector<128xf32>
    %1508 = vector.multi_reduction <add>, %1507, %cst_205 [0] : vector<32x128xf32> to vector<128xf32>
    %1509 = vector.shape_cast %1508 : vector<128xf32> to vector<1x128xf32>
    %1510 = arith.mulf %1505, %1501 : vector<32x1xf32>
    %cst_206 = arith.constant dense<0xFF800000> : vector<1xf32>
    %1511 = vector.multi_reduction <maximumf>, %1510, %cst_206 [0] : vector<32x1xf32> to vector<1xf32>
    %1512 = vector.shape_cast %1511 : vector<1xf32> to vector<1x1xf32>
    %1513 = vector.broadcast %1512 : vector<1x1xf32> to vector<32x1xf32>
    %1514 = arith.subf %1510, %1513 : vector<32x1xf32>
    %1515 = math.exp %1514 : vector<32x1xf32>
    %cst_207 = arith.constant dense<0.000000e+00> : vector<1xf32>
    %1516 = vector.multi_reduction <add>, %1515, %cst_207 [0] : vector<32x1xf32> to vector<1xf32>
    %1517 = vector.shape_cast %1516 : vector<1xf32> to vector<1x1xf32>
    %1518 = tpu.reciprocal %1517 {approx = true} : vector<1x1xf32> -> vector<1x1xf32>
    %1519 = vector.broadcast %1518 : vector<1x1xf32> to vector<32x1xf32>
    %1520 = arith.mulf %1515, %1519 : vector<32x1xf32>
    %1521 = arith.mulf %1505, %1504 : vector<32x1xf32>
    %cst_208 = arith.constant dense<0xFF800000> : vector<1xf32>
    %1522 = vector.multi_reduction <maximumf>, %1521, %cst_208 [0] : vector<32x1xf32> to vector<1xf32>
    %1523 = vector.shape_cast %1522 : vector<1xf32> to vector<1x1xf32>
    %1524 = vector.broadcast %1523 : vector<1x1xf32> to vector<32x1xf32>
    %1525 = arith.subf %1521, %1524 : vector<32x1xf32>
    %1526 = math.exp %1525 : vector<32x1xf32>
    %cst_209 = arith.constant dense<0.000000e+00> : vector<1xf32>
    %1527 = vector.multi_reduction <add>, %1526, %cst_209 [0] : vector<32x1xf32> to vector<1xf32>
    %1528 = vector.shape_cast %1527 : vector<1xf32> to vector<1x1xf32>
    %1529 = tpu.reciprocal %1528 {approx = true} : vector<1x1xf32> -> vector<1x1xf32>
    %1530 = vector.broadcast %1529 : vector<1x1xf32> to vector<32x1xf32>
    %1531 = arith.mulf %1526, %1530 : vector<32x1xf32>
    %1532 = arith.subf %1520, %1531 : vector<32x1xf32>
    %1533 = vector.broadcast %1532 : vector<32x1xf32> to vector<32x128xf32>
    %1534 = arith.mulf %1533, %1491 : vector<32x128xf32>
    %cst_210 = arith.constant dense<0.000000e+00> : vector<128xf32>
    %1535 = vector.multi_reduction <add>, %1534, %cst_210 [0] : vector<32x128xf32> to vector<128xf32>
    %1536 = vector.shape_cast %1535 : vector<128xf32> to vector<1x128xf32>
    %1537 = vector.extract_strided_slice %1509 {offsets = [0, 96], sizes = [1, 1], strides = [1, 1]} : vector<1x128xf32> to vector<1x1xf32>
    %1538 = vector.extract_strided_slice %1509 {offsets = [0, 97], sizes = [1, 1], strides = [1, 1]} : vector<1x128xf32> to vector<1x1xf32>
    %1539 = vector.extract_strided_slice %1509 {offsets = [0, 98], sizes = [1, 1], strides = [1, 1]} : vector<1x128xf32> to vector<1x1xf32>
    %1540 = vector.extract_strided_slice %1509 {offsets = [0, 99], sizes = [1, 1], strides = [1, 1]} : vector<1x128xf32> to vector<1x1xf32>
    %1541 = vector.shape_cast %1539 : vector<1x1xf32> to vector<1x1xf32>
    %1542 = vector.broadcast %1541 : vector<1x1xf32> to vector<1x128xf32>
    %1543 = vector.shape_cast %1540 : vector<1x1xf32> to vector<1x1xf32>
    %1544 = vector.broadcast %1543 : vector<1x1xf32> to vector<1x128xf32>
    %1545 = arith.select %6, %1542, %1544 : vector<1x128xi1>, vector<1x128xf32>
    %1546 = vector.shape_cast %1538 : vector<1x1xf32> to vector<1x1xf32>
    %1547 = vector.broadcast %1546 : vector<1x1xf32> to vector<1x128xf32>
    %1548 = arith.select %4, %1547, %1545 : vector<1x128xi1>, vector<1x128xf32>
    %1549 = vector.shape_cast %1537 : vector<1x1xf32> to vector<1x1xf32>
    %1550 = vector.broadcast %1549 : vector<1x1xf32> to vector<1x128xf32>
    %1551 = arith.select %2, %1550, %1548 : vector<1x128xi1>, vector<1x128xf32>
    %1552 = arith.negf %1551 : vector<1x128xf32>
    %1553 = math.exp %1552 : vector<1x128xf32>
    %cst_211 = arith.constant 1.000000e+00 : f32
    %1554 = vector.broadcast %cst_211 : f32 to vector<1x128xf32>
    %1555 = arith.addf %1554, %1553 : vector<1x128xf32>
    %1556 = arith.divf %1554, %1555 : vector<1x128xf32>
    %1557 = arith.mulf %1556, %1536 : vector<1x128xf32>
    %1558 = vector.broadcast %1531 : vector<32x1xf32> to vector<32x128xf32>
    %1559 = vector.broadcast %1557 : vector<1x128xf32> to vector<32x128xf32>
    %1560 = arith.mulf %1558, %1559 : vector<32x128xf32>
    %1561 = arith.addf %1491, %1560 : vector<32x128xf32>
    %1562 = vector.extract_strided_slice %1557 {offsets = [0, 32], sizes = [1, 32], strides = [1, 1]} : vector<1x128xf32> to vector<1x32xf32>
    %cst_212 = arith.constant dense<0.000000e+00> : vector<1xf32>
    %1563 = vector.multi_reduction <add>, %1562, %cst_212 [1] : vector<1x32xf32> to vector<1xf32>
    %1564 = vector.shape_cast %1563 : vector<1xf32> to vector<1x1xf32>
    %1565 = vector.broadcast %1564 : vector<1x1xf32> to vector<32x1xf32>
    %1566 = arith.mulf %1531, %1565 : vector<32x1xf32>
    %1567 = arith.addf %1501, %1566 : vector<32x1xf32>
    %1568 = vector.extract_strided_slice %1557 {offsets = [0, 64], sizes = [1, 32], strides = [1, 1]} : vector<1x128xf32> to vector<1x32xf32>
    %cst_213 = arith.constant dense<0.000000e+00> : vector<1xf32>
    %1569 = vector.multi_reduction <add>, %1568, %cst_213 [1] : vector<1x32xf32> to vector<1xf32>
    %1570 = vector.shape_cast %1569 : vector<1xf32> to vector<1x1xf32>
    %1571 = vector.broadcast %1570 : vector<1x1xf32> to vector<32x1xf32>
    %1572 = arith.mulf %1531, %1571 : vector<32x1xf32>
    %1573 = arith.addf %1504, %1572 : vector<32x1xf32>
    %1574 = vector.extract_strided_slice %1498 {offsets = [0, 1], sizes = [32, 1], strides = [1, 1]} : vector<32x8xf32> to vector<32x1xf32>
    %1575 = vector.broadcast %1574 : vector<32x1xf32> to vector<32x128xf32>
    %1576 = arith.mulf %1575, %1561 : vector<32x128xf32>
    %cst_214 = arith.constant dense<0.000000e+00> : vector<128xf32>
    %1577 = vector.multi_reduction <add>, %1576, %cst_214 [0] : vector<32x128xf32> to vector<128xf32>
    %1578 = vector.shape_cast %1577 : vector<128xf32> to vector<1x128xf32>
    %1579 = arith.mulf %1574, %1567 : vector<32x1xf32>
    %cst_215 = arith.constant dense<0xFF800000> : vector<1xf32>
    %1580 = vector.multi_reduction <maximumf>, %1579, %cst_215 [0] : vector<32x1xf32> to vector<1xf32>
    %1581 = vector.shape_cast %1580 : vector<1xf32> to vector<1x1xf32>
    %1582 = vector.broadcast %1581 : vector<1x1xf32> to vector<32x1xf32>
    %1583 = arith.subf %1579, %1582 : vector<32x1xf32>
    %1584 = math.exp %1583 : vector<32x1xf32>
    %cst_216 = arith.constant dense<0.000000e+00> : vector<1xf32>
    %1585 = vector.multi_reduction <add>, %1584, %cst_216 [0] : vector<32x1xf32> to vector<1xf32>
    %1586 = vector.shape_cast %1585 : vector<1xf32> to vector<1x1xf32>
    %1587 = tpu.reciprocal %1586 {approx = true} : vector<1x1xf32> -> vector<1x1xf32>
    %1588 = vector.broadcast %1587 : vector<1x1xf32> to vector<32x1xf32>
    %1589 = arith.mulf %1584, %1588 : vector<32x1xf32>
    %1590 = arith.mulf %1574, %1573 : vector<32x1xf32>
    %cst_217 = arith.constant dense<0xFF800000> : vector<1xf32>
    %1591 = vector.multi_reduction <maximumf>, %1590, %cst_217 [0] : vector<32x1xf32> to vector<1xf32>
    %1592 = vector.shape_cast %1591 : vector<1xf32> to vector<1x1xf32>
    %1593 = vector.broadcast %1592 : vector<1x1xf32> to vector<32x1xf32>
    %1594 = arith.subf %1590, %1593 : vector<32x1xf32>
    %1595 = math.exp %1594 : vector<32x1xf32>
    %cst_218 = arith.constant dense<0.000000e+00> : vector<1xf32>
    %1596 = vector.multi_reduction <add>, %1595, %cst_218 [0] : vector<32x1xf32> to vector<1xf32>
    %1597 = vector.shape_cast %1596 : vector<1xf32> to vector<1x1xf32>
    %1598 = tpu.reciprocal %1597 {approx = true} : vector<1x1xf32> -> vector<1x1xf32>
    %1599 = vector.broadcast %1598 : vector<1x1xf32> to vector<32x1xf32>
    %1600 = arith.mulf %1595, %1599 : vector<32x1xf32>
    %1601 = arith.subf %1589, %1600 : vector<32x1xf32>
    %1602 = vector.broadcast %1601 : vector<32x1xf32> to vector<32x128xf32>
    %1603 = arith.mulf %1602, %1561 : vector<32x128xf32>
    %cst_219 = arith.constant dense<0.000000e+00> : vector<128xf32>
    %1604 = vector.multi_reduction <add>, %1603, %cst_219 [0] : vector<32x128xf32> to vector<128xf32>
    %1605 = vector.shape_cast %1604 : vector<128xf32> to vector<1x128xf32>
    %1606 = vector.extract_strided_slice %1578 {offsets = [0, 96], sizes = [1, 1], strides = [1, 1]} : vector<1x128xf32> to vector<1x1xf32>
    %1607 = vector.extract_strided_slice %1578 {offsets = [0, 97], sizes = [1, 1], strides = [1, 1]} : vector<1x128xf32> to vector<1x1xf32>
    %1608 = vector.extract_strided_slice %1578 {offsets = [0, 98], sizes = [1, 1], strides = [1, 1]} : vector<1x128xf32> to vector<1x1xf32>
    %1609 = vector.extract_strided_slice %1578 {offsets = [0, 99], sizes = [1, 1], strides = [1, 1]} : vector<1x128xf32> to vector<1x1xf32>
    %1610 = vector.shape_cast %1608 : vector<1x1xf32> to vector<1x1xf32>
    %1611 = vector.broadcast %1610 : vector<1x1xf32> to vector<1x128xf32>
    %1612 = vector.shape_cast %1609 : vector<1x1xf32> to vector<1x1xf32>
    %1613 = vector.broadcast %1612 : vector<1x1xf32> to vector<1x128xf32>
    %1614 = arith.select %6, %1611, %1613 : vector<1x128xi1>, vector<1x128xf32>
    %1615 = vector.shape_cast %1607 : vector<1x1xf32> to vector<1x1xf32>
    %1616 = vector.broadcast %1615 : vector<1x1xf32> to vector<1x128xf32>
    %1617 = arith.select %4, %1616, %1614 : vector<1x128xi1>, vector<1x128xf32>
    %1618 = vector.shape_cast %1606 : vector<1x1xf32> to vector<1x1xf32>
    %1619 = vector.broadcast %1618 : vector<1x1xf32> to vector<1x128xf32>
    %1620 = arith.select %2, %1619, %1617 : vector<1x128xi1>, vector<1x128xf32>
    %1621 = arith.negf %1620 : vector<1x128xf32>
    %1622 = math.exp %1621 : vector<1x128xf32>
    %cst_220 = arith.constant 1.000000e+00 : f32
    %1623 = vector.broadcast %cst_220 : f32 to vector<1x128xf32>
    %1624 = arith.addf %1623, %1622 : vector<1x128xf32>
    %1625 = arith.divf %1623, %1624 : vector<1x128xf32>
    %1626 = arith.mulf %1625, %1605 : vector<1x128xf32>
    %1627 = vector.broadcast %1600 : vector<32x1xf32> to vector<32x128xf32>
    %1628 = vector.broadcast %1626 : vector<1x128xf32> to vector<32x128xf32>
    %1629 = arith.mulf %1627, %1628 : vector<32x128xf32>
    %1630 = arith.addf %1561, %1629 : vector<32x128xf32>
    %1631 = vector.extract_strided_slice %1626 {offsets = [0, 32], sizes = [1, 32], strides = [1, 1]} : vector<1x128xf32> to vector<1x32xf32>
    %cst_221 = arith.constant dense<0.000000e+00> : vector<1xf32>
    %1632 = vector.multi_reduction <add>, %1631, %cst_221 [1] : vector<1x32xf32> to vector<1xf32>
    %1633 = vector.shape_cast %1632 : vector<1xf32> to vector<1x1xf32>
    %1634 = vector.broadcast %1633 : vector<1x1xf32> to vector<32x1xf32>
    %1635 = arith.mulf %1600, %1634 : vector<32x1xf32>
    %1636 = arith.addf %1567, %1635 : vector<32x1xf32>
    %1637 = vector.extract_strided_slice %1626 {offsets = [0, 64], sizes = [1, 32], strides = [1, 1]} : vector<1x128xf32> to vector<1x32xf32>
    %cst_222 = arith.constant dense<0.000000e+00> : vector<1xf32>
    %1638 = vector.multi_reduction <add>, %1637, %cst_222 [1] : vector<1x32xf32> to vector<1xf32>
    %1639 = vector.shape_cast %1638 : vector<1xf32> to vector<1x1xf32>
    %1640 = vector.broadcast %1639 : vector<1x1xf32> to vector<32x1xf32>
    %1641 = arith.mulf %1600, %1640 : vector<32x1xf32>
    %1642 = arith.addf %1573, %1641 : vector<32x1xf32>
    %1643 = vector.extract_strided_slice %1498 {offsets = [0, 2], sizes = [32, 1], strides = [1, 1]} : vector<32x8xf32> to vector<32x1xf32>
    %1644 = vector.broadcast %1643 : vector<32x1xf32> to vector<32x128xf32>
    %1645 = arith.mulf %1644, %1630 : vector<32x128xf32>
    %cst_223 = arith.constant dense<0.000000e+00> : vector<128xf32>
    %1646 = vector.multi_reduction <add>, %1645, %cst_223 [0] : vector<32x128xf32> to vector<128xf32>
    %1647 = vector.shape_cast %1646 : vector<128xf32> to vector<1x128xf32>
    %1648 = arith.mulf %1643, %1636 : vector<32x1xf32>
    %cst_224 = arith.constant dense<0xFF800000> : vector<1xf32>
    %1649 = vector.multi_reduction <maximumf>, %1648, %cst_224 [0] : vector<32x1xf32> to vector<1xf32>
    %1650 = vector.shape_cast %1649 : vector<1xf32> to vector<1x1xf32>
    %1651 = vector.broadcast %1650 : vector<1x1xf32> to vector<32x1xf32>
    %1652 = arith.subf %1648, %1651 : vector<32x1xf32>
    %1653 = math.exp %1652 : vector<32x1xf32>
    %cst_225 = arith.constant dense<0.000000e+00> : vector<1xf32>
    %1654 = vector.multi_reduction <add>, %1653, %cst_225 [0] : vector<32x1xf32> to vector<1xf32>
    %1655 = vector.shape_cast %1654 : vector<1xf32> to vector<1x1xf32>
    %1656 = tpu.reciprocal %1655 {approx = true} : vector<1x1xf32> -> vector<1x1xf32>
    %1657 = vector.broadcast %1656 : vector<1x1xf32> to vector<32x1xf32>
    %1658 = arith.mulf %1653, %1657 : vector<32x1xf32>
    %1659 = arith.mulf %1643, %1642 : vector<32x1xf32>
    %cst_226 = arith.constant dense<0xFF800000> : vector<1xf32>
    %1660 = vector.multi_reduction <maximumf>, %1659, %cst_226 [0] : vector<32x1xf32> to vector<1xf32>
    %1661 = vector.shape_cast %1660 : vector<1xf32> to vector<1x1xf32>
    %1662 = vector.broadcast %1661 : vector<1x1xf32> to vector<32x1xf32>
    %1663 = arith.subf %1659, %1662 : vector<32x1xf32>
    %1664 = math.exp %1663 : vector<32x1xf32>
    %cst_227 = arith.constant dense<0.000000e+00> : vector<1xf32>
    %1665 = vector.multi_reduction <add>, %1664, %cst_227 [0] : vector<32x1xf32> to vector<1xf32>
    %1666 = vector.shape_cast %1665 : vector<1xf32> to vector<1x1xf32>
    %1667 = tpu.reciprocal %1666 {approx = true} : vector<1x1xf32> -> vector<1x1xf32>
    %1668 = vector.broadcast %1667 : vector<1x1xf32> to vector<32x1xf32>
    %1669 = arith.mulf %1664, %1668 : vector<32x1xf32>
    %1670 = arith.subf %1658, %1669 : vector<32x1xf32>
    %1671 = vector.broadcast %1670 : vector<32x1xf32> to vector<32x128xf32>
    %1672 = arith.mulf %1671, %1630 : vector<32x128xf32>
    %cst_228 = arith.constant dense<0.000000e+00> : vector<128xf32>
    %1673 = vector.multi_reduction <add>, %1672, %cst_228 [0] : vector<32x128xf32> to vector<128xf32>
    %1674 = vector.shape_cast %1673 : vector<128xf32> to vector<1x128xf32>
    %1675 = vector.extract_strided_slice %1647 {offsets = [0, 96], sizes = [1, 1], strides = [1, 1]} : vector<1x128xf32> to vector<1x1xf32>
    %1676 = vector.extract_strided_slice %1647 {offsets = [0, 97], sizes = [1, 1], strides = [1, 1]} : vector<1x128xf32> to vector<1x1xf32>
    %1677 = vector.extract_strided_slice %1647 {offsets = [0, 98], sizes = [1, 1], strides = [1, 1]} : vector<1x128xf32> to vector<1x1xf32>
    %1678 = vector.extract_strided_slice %1647 {offsets = [0, 99], sizes = [1, 1], strides = [1, 1]} : vector<1x128xf32> to vector<1x1xf32>
    %1679 = vector.shape_cast %1677 : vector<1x1xf32> to vector<1x1xf32>
    %1680 = vector.broadcast %1679 : vector<1x1xf32> to vector<1x128xf32>
    %1681 = vector.shape_cast %1678 : vector<1x1xf32> to vector<1x1xf32>
    %1682 = vector.broadcast %1681 : vector<1x1xf32> to vector<1x128xf32>
    %1683 = arith.select %6, %1680, %1682 : vector<1x128xi1>, vector<1x128xf32>
    %1684 = vector.shape_cast %1676 : vector<1x1xf32> to vector<1x1xf32>
    %1685 = vector.broadcast %1684 : vector<1x1xf32> to vector<1x128xf32>
    %1686 = arith.select %4, %1685, %1683 : vector<1x128xi1>, vector<1x128xf32>
    %1687 = vector.shape_cast %1675 : vector<1x1xf32> to vector<1x1xf32>
    %1688 = vector.broadcast %1687 : vector<1x1xf32> to vector<1x128xf32>
    %1689 = arith.select %2, %1688, %1686 : vector<1x128xi1>, vector<1x128xf32>
    %1690 = arith.negf %1689 : vector<1x128xf32>
    %1691 = math.exp %1690 : vector<1x128xf32>
    %cst_229 = arith.constant 1.000000e+00 : f32
    %1692 = vector.broadcast %cst_229 : f32 to vector<1x128xf32>
    %1693 = arith.addf %1692, %1691 : vector<1x128xf32>
    %1694 = arith.divf %1692, %1693 : vector<1x128xf32>
    %1695 = arith.mulf %1694, %1674 : vector<1x128xf32>
    %1696 = vector.broadcast %1669 : vector<32x1xf32> to vector<32x128xf32>
    %1697 = vector.broadcast %1695 : vector<1x128xf32> to vector<32x128xf32>
    %1698 = arith.mulf %1696, %1697 : vector<32x128xf32>
    %1699 = arith.addf %1630, %1698 : vector<32x128xf32>
    %1700 = vector.extract_strided_slice %1695 {offsets = [0, 32], sizes = [1, 32], strides = [1, 1]} : vector<1x128xf32> to vector<1x32xf32>
    %cst_230 = arith.constant dense<0.000000e+00> : vector<1xf32>
    %1701 = vector.multi_reduction <add>, %1700, %cst_230 [1] : vector<1x32xf32> to vector<1xf32>
    %1702 = vector.shape_cast %1701 : vector<1xf32> to vector<1x1xf32>
    %1703 = vector.broadcast %1702 : vector<1x1xf32> to vector<32x1xf32>
    %1704 = arith.mulf %1669, %1703 : vector<32x1xf32>
    %1705 = arith.addf %1636, %1704 : vector<32x1xf32>
    %1706 = vector.extract_strided_slice %1695 {offsets = [0, 64], sizes = [1, 32], strides = [1, 1]} : vector<1x128xf32> to vector<1x32xf32>
    %cst_231 = arith.constant dense<0.000000e+00> : vector<1xf32>
    %1707 = vector.multi_reduction <add>, %1706, %cst_231 [1] : vector<1x32xf32> to vector<1xf32>
    %1708 = vector.shape_cast %1707 : vector<1xf32> to vector<1x1xf32>
    %1709 = vector.broadcast %1708 : vector<1x1xf32> to vector<32x1xf32>
    %1710 = arith.mulf %1669, %1709 : vector<32x1xf32>
    %1711 = arith.addf %1642, %1710 : vector<32x1xf32>
    %1712 = vector.extract_strided_slice %1498 {offsets = [0, 3], sizes = [32, 1], strides = [1, 1]} : vector<32x8xf32> to vector<32x1xf32>
    %1713 = vector.broadcast %1712 : vector<32x1xf32> to vector<32x128xf32>
    %1714 = arith.mulf %1713, %1699 : vector<32x128xf32>
    %cst_232 = arith.constant dense<0.000000e+00> : vector<128xf32>
    %1715 = vector.multi_reduction <add>, %1714, %cst_232 [0] : vector<32x128xf32> to vector<128xf32>
    %1716 = vector.shape_cast %1715 : vector<128xf32> to vector<1x128xf32>
    %1717 = arith.mulf %1712, %1705 : vector<32x1xf32>
    %cst_233 = arith.constant dense<0xFF800000> : vector<1xf32>
    %1718 = vector.multi_reduction <maximumf>, %1717, %cst_233 [0] : vector<32x1xf32> to vector<1xf32>
    %1719 = vector.shape_cast %1718 : vector<1xf32> to vector<1x1xf32>
    %1720 = vector.broadcast %1719 : vector<1x1xf32> to vector<32x1xf32>
    %1721 = arith.subf %1717, %1720 : vector<32x1xf32>
    %1722 = math.exp %1721 : vector<32x1xf32>
    %cst_234 = arith.constant dense<0.000000e+00> : vector<1xf32>
    %1723 = vector.multi_reduction <add>, %1722, %cst_234 [0] : vector<32x1xf32> to vector<1xf32>
    %1724 = vector.shape_cast %1723 : vector<1xf32> to vector<1x1xf32>
    %1725 = tpu.reciprocal %1724 {approx = true} : vector<1x1xf32> -> vector<1x1xf32>
    %1726 = vector.broadcast %1725 : vector<1x1xf32> to vector<32x1xf32>
    %1727 = arith.mulf %1722, %1726 : vector<32x1xf32>
    %1728 = arith.mulf %1712, %1711 : vector<32x1xf32>
    %cst_235 = arith.constant dense<0xFF800000> : vector<1xf32>
    %1729 = vector.multi_reduction <maximumf>, %1728, %cst_235 [0] : vector<32x1xf32> to vector<1xf32>
    %1730 = vector.shape_cast %1729 : vector<1xf32> to vector<1x1xf32>
    %1731 = vector.broadcast %1730 : vector<1x1xf32> to vector<32x1xf32>
    %1732 = arith.subf %1728, %1731 : vector<32x1xf32>
    %1733 = math.exp %1732 : vector<32x1xf32>
    %cst_236 = arith.constant dense<0.000000e+00> : vector<1xf32>
    %1734 = vector.multi_reduction <add>, %1733, %cst_236 [0] : vector<32x1xf32> to vector<1xf32>
    %1735 = vector.shape_cast %1734 : vector<1xf32> to vector<1x1xf32>
    %1736 = tpu.reciprocal %1735 {approx = true} : vector<1x1xf32> -> vector<1x1xf32>
    %1737 = vector.broadcast %1736 : vector<1x1xf32> to vector<32x1xf32>
    %1738 = arith.mulf %1733, %1737 : vector<32x1xf32>
    %1739 = arith.subf %1727, %1738 : vector<32x1xf32>
    %1740 = vector.broadcast %1739 : vector<32x1xf32> to vector<32x128xf32>
    %1741 = arith.mulf %1740, %1699 : vector<32x128xf32>
    %cst_237 = arith.constant dense<0.000000e+00> : vector<128xf32>
    %1742 = vector.multi_reduction <add>, %1741, %cst_237 [0] : vector<32x128xf32> to vector<128xf32>
    %1743 = vector.shape_cast %1742 : vector<128xf32> to vector<1x128xf32>
    %1744 = vector.extract_strided_slice %1716 {offsets = [0, 96], sizes = [1, 1], strides = [1, 1]} : vector<1x128xf32> to vector<1x1xf32>
    %1745 = vector.extract_strided_slice %1716 {offsets = [0, 97], sizes = [1, 1], strides = [1, 1]} : vector<1x128xf32> to vector<1x1xf32>
    %1746 = vector.extract_strided_slice %1716 {offsets = [0, 98], sizes = [1, 1], strides = [1, 1]} : vector<1x128xf32> to vector<1x1xf32>
    %1747 = vector.extract_strided_slice %1716 {offsets = [0, 99], sizes = [1, 1], strides = [1, 1]} : vector<1x128xf32> to vector<1x1xf32>
    %1748 = vector.shape_cast %1746 : vector<1x1xf32> to vector<1x1xf32>
    %1749 = vector.broadcast %1748 : vector<1x1xf32> to vector<1x128xf32>
    %1750 = vector.shape_cast %1747 : vector<1x1xf32> to vector<1x1xf32>
    %1751 = vector.broadcast %1750 : vector<1x1xf32> to vector<1x128xf32>
    %1752 = arith.select %6, %1749, %1751 : vector<1x128xi1>, vector<1x128xf32>
    %1753 = vector.shape_cast %1745 : vector<1x1xf32> to vector<1x1xf32>
    %1754 = vector.broadcast %1753 : vector<1x1xf32> to vector<1x128xf32>
    %1755 = arith.select %4, %1754, %1752 : vector<1x128xi1>, vector<1x128xf32>
    %1756 = vector.shape_cast %1744 : vector<1x1xf32> to vector<1x1xf32>
    %1757 = vector.broadcast %1756 : vector<1x1xf32> to vector<1x128xf32>
    %1758 = arith.select %2, %1757, %1755 : vector<1x128xi1>, vector<1x128xf32>
    %1759 = arith.negf %1758 : vector<1x128xf32>
    %1760 = math.exp %1759 : vector<1x128xf32>
    %cst_238 = arith.constant 1.000000e+00 : f32
    %1761 = vector.broadcast %cst_238 : f32 to vector<1x128xf32>
    %1762 = arith.addf %1761, %1760 : vector<1x128xf32>
    %1763 = arith.divf %1761, %1762 : vector<1x128xf32>
    %1764 = arith.mulf %1763, %1743 : vector<1x128xf32>
    %1765 = vector.broadcast %1738 : vector<32x1xf32> to vector<32x128xf32>
    %1766 = vector.broadcast %1764 : vector<1x128xf32> to vector<32x128xf32>
    %1767 = arith.mulf %1765, %1766 : vector<32x128xf32>
    %1768 = arith.addf %1699, %1767 : vector<32x128xf32>
    %1769 = vector.extract_strided_slice %1764 {offsets = [0, 32], sizes = [1, 32], strides = [1, 1]} : vector<1x128xf32> to vector<1x32xf32>
    %cst_239 = arith.constant dense<0.000000e+00> : vector<1xf32>
    %1770 = vector.multi_reduction <add>, %1769, %cst_239 [1] : vector<1x32xf32> to vector<1xf32>
    %1771 = vector.shape_cast %1770 : vector<1xf32> to vector<1x1xf32>
    %1772 = vector.broadcast %1771 : vector<1x1xf32> to vector<32x1xf32>
    %1773 = arith.mulf %1738, %1772 : vector<32x1xf32>
    %1774 = arith.addf %1705, %1773 : vector<32x1xf32>
    %1775 = vector.extract_strided_slice %1764 {offsets = [0, 64], sizes = [1, 32], strides = [1, 1]} : vector<1x128xf32> to vector<1x32xf32>
    %cst_240 = arith.constant dense<0.000000e+00> : vector<1xf32>
    %1776 = vector.multi_reduction <add>, %1775, %cst_240 [1] : vector<1x32xf32> to vector<1xf32>
    %1777 = vector.shape_cast %1776 : vector<1xf32> to vector<1x1xf32>
    %1778 = vector.broadcast %1777 : vector<1x1xf32> to vector<32x1xf32>
    %1779 = arith.mulf %1738, %1778 : vector<32x1xf32>
    %1780 = arith.addf %1711, %1779 : vector<32x1xf32>
    %1781 = vector.extract_strided_slice %1498 {offsets = [0, 4], sizes = [32, 1], strides = [1, 1]} : vector<32x8xf32> to vector<32x1xf32>
    %1782 = vector.broadcast %1781 : vector<32x1xf32> to vector<32x128xf32>
    %1783 = arith.mulf %1782, %1768 : vector<32x128xf32>
    %cst_241 = arith.constant dense<0.000000e+00> : vector<128xf32>
    %1784 = vector.multi_reduction <add>, %1783, %cst_241 [0] : vector<32x128xf32> to vector<128xf32>
    %1785 = vector.shape_cast %1784 : vector<128xf32> to vector<1x128xf32>
    %1786 = arith.mulf %1781, %1774 : vector<32x1xf32>
    %cst_242 = arith.constant dense<0xFF800000> : vector<1xf32>
    %1787 = vector.multi_reduction <maximumf>, %1786, %cst_242 [0] : vector<32x1xf32> to vector<1xf32>
    %1788 = vector.shape_cast %1787 : vector<1xf32> to vector<1x1xf32>
    %1789 = vector.broadcast %1788 : vector<1x1xf32> to vector<32x1xf32>
    %1790 = arith.subf %1786, %1789 : vector<32x1xf32>
    %1791 = math.exp %1790 : vector<32x1xf32>
    %cst_243 = arith.constant dense<0.000000e+00> : vector<1xf32>
    %1792 = vector.multi_reduction <add>, %1791, %cst_243 [0] : vector<32x1xf32> to vector<1xf32>
    %1793 = vector.shape_cast %1792 : vector<1xf32> to vector<1x1xf32>
    %1794 = tpu.reciprocal %1793 {approx = true} : vector<1x1xf32> -> vector<1x1xf32>
    %1795 = vector.broadcast %1794 : vector<1x1xf32> to vector<32x1xf32>
    %1796 = arith.mulf %1791, %1795 : vector<32x1xf32>
    %1797 = arith.mulf %1781, %1780 : vector<32x1xf32>
    %cst_244 = arith.constant dense<0xFF800000> : vector<1xf32>
    %1798 = vector.multi_reduction <maximumf>, %1797, %cst_244 [0] : vector<32x1xf32> to vector<1xf32>
    %1799 = vector.shape_cast %1798 : vector<1xf32> to vector<1x1xf32>
    %1800 = vector.broadcast %1799 : vector<1x1xf32> to vector<32x1xf32>
    %1801 = arith.subf %1797, %1800 : vector<32x1xf32>
    %1802 = math.exp %1801 : vector<32x1xf32>
    %cst_245 = arith.constant dense<0.000000e+00> : vector<1xf32>
    %1803 = vector.multi_reduction <add>, %1802, %cst_245 [0] : vector<32x1xf32> to vector<1xf32>
    %1804 = vector.shape_cast %1803 : vector<1xf32> to vector<1x1xf32>
    %1805 = tpu.reciprocal %1804 {approx = true} : vector<1x1xf32> -> vector<1x1xf32>
    %1806 = vector.broadcast %1805 : vector<1x1xf32> to vector<32x1xf32>
    %1807 = arith.mulf %1802, %1806 : vector<32x1xf32>
    %1808 = arith.subf %1796, %1807 : vector<32x1xf32>
    %1809 = vector.broadcast %1808 : vector<32x1xf32> to vector<32x128xf32>
    %1810 = arith.mulf %1809, %1768 : vector<32x128xf32>
    %cst_246 = arith.constant dense<0.000000e+00> : vector<128xf32>
    %1811 = vector.multi_reduction <add>, %1810, %cst_246 [0] : vector<32x128xf32> to vector<128xf32>
    %1812 = vector.shape_cast %1811 : vector<128xf32> to vector<1x128xf32>
    %1813 = vector.extract_strided_slice %1785 {offsets = [0, 96], sizes = [1, 1], strides = [1, 1]} : vector<1x128xf32> to vector<1x1xf32>
    %1814 = vector.extract_strided_slice %1785 {offsets = [0, 97], sizes = [1, 1], strides = [1, 1]} : vector<1x128xf32> to vector<1x1xf32>
    %1815 = vector.extract_strided_slice %1785 {offsets = [0, 98], sizes = [1, 1], strides = [1, 1]} : vector<1x128xf32> to vector<1x1xf32>
    %1816 = vector.extract_strided_slice %1785 {offsets = [0, 99], sizes = [1, 1], strides = [1, 1]} : vector<1x128xf32> to vector<1x1xf32>
    %1817 = vector.shape_cast %1815 : vector<1x1xf32> to vector<1x1xf32>
    %1818 = vector.broadcast %1817 : vector<1x1xf32> to vector<1x128xf32>
    %1819 = vector.shape_cast %1816 : vector<1x1xf32> to vector<1x1xf32>
    %1820 = vector.broadcast %1819 : vector<1x1xf32> to vector<1x128xf32>
    %1821 = arith.select %6, %1818, %1820 : vector<1x128xi1>, vector<1x128xf32>
    %1822 = vector.shape_cast %1814 : vector<1x1xf32> to vector<1x1xf32>
    %1823 = vector.broadcast %1822 : vector<1x1xf32> to vector<1x128xf32>
    %1824 = arith.select %4, %1823, %1821 : vector<1x128xi1>, vector<1x128xf32>
    %1825 = vector.shape_cast %1813 : vector<1x1xf32> to vector<1x1xf32>
    %1826 = vector.broadcast %1825 : vector<1x1xf32> to vector<1x128xf32>
    %1827 = arith.select %2, %1826, %1824 : vector<1x128xi1>, vector<1x128xf32>
    %1828 = arith.negf %1827 : vector<1x128xf32>
    %1829 = math.exp %1828 : vector<1x128xf32>
    %cst_247 = arith.constant 1.000000e+00 : f32
    %1830 = vector.broadcast %cst_247 : f32 to vector<1x128xf32>
    %1831 = arith.addf %1830, %1829 : vector<1x128xf32>
    %1832 = arith.divf %1830, %1831 : vector<1x128xf32>
    %1833 = arith.mulf %1832, %1812 : vector<1x128xf32>
    %1834 = vector.broadcast %1807 : vector<32x1xf32> to vector<32x128xf32>
    %1835 = vector.broadcast %1833 : vector<1x128xf32> to vector<32x128xf32>
    %1836 = arith.mulf %1834, %1835 : vector<32x128xf32>
    %1837 = arith.addf %1768, %1836 : vector<32x128xf32>
    %1838 = vector.extract_strided_slice %1833 {offsets = [0, 32], sizes = [1, 32], strides = [1, 1]} : vector<1x128xf32> to vector<1x32xf32>
    %cst_248 = arith.constant dense<0.000000e+00> : vector<1xf32>
    %1839 = vector.multi_reduction <add>, %1838, %cst_248 [1] : vector<1x32xf32> to vector<1xf32>
    %1840 = vector.shape_cast %1839 : vector<1xf32> to vector<1x1xf32>
    %1841 = vector.broadcast %1840 : vector<1x1xf32> to vector<32x1xf32>
    %1842 = arith.mulf %1807, %1841 : vector<32x1xf32>
    %1843 = arith.addf %1774, %1842 : vector<32x1xf32>
    %1844 = vector.extract_strided_slice %1833 {offsets = [0, 64], sizes = [1, 32], strides = [1, 1]} : vector<1x128xf32> to vector<1x32xf32>
    %cst_249 = arith.constant dense<0.000000e+00> : vector<1xf32>
    %1845 = vector.multi_reduction <add>, %1844, %cst_249 [1] : vector<1x32xf32> to vector<1xf32>
    %1846 = vector.shape_cast %1845 : vector<1xf32> to vector<1x1xf32>
    %1847 = vector.broadcast %1846 : vector<1x1xf32> to vector<32x1xf32>
    %1848 = arith.mulf %1807, %1847 : vector<32x1xf32>
    %1849 = arith.addf %1780, %1848 : vector<32x1xf32>
    %1850 = vector.extract_strided_slice %1498 {offsets = [0, 5], sizes = [32, 1], strides = [1, 1]} : vector<32x8xf32> to vector<32x1xf32>
    %1851 = vector.broadcast %1850 : vector<32x1xf32> to vector<32x128xf32>
    %1852 = arith.mulf %1851, %1837 : vector<32x128xf32>
    %cst_250 = arith.constant dense<0.000000e+00> : vector<128xf32>
    %1853 = vector.multi_reduction <add>, %1852, %cst_250 [0] : vector<32x128xf32> to vector<128xf32>
    %1854 = vector.shape_cast %1853 : vector<128xf32> to vector<1x128xf32>
    %1855 = arith.mulf %1850, %1843 : vector<32x1xf32>
    %cst_251 = arith.constant dense<0xFF800000> : vector<1xf32>
    %1856 = vector.multi_reduction <maximumf>, %1855, %cst_251 [0] : vector<32x1xf32> to vector<1xf32>
    %1857 = vector.shape_cast %1856 : vector<1xf32> to vector<1x1xf32>
    %1858 = vector.broadcast %1857 : vector<1x1xf32> to vector<32x1xf32>
    %1859 = arith.subf %1855, %1858 : vector<32x1xf32>
    %1860 = math.exp %1859 : vector<32x1xf32>
    %cst_252 = arith.constant dense<0.000000e+00> : vector<1xf32>
    %1861 = vector.multi_reduction <add>, %1860, %cst_252 [0] : vector<32x1xf32> to vector<1xf32>
    %1862 = vector.shape_cast %1861 : vector<1xf32> to vector<1x1xf32>
    %1863 = tpu.reciprocal %1862 {approx = true} : vector<1x1xf32> -> vector<1x1xf32>
    %1864 = vector.broadcast %1863 : vector<1x1xf32> to vector<32x1xf32>
    %1865 = arith.mulf %1860, %1864 : vector<32x1xf32>
    %1866 = arith.mulf %1850, %1849 : vector<32x1xf32>
    %cst_253 = arith.constant dense<0xFF800000> : vector<1xf32>
    %1867 = vector.multi_reduction <maximumf>, %1866, %cst_253 [0] : vector<32x1xf32> to vector<1xf32>
    %1868 = vector.shape_cast %1867 : vector<1xf32> to vector<1x1xf32>
    %1869 = vector.broadcast %1868 : vector<1x1xf32> to vector<32x1xf32>
    %1870 = arith.subf %1866, %1869 : vector<32x1xf32>
    %1871 = math.exp %1870 : vector<32x1xf32>
    %cst_254 = arith.constant dense<0.000000e+00> : vector<1xf32>
    %1872 = vector.multi_reduction <add>, %1871, %cst_254 [0] : vector<32x1xf32> to vector<1xf32>
    %1873 = vector.shape_cast %1872 : vector<1xf32> to vector<1x1xf32>
    %1874 = tpu.reciprocal %1873 {approx = true} : vector<1x1xf32> -> vector<1x1xf32>
    %1875 = vector.broadcast %1874 : vector<1x1xf32> to vector<32x1xf32>
    %1876 = arith.mulf %1871, %1875 : vector<32x1xf32>
    %1877 = arith.subf %1865, %1876 : vector<32x1xf32>
    %1878 = vector.broadcast %1877 : vector<32x1xf32> to vector<32x128xf32>
    %1879 = arith.mulf %1878, %1837 : vector<32x128xf32>
    %cst_255 = arith.constant dense<0.000000e+00> : vector<128xf32>
    %1880 = vector.multi_reduction <add>, %1879, %cst_255 [0] : vector<32x128xf32> to vector<128xf32>
    %1881 = vector.shape_cast %1880 : vector<128xf32> to vector<1x128xf32>
    %1882 = vector.extract_strided_slice %1854 {offsets = [0, 96], sizes = [1, 1], strides = [1, 1]} : vector<1x128xf32> to vector<1x1xf32>
    %1883 = vector.extract_strided_slice %1854 {offsets = [0, 97], sizes = [1, 1], strides = [1, 1]} : vector<1x128xf32> to vector<1x1xf32>
    %1884 = vector.extract_strided_slice %1854 {offsets = [0, 98], sizes = [1, 1], strides = [1, 1]} : vector<1x128xf32> to vector<1x1xf32>
    %1885 = vector.extract_strided_slice %1854 {offsets = [0, 99], sizes = [1, 1], strides = [1, 1]} : vector<1x128xf32> to vector<1x1xf32>
    %1886 = vector.shape_cast %1884 : vector<1x1xf32> to vector<1x1xf32>
    %1887 = vector.broadcast %1886 : vector<1x1xf32> to vector<1x128xf32>
    %1888 = vector.shape_cast %1885 : vector<1x1xf32> to vector<1x1xf32>
    %1889 = vector.broadcast %1888 : vector<1x1xf32> to vector<1x128xf32>
    %1890 = arith.select %6, %1887, %1889 : vector<1x128xi1>, vector<1x128xf32>
    %1891 = vector.shape_cast %1883 : vector<1x1xf32> to vector<1x1xf32>
    %1892 = vector.broadcast %1891 : vector<1x1xf32> to vector<1x128xf32>
    %1893 = arith.select %4, %1892, %1890 : vector<1x128xi1>, vector<1x128xf32>
    %1894 = vector.shape_cast %1882 : vector<1x1xf32> to vector<1x1xf32>
    %1895 = vector.broadcast %1894 : vector<1x1xf32> to vector<1x128xf32>
    %1896 = arith.select %2, %1895, %1893 : vector<1x128xi1>, vector<1x128xf32>
    %1897 = arith.negf %1896 : vector<1x128xf32>
    %1898 = math.exp %1897 : vector<1x128xf32>
    %cst_256 = arith.constant 1.000000e+00 : f32
    %1899 = vector.broadcast %cst_256 : f32 to vector<1x128xf32>
    %1900 = arith.addf %1899, %1898 : vector<1x128xf32>
    %1901 = arith.divf %1899, %1900 : vector<1x128xf32>
    %1902 = arith.mulf %1901, %1881 : vector<1x128xf32>
    %1903 = vector.broadcast %1876 : vector<32x1xf32> to vector<32x128xf32>
    %1904 = vector.broadcast %1902 : vector<1x128xf32> to vector<32x128xf32>
    %1905 = arith.mulf %1903, %1904 : vector<32x128xf32>
    %1906 = arith.addf %1837, %1905 : vector<32x128xf32>
    %1907 = vector.extract_strided_slice %1902 {offsets = [0, 32], sizes = [1, 32], strides = [1, 1]} : vector<1x128xf32> to vector<1x32xf32>
    %cst_257 = arith.constant dense<0.000000e+00> : vector<1xf32>
    %1908 = vector.multi_reduction <add>, %1907, %cst_257 [1] : vector<1x32xf32> to vector<1xf32>
    %1909 = vector.shape_cast %1908 : vector<1xf32> to vector<1x1xf32>
    %1910 = vector.broadcast %1909 : vector<1x1xf32> to vector<32x1xf32>
    %1911 = arith.mulf %1876, %1910 : vector<32x1xf32>
    %1912 = arith.addf %1843, %1911 : vector<32x1xf32>
    %1913 = vector.extract_strided_slice %1902 {offsets = [0, 64], sizes = [1, 32], strides = [1, 1]} : vector<1x128xf32> to vector<1x32xf32>
    %cst_258 = arith.constant dense<0.000000e+00> : vector<1xf32>
    %1914 = vector.multi_reduction <add>, %1913, %cst_258 [1] : vector<1x32xf32> to vector<1xf32>
    %1915 = vector.shape_cast %1914 : vector<1xf32> to vector<1x1xf32>
    %1916 = vector.broadcast %1915 : vector<1x1xf32> to vector<32x1xf32>
    %1917 = arith.mulf %1876, %1916 : vector<32x1xf32>
    %1918 = arith.addf %1849, %1917 : vector<32x1xf32>
    %1919 = vector.extract_strided_slice %1498 {offsets = [0, 6], sizes = [32, 1], strides = [1, 1]} : vector<32x8xf32> to vector<32x1xf32>
    %1920 = vector.broadcast %1919 : vector<32x1xf32> to vector<32x128xf32>
    %1921 = arith.mulf %1920, %1906 : vector<32x128xf32>
    %cst_259 = arith.constant dense<0.000000e+00> : vector<128xf32>
    %1922 = vector.multi_reduction <add>, %1921, %cst_259 [0] : vector<32x128xf32> to vector<128xf32>
    %1923 = vector.shape_cast %1922 : vector<128xf32> to vector<1x128xf32>
    %1924 = arith.mulf %1919, %1912 : vector<32x1xf32>
    %cst_260 = arith.constant dense<0xFF800000> : vector<1xf32>
    %1925 = vector.multi_reduction <maximumf>, %1924, %cst_260 [0] : vector<32x1xf32> to vector<1xf32>
    %1926 = vector.shape_cast %1925 : vector<1xf32> to vector<1x1xf32>
    %1927 = vector.broadcast %1926 : vector<1x1xf32> to vector<32x1xf32>
    %1928 = arith.subf %1924, %1927 : vector<32x1xf32>
    %1929 = math.exp %1928 : vector<32x1xf32>
    %cst_261 = arith.constant dense<0.000000e+00> : vector<1xf32>
    %1930 = vector.multi_reduction <add>, %1929, %cst_261 [0] : vector<32x1xf32> to vector<1xf32>
    %1931 = vector.shape_cast %1930 : vector<1xf32> to vector<1x1xf32>
    %1932 = tpu.reciprocal %1931 {approx = true} : vector<1x1xf32> -> vector<1x1xf32>
    %1933 = vector.broadcast %1932 : vector<1x1xf32> to vector<32x1xf32>
    %1934 = arith.mulf %1929, %1933 : vector<32x1xf32>
    %1935 = arith.mulf %1919, %1918 : vector<32x1xf32>
    %cst_262 = arith.constant dense<0xFF800000> : vector<1xf32>
    %1936 = vector.multi_reduction <maximumf>, %1935, %cst_262 [0] : vector<32x1xf32> to vector<1xf32>
    %1937 = vector.shape_cast %1936 : vector<1xf32> to vector<1x1xf32>
    %1938 = vector.broadcast %1937 : vector<1x1xf32> to vector<32x1xf32>
    %1939 = arith.subf %1935, %1938 : vector<32x1xf32>
    %1940 = math.exp %1939 : vector<32x1xf32>
    %cst_263 = arith.constant dense<0.000000e+00> : vector<1xf32>
    %1941 = vector.multi_reduction <add>, %1940, %cst_263 [0] : vector<32x1xf32> to vector<1xf32>
    %1942 = vector.shape_cast %1941 : vector<1xf32> to vector<1x1xf32>
    %1943 = tpu.reciprocal %1942 {approx = true} : vector<1x1xf32> -> vector<1x1xf32>
    %1944 = vector.broadcast %1943 : vector<1x1xf32> to vector<32x1xf32>
    %1945 = arith.mulf %1940, %1944 : vector<32x1xf32>
    %1946 = arith.subf %1934, %1945 : vector<32x1xf32>
    %1947 = vector.broadcast %1946 : vector<32x1xf32> to vector<32x128xf32>
    %1948 = arith.mulf %1947, %1906 : vector<32x128xf32>
    %cst_264 = arith.constant dense<0.000000e+00> : vector<128xf32>
    %1949 = vector.multi_reduction <add>, %1948, %cst_264 [0] : vector<32x128xf32> to vector<128xf32>
    %1950 = vector.shape_cast %1949 : vector<128xf32> to vector<1x128xf32>
    %1951 = vector.extract_strided_slice %1923 {offsets = [0, 96], sizes = [1, 1], strides = [1, 1]} : vector<1x128xf32> to vector<1x1xf32>
    %1952 = vector.extract_strided_slice %1923 {offsets = [0, 97], sizes = [1, 1], strides = [1, 1]} : vector<1x128xf32> to vector<1x1xf32>
    %1953 = vector.extract_strided_slice %1923 {offsets = [0, 98], sizes = [1, 1], strides = [1, 1]} : vector<1x128xf32> to vector<1x1xf32>
    %1954 = vector.extract_strided_slice %1923 {offsets = [0, 99], sizes = [1, 1], strides = [1, 1]} : vector<1x128xf32> to vector<1x1xf32>
    %1955 = vector.shape_cast %1953 : vector<1x1xf32> to vector<1x1xf32>
    %1956 = vector.broadcast %1955 : vector<1x1xf32> to vector<1x128xf32>
    %1957 = vector.shape_cast %1954 : vector<1x1xf32> to vector<1x1xf32>
    %1958 = vector.broadcast %1957 : vector<1x1xf32> to vector<1x128xf32>
    %1959 = arith.select %6, %1956, %1958 : vector<1x128xi1>, vector<1x128xf32>
    %1960 = vector.shape_cast %1952 : vector<1x1xf32> to vector<1x1xf32>
    %1961 = vector.broadcast %1960 : vector<1x1xf32> to vector<1x128xf32>
    %1962 = arith.select %4, %1961, %1959 : vector<1x128xi1>, vector<1x128xf32>
    %1963 = vector.shape_cast %1951 : vector<1x1xf32> to vector<1x1xf32>
    %1964 = vector.broadcast %1963 : vector<1x1xf32> to vector<1x128xf32>
    %1965 = arith.select %2, %1964, %1962 : vector<1x128xi1>, vector<1x128xf32>
    %1966 = arith.negf %1965 : vector<1x128xf32>
    %1967 = math.exp %1966 : vector<1x128xf32>
    %cst_265 = arith.constant 1.000000e+00 : f32
    %1968 = vector.broadcast %cst_265 : f32 to vector<1x128xf32>
    %1969 = arith.addf %1968, %1967 : vector<1x128xf32>
    %1970 = arith.divf %1968, %1969 : vector<1x128xf32>
    %1971 = arith.mulf %1970, %1950 : vector<1x128xf32>
    %1972 = vector.broadcast %1945 : vector<32x1xf32> to vector<32x128xf32>
    %1973 = vector.broadcast %1971 : vector<1x128xf32> to vector<32x128xf32>
    %1974 = arith.mulf %1972, %1973 : vector<32x128xf32>
    %1975 = arith.addf %1906, %1974 : vector<32x128xf32>
    %1976 = vector.extract_strided_slice %1498 {offsets = [0, 7], sizes = [32, 1], strides = [1, 1]} : vector<32x8xf32> to vector<32x1xf32>
    %1977 = vector.broadcast %1976 : vector<32x1xf32> to vector<32x128xf32>
    %1978 = arith.mulf %1977, %1975 : vector<32x128xf32>
    %cst_266 = arith.constant dense<0.000000e+00> : vector<128xf32>
    %1979 = vector.multi_reduction <add>, %1978, %cst_266 [0] : vector<32x128xf32> to vector<128xf32>
    %1980 = vector.shape_cast %1979 : vector<128xf32> to vector<1x128xf32>
    %1981 = vector.extract_strided_slice %1980 {offsets = [0, 0], sizes = [1, 32], strides = [1, 1]} : vector<1x128xf32> to vector<1x32xf32>
    %1982 = tpu.concatenate %508, %999, %1490, %1981 in 1 : vector<1x32xf32>, vector<1x32xf32>, vector<1x32xf32>, vector<1x32xf32> -> vector<1x128xf32>
    %c0_267 = arith.constant 0 : index
    %c0_268 = arith.constant 0 : index
    %1983 = vector.load %arg7[%c0_267, %c0_268] : memref<128x128xf32, #tpu.memory_space<vmem>>, vector<128x128xf32>
    %cst_269 = arith.constant dense<0.000000e+00> : vector<1x128xf32>
    %1984 = tpu.matmul %1982, %1983, %cst_269 {dimension_numbers = #tpu.dot_dimension_numbers<[1], [0], [0], [1], [0, 0, 1, 1], [], []>} : vector<1x128xf32>, vector<128x128xf32>, vector<1x128xf32> -> vector<1x128xf32>
    %c0_270 = arith.constant 0 : index
    %c0_271 = arith.constant 0 : index
    %1985 = vector.load %arg8[%c0_270, %c0_271] : memref<1x128xf32, #tpu.memory_space<vmem>>, vector<1x128xf32>
    %c0_272 = arith.constant 0 : index
    %c0_273 = arith.constant 0 : index
    %1986 = vector.load %arg9[%c0_272, %c0_273] : memref<1x128xf32, #tpu.memory_space<vmem>>, vector<1x128xf32>
    %c0_274 = arith.constant 0 : index
    %c0_275 = arith.constant 0 : index
    %1987 = vector.load %arg10[%c0_274, %c0_275] : memref<1x128xf32, #tpu.memory_space<vmem>>, vector<1x128xf32>
    %c0_276 = arith.constant 0 : index
    %c0_277 = arith.constant 0 : index
    %1988 = vector.load %arg11[%c0_276, %c0_277] : memref<1x1xf32, #tpu.memory_space<vmem>>, vector<1x1xf32>
    %1989 = arith.addf %17, %1984 : vector<1x128xf32>
    %cst_278 = arith.constant dense<0.000000e+00> : vector<1xf32>
    %1990 = vector.multi_reduction <add>, %1989, %cst_278 [1] : vector<1x128xf32> to vector<1xf32>
    %1991 = vector.shape_cast %1990 : vector<1xf32> to vector<1x1xf32>
    %cst_279 = arith.constant 1.280000e+02 : f32
    %1992 = vector.broadcast %cst_279 : f32 to vector<1x1xf32>
    %1993 = arith.divf %1991, %1992 : vector<1x1xf32>
    %1994 = vector.broadcast %1993 : vector<1x1xf32> to vector<1x128xf32>
    %1995 = arith.subf %1989, %1994 : vector<1x128xf32>
    %1996 = arith.mulf %1995, %1995 : vector<1x128xf32>
    %cst_280 = arith.constant dense<0.000000e+00> : vector<1xf32>
    %1997 = vector.multi_reduction <add>, %1996, %cst_280 [1] : vector<1x128xf32> to vector<1xf32>
    %1998 = vector.shape_cast %1997 : vector<1xf32> to vector<1x1xf32>
    %cst_281 = arith.constant 1.280000e+02 : f32
    %1999 = vector.broadcast %cst_281 : f32 to vector<1x1xf32>
    %2000 = arith.divf %1998, %1999 : vector<1x1xf32>
    %cst_282 = arith.constant 9.99999974E-6 : f32
    %2001 = vector.broadcast %cst_282 : f32 to vector<1x1xf32>
    %2002 = arith.addf %2000, %2001 : vector<1x1xf32>
    %2003 = math.rsqrt %2002 : vector<1x1xf32>
    %2004 = vector.broadcast %2003 : vector<1x1xf32> to vector<1x128xf32>
    %2005 = arith.mulf %1995, %2004 : vector<1x128xf32>
    %2006 = arith.mulf %2005, %1985 : vector<1x128xf32>
    %2007 = arith.addf %2006, %1986 : vector<1x128xf32>
    %2008 = arith.mulf %2007, %1987 : vector<1x128xf32>
    %cst_283 = arith.constant dense<0.000000e+00> : vector<1xf32>
    %2009 = vector.multi_reduction <add>, %2008, %cst_283 [1] : vector<1x128xf32> to vector<1xf32>
    %2010 = vector.shape_cast %2009 : vector<1xf32> to vector<1x1xf32>
    %2011 = arith.addf %2010, %1988 : vector<1x1xf32>
    %c0_284 = arith.constant 0 : index
    %c0_285 = arith.constant 0 : index
    %c0_286 = arith.constant 0 : index
    %2012 = vector.load %arg12[%c0_284, %c0_285, %c0_286] : memref<1x1x1xf32, #tpu.memory_space<vmem>>, vector<1x1x1xf32>
    %2013 = vector.shape_cast %2012 : vector<1x1x1xf32> to vector<1x1xf32>
    %2014 = vector.shape_cast %2011 : vector<1x1xf32> to vector<1x1x1xf32>
    tpu.vector_store %arg12[%c0_284, %c0_285, %c0_286], %2014 {strides = array<i32>} : memref<1x1x1xf32, #tpu.memory_space<vmem>>, vector<1x1x1xf32>,
    return
  }
  func.func @transform_0(%arg0: i32) -> (i32, i32, i32) {
    %c0_i32 = arith.constant 0 : i32
    %c0_i32_0 = arith.constant 0 : i32
    %c0_i32_1 = arith.constant 0 : i32
    return %arg0, %c0_i32, %c0_i32_0 : i32, i32, i32
  }
  func.func @transform_1(%arg0: i32) -> (i32, i32) {
    %c0_i32 = arith.constant 0 : i32
    %c0_i32_0 = arith.constant 0 : i32
    %c0_i32_1 = arith.constant 0 : i32
    return %c0_i32, %c0_i32_0 : i32, i32
  }
  func.func @transform_2(%arg0: i32) -> (i32, i32) {
    %c0_i32 = arith.constant 0 : i32
    %c0_i32_0 = arith.constant 0 : i32
    %c0_i32_1 = arith.constant 0 : i32
    return %c0_i32, %c0_i32_0 : i32, i32
  }
  func.func @transform_3(%arg0: i32) -> (i32, i32) {
    %c0_i32 = arith.constant 0 : i32
    %c0_i32_0 = arith.constant 0 : i32
    %c0_i32_1 = arith.constant 0 : i32
    return %c0_i32, %c0_i32_0 : i32, i32
  }
  func.func @transform_4(%arg0: i32) -> (i32, i32) {
    %c0_i32 = arith.constant 0 : i32
    %c0_i32_0 = arith.constant 0 : i32
    %c0_i32_1 = arith.constant 0 : i32
    return %c0_i32, %c0_i32_0 : i32, i32
  }
  func.func @transform_5(%arg0: i32) -> (i32, i32) {
    %c0_i32 = arith.constant 0 : i32
    %c0_i32_0 = arith.constant 0 : i32
    %c0_i32_1 = arith.constant 0 : i32
    return %c0_i32, %c0_i32_0 : i32, i32
  }
  func.func @transform_6(%arg0: i32) -> (i32, i32) {
    %c0_i32 = arith.constant 0 : i32
    %c0_i32_0 = arith.constant 0 : i32
    %c0_i32_1 = arith.constant 0 : i32
    return %c0_i32, %c0_i32_0 : i32, i32
  }
  func.func @transform_7(%arg0: i32) -> (i32, i32) {
    %c0_i32 = arith.constant 0 : i32
    %c0_i32_0 = arith.constant 0 : i32
    %c0_i32_1 = arith.constant 0 : i32
    return %c0_i32, %c0_i32_0 : i32, i32
  }
  func.func @transform_8(%arg0: i32) -> (i32, i32) {
    %c0_i32 = arith.constant 0 : i32
    %c0_i32_0 = arith.constant 0 : i32
    %c0_i32_1 = arith.constant 0 : i32
    return %c0_i32, %c0_i32_0 : i32, i32
  }
  func.func @transform_9(%arg0: i32) -> (i32, i32) {
    %c0_i32 = arith.constant 0 : i32
    %c0_i32_0 = arith.constant 0 : i32
    %c0_i32_1 = arith.constant 0 : i32
    return %c0_i32, %c0_i32_0 : i32, i32
  }
  func.func @transform_10(%arg0: i32) -> (i32, i32) {
    %c0_i32 = arith.constant 0 : i32
    %c0_i32_0 = arith.constant 0 : i32
    %c0_i32_1 = arith.constant 0 : i32
    return %c0_i32, %c0_i32_0 : i32, i32
  }
  func.func @transform_11(%arg0: i32) -> (i32, i32, i32) {
    %c0_i32 = arith.constant 0 : i32
    %c0_i32_0 = arith.constant 0 : i32
    %c0_i32_1 = arith.constant 0 : i32
    return %arg0, %c0_i32, %c0_i32_0 : i32, i32, i32
  }
}

</mosaic_0001>

<llo_original>
// kernel: srwm_predictor_forward.1
$region0: #{srwm_predictor_forward.1}
  #allocation0 [shape = 'u32[]', space=smem, size = 0x4, offset = 0x4, fixed_abs, tag = 'smem constant byte address 0x4 - core index']
  #allocation1 [shape = 'u32[144,128]{1,0:T(1,128)}', space=vmem, size = 0x12000, scoped, tag = 'internal scratch']
  #allocation2 [shape = 'f32[1,1]{1,0:T(1,128)S(1)}', space=vmem, size = 0x200, scoped, tag = 'scoped memory for srwm_predictor_forward.1']
  %s0 = inlined_call_operand.vmem [shape: f32[2,1,8], index: 0, kind: input, shape index: {}]
  %s1 = inlined_call_operand.vmem [shape: f32[1,128], index: 1, kind: input, shape index: {}]
  %s2 = inlined_call_operand.vmem [shape: f32[1,128], index: 2, kind: input, shape index: {}]
  %s3 = inlined_call_operand.vmem [shape: f32[128,1], index: 3, kind: input, shape index: {}]
  %s4 = inlined_call_operand.vmem [shape: f32[128,1], index: 4, kind: input, shape index: {}]
  %s5 = inlined_call_operand.vmem [shape: f32[128,128], index: 5, kind: input, shape index: {}]
  %s6 = inlined_call_operand.vmem [shape: f32[128,128], index: 6, kind: input, shape index: {}]
  %s7 = inlined_call_operand.vmem [shape: f32[1,128], index: 7, kind: input, shape index: {}]
  %s8 = inlined_call_operand.vmem [shape: f32[1,128], index: 8, kind: input, shape index: {}]
  %s9 = inlined_call_operand.vmem [shape: f32[1,128], index: 9, kind: input, shape index: {}]
  %s10 = inlined_call_operand.<no memory space> [shape: f32[1,1], index: 10, kind: input, shape index: {}]
  %s11 = inlined_call_operand.vmem [shape: f32[2,1,1], index: 11, kind: output, shape index: {}]
  %s12 = sld [smem:[#allocation0]]
  $region77: #{srwm_predictor_forward.1} parent=0
    _
  %s14 = ssub.s32 1, %s12
  %s15 = scalar_select 0, %s14, %s12
  %v16 = vstv %s10
  %17 = vst [vmem:[#allocation2] sm:$0x1] %v16
  loop: start=0, step=1, limit=4
  $region2: #{srwm_predictor_forward.1} parent=0 // loop_pre_header
    _
  $region3: #{srwm_predictor_forward.1} parent=0 // loop_header
    %s19 = sphi 0, %s23
    %p20 = scmp.ge.s32.totalorder %s19, 4
    %s29 = sphi 0, %s31
    %s32 = sphi 0, %s29
    %s33 = sphi 0, %s32
    %s49 = sphi 0, %s33
    %s53 = sphi 0, %s53
    %s55 = sphi 0, %s53
    %s56 = sphi 0, %s55
    %s70 = sphi 0, %s56
    %s74 = sphi 0, %s74
    %s76 = sphi 0, %s74
    %s77 = sphi 0, %s76
    %s91 = sphi 0, %s77
    %s95 = sphi 0, %s95
    %s97 = sphi 0, %s95
    %s98 = sphi 0, %s97
    %s112 = sphi 0, %s98
    %s116 = sphi 0, %s116
    %s118 = sphi 0, %s116
    %s119 = sphi 0, %s118
    %s133 = sphi 0, %s119
    %s137 = sphi 0, %s137
    %s139 = sphi 0, %s137
    %s140 = sphi 0, %s139
    %s154 = sphi 0, %s140
    %s158 = sphi 0, %s158
    %s160 = sphi 0, %s158
    %s161 = sphi 0, %s160
    %s175 = sphi 0, %s161
    %s179 = sphi 0, %s179
    %s181 = sphi 0, %s179
    %s182 = sphi 0, %s181
    %s196 = sphi 0, %s182
    %s200 = sphi 0, %s200
    %s202 = sphi 0, %s200
    %s203 = sphi 0, %s202
    %s217 = sphi 0, %s203
    %s221 = sphi 0, %s221
    %s223 = sphi 0, %s221
    %s224 = sphi 0, %s223
    %s238 = sphi 0, %s224
    %s242 = sphi 0, %s242
    %s244 = sphi 0, %s242
    %s245 = sphi 0, %s244
    %s259 = sphi 0, %s245
    %s265 = sphi 0, %s267
    %s268 = sphi 0, %s265
    %s269 = sphi 0, %s268
    %s285 = sphi 0, %s269
  $region4: #{srwm_predictor_forward.1} parent=0 // loop_header_branch
    %22 = sbr.rel (%p20) target = $region8
  $region5: #{srwm_predictor_forward.1} parent=0 // loop_body
    %s24 = ssub.s32 %s19, 1
    %s25 = ssub.s32 %s19, 2
    %s26 = sadd.s32 %s19, 1
    %s27 = ssub.s32 %s19, %s26
    %p28 = scmp.eq.s32.totalorder %s27, 0
    %s30 = sadd.s32 %s29, 1
    %s31 = scalar_select %p28, %s29, %s30
    %p34 = pneg %p28
    %p35 = scmp.eq.s32.totalorder %s19, 1
    %p36 = por %p34, %p35
    %p37 = scmp.ne.s32.totalorder %s29, %s32
    %p38 = scmp.eq.s32.totalorder %s19, 0
    %p39 = por %p37, %p38
    %p40 = scmp.ne.s32.totalorder %s29, %s32
    %p41 = scmp.eq.s32.totalorder %s24, 1
    %p42 = por %p40, %p41
    %p43 = scmp.ne.s32.totalorder %s32, %s33
    %p44 = scmp.eq.s32.totalorder %s24, 0
    %p45 = por %p43, %p44
    %p46 = scmp.ne.s32.totalorder %s32, %s33
    %p47 = scmp.eq.s32.totalorder %s25, 1
    %p48 = por %p46, %p47
    %p50 = scmp.ne.s32.totalorder %s33, %s49
    %p51 = scmp.eq.s32.totalorder %s25, 0
    %p52 = por %p50, %p51
    %s54 = sadd.s32 %s53, 1
    %p57 = scmp.eq.s32.totalorder %s19, 1
    %p58 = scmp.ne.s32.totalorder %s53, %s55
    %p59 = scmp.eq.s32.totalorder %s19, 0
    %p60 = por %p58, %p59
    %p61 = scmp.ne.s32.totalorder %s53, %s55
    %p62 = scmp.eq.s32.totalorder %s24, 1
    %p63 = por %p61, %p62
    %p64 = scmp.ne.s32.totalorder %s55, %s56
    %p65 = scmp.eq.s32.totalorder %s24, 0
    %p66 = por %p64, %p65
    %p67 = scmp.ne.s32.totalorder %s55, %s56
    %p68 = scmp.eq.s32.totalorder %s25, 1
    %p69 = por %p67, %p68
    %p71 = scmp.ne.s32.totalorder %s56, %s70
    %p72 = scmp.eq.s32.totalorder %s25, 0
    %p73 = por %p71, %p72
    %s75 = sadd.s32 %s74, 1
    %p78 = scmp.eq.s32.totalorder %s19, 1
    %p79 = scmp.ne.s32.totalorder %s74, %s76
    %p80 = scmp.eq.s32.totalorder %s19, 0
    %p81 = por %p79, %p80
    %p82 = scmp.ne.s32.totalorder %s74, %s76
    %p83 = scmp.eq.s32.totalorder %s24, 1
    %p84 = por %p82, %p83
    %p85 = scmp.ne.s32.totalorder %s76, %s77
    %p86 = scmp.eq.s32.totalorder %s24, 0
    %p87 = por %p85, %p86
    %p88 = scmp.ne.s32.totalorder %s76, %s77
    %p89 = scmp.eq.s32.totalorder %s25, 1
    %p90 = por %p88, %p89
    %p92 = scmp.ne.s32.totalorder %s77, %s91
    %p93 = scmp.eq.s32.totalorder %s25, 0
    %p94 = por %p92, %p93
    %s96 = sadd.s32 %s95, 1
    %p99 = scmp.eq.s32.totalorder %s19, 1
    %p100 = scmp.ne.s32.totalorder %s95, %s97
    %p101 = scmp.eq.s32.totalorder %s19, 0
    %p102 = por %p100, %p101
    %p103 = scmp.ne.s32.totalorder %s95, %s97
    %p104 = scmp.eq.s32.totalorder %s24, 1
    %p105 = por %p103, %p104
    %p106 = scmp.ne.s32.totalorder %s97, %s98
    %p107 = scmp.eq.s32.totalorder %s24, 0
    %p108 = por %p106, %p107
    %p109 = scmp.ne.s32.totalorder %s97, %s98
    %p110 = scmp.eq.s32.totalorder %s25, 1
    %p111 = por %p109, %p110
    %p113 = scmp.ne.s32.totalorder %s98, %s112
    %p114 = scmp.eq.s32.totalorder %s25, 0
    %p115 = por %p113, %p114
    %s117 = sadd.s32 %s116, 1
    %p120 = scmp.eq.s32.totalorder %s19, 1
    %p121 = scmp.ne.s32.totalorder %s116, %s118
    %p122 = scmp.eq.s32.totalorder %s19, 0
    %p123 = por %p121, %p122
    %p124 = scmp.ne.s32.totalorder %s116, %s118
    %p125 = scmp.eq.s32.totalorder %s24, 1
    %p126 = por %p124, %p125
    %p127 = scmp.ne.s32.totalorder %s118, %s119
    %p128 = scmp.eq.s32.totalorder %s24, 0
    %p129 = por %p127, %p128
    %p130 = scmp.ne.s32.totalorder %s118, %s119
    %p131 = scmp.eq.s32.totalorder %s25, 1
    %p132 = por %p130, %p131
    %p134 = scmp.ne.s32.totalorder %s119, %s133
    %p135 = scmp.eq.s32.totalorder %s25, 0
    %p136 = por %p134, %p135
    %s138 = sadd.s32 %s137, 1
    %p141 = scmp.eq.s32.totalorder %s19, 1
    %p142 = scmp.ne.s32.totalorder %s137, %s139
    %p143 = scmp.eq.s32.totalorder %s19, 0
    %p144 = por %p142, %p143
    %p145 = scmp.ne.s32.totalorder %s137, %s139
    %p146 = scmp.eq.s32.totalorder %s24, 1
    %p147 = por %p145, %p146
    %p148 = scmp.ne.s32.totalorder %s139, %s140
    %p149 = scmp.eq.s32.totalorder %s24, 0
    %p150 = por %p148, %p149
    %p151 = scmp.ne.s32.totalorder %s139, %s140
    %p152 = scmp.eq.s32.totalorder %s25, 1
    %p153 = por %p151, %p152
    %p155 = scmp.ne.s32.totalorder %s140, %s154
    %p156 = scmp.eq.s32.totalorder %s25, 0
    %p157 = por %p155, %p156
    %s159 = sadd.s32 %s158, 1
    %p162 = scmp.eq.s32.totalorder %s19, 1
    %p163 = scmp.ne.s32.totalorder %s158, %s160
    %p164 = scmp.eq.s32.totalorder %s19, 0
    %p165 = por %p163, %p164
    %p166 = scmp.ne.s32.totalorder %s158, %s160
    %p167 = scmp.eq.s32.totalorder %s24, 1
    %p168 = por %p166, %p167
    %p169 = scmp.ne.s32.totalorder %s160, %s161
    %p170 = scmp.eq.s32.totalorder %s24, 0
    %p171 = por %p169, %p170
    %p172 = scmp.ne.s32.totalorder %s160, %s161
    %p173 = scmp.eq.s32.totalorder %s25, 1
    %p174 = por %p172, %p173
    %p176 = scmp.ne.s32.totalorder %s161, %s175
    %p177 = scmp.eq.s32.totalorder %s25, 0
    %p178 = por %p176, %p177
    %s180 = sadd.s32 %s179, 1
    %p183 = scmp.eq.s32.totalorder %s19, 1
    %p184 = scmp.ne.s32.totalorder %s179, %s181
    %p185 = scmp.eq.s32.totalorder %s19, 0
    %p186 = por %p184, %p185
    %p187 = scmp.ne.s32.totalorder %s179, %s181
    %p188 = scmp.eq.s32.totalorder %s24, 1
    %p189 = por %p187, %p188
    %p190 = scmp.ne.s32.totalorder %s181, %s182
    %p191 = scmp.eq.s32.totalorder %s24, 0
    %p192 = por %p190, %p191
    %p193 = scmp.ne.s32.totalorder %s181, %s182
    %p194 = scmp.eq.s32.totalorder %s25, 1
    %p195 = por %p193, %p194
    %p197 = scmp.ne.s32.totalorder %s182, %s196
    %p198 = scmp.eq.s32.totalorder %s25, 0
    %p199 = por %p197, %p198
    %s201 = sadd.s32 %s200, 1
    %p204 = scmp.eq.s32.totalorder %s19, 1
    %p205 = scmp.ne.s32.totalorder %s200, %s202
    %p206 = scmp.eq.s32.totalorder %s19, 0
    %p207 = por %p205, %p206
    %p208 = scmp.ne.s32.totalorder %s200, %s202
    %p209 = scmp.eq.s32.totalorder %s24, 1
    %p210 = por %p208, %p209
    %p211 = scmp.ne.s32.totalorder %s202, %s203
    %p212 = scmp.eq.s32.totalorder %s24, 0
    %p213 = por %p211, %p212
    %p214 = scmp.ne.s32.totalorder %s202, %s203
    %p215 = scmp.eq.s32.totalorder %s25, 1
    %p216 = por %p214, %p215
    %p218 = scmp.ne.s32.totalorder %s203, %s217
    %p219 = scmp.eq.s32.totalorder %s25, 0
    %p220 = por %p218, %p219
    %s222 = sadd.s32 %s221, 1
    %p225 = scmp.eq.s32.totalorder %s19, 1
    %p226 = scmp.ne.s32.totalorder %s221, %s223
    %p227 = scmp.eq.s32.totalorder %s19, 0
    %p228 = por %p226, %p227
    %p229 = scmp.ne.s32.totalorder %s221, %s223
    %p230 = scmp.eq.s32.totalorder %s24, 1
    %p231 = por %p229, %p230
    %p232 = scmp.ne.s32.totalorder %s223, %s224
    %p233 = scmp.eq.s32.totalorder %s24, 0
    %p234 = por %p232, %p233
    %p235 = scmp.ne.s32.totalorder %s223, %s224
    %p236 = scmp.eq.s32.totalorder %s25, 1
    %p237 = por %p235, %p236
    %p239 = scmp.ne.s32.totalorder %s224, %s238
    %p240 = scmp.eq.s32.totalorder %s25, 0
    %p241 = por %p239, %p240
    %s243 = sadd.s32 %s242, 1
    %p246 = scmp.eq.s32.totalorder %s19, 1
    %p247 = scmp.ne.s32.totalorder %s242, %s244
    %p248 = scmp.eq.s32.totalorder %s19, 0
    %p249 = por %p247, %p248
    %p250 = scmp.ne.s32.totalorder %s242, %s244
    %p251 = scmp.eq.s32.totalorder %s24, 1
    %p252 = por %p250, %p251
    %p253 = scmp.ne.s32.totalorder %s244, %s245
    %p254 = scmp.eq.s32.totalorder %s24, 0
    %p255 = por %p253, %p254
    %p256 = scmp.ne.s32.totalorder %s244, %s245
    %p257 = scmp.eq.s32.totalorder %s25, 1
    %p258 = por %p256, %p257
    %p260 = scmp.ne.s32.totalorder %s245, %s259
    %p261 = scmp.eq.s32.totalorder %s25, 0
    %p262 = por %p260, %p261
    %s263 = ssub.s32 %s19, %s26
    %p264 = scmp.eq.s32.totalorder %s263, 0
    %s266 = sadd.s32 %s265, 1
    %s267 = scalar_select %p264, %s265, %s266
    %p270 = pneg %p264
    %p271 = scmp.eq.s32.totalorder %s19, 1
    %p272 = por %p270, %p271
    %p273 = scmp.ne.s32.totalorder %s265, %s268
    %p274 = scmp.eq.s32.totalorder %s19, 0
    %p275 = por %p273, %p274
    %p276 = scmp.ne.s32.totalorder %s265, %s268
    %p277 = scmp.eq.s32.totalorder %s24, 1
    %p278 = por %p276, %p277
    %p279 = scmp.ne.s32.totalorder %s268, %s269
    %p280 = scmp.eq.s32.totalorder %s24, 0
    %p281 = por %p279, %p280
    %p282 = scmp.ne.s32.totalorder %s268, %s269
    %p283 = scmp.eq.s32.totalorder %s25, 1
    %p284 = por %p282, %p283
    %p286 = scmp.ne.s32.totalorder %s269, %s285
    %p287 = scmp.eq.s32.totalorder %s25, 0
    %p288 = por %p286, %p287
    %p289 = scmp.le.s32.totalorder 1, %s19
    %p290 = scmp.lt.s32.totalorder %s19, 3
    %p291 = pnand %p289, %p290
    %p292 = pneg %p291
    // Predicated region
    $region9: #{srwm_predictor_forward.1} parent=5 // pred_check
      _
    $region10: #{srwm_predictor_forward.1} parent=5 // pred_check_branch
      %294 = sbr.rel (%p291) target = $region12
    $region11: #{srwm_predictor_forward.1} parent=5 // pred_region
      %s295 = ssub.s32 %s19, 1
      // Predicated region
      $region13: #{srwm_predictor_forward.1} parent=11 // pred_check
        %p296 = pneg %p66
      $region14: #{srwm_predictor_forward.1} parent=11 // pred_check_branch
        %298 = sbr.rel (%p296) target = $region16
      $region15: #{srwm_predictor_forward.1} parent=11 // pred_region
        _
      $region16: #{srwm_predictor_forward.1} parent=11 // pred_fallthru
        _
      // Predicated region
      $region17: #{srwm_predictor_forward.1} parent=11 // pred_check
        %p299 = pneg %p87
      $region18: #{srwm_predictor_forward.1} parent=11 // pred_check_branch
        %301 = sbr.rel (%p299) target = $region20
      $region19: #{srwm_predictor_forward.1} parent=11 // pred_region
        _
      $region20: #{srwm_predictor_forward.1} parent=11 // pred_fallthru
        _
      // Predicated region
      $region21: #{srwm_predictor_forward.1} parent=11 // pred_check
        %p302 = pneg %p108
      $region22: #{srwm_predictor_forward.1} parent=11 // pred_check_branch
        %304 = sbr.rel (%p302) target = $region24
      $region23: #{srwm_predictor_forward.1} parent=11 // pred_region
        _
      $region24: #{srwm_predictor_forward.1} parent=11 // pred_fallthru
        _
      // Predicated region
      $region25: #{srwm_predictor_forward.1} parent=11 // pred_check
        %p305 = pneg %p129
      $region26: #{srwm_predictor_forward.1} parent=11 // pred_check_branch
        %307 = sbr.rel (%p305) target = $region28
      $region27: #{srwm_predictor_forward.1} parent=11 // pred_region
        _
      $region28: #{srwm_predictor_forward.1} parent=11 // pred_fallthru
        _
      // Predicated region
      $region29: #{srwm_predictor_forward.1} parent=11 // pred_check
        %p308 = pneg %p150
      $region30: #{srwm_predictor_forward.1} parent=11 // pred_check_branch
        %310 = sbr.rel (%p308) target = $region32
      $region31: #{srwm_predictor_forward.1} parent=11 // pred_region
        _
      $region32: #{srwm_predictor_forward.1} parent=11 // pred_fallthru
        _
      // Predicated region
      $region33: #{srwm_predictor_forward.1} parent=11 // pred_check
        %p311 = pneg %p171
      $region34: #{srwm_predictor_forward.1} parent=11 // pred_check_branch
        %313 = sbr.rel (%p311) target = $region36
      $region35: #{srwm_predictor_forward.1} parent=11 // pred_region
        _
      $region36: #{srwm_predictor_forward.1} parent=11 // pred_fallthru
        _
      // Predicated region
      $region37: #{srwm_predictor_forward.1} parent=11 // pred_check
        %p314 = pneg %p192
      $region38: #{srwm_predictor_forward.1} parent=11 // pred_check_branch
        %316 = sbr.rel (%p314) target = $region40
      $region39: #{srwm_predictor_forward.1} parent=11 // pred_region
        _
      $region40: #{srwm_predictor_forward.1} parent=11 // pred_fallthru
        _
      // Predicated region
      $region41: #{srwm_predictor_forward.1} parent=11 // pred_check
        %p317 = pneg %p213
      $region42: #{srwm_predictor_forward.1} parent=11 // pred_check_branch
        %319 = sbr.rel (%p317) target = $region44
      $region43: #{srwm_predictor_forward.1} parent=11 // pred_region
        _
      $region44: #{srwm_predictor_forward.1} parent=11 // pred_fallthru
        _
      // Predicated region
      $region45: #{srwm_predictor_forward.1} parent=11 // pred_check
        %p320 = pneg %p234
      $region46: #{srwm_predictor_forward.1} parent=11 // pred_check_branch
        %322 = sbr.rel (%p320) target = $region48
      $region47: #{srwm_predictor_forward.1} parent=11 // pred_region
        _
      $region48: #{srwm_predictor_forward.1} parent=11 // pred_fallthru
        _
      // Predicated region
      $region49: #{srwm_predictor_forward.1} parent=11 // pred_check
        %p323 = pneg %p255
      $region50: #{srwm_predictor_forward.1} parent=11 // pred_check_branch
        %325 = sbr.rel (%p323) target = $region52
      $region51: #{srwm_predictor_forward.1} parent=11 // pred_region
        _
      $region52: #{srwm_predictor_forward.1} parent=11 // pred_fallthru
        _
    $region12: #{srwm_predictor_forward.1} parent=5 // pred_fallthru
      _
    %p326 = scmp.lt.s32.totalorder %s19, 2
    // Predicated region
    $region53: #{srwm_predictor_forward.1} parent=5 // pred_check
      %p327 = pneg %p326
    $region54: #{srwm_predictor_forward.1} parent=5 // pred_check_branch
      %329 = sbr.rel (%p327) target = $region56
    $region55: #{srwm_predictor_forward.1} parent=5 // pred_region
      // Predicated region
      $region57: #{srwm_predictor_forward.1} parent=55 // pred_check
        %p330 = pneg %p39
      $region58: #{srwm_predictor_forward.1} parent=55 // pred_check_branch
        %332 = sbr.rel (%p330) target = $region60
      $region59: #{srwm_predictor_forward.1} parent=55 // pred_region
        %p333 = scmp.lt.s32.totalorder %s19, 1
        %s334 = scalar_select %p333, %s19, 1
        %s335 = scalar_lea.vmem %s0, %s334
      $region60: #{srwm_predictor_forward.1} parent=55 // pred_fallthru
        _
    $region56: #{srwm_predictor_forward.1} parent=5 // pred_fallthru
      _
    %p336 = scmp.le.s32.totalorder 1, %s19
    %p337 = scmp.lt.s32.totalorder %s19, 3
    %p338 = pnand %p336, %p337
    %p339 = pneg %p338
    // Predicated region
    $region61: #{srwm_predictor_forward.1} parent=5 // pred_check
      _
    $region62: #{srwm_predictor_forward.1} parent=5 // pred_check_branch
      %341 = sbr.rel (%p338) target = $region64
    $region63: #{srwm_predictor_forward.1} parent=5 // pred_region
      %s342 = ssub.s32 %s19, 1
      %p343 = scmp.lt.s32.totalorder %s24, 1
      %s344 = scalar_select %p343, %s24, 1
      %s345 = scalar_lea.vmem %s0, %s344
      %p346 = pneg %p45
      %p347 = pneg %p42
      %p348 = pneg %p66
      %p349 = pneg %p63
      %p350 = pneg %p87
      %p351 = pneg %p84
      %p352 = pneg %p108
      %p353 = pneg %p105
      %p354 = pneg %p129
      %p355 = pneg %p126
      %p356 = pneg %p150
      %p357 = pneg %p147
      %p358 = pneg %p171
      %p359 = pneg %p168
      %p360 = pneg %p192
      %p361 = pneg %p189
      %p362 = pneg %p213
      %p363 = pneg %p210
      %p364 = pneg %p234
      %p365 = pneg %p231
      %p366 = pneg %p255
      %p367 = pneg %p252
      %p368 = pneg %p281
      %p369 = pneg %p278
      %p370 = scmp.lt.s32.totalorder %s24, 1
      %s371 = scalar_select %p370, %s24, 1
      %s372 = scalar_lea.vmem %s11, %s371
      %p373 = scmp.lt.s32.totalorder %s24, 1
      %s374 = scalar_select %p373, %s24, 1
      %s375 = scalar_lea.vmem %s0, %s374
      %p376 = scmp.lt.s32.totalorder %s24, 1
      %s377 = scalar_select %p376, %s24, 1
      %s378 = scalar_lea.vmem %s11, %s377
      %v379 = vlaneseq
      %v380 = vand.u32 %v379, 127
      %vm381 = vcmp.lt.s32.totalorder %v380, 32
      %vm382 = vcmp.lt.s32.totalorder %v380, 64
      %vm383 = vcmp.lt.s32.totalorder %v380, 96
      %v384 = vld [vmem:[%s1] sm:$0x1]
      %v385 = vld [vmem:[%s2] sm:$0x1]
      %v386 = vld [vmem:[%s3] sm:$0xff]
      %v387 = vld [vmem:[%s3 + $0x8] sm:$0xff]
      %v388 = vld [vmem:[%s3 + $0x10] sm:$0xff]
      %v389 = vld [vmem:[%s3 + $0x18] sm:$0xff]
      %v390 = vld [vmem:[%s3 + $0x20] sm:$0xff]
      %v391 = vld [vmem:[%s3 + $0x28] sm:$0xff]
      %v392 = vld [vmem:[%s3 + $0x30] sm:$0xff]
      %v393 = vld [vmem:[%s3 + $0x38] sm:$0xff]
      %v394 = vld [vmem:[%s3 + $0x40] sm:$0xff]
      %v395 = vld [vmem:[%s3 + $0x48] sm:$0xff]
      %v396 = vld [vmem:[%s3 + $0x50] sm:$0xff]
      %v397 = vld [vmem:[%s3 + $0x58] sm:$0xff]
      %v398 = vld [vmem:[%s3 + $0x60] sm:$0xff]
      %v399 = vld [vmem:[%s3 + $0x68] sm:$0xff]
      %v400 = vld [vmem:[%s3 + $0x70] sm:$0xff]
      %v401 = vld [vmem:[%s3 + $0x78] sm:$0xff]
      %v402 = vld [vmem:[%s4] sm:$0xff]
      %v403 = vld [vmem:[%s4 + $0x8] sm:$0xff]
      %v404 = vld [vmem:[%s4 + $0x10] sm:$0xff]
      %v405 = vld [vmem:[%s4 + $0x18] sm:$0xff]
      %v406 = vld [vmem:[%s4 + $0x20] sm:$0xff]
      %v407 = vld [vmem:[%s4 + $0x28] sm:$0xff]
      %v408 = vld [vmem:[%s4 + $0x30] sm:$0xff]
      %v409 = vld [vmem:[%s4 + $0x38] sm:$0xff]
      %v410 = vld [vmem:[%s4 + $0x40] sm:$0xff]
      %v411 = vld [vmem:[%s4 + $0x48] sm:$0xff]
      %v412 = vld [vmem:[%s4 + $0x50] sm:$0xff]
      %v413 = vld [vmem:[%s4 + $0x58] sm:$0xff]
      %v414 = vld [vmem:[%s4 + $0x60] sm:$0xff]
      %v415 = vld [vmem:[%s4 + $0x68] sm:$0xff]
      %v416 = vld [vmem:[%s4 + $0x70] sm:$0xff]
      %v417 = vld [vmem:[%s4 + $0x78] sm:$0xff]
      %v418 = vld [vmem:[%s5] sm:$0xff]
      %v419 = vld [vmem:[%s5 + $0x8] sm:$0xff]
      %v420 = vld [vmem:[%s5 + $0x10] sm:$0xff]
      %v421 = vld [vmem:[%s5 + $0x18] sm:$0xff]
      %v422 = vld [vmem:[%s5 + $0x20] sm:$0xff]
      %v423 = vld [vmem:[%s5 + $0x28] sm:$0xff]
      %v424 = vld [vmem:[%s5 + $0x30] sm:$0xff]
      %v425 = vld [vmem:[%s5 + $0x38] sm:$0xff]
      %v426 = vld [vmem:[%s5 + $0x40] sm:$0xff]
      %v427 = vld [vmem:[%s5 + $0x48] sm:$0xff]
      %v428 = vld [vmem:[%s5 + $0x50] sm:$0xff]
      %v429 = vld [vmem:[%s5 + $0x58] sm:$0xff]
      %v430 = vld [vmem:[%s5 + $0x60] sm:$0xff]
      %v431 = vld [vmem:[%s5 + $0x68] sm:$0xff]
      %v432 = vld [vmem:[%s5 + $0x70] sm:$0xff]
      %v433 = vld [vmem:[%s5 + $0x78] sm:$0xff]
      %v434 = vld [vmem:[%s375] sm:$0x1]
      %436 = vset.pattern.permute.xlu0 7
      %437 = vperm.xlu0 %436, %v434
      %v438 = vpop.permute.xlu0 %437
      %v440 = vlaneseq
      %v441 = vshrl.u32 %v440, 7
      %v442 = vsub.s32 0, %v441
      %v443 = vrot.slane %v438, %v442
      %v444 = vmul.f32 %v443, %v384
      %v445 = vadd.f32 %v444, %v385
      %447 = vset.pattern.permute.xlu0 0
      %448 = vperm.xlu0 %447, %v386
      %v449 = vpop.permute.xlu0 %448
      %452 = vset.pattern.permute.xlu0 0
      %453 = vperm.xlu0 %452, %v387
      %v454 = vpop.permute.xlu0 %453
      %457 = vset.pattern.permute.xlu0 0
      %458 = vperm.xlu0 %457, %v388
      %v459 = vpop.permute.xlu0 %458
      %462 = vset.pattern.permute.xlu0 0
      %463 = vperm.xlu0 %462, %v389
      %v464 = vpop.permute.xlu0 %463
      %v466 = vlaneseq
      %v467 = vshrl.u32 %v466, 7
      %v468 = vsub.s32 0, %v467
      %v469 = vrot.slane %v434, %v468
      %v471 = vmul.f32 %v449, %v469
      %v472 = vmul.f32 %v454, %v469
      %v473 = vmul.f32 %v459, %v469
      %v474 = vmul.f32 %v464, %v469
      %476 = vset.pattern.permute.xlu0 0
      %477 = vperm.xlu0 %476, %v402
      %v478 = vpop.permute.xlu0 %477
      %481 = vset.pattern.permute.xlu0 0
      %482 = vperm.xlu0 %481, %v403
      %v483 = vpop.permute.xlu0 %482
      %486 = vset.pattern.permute.xlu0 0
      %487 = vperm.xlu0 %486, %v404
      %v488 = vpop.permute.xlu0 %487
      %491 = vset.pattern.permute.xlu0 0
      %492 = vperm.xlu0 %491, %v405
      %v493 = vpop.permute.xlu0 %492
      %v495 = vadd.f32 %v471, %v478
      %v496 = vadd.f32 %v472, %v483
      %v497 = vadd.f32 %v473, %v488
      %v498 = vadd.f32 %v474, %v493
      %503 = vrot.lane.b32.xlu0 %v418, 96
      %v504 = vpop.permute.xlu0 %503
      %505 = vrot.lane.b32.xlu0 %v419, 96
      %v506 = vpop.permute.xlu0 %505
      %507 = vrot.lane.b32.xlu0 %v420, 96
      %v508 = vpop.permute.xlu0 %507
      %509 = vrot.lane.b32.xlu0 %v421, 96
      %v510 = vpop.permute.xlu0 %509
      %vm515 = vcmask 261120
      %v516 = vsel %vm515, %v504, 0.0
      %517 = vadd.xlane.f32.xlu0 %v516
      %v518 = vpop.xlane.xlu0 %517
      %v519 = vsel %vm515, %v506, 0.0
      %520 = vadd.xlane.f32.xlu0 %v519
      %v521 = vpop.xlane.xlu0 %520
      %v522 = vsel %vm515, %v508, 0.0
      %523 = vadd.xlane.f32.xlu0 %v522
      %v524 = vpop.xlane.xlu0 %523
      %v525 = vsel %vm515, %v510, 0.0
      %526 = vadd.xlane.f32.xlu0 %v525
      %v527 = vpop.xlane.xlu0 %526
      %528 = vrot.lane.b32.xlu0 %v418, 64
      %v529 = vpop.permute.xlu0 %528
      %530 = vrot.lane.b32.xlu0 %v419, 64
      %v531 = vpop.permute.xlu0 %530
      %532 = vrot.lane.b32.xlu0 %v420, 64
      %v533 = vpop.permute.xlu0 %532
      %534 = vrot.lane.b32.xlu0 %v421, 64
      %v535 = vpop.permute.xlu0 %534
      %v540 = vsel %vm515, %v529, 0.0
      %541 = vadd.xlane.f32.xlu0 %v540
      %v542 = vpop.xlane.xlu0 %541
      %v543 = vsel %vm515, %v531, 0.0
      %544 = vadd.xlane.f32.xlu0 %v543
      %v545 = vpop.xlane.xlu0 %544
      %v546 = vsel %vm515, %v533, 0.0
      %547 = vadd.xlane.f32.xlu0 %v546
      %v548 = vpop.xlane.xlu0 %547
      %v549 = vsel %vm515, %v535, 0.0
      %550 = vadd.xlane.f32.xlu0 %v549
      %v551 = vpop.xlane.xlu0 %550
      %553 = vset.pattern.permute.xlu0 0
      %554 = vperm.xlu0 %553, %v495
      %v555 = vpop.permute.xlu0 %554
      %558 = vset.pattern.permute.xlu0 0
      %559 = vperm.xlu0 %558, %v496
      %v560 = vpop.permute.xlu0 %559
      %563 = vset.pattern.permute.xlu0 0
      %564 = vperm.xlu0 %563, %v497
      %v565 = vpop.permute.xlu0 %564
      %568 = vset.pattern.permute.xlu0 0
      %569 = vperm.xlu0 %568, %v498
      %v570 = vpop.permute.xlu0 %569
      %v572 = vmul.f32 %v555, %v418
      %v573 = vmul.f32 %v560, %v419
      %v574 = vmul.f32 %v565, %v420
      %v575 = vmul.f32 %v570, %v421
      %v576 = vadd.f32 %v572, %v573
      %v577 = vadd.f32 %v576, %v574
      %v578 = vadd.f32 %v577, %v575
      %v579 = vrot.slane %v578, 4
      %v580 = vadd.f32 %v578, %v579
      %v581 = vrot.slane %v580, 2
      %v582 = vadd.f32 %v580, %v581
      %v583 = vrot.slane %v582, 1
      %v584 = vadd.f32 %v582, %v583
      %v585 = vmul.f32 %v495, %v518
      %v586 = vmul.f32 %v496, %v521
      %v587 = vmul.f32 %v497, %v524
      %v588 = vmul.f32 %v498, %v527
      %vm589 = vcmask 7168
      %v590 = vsel %vm589, %v585, -inf
      %v591 = vsel %vm589, %v586, -inf
      %v592 = vsel %vm589, %v587, -inf
      %v593 = vsel %vm589, %v588, -inf
      %v594 = vmax.f32 %v590, %v591
      %v595 = vmax.f32 %v592, %v593
      %v596 = vmax.f32 %v594, %v595
      %v597 = vrot.slane %v596, 4
      %v598 = vmax.f32 %v596, %v597
      %v599 = vrot.slane %v598, 2
      %v600 = vmax.f32 %v598, %v599
      %v601 = vrot.slane %v600, 1
      %v602 = vmax.f32 %v600, %v601
      %v603 = vsub.f32 %v585, %v602
      %v604 = vsub.f32 %v586, %v602
      %v605 = vsub.f32 %v587, %v602
      %v606 = vsub.f32 %v588, %v602
      %v607 = vmul.f32 %v603, 1.442695
      %v608 = vpow.pop %v607
      %v609 = vmul.f32 %v604, 1.442695
      %v610 = vpow.pop %v609
      %v611 = vmul.f32 %v605, 1.442695
      %v612 = vpow.pop %v611
      %v613 = vmul.f32 %v606, 1.442695
      %v614 = vpow.pop %v613
      %v615 = vsel %vm589, %v608, 0.0
      %v616 = vsel %vm589, %v610, 0.0
      %v617 = vadd.f32 %v615, %v616
      %v618 = vsel %vm589, %v612, 0.0
      %v619 = vadd.f32 %v617, %v618
      %v620 = vsel %vm589, %v614, 0.0
      %v621 = vadd.f32 %v619, %v620
      %v622 = vrot.slane %v621, 4
      %v623 = vadd.f32 %v621, %v622
      %v624 = vrot.slane %v623, 2
      %v625 = vadd.f32 %v623, %v624
      %v626 = vrot.slane %v625, 1
      %v627 = vadd.f32 %v625, %v626
      %v628 = vrcp.pop %v627
      %v629 = vmul.f32 %v608, %v628
      %v630 = vmul.f32 %v610, %v628
      %v631 = vmul.f32 %v612, %v628
      %v632 = vmul.f32 %v614, %v628
      %v633 = vmul.f32 %v495, %v542
      %v634 = vmul.f32 %v496, %v545
      %v635 = vmul.f32 %v497, %v548
      %v636 = vmul.f32 %v498, %v551
      %v637 = vsel %vm589, %v633, -inf
      %v638 = vsel %vm589, %v634, -inf
      %v639 = vsel %vm589, %v635, -inf
      %v640 = vsel %vm589, %v636, -inf
      %v641 = vmax.f32 %v637, %v638
      %v642 = vmax.f32 %v639, %v640
      %v643 = vmax.f32 %v641, %v642
      %v644 = vrot.slane %v643, 4
      %v645 = vmax.f32 %v643, %v644
      %v646 = vrot.slane %v645, 2
      %v647 = vmax.f32 %v645, %v646
      %v648 = vrot.slane %v647, 1
      %v649 = vmax.f32 %v647, %v648
      %v650 = vsub.f32 %v633, %v649
      %v651 = vsub.f32 %v634, %v649
      %v652 = vsub.f32 %v635, %v649
      %v653 = vsub.f32 %v636, %v649
      %v654 = vmul.f32 %v650, 1.442695
      %v655 = vpow.pop %v654
      %v656 = vmul.f32 %v651, 1.442695
      %v657 = vpow.pop %v656
      %v658 = vmul.f32 %v652, 1.442695
      %v659 = vpow.pop %v658
      %v660 = vmul.f32 %v653, 1.442695
      %v661 = vpow.pop %v660
      %v662 = vsel %vm589, %v655, 0.0
      %v663 = vsel %vm589, %v657, 0.0
      %v664 = vadd.f32 %v662, %v663
      %v665 = vsel %vm589, %v659, 0.0
      %v666 = vadd.f32 %v664, %v665
      %v667 = vsel %vm589, %v661, 0.0
      %v668 = vadd.f32 %v666, %v667
      %v669 = vrot.slane %v668, 4
      %v670 = vadd.f32 %v668, %v669
      %v671 = vrot.slane %v670, 2
      %v672 = vadd.f32 %v670, %v671
      %v673 = vrot.slane %v672, 1
      %v674 = vadd.f32 %v672, %v673
      %v675 = vrcp.pop %v674
      %v676 = vmul.f32 %v655, %v675
      %v677 = vmul.f32 %v657, %v675
      %v678 = vmul.f32 %v659, %v675
      %v679 = vmul.f32 %v661, %v675
      %v680 = vsub.f32 %v629, %v676
      %v681 = vsub.f32 %v630, %v677
      %v682 = vsub.f32 %v631, %v678
      %v683 = vsub.f32 %v632, %v679
      %685 = vset.pattern.permute.xlu0 0
      %686 = vperm.xlu0 %685, %v680
      %v687 = vpop.permute.xlu0 %686
      %690 = vset.pattern.permute.xlu0 0
      %691 = vperm.xlu0 %690, %v681
      %v692 = vpop.permute.xlu0 %691
      %695 = vset.pattern.permute.xlu0 0
      %696 = vperm.xlu0 %695, %v682
      %v697 = vpop.permute.xlu0 %696
      %700 = vset.pattern.permute.xlu0 0
      %701 = vperm.xlu0 %700, %v683
      %v702 = vpop.permute.xlu0 %701
      %v704 = vmul.f32 %v687, %v418
      %v705 = vmul.f32 %v692, %v419
      %v706 = vmul.f32 %v697, %v420
      %v707 = vmul.f32 %v702, %v421
      %v708 = vadd.f32 %v704, %v705
      %v709 = vadd.f32 %v708, %v706
      %v710 = vadd.f32 %v709, %v707
      %v711 = vrot.slane %v710, 4
      %v712 = vadd.f32 %v710, %v711
      %v713 = vrot.slane %v712, 2
      %v714 = vadd.f32 %v712, %v713
      %v715 = vrot.slane %v714, 1
      %v716 = vadd.f32 %v714, %v715
      %718 = vset.pattern.permute.xlu0 98
      %719 = vperm.xlu0 %718, %v584
      %v720 = vpop.permute.xlu0 %719
      %722 = vset.pattern.permute.xlu0 99
      %723 = vperm.xlu0 %722, %v584
      %v724 = vpop.permute.xlu0 %723
      %v726 = vsel %vm383, %v720, %v724
      %727 = vset.pattern.permute.xlu0 97
      %728 = vperm.xlu0 %727, %v584
      %v729 = vpop.permute.xlu0 %728
      %v731 = vsel %vm382, %v729, %v726
      %732 = vset.pattern.permute.xlu0 96
      %733 = vperm.xlu0 %732, %v584
      %v734 = vpop.permute.xlu0 %733
      %v736 = vsel %vm381, %v734, %v731
      %v737 = vxor.u32 %v736, 2147483648
      %v738 = vmul.f32 %v737, 1.442695
      %v739 = vpow.pop %v738
      %v740 = vadd.f32 %v739, 1.0
      %v741 = vrcp.pop %v740
      %v742 = vmul.f32 1.0, %v741
      %v743 = vmul.f32 %v742, %v716
      %745 = vset.pattern.permute.xlu0 0
      %746 = vperm.xlu0 %745, %v676
      %v747 = vpop.permute.xlu0 %746
      %750 = vset.pattern.permute.xlu0 0
      %751 = vperm.xlu0 %750, %v677
      %v752 = vpop.permute.xlu0 %751
      %755 = vset.pattern.permute.xlu0 0
      %756 = vperm.xlu0 %755, %v678
      %v757 = vpop.permute.xlu0 %756
      %760 = vset.pattern.permute.xlu0 0
      %761 = vperm.xlu0 %760, %v679
      %v762 = vpop.permute.xlu0 %761
      %v764 = vmul.f32 %v747, %v743
      %v765 = vmul.f32 %v752, %v743
      %v766 = vmul.f32 %v757, %v743
      %v767 = vmul.f32 %v762, %v743
      %v768 = vadd.f32 %v418, %v764
      %v769 = vadd.f32 %v419, %v765
      %v770 = vadd.f32 %v420, %v766
      %v771 = vadd.f32 %v421, %v767
      %773 = vrot.lane.b32.xlu0 %v743, 96
      %v774 = vpop.permute.xlu0 %773
      %v776 = vsel %vm515, %v774, 0.0
      %777 = vadd.xlane.f32.xlu0 %v776
      %v778 = vpop.xlane.xlu0 %777
      %v779 = vmul.f32 %v676, %v778
      %v780 = vmul.f32 %v677, %v778
      %v781 = vmul.f32 %v678, %v778
      %v782 = vmul.f32 %v679, %v778
      %v783 = vadd.f32 %v518, %v779
      %v784 = vadd.f32 %v521, %v780
      %v785 = vadd.f32 %v524, %v781
      %v786 = vadd.f32 %v527, %v782
      %787 = vrot.lane.b32.xlu0 %v743, 64
      %v788 = vpop.permute.xlu0 %787
      %v790 = vsel %vm515, %v788, 0.0
      %791 = vadd.xlane.f32.xlu0 %v790
      %v792 = vpop.xlane.xlu0 %791
      %v793 = vmul.f32 %v676, %v792
      %v794 = vmul.f32 %v677, %v792
      %v795 = vmul.f32 %v678, %v792
      %v796 = vmul.f32 %v679, %v792
      %v797 = vadd.f32 %v542, %v793
      %v798 = vadd.f32 %v545, %v794
      %v799 = vadd.f32 %v548, %v795
      %v800 = vadd.f32 %v551, %v796
      %801 = vset.pattern.permute.xlu0 1
      %802 = vperm.xlu0 %801, %v495
      %v803 = vpop.permute.xlu0 %802
      %805 = vset.pattern.permute.xlu0 1
      %806 = vperm.xlu0 %805, %v496
      %v807 = vpop.permute.xlu0 %806
      %809 = vset.pattern.permute.xlu0 1
      %810 = vperm.xlu0 %809, %v497
      %v811 = vpop.permute.xlu0 %810
      %813 = vset.pattern.permute.xlu0 1
      %814 = vperm.xlu0 %813, %v498
      %v815 = vpop.permute.xlu0 %814
      %v817 = vmul.f32 %v803, %v768
      %v818 = vmul.f32 %v807, %v769
      %v819 = vmul.f32 %v811, %v770
      %v820 = vmul.f32 %v815, %v771
      %v821 = vadd.f32 %v817, %v818
      %v822 = vadd.f32 %v821, %v819
      %v823 = vadd.f32 %v822, %v820
      %v824 = vrot.slane %v823, 4
      %v825 = vadd.f32 %v823, %v824
      %v826 = vrot.slane %v825, 2
      %v827 = vadd.f32 %v825, %v826
      %v828 = vrot.slane %v827, 1
      %v829 = vadd.f32 %v827, %v828
      %834 = vrot.lane.b32.xlu0 %v783, 1
      %v835 = vpop.permute.xlu0 %834
      %836 = vrot.lane.b32.xlu0 %v784, 1
      %v837 = vpop.permute.xlu0 %836
      %838 = vrot.lane.b32.xlu0 %v785, 1
      %v839 = vpop.permute.xlu0 %838
      %840 = vrot.lane.b32.xlu0 %v786, 1
      %v841 = vpop.permute.xlu0 %840
      %v846 = vmul.f32 %v495, %v835
      %v847 = vmul.f32 %v496, %v837
      %v848 = vmul.f32 %v497, %v839
      %v849 = vmul.f32 %v498, %v841
      %vm850 = vcmask 15368
      %v851 = vsel %vm850, %v846, -inf
      %v852 = vsel %vm850, %v847, -inf
      %v853 = vsel %vm850, %v848, -inf
      %v854 = vsel %vm850, %v849, -inf
      %v855 = vmax.f32 %v851, %v852
      %v856 = vmax.f32 %v853, %v854
      %v857 = vmax.f32 %v855, %v856
      %v858 = vrot.slane %v857, 4
      %v859 = vmax.f32 %v857, %v858
      %v860 = vrot.slane %v859, 2
      %v861 = vmax.f32 %v859, %v860
      %v862 = vrot.slane %v861, 1
      %v863 = vmax.f32 %v861, %v862
      %v864 = vsub.f32 %v846, %v863
      %v865 = vsub.f32 %v847, %v863
      %v866 = vsub.f32 %v848, %v863
      %v867 = vsub.f32 %v849, %v863
      %v868 = vmul.f32 %v864, 1.442695
      %v869 = vpow.pop %v868
      %v870 = vmul.f32 %v865, 1.442695
      %v871 = vpow.pop %v870
      %v872 = vmul.f32 %v866, 1.442695
      %v873 = vpow.pop %v872
      %v874 = vmul.f32 %v867, 1.442695
      %v875 = vpow.pop %v874
      %v876 = vsel %vm850, %v869, 0.0
      %v877 = vsel %vm850, %v871, 0.0
      %v878 = vadd.f32 %v876, %v877
      %v879 = vsel %vm850, %v873, 0.0
      %v880 = vadd.f32 %v878, %v879
      %v881 = vsel %vm850, %v875, 0.0
      %v882 = vadd.f32 %v880, %v881
      %v883 = vrot.slane %v882, 4
      %v884 = vadd.f32 %v882, %v883
      %v885 = vrot.slane %v884, 2
      %v886 = vadd.f32 %v884, %v885
      %v887 = vrot.slane %v886, 1
      %v888 = vadd.f32 %v886, %v887
      %v889 = vrcp.pop %v888
      %v890 = vmul.f32 %v869, %v889
      %v891 = vmul.f32 %v871, %v889
      %v892 = vmul.f32 %v873, %v889
      %v893 = vmul.f32 %v875, %v889
      %898 = vrot.lane.b32.xlu0 %v797, 1
      %v899 = vpop.permute.xlu0 %898
      %900 = vrot.lane.b32.xlu0 %v798, 1
      %v901 = vpop.permute.xlu0 %900
      %902 = vrot.lane.b32.xlu0 %v799, 1
      %v903 = vpop.permute.xlu0 %902
      %904 = vrot.lane.b32.xlu0 %v800, 1
      %v905 = vpop.permute.xlu0 %904
      %v910 = vmul.f32 %v495, %v899
      %v911 = vmul.f32 %v496, %v901
      %v912 = vmul.f32 %v497, %v903
      %v913 = vmul.f32 %v498, %v905
      %v914 = vsel %vm850, %v910, -inf
      %v915 = vsel %vm850, %v911, -inf
      %v916 = vsel %vm850, %v912, -inf
      %v917 = vsel %vm850, %v913, -inf
      %v918 = vmax.f32 %v914, %v915
      %v919 = vmax.f32 %v916, %v917
      %v920 = vmax.f32 %v918, %v919
      %v921 = vrot.slane %v920, 4
      %v922 = vmax.f32 %v920, %v921
      %v923 = vrot.slane %v922, 2
      %v924 = vmax.f32 %v922, %v923
      %v925 = vrot.slane %v924, 1
      %v926 = vmax.f32 %v924, %v925
      %v927 = vsub.f32 %v910, %v926
      %v928 = vsub.f32 %v911, %v926
      %v929 = vsub.f32 %v912, %v926
      %v930 = vsub.f32 %v913, %v926
      %v931 = vmul.f32 %v927, 1.442695
      %v932 = vpow.pop %v931
      %v933 = vmul.f32 %v928, 1.442695
      %v934 = vpow.pop %v933
      %v935 = vmul.f32 %v929, 1.442695
      %v936 = vpow.pop %v935
      %v937 = vmul.f32 %v930, 1.442695
      %v938 = vpow.pop %v937
      %v939 = vsel %vm850, %v932, 0.0
      %v940 = vsel %vm850, %v934, 0.0
      %v941 = vadd.f32 %v939, %v940
      %v942 = vsel %vm850, %v936, 0.0
      %v943 = vadd.f32 %v941, %v942
      %v944 = vsel %vm850, %v938, 0.0
      %v945 = vadd.f32 %v943, %v944
      %v946 = vrot.slane %v945, 4
      %v947 = vadd.f32 %v945, %v946
      %v948 = vrot.slane %v947, 2
      %v949 = vadd.f32 %v947, %v948
      %v950 = vrot.slane %v949, 1
      %v951 = vadd.f32 %v949, %v950
      %v952 = vrcp.pop %v951
      %v953 = vmul.f32 %v932, %v952
      %v954 = vmul.f32 %v934, %v952
      %v955 = vmul.f32 %v936, %v952
      %v956 = vmul.f32 %v938, %v952
      %v957 = vsub.f32 %v890, %v953
      %v958 = vsub.f32 %v891, %v954
      %v959 = vsub.f32 %v892, %v955
      %v960 = vsub.f32 %v893, %v956
      %962 = vset.pattern.permute.xlu0 1
      %963 = vperm.xlu0 %962, %v957
      %v964 = vpop.permute.xlu0 %963
      %967 = vset.pattern.permute.xlu0 1
      %968 = vperm.xlu0 %967, %v958
      %v969 = vpop.permute.xlu0 %968
      %972 = vset.pattern.permute.xlu0 1
      %973 = vperm.xlu0 %972, %v959
      %v974 = vpop.permute.xlu0 %973
      %977 = vset.pattern.permute.xlu0 1
      %978 = vperm.xlu0 %977, %v960
      %v979 = vpop.permute.xlu0 %978
      %v981 = vmul.f32 %v964, %v768
      %v982 = vmul.f32 %v969, %v769
      %v983 = vmul.f32 %v974, %v770
      %v984 = vmul.f32 %v979, %v771
      %v985 = vadd.f32 %v981, %v982
      %v986 = vadd.f32 %v985, %v983
      %v987 = vadd.f32 %v986, %v984
      %v988 = vrot.slane %v987, 4
      %v989 = vadd.f32 %v987, %v988
      %v990 = vrot.slane %v989, 2
      %v991 = vadd.f32 %v989, %v990
      %v992 = vrot.slane %v991, 1
      %v993 = vadd.f32 %v991, %v992
      %995 = vset.pattern.permute.xlu0 98
      %996 = vperm.xlu0 %995, %v829
      %v997 = vpop.permute.xlu0 %996
      %999 = vset.pattern.permute.xlu0 99
      %1000 = vperm.xlu0 %999, %v829
      %v1001 = vpop.permute.xlu0 %1000
      %v1003 = vsel %vm383, %v997, %v1001
      %1004 = vset.pattern.permute.xlu0 97
      %1005 = vperm.xlu0 %1004, %v829
      %v1006 = vpop.permute.xlu0 %1005
      %v1008 = vsel %vm382, %v1006, %v1003
      %1009 = vset.pattern.permute.xlu0 96
      %1010 = vperm.xlu0 %1009, %v829
      %v1011 = vpop.permute.xlu0 %1010
      %v1013 = vsel %vm381, %v1011, %v1008
      %v1014 = vxor.u32 %v1013, 2147483648
      %v1015 = vmul.f32 %v1014, 1.442695
      %v1016 = vpow.pop %v1015
      %v1017 = vadd.f32 %v1016, 1.0
      %v1018 = vrcp.pop %v1017
      %v1019 = vmul.f32 1.0, %v1018
      %v1020 = vmul.f32 %v1019, %v993
      %1022 = vset.pattern.permute.xlu0 1
      %1023 = vperm.xlu0 %1022, %v953
      %v1024 = vpop.permute.xlu0 %1023
      %1027 = vset.pattern.permute.xlu0 1
      %1028 = vperm.xlu0 %1027, %v954
      %v1029 = vpop.permute.xlu0 %1028
      %1032 = vset.pattern.permute.xlu0 1
      %1033 = vperm.xlu0 %1032, %v955
      %v1034 = vpop.permute.xlu0 %1033
      %1037 = vset.pattern.permute.xlu0 1
      %1038 = vperm.xlu0 %1037, %v956
      %v1039 = vpop.permute.xlu0 %1038
      %v1041 = vmul.f32 %v1024, %v1020
      %v1042 = vmul.f32 %v1029, %v1020
      %v1043 = vmul.f32 %v1034, %v1020
      %v1044 = vmul.f32 %v1039, %v1020
      %v1045 = vadd.f32 %v768, %v1041
      %v1046 = vadd.f32 %v769, %v1042
      %v1047 = vadd.f32 %v770, %v1043
      %v1048 = vadd.f32 %v771, %v1044
      %1050 = vrot.lane.b32.xlu0 %v1020, 96
      %v1051 = vpop.permute.xlu0 %1050
      %v1053 = vsel %vm515, %v1051, 0.0
      %1054 = vadd.xlane.f32.xlu0 %v1053
      %v1055 = vpop.xlane.xlu0 %1054
      %v1056 = vmul.f32 %v953, %v1055
      %v1057 = vmul.f32 %v954, %v1055
      %v1058 = vmul.f32 %v955, %v1055
      %v1059 = vmul.f32 %v956, %v1055
      %1064 = vrot.lane.b32.xlu0 %v1056, 127
      %v1065 = vpop.permute.xlu0 %1064
      %1066 = vrot.lane.b32.xlu0 %v1057, 127
      %v1067 = vpop.permute.xlu0 %1066
      %1068 = vrot.lane.b32.xlu0 %v1058, 127
      %v1069 = vpop.permute.xlu0 %1068
      %1070 = vrot.lane.b32.xlu0 %v1059, 127
      %v1071 = vpop.permute.xlu0 %1070
      %v1076 = vadd.f32 %v783, %v1065
      %v1077 = vadd.f32 %v784, %v1067
      %v1078 = vadd.f32 %v785, %v1069
      %v1079 = vadd.f32 %v786, %v1071
      %1080 = vrot.lane.b32.xlu0 %v1020, 64
      %v1081 = vpop.permute.xlu0 %1080
      %v1083 = vsel %vm515, %v1081, 0.0
      %1084 = vadd.xlane.f32.xlu0 %v1083
      %v1085 = vpop.xlane.xlu0 %1084
      %v1086 = vmul.f32 %v953, %v1085
      %v1087 = vmul.f32 %v954, %v1085
      %v1088 = vmul.f32 %v955, %v1085
      %v1089 = vmul.f32 %v956, %v1085
      %1094 = vrot.lane.b32.xlu0 %v1086, 127
      %v1095 = vpop.permute.xlu0 %1094
      %1096 = vrot.lane.b32.xlu0 %v1087, 127
      %v1097 = vpop.permute.xlu0 %1096
      %1098 = vrot.lane.b32.xlu0 %v1088, 127
      %v1099 = vpop.permute.xlu0 %1098
      %1100 = vrot.lane.b32.xlu0 %v1089, 127
      %v1101 = vpop.permute.xlu0 %1100
      %v1106 = vadd.f32 %v797, %v1095
      %v1107 = vadd.f32 %v798, %v1097
      %v1108 = vadd.f32 %v799, %v1099
      %v1109 = vadd.f32 %v800, %v1101
      %1110 = vset.pattern.permute.xlu0 2
      %1111 = vperm.xlu0 %1110, %v495
      %v1112 = vpop.permute.xlu0 %1111
      %1114 = vset.pattern.permute.xlu0 2
      %1115 = vperm.xlu0 %1114, %v496
      %v1116 = vpop.permute.xlu0 %1115
      %1118 = vset.pattern.permute.xlu0 2
      %1119 = vperm.xlu0 %1118, %v497
      %v1120 = vpop.permute.xlu0 %1119
      %1122 = vset.pattern.permute.xlu0 2
      %1123 = vperm.xlu0 %1122, %v498
      %v1124 = vpop.permute.xlu0 %1123
      %v1126 = vmul.f32 %v1112, %v1045
      %v1127 = vmul.f32 %v1116, %v1046
      %v1128 = vmul.f32 %v1120, %v1047
      %v1129 = vmul.f32 %v1124, %v1048
      %v1130 = vadd.f32 %v1126, %v1127
      %v1131 = vadd.f32 %v1130, %v1128
      %v1132 = vadd.f32 %v1131, %v1129
      %v1133 = vrot.slane %v1132, 4
      %v1134 = vadd.f32 %v1132, %v1133
      %v1135 = vrot.slane %v1134, 2
      %v1136 = vadd.f32 %v1134, %v1135
      %v1137 = vrot.slane %v1136, 1
      %v1138 = vadd.f32 %v1136, %v1137
      %1143 = vrot.lane.b32.xlu0 %v1076, 2
      %v1144 = vpop.permute.xlu0 %1143
      %1145 = vrot.lane.b32.xlu0 %v1077, 2
      %v1146 = vpop.permute.xlu0 %1145
      %1147 = vrot.lane.b32.xlu0 %v1078, 2
      %v1148 = vpop.permute.xlu0 %1147
      %1149 = vrot.lane.b32.xlu0 %v1079, 2
      %v1150 = vpop.permute.xlu0 %1149
      %v1155 = vmul.f32 %v495, %v1144
      %v1156 = vmul.f32 %v496, %v1146
      %v1157 = vmul.f32 %v497, %v1148
      %v1158 = vmul.f32 %v498, %v1150
      %vm1159 = vcmask 23568
      %v1160 = vsel %vm1159, %v1155, -inf
      %v1161 = vsel %vm1159, %v1156, -inf
      %v1162 = vsel %vm1159, %v1157, -inf
      %v1163 = vsel %vm1159, %v1158, -inf
      %v1164 = vmax.f32 %v1160, %v1161
      %v1165 = vmax.f32 %v1162, %v1163
      %v1166 = vmax.f32 %v1164, %v1165
      %v1167 = vrot.slane %v1166, 4
      %v1168 = vmax.f32 %v1166, %v1167
      %v1169 = vrot.slane %v1168, 2
      %v1170 = vmax.f32 %v1168, %v1169
      %v1171 = vrot.slane %v1170, 1
      %v1172 = vmax.f32 %v1170, %v1171
      %v1173 = vsub.f32 %v1155, %v1172
      %v1174 = vsub.f32 %v1156, %v1172
      %v1175 = vsub.f32 %v1157, %v1172
      %v1176 = vsub.f32 %v1158, %v1172
      %v1177 = vmul.f32 %v1173, 1.442695
      %v1178 = vpow.pop %v1177
      %v1179 = vmul.f32 %v1174, 1.442695
      %v1180 = vpow.pop %v1179
      %v1181 = vmul.f32 %v1175, 1.442695
      %v1182 = vpow.pop %v1181
      %v1183 = vmul.f32 %v1176, 1.442695
      %v1184 = vpow.pop %v1183
      %v1185 = vsel %vm1159, %v1178, 0.0
      %v1186 = vsel %vm1159, %v1180, 0.0
      %v1187 = vadd.f32 %v1185, %v1186
      %v1188 = vsel %vm1159, %v1182, 0.0
      %v1189 = vadd.f32 %v1187, %v1188
      %v1190 = vsel %vm1159, %v1184, 0.0
      %v1191 = vadd.f32 %v1189, %v1190
      %v1192 = vrot.slane %v1191, 4
      %v1193 = vadd.f32 %v1191, %v1192
      %v1194 = vrot.slane %v1193, 2
      %v1195 = vadd.f32 %v1193, %v1194
      %v1196 = vrot.slane %v1195, 1
      %v1197 = vadd.f32 %v1195, %v1196
      %v1198 = vrcp.pop %v1197
      %v1199 = vmul.f32 %v1178, %v1198
      %v1200 = vmul.f32 %v1180, %v1198
      %v1201 = vmul.f32 %v1182, %v1198
      %v1202 = vmul.f32 %v1184, %v1198
      %1207 = vrot.lane.b32.xlu0 %v1106, 2
      %v1208 = vpop.permute.xlu0 %1207
      %1209 = vrot.lane.b32.xlu0 %v1107, 2
      %v1210 = vpop.permute.xlu0 %1209
      %1211 = vrot.lane.b32.xlu0 %v1108, 2
      %v1212 = vpop.permute.xlu0 %1211
      %1213 = vrot.lane.b32.xlu0 %v1109, 2
      %v1214 = vpop.permute.xlu0 %1213
      %v1219 = vmul.f32 %v495, %v1208
      %v1220 = vmul.f32 %v496, %v1210
      %v1221 = vmul.f32 %v497, %v1212
      %v1222 = vmul.f32 %v498, %v1214
      %v1223 = vsel %vm1159, %v1219, -inf
      %v1224 = vsel %vm1159, %v1220, -inf
      %v1225 = vsel %vm1159, %v1221, -inf
      %v1226 = vsel %vm1159, %v1222, -inf
      %v1227 = vmax.f32 %v1223, %v1224
      %v1228 = vmax.f32 %v1225, %v1226
      %v1229 = vmax.f32 %v1227, %v1228
      %v1230 = vrot.slane %v1229, 4
      %v1231 = vmax.f32 %v1229, %v1230
      %v1232 = vrot.slane %v1231, 2
      %v1233 = vmax.f32 %v1231, %v1232
      %v1234 = vrot.slane %v1233, 1
      %v1235 = vmax.f32 %v1233, %v1234
      %v1236 = vsub.f32 %v1219, %v1235
      %v1237 = vsub.f32 %v1220, %v1235
      %v1238 = vsub.f32 %v1221, %v1235
      %v1239 = vsub.f32 %v1222, %v1235
      %v1240 = vmul.f32 %v1236, 1.442695
      %v1241 = vpow.pop %v1240
      %v1242 = vmul.f32 %v1237, 1.442695
      %v1243 = vpow.pop %v1242
      %v1244 = vmul.f32 %v1238, 1.442695
      %v1245 = vpow.pop %v1244
      %v1246 = vmul.f32 %v1239, 1.442695
      %v1247 = vpow.pop %v1246
      %v1248 = vsel %vm1159, %v1241, 0.0
      %v1249 = vsel %vm1159, %v1243, 0.0
      %v1250 = vadd.f32 %v1248, %v1249
      %v1251 = vsel %vm1159, %v1245, 0.0
      %v1252 = vadd.f32 %v1250, %v1251
      %v1253 = vsel %vm1159, %v1247, 0.0
      %v1254 = vadd.f32 %v1252, %v1253
      %v1255 = vrot.slane %v1254, 4
      %v1256 = vadd.f32 %v1254, %v1255
      %v1257 = vrot.slane %v1256, 2
      %v1258 = vadd.f32 %v1256, %v1257
      %v1259 = vrot.slane %v1258, 1
      %v1260 = vadd.f32 %v1258, %v1259
      %v1261 = vrcp.pop %v1260
      %v1262 = vmul.f32 %v1241, %v1261
      %v1263 = vmul.f32 %v1243, %v1261
      %v1264 = vmul.f32 %v1245, %v1261
      %v1265 = vmul.f32 %v1247, %v1261
      %v1266 = vsub.f32 %v1199, %v1262
      %v1267 = vsub.f32 %v1200, %v1263
      %v1268 = vsub.f32 %v1201, %v1264
      %v1269 = vsub.f32 %v1202, %v1265
      %1271 = vset.pattern.permute.xlu0 2
      %1272 = vperm.xlu0 %1271, %v1266
      %v1273 = vpop.permute.xlu0 %1272
      %1276 = vset.pattern.permute.xlu0 2
      %1277 = vperm.xlu0 %1276, %v1267
      %v1278 = vpop.permute.xlu0 %1277
      %1281 = vset.pattern.permute.xlu0 2
      %1282 = vperm.xlu0 %1281, %v1268
      %v1283 = vpop.permute.xlu0 %1282
      %1286 = vset.pattern.permute.xlu0 2
      %1287 = vperm.xlu0 %1286, %v1269
      %v1288 = vpop.permute.xlu0 %1287
      %v1290 = vmul.f32 %v1273, %v1045
      %v1291 = vmul.f32 %v1278, %v1046
      %v1292 = vmul.f32 %v1283, %v1047
      %v1293 = vmul.f32 %v1288, %v1048
      %v1294 = vadd.f32 %v1290, %v1291
      %v1295 = vadd.f32 %v1294, %v1292
      %v1296 = vadd.f32 %v1295, %v1293
      %v1297 = vrot.slane %v1296, 4
      %v1298 = vadd.f32 %v1296, %v1297
      %v1299 = vrot.slane %v1298, 2
      %v1300 = vadd.f32 %v1298, %v1299
      %v1301 = vrot.slane %v1300, 1
      %v1302 = vadd.f32 %v1300, %v1301
      %1304 = vset.pattern.permute.xlu0 98
      %1305 = vperm.xlu0 %1304, %v1138
      %v1306 = vpop.permute.xlu0 %1305
      %1308 = vset.pattern.permute.xlu0 99
      %1309 = vperm.xlu0 %1308, %v1138
      %v1310 = vpop.permute.xlu0 %1309
      %v1312 = vsel %vm383, %v1306, %v1310
      %1313 = vset.pattern.permute.xlu0 97
      %1314 = vperm.xlu0 %1313, %v1138
      %v1315 = vpop.permute.xlu0 %1314
      %v1317 = vsel %vm382, %v1315, %v1312
      %1318 = vset.pattern.permute.xlu0 96
      %1319 = vperm.xlu0 %1318, %v1138
      %v1320 = vpop.permute.xlu0 %1319
      %v1322 = vsel %vm381, %v1320, %v1317
      %v1323 = vxor.u32 %v1322, 2147483648
      %v1324 = vmul.f32 %v1323, 1.442695
      %v1325 = vpow.pop %v1324
      %v1326 = vadd.f32 %v1325, 1.0
      %v1327 = vrcp.pop %v1326
      %v1328 = vmul.f32 1.0, %v1327
      %v1329 = vmul.f32 %v1328, %v1302
      %1331 = vset.pattern.permute.xlu0 2
      %1332 = vperm.xlu0 %1331, %v1262
      %v1333 = vpop.permute.xlu0 %1332
      %1336 = vset.pattern.permute.xlu0 2
      %1337 = vperm.xlu0 %1336, %v1263
      %v1338 = vpop.permute.xlu0 %1337
      %1341 = vset.pattern.permute.xlu0 2
      %1342 = vperm.xlu0 %1341, %v1264
      %v1343 = vpop.permute.xlu0 %1342
      %1346 = vset.pattern.permute.xlu0 2
      %1347 = vperm.xlu0 %1346, %v1265
      %v1348 = vpop.permute.xlu0 %1347
      %v1350 = vmul.f32 %v1333, %v1329
      %v1351 = vmul.f32 %v1338, %v1329
      %v1352 = vmul.f32 %v1343, %v1329
      %v1353 = vmul.f32 %v1348, %v1329
      %v1354 = vadd.f32 %v1045, %v1350
      %v1355 = vadd.f32 %v1046, %v1351
      %v1356 = vadd.f32 %v1047, %v1352
      %v1357 = vadd.f32 %v1048, %v1353
      %1359 = vrot.lane.b32.xlu0 %v1329, 96
      %v1360 = vpop.permute.xlu0 %1359
      %v1362 = vsel %vm515, %v1360, 0.0
      %1363 = vadd.xlane.f32.xlu0 %v1362
      %v1364 = vpop.xlane.xlu0 %1363
      %v1365 = vmul.f32 %v1262, %v1364
      %v1366 = vmul.f32 %v1263, %v1364
      %v1367 = vmul.f32 %v1264, %v1364
      %v1368 = vmul.f32 %v1265, %v1364
      %1373 = vrot.lane.b32.xlu0 %v1365, 126
      %v1374 = vpop.permute.xlu0 %1373
      %1375 = vrot.lane.b32.xlu0 %v1366, 126
      %v1376 = vpop.permute.xlu0 %1375
      %1377 = vrot.lane.b32.xlu0 %v1367, 126
      %v1378 = vpop.permute.xlu0 %1377
      %1379 = vrot.lane.b32.xlu0 %v1368, 126
      %v1380 = vpop.permute.xlu0 %1379
      %v1385 = vadd.f32 %v1076, %v1374
      %v1386 = vadd.f32 %v1077, %v1376
      %v1387 = vadd.f32 %v1078, %v1378
      %v1388 = vadd.f32 %v1079, %v1380
      %1389 = vrot.lane.b32.xlu0 %v1329, 64
      %v1390 = vpop.permute.xlu0 %1389
      %v1392 = vsel %vm515, %v1390, 0.0
      %1393 = vadd.xlane.f32.xlu0 %v1392
      %v1394 = vpop.xlane.xlu0 %1393
      %v1395 = vmul.f32 %v1262, %v1394
      %v1396 = vmul.f32 %v1263, %v1394
      %v1397 = vmul.f32 %v1264, %v1394
      %v1398 = vmul.f32 %v1265, %v1394
      %1403 = vrot.lane.b32.xlu0 %v1395, 126
      %v1404 = vpop.permute.xlu0 %1403
      %1405 = vrot.lane.b32.xlu0 %v1396, 126
      %v1406 = vpop.permute.xlu0 %1405
      %1407 = vrot.lane.b32.xlu0 %v1397, 126
      %v1408 = vpop.permute.xlu0 %1407
      %1409 = vrot.lane.b32.xlu0 %v1398, 126
      %v1410 = vpop.permute.xlu0 %1409
      %v1415 = vadd.f32 %v1106, %v1404
      %v1416 = vadd.f32 %v1107, %v1406
      %v1417 = vadd.f32 %v1108, %v1408
      %v1418 = vadd.f32 %v1109, %v1410
      %1419 = vset.pattern.permute.xlu0 3
      %1420 = vperm.xlu0 %1419, %v495
      %v1421 = vpop.permute.xlu0 %1420
      %1423 = vset.pattern.permute.xlu0 3
      %1424 = vperm.xlu0 %1423, %v496
      %v1425 = vpop.permute.xlu0 %1424
      %1427 = vset.pattern.permute.xlu0 3
      %1428 = vperm.xlu0 %1427, %v497
      %v1429 = vpop.permute.xlu0 %1428
      %1431 = vset.pattern.permute.xlu0 3
      %1432 = vperm.xlu0 %1431, %v498
      %v1433 = vpop.permute.xlu0 %1432
      %v1435 = vmul.f32 %v1421, %v1354
      %v1436 = vmul.f32 %v1425, %v1355
      %v1437 = vmul.f32 %v1429, %v1356
      %v1438 = vmul.f32 %v1433, %v1357
      %v1439 = vadd.f32 %v1435, %v1436
      %v1440 = vadd.f32 %v1439, %v1437
      %v1441 = vadd.f32 %v1440, %v1438
      %v1442 = vrot.slane %v1441, 4
      %v1443 = vadd.f32 %v1441, %v1442
      %v1444 = vrot.slane %v1443, 2
      %v1445 = vadd.f32 %v1443, %v1444
      %v1446 = vrot.slane %v1445, 1
      %v1447 = vadd.f32 %v1445, %v1446
      %1452 = vrot.lane.b32.xlu0 %v1385, 3
      %v1453 = vpop.permute.xlu0 %1452
      %1454 = vrot.lane.b32.xlu0 %v1386, 3
      %v1455 = vpop.permute.xlu0 %1454
      %1456 = vrot.lane.b32.xlu0 %v1387, 3
      %v1457 = vpop.permute.xlu0 %1456
      %1458 = vrot.lane.b32.xlu0 %v1388, 3
      %v1459 = vpop.permute.xlu0 %1458
      %v1464 = vmul.f32 %v495, %v1453
      %v1465 = vmul.f32 %v496, %v1455
      %v1466 = vmul.f32 %v497, %v1457
      %v1467 = vmul.f32 %v498, %v1459
      %vm1468 = vcmask 31768
      %v1469 = vsel %vm1468, %v1464, -inf
      %v1470 = vsel %vm1468, %v1465, -inf
      %v1471 = vsel %vm1468, %v1466, -inf
      %v1472 = vsel %vm1468, %v1467, -inf
      %v1473 = vmax.f32 %v1469, %v1470
      %v1474 = vmax.f32 %v1471, %v1472
      %v1475 = vmax.f32 %v1473, %v1474
      %v1476 = vrot.slane %v1475, 4
      %v1477 = vmax.f32 %v1475, %v1476
      %v1478 = vrot.slane %v1477, 2
      %v1479 = vmax.f32 %v1477, %v1478
      %v1480 = vrot.slane %v1479, 1
      %v1481 = vmax.f32 %v1479, %v1480
      %v1482 = vsub.f32 %v1464, %v1481
      %v1483 = vsub.f32 %v1465, %v1481
      %v1484 = vsub.f32 %v1466, %v1481
      %v1485 = vsub.f32 %v1467, %v1481
      %v1486 = vmul.f32 %v1482, 1.442695
      %v1487 = vpow.pop %v1486
      %v1488 = vmul.f32 %v1483, 1.442695
      %v1489 = vpow.pop %v1488
      %v1490 = vmul.f32 %v1484, 1.442695
      %v1491 = vpow.pop %v1490
      %v1492 = vmul.f32 %v1485, 1.442695
      %v1493 = vpow.pop %v1492
      %v1494 = vsel %vm1468, %v1487, 0.0
      %v1495 = vsel %vm1468, %v1489, 0.0
      %v1496 = vadd.f32 %v1494, %v1495
      %v1497 = vsel %vm1468, %v1491, 0.0
      %v1498 = vadd.f32 %v1496, %v1497
      %v1499 = vsel %vm1468, %v1493, 0.0
      %v1500 = vadd.f32 %v1498, %v1499
      %v1501 = vrot.slane %v1500, 4
      %v1502 = vadd.f32 %v1500, %v1501
      %v1503 = vrot.slane %v1502, 2
      %v1504 = vadd.f32 %v1502, %v1503
      %v1505 = vrot.slane %v1504, 1
      %v1506 = vadd.f32 %v1504, %v1505
      %v1507 = vrcp.pop %v1506
      %v1508 = vmul.f32 %v1487, %v1507
      %v1509 = vmul.f32 %v1489, %v1507
      %v1510 = vmul.f32 %v1491, %v1507
      %v1511 = vmul.f32 %v1493, %v1507
      %1516 = vrot.lane.b32.xlu0 %v1415, 3
      %v1517 = vpop.permute.xlu0 %1516
      %1518 = vrot.lane.b32.xlu0 %v1416, 3
      %v1519 = vpop.permute.xlu0 %1518
      %1520 = vrot.lane.b32.xlu0 %v1417, 3
      %v1521 = vpop.permute.xlu0 %1520
      %1522 = vrot.lane.b32.xlu0 %v1418, 3
      %v1523 = vpop.permute.xlu0 %1522
      %v1528 = vmul.f32 %v495, %v1517
      %v1529 = vmul.f32 %v496, %v1519
      %v1530 = vmul.f32 %v497, %v1521
      %v1531 = vmul.f32 %v498, %v1523
      %v1532 = vsel %vm1468, %v1528, -inf
      %v1533 = vsel %vm1468, %v1529, -inf
      %v1534 = vsel %vm1468, %v1530, -inf
      %v1535 = vsel %vm1468, %v1531, -inf
      %v1536 = vmax.f32 %v1532, %v1533
      %v1537 = vmax.f32 %v1534, %v1535
      %v1538 = vmax.f32 %v1536, %v1537
      %v1539 = vrot.slane %v1538, 4
      %v1540 = vmax.f32 %v1538, %v1539
      %v1541 = vrot.slane %v1540, 2
      %v1542 = vmax.f32 %v1540, %v1541
      %v1543 = vrot.slane %v1542, 1
      %v1544 = vmax.f32 %v1542, %v1543
      %v1545 = vsub.f32 %v1528, %v1544
      %v1546 = vsub.f32 %v1529, %v1544
      %v1547 = vsub.f32 %v1530, %v1544
      %v1548 = vsub.f32 %v1531, %v1544
      %v1549 = vmul.f32 %v1545, 1.442695
      %v1550 = vpow.pop %v1549
      %v1551 = vmul.f32 %v1546, 1.442695
      %v1552 = vpow.pop %v1551
      %v1553 = vmul.f32 %v1547, 1.442695
      %v1554 = vpow.pop %v1553
      %v1555 = vmul.f32 %v1548, 1.442695
      %v1556 = vpow.pop %v1555
      %v1557 = vsel %vm1468, %v1550, 0.0
      %v1558 = vsel %vm1468, %v1552, 0.0
      %v1559 = vadd.f32 %v1557, %v1558
      %v1560 = vsel %vm1468, %v1554, 0.0
      %v1561 = vadd.f32 %v1559, %v1560
      %v1562 = vsel %vm1468, %v1556, 0.0
      %v1563 = vadd.f32 %v1561, %v1562
      %v1564 = vrot.slane %v1563, 4
      %v1565 = vadd.f32 %v1563, %v1564
      %v1566 = vrot.slane %v1565, 2
      %v1567 = vadd.f32 %v1565, %v1566
      %v1568 = vrot.slane %v1567, 1
      %v1569 = vadd.f32 %v1567, %v1568
      %v1570 = vrcp.pop %v1569
      %v1571 = vmul.f32 %v1550, %v1570
      %v1572 = vmul.f32 %v1552, %v1570
      %v1573 = vmul.f32 %v1554, %v1570
      %v1574 = vmul.f32 %v1556, %v1570
      %v1575 = vsub.f32 %v1508, %v1571
      %v1576 = vsub.f32 %v1509, %v1572
      %v1577 = vsub.f32 %v1510, %v1573
      %v1578 = vsub.f32 %v1511, %v1574
      %1580 = vset.pattern.permute.xlu0 3
      %1581 = vperm.xlu0 %1580, %v1575
      %v1582 = vpop.permute.xlu0 %1581
      %1585 = vset.pattern.permute.xlu0 3
      %1586 = vperm.xlu0 %1585, %v1576
      %v1587 = vpop.permute.xlu0 %1586
      %1590 = vset.pattern.permute.xlu0 3
      %1591 = vperm.xlu0 %1590, %v1577
      %v1592 = vpop.permute.xlu0 %1591
      %1595 = vset.pattern.permute.xlu0 3
      %1596 = vperm.xlu0 %1595, %v1578
      %v1597 = vpop.permute.xlu0 %1596
      %v1599 = vmul.f32 %v1582, %v1354
      %v1600 = vmul.f32 %v1587, %v1355
      %v1601 = vmul.f32 %v1592, %v1356
      %v1602 = vmul.f32 %v1597, %v1357
      %v1603 = vadd.f32 %v1599, %v1600
      %v1604 = vadd.f32 %v1603, %v1601
      %v1605 = vadd.f32 %v1604, %v1602
      %v1606 = vrot.slane %v1605, 4
      %v1607 = vadd.f32 %v1605, %v1606
      %v1608 = vrot.slane %v1607, 2
      %v1609 = vadd.f32 %v1607, %v1608
      %v1610 = vrot.slane %v1609, 1
      %v1611 = vadd.f32 %v1609, %v1610
      %1613 = vset.pattern.permute.xlu0 98
      %1614 = vperm.xlu0 %1613, %v1447
      %v1615 = vpop.permute.xlu0 %1614
      %1617 = vset.pattern.permute.xlu0 99
      %1618 = vperm.xlu0 %1617, %v1447
      %v1619 = vpop.permute.xlu0 %1618
      %v1621 = vsel %vm383, %v1615, %v1619
      %1622 = vset.pattern.permute.xlu0 97
      %1623 = vperm.xlu0 %1622, %v1447
      %v1624 = vpop.permute.xlu0 %1623
      %v1626 = vsel %vm382, %v1624, %v1621
      %1627 = vset.pattern.permute.xlu0 96
      %1628 = vperm.xlu0 %1627, %v1447
      %v1629 = vpop.permute.xlu0 %1628
      %v1631 = vsel %vm381, %v1629, %v1626
      %v1632 = vxor.u32 %v1631, 2147483648
      %v1633 = vmul.f32 %v1632, 1.442695
      %v1634 = vpow.pop %v1633
      %v1635 = vadd.f32 %v1634, 1.0
      %v1636 = vrcp.pop %v1635
      %v1637 = vmul.f32 1.0, %v1636
      %v1638 = vmul.f32 %v1637, %v1611
      %1640 = vset.pattern.permute.xlu0 3
      %1641 = vperm.xlu0 %1640, %v1571
      %v1642 = vpop.permute.xlu0 %1641
      %1645 = vset.pattern.permute.xlu0 3
      %1646 = vperm.xlu0 %1645, %v1572
      %v1647 = vpop.permute.xlu0 %1646
      %1650 = vset.pattern.permute.xlu0 3
      %1651 = vperm.xlu0 %1650, %v1573
      %v1652 = vpop.permute.xlu0 %1651
      %1655 = vset.pattern.permute.xlu0 3
      %1656 = vperm.xlu0 %1655, %v1574
      %v1657 = vpop.permute.xlu0 %1656
      %v1659 = vmul.f32 %v1642, %v1638
      %v1660 = vmul.f32 %v1647, %v1638
      %v1661 = vmul.f32 %v1652, %v1638
      %v1662 = vmul.f32 %v1657, %v1638
      %v1663 = vadd.f32 %v1354, %v1659
      %v1664 = vadd.f32 %v1355, %v1660
      %v1665 = vadd.f32 %v1356, %v1661
      %v1666 = vadd.f32 %v1357, %v1662
      %1668 = vrot.lane.b32.xlu0 %v1638, 96
      %v1669 = vpop.permute.xlu0 %1668
      %v1671 = vsel %vm515, %v1669, 0.0
      %1672 = vadd.xlane.f32.xlu0 %v1671
      %v1673 = vpop.xlane.xlu0 %1672
      %v1674 = vmul.f32 %v1571, %v1673
      %v1675 = vmul.f32 %v1572, %v1673
      %v1676 = vmul.f32 %v1573, %v1673
      %v1677 = vmul.f32 %v1574, %v1673
      %1682 = vrot.lane.b32.xlu0 %v1674, 125
      %v1683 = vpop.permute.xlu0 %1682
      %1684 = vrot.lane.b32.xlu0 %v1675, 125
      %v1685 = vpop.permute.xlu0 %1684
      %1686 = vrot.lane.b32.xlu0 %v1676, 125
      %v1687 = vpop.permute.xlu0 %1686
      %1688 = vrot.lane.b32.xlu0 %v1677, 125
      %v1689 = vpop.permute.xlu0 %1688
      %v1694 = vadd.f32 %v1385, %v1683
      %v1695 = vadd.f32 %v1386, %v1685
      %v1696 = vadd.f32 %v1387, %v1687
      %v1697 = vadd.f32 %v1388, %v1689
      %1698 = vrot.lane.b32.xlu0 %v1638, 64
      %v1699 = vpop.permute.xlu0 %1698
      %v1701 = vsel %vm515, %v1699, 0.0
      %1702 = vadd.xlane.f32.xlu0 %v1701
      %v1703 = vpop.xlane.xlu0 %1702
      %v1704 = vmul.f32 %v1571, %v1703
      %v1705 = vmul.f32 %v1572, %v1703
      %v1706 = vmul.f32 %v1573, %v1703
      %v1707 = vmul.f32 %v1574, %v1703
      %1712 = vrot.lane.b32.xlu0 %v1704, 125
      %v1713 = vpop.permute.xlu0 %1712
      %1714 = vrot.lane.b32.xlu0 %v1705, 125
      %v1715 = vpop.permute.xlu0 %1714
      %1716 = vrot.lane.b32.xlu0 %v1706, 125
      %v1717 = vpop.permute.xlu0 %1716
      %1718 = vrot.lane.b32.xlu0 %v1707, 125
      %v1719 = vpop.permute.xlu0 %1718
      %v1724 = vadd.f32 %v1415, %v1713
      %v1725 = vadd.f32 %v1416, %v1715
      %v1726 = vadd.f32 %v1417, %v1717
      %v1727 = vadd.f32 %v1418, %v1719
      %1728 = vset.pattern.permute.xlu0 4
      %1729 = vperm.xlu0 %1728, %v495
      %v1730 = vpop.permute.xlu0 %1729
      %1732 = vset.pattern.permute.xlu0 4
      %1733 = vperm.xlu0 %1732, %v496
      %v1734 = vpop.permute.xlu0 %1733
      %1736 = vset.pattern.permute.xlu0 4
      %1737 = vperm.xlu0 %1736, %v497
      %v1738 = vpop.permute.xlu0 %1737
      %1740 = vset.pattern.permute.xlu0 4
      %1741 = vperm.xlu0 %1740, %v498
      %v1742 = vpop.permute.xlu0 %1741
      %v1744 = vmul.f32 %v1730, %v1663
      %v1745 = vmul.f32 %v1734, %v1664
      %v1746 = vmul.f32 %v1738, %v1665
      %v1747 = vmul.f32 %v1742, %v1666
      %v1748 = vadd.f32 %v1744, %v1745
      %v1749 = vadd.f32 %v1748, %v1746
      %v1750 = vadd.f32 %v1749, %v1747
      %v1751 = vrot.slane %v1750, 4
      %v1752 = vadd.f32 %v1750, %v1751
      %v1753 = vrot.slane %v1752, 2
      %v1754 = vadd.f32 %v1752, %v1753
      %v1755 = vrot.slane %v1754, 1
      %v1756 = vadd.f32 %v1754, %v1755
      %1761 = vrot.lane.b32.xlu0 %v1694, 4
      %v1762 = vpop.permute.xlu0 %1761
      %1763 = vrot.lane.b32.xlu0 %v1695, 4
      %v1764 = vpop.permute.xlu0 %1763
      %1765 = vrot.lane.b32.xlu0 %v1696, 4
      %v1766 = vpop.permute.xlu0 %1765
      %1767 = vrot.lane.b32.xlu0 %v1697, 4
      %v1768 = vpop.permute.xlu0 %1767
      %v1773 = vmul.f32 %v495, %v1762
      %v1774 = vmul.f32 %v496, %v1764
      %v1775 = vmul.f32 %v497, %v1766
      %v1776 = vmul.f32 %v498, %v1768
      %vm1777 = vcmask 39968
      %v1778 = vsel %vm1777, %v1773, -inf
      %v1779 = vsel %vm1777, %v1774, -inf
      %v1780 = vsel %vm1777, %v1775, -inf
      %v1781 = vsel %vm1777, %v1776, -inf
      %v1782 = vmax.f32 %v1778, %v1779
      %v1783 = vmax.f32 %v1780, %v1781
      %v1784 = vmax.f32 %v1782, %v1783
      %v1785 = vrot.slane %v1784, 4
      %v1786 = vmax.f32 %v1784, %v1785
      %v1787 = vrot.slane %v1786, 2
      %v1788 = vmax.f32 %v1786, %v1787
      %v1789 = vrot.slane %v1788, 1
      %v1790 = vmax.f32 %v1788, %v1789
      %v1791 = vsub.f32 %v1773, %v1790
      %v1792 = vsub.f32 %v1774, %v1790
      %v1793 = vsub.f32 %v1775, %v1790
      %v1794 = vsub.f32 %v1776, %v1790
      %v1795 = vmul.f32 %v1791, 1.442695
      %v1796 = vpow.pop %v1795
      %v1797 = vmul.f32 %v1792, 1.442695
      %v1798 = vpow.pop %v1797
      %v1799 = vmul.f32 %v1793, 1.442695
      %v1800 = vpow.pop %v1799
      %v1801 = vmul.f32 %v1794, 1.442695
      %v1802 = vpow.pop %v1801
      %v1803 = vsel %vm1777, %v1796, 0.0
      %v1804 = vsel %vm1777, %v1798, 0.0
      %v1805 = vadd.f32 %v1803, %v1804
      %v1806 = vsel %vm1777, %v1800, 0.0
      %v1807 = vadd.f32 %v1805, %v1806
      %v1808 = vsel %vm1777, %v1802, 0.0
      %v1809 = vadd.f32 %v1807, %v1808
      %v1810 = vrot.slane %v1809, 4
      %v1811 = vadd.f32 %v1809, %v1810
      %v1812 = vrot.slane %v1811, 2
      %v1813 = vadd.f32 %v1811, %v1812
      %v1814 = vrot.slane %v1813, 1
      %v1815 = vadd.f32 %v1813, %v1814
      %v1816 = vrcp.pop %v1815
      %v1817 = vmul.f32 %v1796, %v1816
      %v1818 = vmul.f32 %v1798, %v1816
      %v1819 = vmul.f32 %v1800, %v1816
      %v1820 = vmul.f32 %v1802, %v1816
      %1825 = vrot.lane.b32.xlu0 %v1724, 4
      %v1826 = vpop.permute.xlu0 %1825
      %1827 = vrot.lane.b32.xlu0 %v1725, 4
      %v1828 = vpop.permute.xlu0 %1827
      %1829 = vrot.lane.b32.xlu0 %v1726, 4
      %v1830 = vpop.permute.xlu0 %1829
      %1831 = vrot.lane.b32.xlu0 %v1727, 4
      %v1832 = vpop.permute.xlu0 %1831
      %v1837 = vmul.f32 %v495, %v1826
      %v1838 = vmul.f32 %v496, %v1828
      %v1839 = vmul.f32 %v497, %v1830
      %v1840 = vmul.f32 %v498, %v1832
      %v1841 = vsel %vm1777, %v1837, -inf
      %v1842 = vsel %vm1777, %v1838, -inf
      %v1843 = vsel %vm1777, %v1839, -inf
      %v1844 = vsel %vm1777, %v1840, -inf
      %v1845 = vmax.f32 %v1841, %v1842
      %v1846 = vmax.f32 %v1843, %v1844
      %v1847 = vmax.f32 %v1845, %v1846
      %v1848 = vrot.slane %v1847, 4
      %v1849 = vmax.f32 %v1847, %v1848
      %v1850 = vrot.slane %v1849, 2
      %v1851 = vmax.f32 %v1849, %v1850
      %v1852 = vrot.slane %v1851, 1
      %v1853 = vmax.f32 %v1851, %v1852
      %v1854 = vsub.f32 %v1837, %v1853
      %v1855 = vsub.f32 %v1838, %v1853
      %v1856 = vsub.f32 %v1839, %v1853
      %v1857 = vsub.f32 %v1840, %v1853
      %v1858 = vmul.f32 %v1854, 1.442695
      %v1859 = vpow.pop %v1858
      %v1860 = vmul.f32 %v1855, 1.442695
      %v1861 = vpow.pop %v1860
      %v1862 = vmul.f32 %v1856, 1.442695
      %v1863 = vpow.pop %v1862
      %v1864 = vmul.f32 %v1857, 1.442695
      %v1865 = vpow.pop %v1864
      %v1866 = vsel %vm1777, %v1859, 0.0
      %v1867 = vsel %vm1777, %v1861, 0.0
      %v1868 = vadd.f32 %v1866, %v1867
      %v1869 = vsel %vm1777, %v1863, 0.0
      %v1870 = vadd.f32 %v1868, %v1869
      %v1871 = vsel %vm1777, %v1865, 0.0
      %v1872 = vadd.f32 %v1870, %v1871
      %v1873 = vrot.slane %v1872, 4
      %v1874 = vadd.f32 %v1872, %v1873
      %v1875 = vrot.slane %v1874, 2
      %v1876 = vadd.f32 %v1874, %v1875
      %v1877 = vrot.slane %v1876, 1
      %v1878 = vadd.f32 %v1876, %v1877
      %v1879 = vrcp.pop %v1878
      %v1880 = vmul.f32 %v1859, %v1879
      %v1881 = vmul.f32 %v1861, %v1879
      %v1882 = vmul.f32 %v1863, %v1879
      %v1883 = vmul.f32 %v1865, %v1879
      %v1884 = vsub.f32 %v1817, %v1880
      %v1885 = vsub.f32 %v1818, %v1881
      %v1886 = vsub.f32 %v1819, %v1882
      %v1887 = vsub.f32 %v1820, %v1883
      %1889 = vset.pattern.permute.xlu0 4
      %1890 = vperm.xlu0 %1889, %v1884
      %v1891 = vpop.permute.xlu0 %1890
      %1894 = vset.pattern.permute.xlu0 4
      %1895 = vperm.xlu0 %1894, %v1885
      %v1896 = vpop.permute.xlu0 %1895
      %1899 = vset.pattern.permute.xlu0 4
      %1900 = vperm.xlu0 %1899, %v1886
      %v1901 = vpop.permute.xlu0 %1900
      %1904 = vset.pattern.permute.xlu0 4
      %1905 = vperm.xlu0 %1904, %v1887
      %v1906 = vpop.permute.xlu0 %1905
      %v1908 = vmul.f32 %v1891, %v1663
      %v1909 = vmul.f32 %v1896, %v1664
      %v1910 = vmul.f32 %v1901, %v1665
      %v1911 = vmul.f32 %v1906, %v1666
      %v1912 = vadd.f32 %v1908, %v1909
      %v1913 = vadd.f32 %v1912, %v1910
      %v1914 = vadd.f32 %v1913, %v1911
      %v1915 = vrot.slane %v1914, 4
      %v1916 = vadd.f32 %v1914, %v1915
      %v1917 = vrot.slane %v1916, 2
      %v1918 = vadd.f32 %v1916, %v1917
      %v1919 = vrot.slane %v1918, 1
      %v1920 = vadd.f32 %v1918, %v1919
      %1922 = vset.pattern.permute.xlu0 98
      %1923 = vperm.xlu0 %1922, %v1756
      %v1924 = vpop.permute.xlu0 %1923
      %1926 = vset.pattern.permute.xlu0 99
      %1927 = vperm.xlu0 %1926, %v1756
      %v1928 = vpop.permute.xlu0 %1927
      %v1930 = vsel %vm383, %v1924, %v1928
      %1931 = vset.pattern.permute.xlu0 97
      %1932 = vperm.xlu0 %1931, %v1756
      %v1933 = vpop.permute.xlu0 %1932
      %v1935 = vsel %vm382, %v1933, %v1930
      %1936 = vset.pattern.permute.xlu0 96
      %1937 = vperm.xlu0 %1936, %v1756
      %v1938 = vpop.permute.xlu0 %1937
      %v1940 = vsel %vm381, %v1938, %v1935
      %v1941 = vxor.u32 %v1940, 2147483648
      %v1942 = vmul.f32 %v1941, 1.442695
      %v1943 = vpow.pop %v1942
      %v1944 = vadd.f32 %v1943, 1.0
      %v1945 = vrcp.pop %v1944
      %v1946 = vmul.f32 1.0, %v1945
      %v1947 = vmul.f32 %v1946, %v1920
      %1949 = vset.pattern.permute.xlu0 4
      %1950 = vperm.xlu0 %1949, %v1880
      %v1951 = vpop.permute.xlu0 %1950
      %1954 = vset.pattern.permute.xlu0 4
      %1955 = vperm.xlu0 %1954, %v1881
      %v1956 = vpop.permute.xlu0 %1955
      %1959 = vset.pattern.permute.xlu0 4
      %1960 = vperm.xlu0 %1959, %v1882
      %v1961 = vpop.permute.xlu0 %1960
      %1964 = vset.pattern.permute.xlu0 4
      %1965 = vperm.xlu0 %1964, %v1883
      %v1966 = vpop.permute.xlu0 %1965
      %v1968 = vmul.f32 %v1951, %v1947
      %v1969 = vmul.f32 %v1956, %v1947
      %v1970 = vmul.f32 %v1961, %v1947
      %v1971 = vmul.f32 %v1966, %v1947
      %v1972 = vadd.f32 %v1663, %v1968
      %v1973 = vadd.f32 %v1664, %v1969
      %v1974 = vadd.f32 %v1665, %v1970
      %v1975 = vadd.f32 %v1666, %v1971
      %1977 = vrot.lane.b32.xlu0 %v1947, 96
      %v1978 = vpop.permute.xlu0 %1977
      %v1980 = vsel %vm515, %v1978, 0.0
      %1981 = vadd.xlane.f32.xlu0 %v1980
      %v1982 = vpop.xlane.xlu0 %1981
      %v1983 = vmul.f32 %v1880, %v1982
      %v1984 = vmul.f32 %v1881, %v1982
      %v1985 = vmul.f32 %v1882, %v1982
      %v1986 = vmul.f32 %v1883, %v1982
      %1991 = vrot.lane.b32.xlu0 %v1983, 124
      %v1992 = vpop.permute.xlu0 %1991
      %1993 = vrot.lane.b32.xlu0 %v1984, 124
      %v1994 = vpop.permute.xlu0 %1993
      %1995 = vrot.lane.b32.xlu0 %v1985, 124
      %v1996 = vpop.permute.xlu0 %1995
      %1997 = vrot.lane.b32.xlu0 %v1986, 124
      %v1998 = vpop.permute.xlu0 %1997
      %v2003 = vadd.f32 %v1694, %v1992
      %v2004 = vadd.f32 %v1695, %v1994
      %v2005 = vadd.f32 %v1696, %v1996
      %v2006 = vadd.f32 %v1697, %v1998
      %2007 = vrot.lane.b32.xlu0 %v1947, 64
      %v2008 = vpop.permute.xlu0 %2007
      %v2010 = vsel %vm515, %v2008, 0.0
      %2011 = vadd.xlane.f32.xlu0 %v2010
      %v2012 = vpop.xlane.xlu0 %2011
      %v2013 = vmul.f32 %v1880, %v2012
      %v2014 = vmul.f32 %v1881, %v2012
      %v2015 = vmul.f32 %v1882, %v2012
      %v2016 = vmul.f32 %v1883, %v2012
      %2021 = vrot.lane.b32.xlu0 %v2013, 124
      %v2022 = vpop.permute.xlu0 %2021
      %2023 = vrot.lane.b32.xlu0 %v2014, 124
      %v2024 = vpop.permute.xlu0 %2023
      %2025 = vrot.lane.b32.xlu0 %v2015, 124
      %v2026 = vpop.permute.xlu0 %2025
      %2027 = vrot.lane.b32.xlu0 %v2016, 124
      %v2028 = vpop.permute.xlu0 %2027
      %v2033 = vadd.f32 %v1724, %v2022
      %v2034 = vadd.f32 %v1725, %v2024
      %v2035 = vadd.f32 %v1726, %v2026
      %v2036 = vadd.f32 %v1727, %v2028
      %2037 = vset.pattern.permute.xlu0 5
      %2038 = vperm.xlu0 %2037, %v495
      %v2039 = vpop.permute.xlu0 %2038
      %2041 = vset.pattern.permute.xlu0 5
      %2042 = vperm.xlu0 %2041, %v496
      %v2043 = vpop.permute.xlu0 %2042
      %2045 = vset.pattern.permute.xlu0 5
      %2046 = vperm.xlu0 %2045, %v497
      %v2047 = vpop.permute.xlu0 %2046
      %2049 = vset.pattern.permute.xlu0 5
      %2050 = vperm.xlu0 %2049, %v498
      %v2051 = vpop.permute.xlu0 %2050
      %v2053 = vmul.f32 %v2039, %v1972
      %v2054 = vmul.f32 %v2043, %v1973
      %v2055 = vmul.f32 %v2047, %v1974
      %v2056 = vmul.f32 %v2051, %v1975
      %v2057 = vadd.f32 %v2053, %v2054
      %v2058 = vadd.f32 %v2057, %v2055
      %v2059 = vadd.f32 %v2058, %v2056
      %v2060 = vrot.slane %v2059, 4
      %v2061 = vadd.f32 %v2059, %v2060
      %v2062 = vrot.slane %v2061, 2
      %v2063 = vadd.f32 %v2061, %v2062
      %v2064 = vrot.slane %v2063, 1
      %v2065 = vadd.f32 %v2063, %v2064
      %2070 = vrot.lane.b32.xlu0 %v2003, 5
      %v2071 = vpop.permute.xlu0 %2070
      %2072 = vrot.lane.b32.xlu0 %v2004, 5
      %v2073 = vpop.permute.xlu0 %2072
      %2074 = vrot.lane.b32.xlu0 %v2005, 5
      %v2075 = vpop.permute.xlu0 %2074
      %2076 = vrot.lane.b32.xlu0 %v2006, 5
      %v2077 = vpop.permute.xlu0 %2076
      %v2082 = vmul.f32 %v495, %v2071
      %v2083 = vmul.f32 %v496, %v2073
      %v2084 = vmul.f32 %v497, %v2075
      %v2085 = vmul.f32 %v498, %v2077
      %vm2086 = vcmask 48168
      %v2087 = vsel %vm2086, %v2082, -inf
      %v2088 = vsel %vm2086, %v2083, -inf
      %v2089 = vsel %vm2086, %v2084, -inf
      %v2090 = vsel %vm2086, %v2085, -inf
      %v2091 = vmax.f32 %v2087, %v2088
      %v2092 = vmax.f32 %v2089, %v2090
      %v2093 = vmax.f32 %v2091, %v2092
      %v2094 = vrot.slane %v2093, 4
      %v2095 = vmax.f32 %v2093, %v2094
      %v2096 = vrot.slane %v2095, 2
      %v2097 = vmax.f32 %v2095, %v2096
      %v2098 = vrot.slane %v2097, 1
      %v2099 = vmax.f32 %v2097, %v2098
      %v2100 = vsub.f32 %v2082, %v2099
      %v2101 = vsub.f32 %v2083, %v2099
      %v2102 = vsub.f32 %v2084, %v2099
      %v2103 = vsub.f32 %v2085, %v2099
      %v2104 = vmul.f32 %v2100, 1.442695
      %v2105 = vpow.pop %v2104
      %v2106 = vmul.f32 %v2101, 1.442695
      %v2107 = vpow.pop %v2106
      %v2108 = vmul.f32 %v2102, 1.442695
      %v2109 = vpow.pop %v2108
      %v2110 = vmul.f32 %v2103, 1.442695
      %v2111 = vpow.pop %v2110
      %v2112 = vsel %vm2086, %v2105, 0.0
      %v2113 = vsel %vm2086, %v2107, 0.0
      %v2114 = vadd.f32 %v2112, %v2113
      %v2115 = vsel %vm2086, %v2109, 0.0
      %v2116 = vadd.f32 %v2114, %v2115
      %v2117 = vsel %vm2086, %v2111, 0.0
      %v2118 = vadd.f32 %v2116, %v2117
      %v2119 = vrot.slane %v2118, 4
      %v2120 = vadd.f32 %v2118, %v2119
      %v2121 = vrot.slane %v2120, 2
      %v2122 = vadd.f32 %v2120, %v2121
      %v2123 = vrot.slane %v2122, 1
      %v2124 = vadd.f32 %v2122, %v2123
      %v2125 = vrcp.pop %v2124
      %v2126 = vmul.f32 %v2105, %v2125
      %v2127 = vmul.f32 %v2107, %v2125
      %v2128 = vmul.f32 %v2109, %v2125
      %v2129 = vmul.f32 %v2111, %v2125
      %2134 = vrot.lane.b32.xlu0 %v2033, 5
      %v2135 = vpop.permute.xlu0 %2134
      %2136 = vrot.lane.b32.xlu0 %v2034, 5
      %v2137 = vpop.permute.xlu0 %2136
      %2138 = vrot.lane.b32.xlu0 %v2035, 5
      %v2139 = vpop.permute.xlu0 %2138
      %2140 = vrot.lane.b32.xlu0 %v2036, 5
      %v2141 = vpop.permute.xlu0 %2140
      %v2146 = vmul.f32 %v495, %v2135
      %v2147 = vmul.f32 %v496, %v2137
      %v2148 = vmul.f32 %v497, %v2139
      %v2149 = vmul.f32 %v498, %v2141
      %v2150 = vsel %vm2086, %v2146, -inf
      %v2151 = vsel %vm2086, %v2147, -inf
      %v2152 = vsel %vm2086, %v2148, -inf
      %v2153 = vsel %vm2086, %v2149, -inf
      %v2154 = vmax.f32 %v2150, %v2151
      %v2155 = vmax.f32 %v2152, %v2153
      %v2156 = vmax.f32 %v2154, %v2155
      %v2157 = vrot.slane %v2156, 4
      %v2158 = vmax.f32 %v2156, %v2157
      %v2159 = vrot.slane %v2158, 2
      %v2160 = vmax.f32 %v2158, %v2159
      %v2161 = vrot.slane %v2160, 1
      %v2162 = vmax.f32 %v2160, %v2161
      %v2163 = vsub.f32 %v2146, %v2162
      %v2164 = vsub.f32 %v2147, %v2162
      %v2165 = vsub.f32 %v2148, %v2162
      %v2166 = vsub.f32 %v2149, %v2162
      %v2167 = vmul.f32 %v2163, 1.442695
      %v2168 = vpow.pop %v2167
      %v2169 = vmul.f32 %v2164, 1.442695
      %v2170 = vpow.pop %v2169
      %v2171 = vmul.f32 %v2165, 1.442695
      %v2172 = vpow.pop %v2171
      %v2173 = vmul.f32 %v2166, 1.442695
      %v2174 = vpow.pop %v2173
      %v2175 = vsel %vm2086, %v2168, 0.0
      %v2176 = vsel %vm2086, %v2170, 0.0
      %v2177 = vadd.f32 %v2175, %v2176
      %v2178 = vsel %vm2086, %v2172, 0.0
      %v2179 = vadd.f32 %v2177, %v2178
      %v2180 = vsel %vm2086, %v2174, 0.0
      %v2181 = vadd.f32 %v2179, %v2180
      %v2182 = vrot.slane %v2181, 4
      %v2183 = vadd.f32 %v2181, %v2182
      %v2184 = vrot.slane %v2183, 2
      %v2185 = vadd.f32 %v2183, %v2184
      %v2186 = vrot.slane %v2185, 1
      %v2187 = vadd.f32 %v2185, %v2186
      %v2188 = vrcp.pop %v2187
      %v2189 = vmul.f32 %v2168, %v2188
      %v2190 = vmul.f32 %v2170, %v2188
      %v2191 = vmul.f32 %v2172, %v2188
      %v2192 = vmul.f32 %v2174, %v2188
      %v2193 = vsub.f32 %v2126, %v2189
      %v2194 = vsub.f32 %v2127, %v2190
      %v2195 = vsub.f32 %v2128, %v2191
      %v2196 = vsub.f32 %v2129, %v2192
      %2198 = vset.pattern.permute.xlu0 5
      %2199 = vperm.xlu0 %2198, %v2193
      %v2200 = vpop.permute.xlu0 %2199
      %2203 = vset.pattern.permute.xlu0 5
      %2204 = vperm.xlu0 %2203, %v2194
      %v2205 = vpop.permute.xlu0 %2204
      %2208 = vset.pattern.permute.xlu0 5
      %2209 = vperm.xlu0 %2208, %v2195
      %v2210 = vpop.permute.xlu0 %2209
      %2213 = vset.pattern.permute.xlu0 5
      %2214 = vperm.xlu0 %2213, %v2196
      %v2215 = vpop.permute.xlu0 %2214
      %v2217 = vmul.f32 %v2200, %v1972
      %v2218 = vmul.f32 %v2205, %v1973
      %v2219 = vmul.f32 %v2210, %v1974
      %v2220 = vmul.f32 %v2215, %v1975
      %v2221 = vadd.f32 %v2217, %v2218
      %v2222 = vadd.f32 %v2221, %v2219
      %v2223 = vadd.f32 %v2222, %v2220
      %v2224 = vrot.slane %v2223, 4
      %v2225 = vadd.f32 %v2223, %v2224
      %v2226 = vrot.slane %v2225, 2
      %v2227 = vadd.f32 %v2225, %v2226
      %v2228 = vrot.slane %v2227, 1
      %v2229 = vadd.f32 %v2227, %v2228
      %2231 = vset.pattern.permute.xlu0 98
      %2232 = vperm.xlu0 %2231, %v2065
      %v2233 = vpop.permute.xlu0 %2232
      %2235 = vset.pattern.permute.xlu0 99
      %2236 = vperm.xlu0 %2235, %v2065
      %v2237 = vpop.permute.xlu0 %2236
      %v2239 = vsel %vm383, %v2233, %v2237
      %2240 = vset.pattern.permute.xlu0 97
      %2241 = vperm.xlu0 %2240, %v2065
      %v2242 = vpop.permute.xlu0 %2241
      %v2244 = vsel %vm382, %v2242, %v2239
      %2245 = vset.pattern.permute.xlu0 96
      %2246 = vperm.xlu0 %2245, %v2065
      %v2247 = vpop.permute.xlu0 %2246
      %v2249 = vsel %vm381, %v2247, %v2244
      %v2250 = vxor.u32 %v2249, 2147483648
      %v2251 = vmul.f32 %v2250, 1.442695
      %v2252 = vpow.pop %v2251
      %v2253 = vadd.f32 %v2252, 1.0
      %v2254 = vrcp.pop %v2253
      %v2255 = vmul.f32 1.0, %v2254
      %v2256 = vmul.f32 %v2255, %v2229
      %2258 = vset.pattern.permute.xlu0 5
      %2259 = vperm.xlu0 %2258, %v2189
      %v2260 = vpop.permute.xlu0 %2259
      %2263 = vset.pattern.permute.xlu0 5
      %2264 = vperm.xlu0 %2263, %v2190
      %v2265 = vpop.permute.xlu0 %2264
      %2268 = vset.pattern.permute.xlu0 5
      %2269 = vperm.xlu0 %2268, %v2191
      %v2270 = vpop.permute.xlu0 %2269
      %2273 = vset.pattern.permute.xlu0 5
      %2274 = vperm.xlu0 %2273, %v2192
      %v2275 = vpop.permute.xlu0 %2274
      %v2277 = vmul.f32 %v2260, %v2256
      %v2278 = vmul.f32 %v2265, %v2256
      %v2279 = vmul.f32 %v2270, %v2256
      %v2280 = vmul.f32 %v2275, %v2256
      %v2281 = vadd.f32 %v1972, %v2277
      %v2282 = vadd.f32 %v1973, %v2278
      %v2283 = vadd.f32 %v1974, %v2279
      %v2284 = vadd.f32 %v1975, %v2280
      %2286 = vrot.lane.b32.xlu0 %v2256, 96
      %v2287 = vpop.permute.xlu0 %2286
      %v2289 = vsel %vm515, %v2287, 0.0
      %2290 = vadd.xlane.f32.xlu0 %v2289
      %v2291 = vpop.xlane.xlu0 %2290
      %v2292 = vmul.f32 %v2189, %v2291
      %v2293 = vmul.f32 %v2190, %v2291
      %v2294 = vmul.f32 %v2191, %v2291
      %v2295 = vmul.f32 %v2192, %v2291
      %2300 = vrot.lane.b32.xlu0 %v2292, 123
      %v2301 = vpop.permute.xlu0 %2300
      %2302 = vrot.lane.b32.xlu0 %v2293, 123
      %v2303 = vpop.permute.xlu0 %2302
      %2304 = vrot.lane.b32.xlu0 %v2294, 123
      %v2305 = vpop.permute.xlu0 %2304
      %2306 = vrot.lane.b32.xlu0 %v2295, 123
      %v2307 = vpop.permute.xlu0 %2306
      %v2312 = vadd.f32 %v2003, %v2301
      %v2313 = vadd.f32 %v2004, %v2303
      %v2314 = vadd.f32 %v2005, %v2305
      %v2315 = vadd.f32 %v2006, %v2307
      %2316 = vrot.lane.b32.xlu0 %v2256, 64
      %v2317 = vpop.permute.xlu0 %2316
      %v2319 = vsel %vm515, %v2317, 0.0
      %2320 = vadd.xlane.f32.xlu0 %v2319
      %v2321 = vpop.xlane.xlu0 %2320
      %v2322 = vmul.f32 %v2189, %v2321
      %v2323 = vmul.f32 %v2190, %v2321
      %v2324 = vmul.f32 %v2191, %v2321
      %v2325 = vmul.f32 %v2192, %v2321
      %2330 = vrot.lane.b32.xlu0 %v2322, 123
      %v2331 = vpop.permute.xlu0 %2330
      %2332 = vrot.lane.b32.xlu0 %v2323, 123
      %v2333 = vpop.permute.xlu0 %2332
      %2334 = vrot.lane.b32.xlu0 %v2324, 123
      %v2335 = vpop.permute.xlu0 %2334
      %2336 = vrot.lane.b32.xlu0 %v2325, 123
      %v2337 = vpop.permute.xlu0 %2336
      %v2342 = vadd.f32 %v2033, %v2331
      %v2343 = vadd.f32 %v2034, %v2333
      %v2344 = vadd.f32 %v2035, %v2335
      %v2345 = vadd.f32 %v2036, %v2337
      %2346 = vset.pattern.permute.xlu0 6
      %2347 = vperm.xlu0 %2346, %v495
      %v2348 = vpop.permute.xlu0 %2347
      %2350 = vset.pattern.permute.xlu0 6
      %2351 = vperm.xlu0 %2350, %v496
      %v2352 = vpop.permute.xlu0 %2351
      %2354 = vset.pattern.permute.xlu0 6
      %2355 = vperm.xlu0 %2354, %v497
      %v2356 = vpop.permute.xlu0 %2355
      %2358 = vset.pattern.permute.xlu0 6
      %2359 = vperm.xlu0 %2358, %v498
      %v2360 = vpop.permute.xlu0 %2359
      %v2362 = vmul.f32 %v2348, %v2281
      %v2363 = vmul.f32 %v2352, %v2282
      %v2364 = vmul.f32 %v2356, %v2283
      %v2365 = vmul.f32 %v2360, %v2284
      %v2366 = vadd.f32 %v2362, %v2363
      %v2367 = vadd.f32 %v2366, %v2364
      %v2368 = vadd.f32 %v2367, %v2365
      %v2369 = vrot.slane %v2368, 4
      %v2370 = vadd.f32 %v2368, %v2369
      %v2371 = vrot.slane %v2370, 2
      %v2372 = vadd.f32 %v2370, %v2371
      %v2373 = vrot.slane %v2372, 1
      %v2374 = vadd.f32 %v2372, %v2373
      %2379 = vrot.lane.b32.xlu0 %v2312, 6
      %v2380 = vpop.permute.xlu0 %2379
      %2381 = vrot.lane.b32.xlu0 %v2313, 6
      %v2382 = vpop.permute.xlu0 %2381
      %2383 = vrot.lane.b32.xlu0 %v2314, 6
      %v2384 = vpop.permute.xlu0 %2383
      %2385 = vrot.lane.b32.xlu0 %v2315, 6
      %v2386 = vpop.permute.xlu0 %2385
      %v2391 = vmul.f32 %v495, %v2380
      %v2392 = vmul.f32 %v496, %v2382
      %v2393 = vmul.f32 %v497, %v2384
      %v2394 = vmul.f32 %v498, %v2386
      %vm2395 = vcmask 56368
      %v2396 = vsel %vm2395, %v2391, -inf
      %v2397 = vsel %vm2395, %v2392, -inf
      %v2398 = vsel %vm2395, %v2393, -inf
      %v2399 = vsel %vm2395, %v2394, -inf
      %v2400 = vmax.f32 %v2396, %v2397
      %v2401 = vmax.f32 %v2398, %v2399
      %v2402 = vmax.f32 %v2400, %v2401
      %v2403 = vrot.slane %v2402, 4
      %v2404 = vmax.f32 %v2402, %v2403
      %v2405 = vrot.slane %v2404, 2
      %v2406 = vmax.f32 %v2404, %v2405
      %v2407 = vrot.slane %v2406, 1
      %v2408 = vmax.f32 %v2406, %v2407
      %v2409 = vsub.f32 %v2391, %v2408
      %v2410 = vsub.f32 %v2392, %v2408
      %v2411 = vsub.f32 %v2393, %v2408
      %v2412 = vsub.f32 %v2394, %v2408
      %v2413 = vmul.f32 %v2409, 1.442695
      %v2414 = vpow.pop %v2413
      %v2415 = vmul.f32 %v2410, 1.442695
      %v2416 = vpow.pop %v2415
      %v2417 = vmul.f32 %v2411, 1.442695
      %v2418 = vpow.pop %v2417
      %v2419 = vmul.f32 %v2412, 1.442695
      %v2420 = vpow.pop %v2419
      %v2421 = vsel %vm2395, %v2414, 0.0
      %v2422 = vsel %vm2395, %v2416, 0.0
      %v2423 = vadd.f32 %v2421, %v2422
      %v2424 = vsel %vm2395, %v2418, 0.0
      %v2425 = vadd.f32 %v2423, %v2424
      %v2426 = vsel %vm2395, %v2420, 0.0
      %v2427 = vadd.f32 %v2425, %v2426
      %v2428 = vrot.slane %v2427, 4
      %v2429 = vadd.f32 %v2427, %v2428
      %v2430 = vrot.slane %v2429, 2
      %v2431 = vadd.f32 %v2429, %v2430
      %v2432 = vrot.slane %v2431, 1
      %v2433 = vadd.f32 %v2431, %v2432
      %v2434 = vrcp.pop %v2433
      %v2435 = vmul.f32 %v2414, %v2434
      %v2436 = vmul.f32 %v2416, %v2434
      %v2437 = vmul.f32 %v2418, %v2434
      %v2438 = vmul.f32 %v2420, %v2434
      %2443 = vrot.lane.b32.xlu0 %v2342, 6
      %v2444 = vpop.permute.xlu0 %2443
      %2445 = vrot.lane.b32.xlu0 %v2343, 6
      %v2446 = vpop.permute.xlu0 %2445
      %2447 = vrot.lane.b32.xlu0 %v2344, 6
      %v2448 = vpop.permute.xlu0 %2447
      %2449 = vrot.lane.b32.xlu0 %v2345, 6
      %v2450 = vpop.permute.xlu0 %2449
      %v2455 = vmul.f32 %v495, %v2444
      %v2456 = vmul.f32 %v496, %v2446
      %v2457 = vmul.f32 %v497, %v2448
      %v2458 = vmul.f32 %v498, %v2450
      %v2459 = vsel %vm2395, %v2455, -inf
      %v2460 = vsel %vm2395, %v2456, -inf
      %v2461 = vsel %vm2395, %v2457, -inf
      %v2462 = vsel %vm2395, %v2458, -inf
      %v2463 = vmax.f32 %v2459, %v2460
      %v2464 = vmax.f32 %v2461, %v2462
      %v2465 = vmax.f32 %v2463, %v2464
      %v2466 = vrot.slane %v2465, 4
      %v2467 = vmax.f32 %v2465, %v2466
      %v2468 = vrot.slane %v2467, 2
      %v2469 = vmax.f32 %v2467, %v2468
      %v2470 = vrot.slane %v2469, 1
      %v2471 = vmax.f32 %v2469, %v2470
      %v2472 = vsub.f32 %v2455, %v2471
      %v2473 = vsub.f32 %v2456, %v2471
      %v2474 = vsub.f32 %v2457, %v2471
      %v2475 = vsub.f32 %v2458, %v2471
      %v2476 = vmul.f32 %v2472, 1.442695
      %v2477 = vpow.pop %v2476
      %v2478 = vmul.f32 %v2473, 1.442695
      %v2479 = vpow.pop %v2478
      %v2480 = vmul.f32 %v2474, 1.442695
      %v2481 = vpow.pop %v2480
      %v2482 = vmul.f32 %v2475, 1.442695
      %v2483 = vpow.pop %v2482
      %v2484 = vsel %vm2395, %v2477, 0.0
      %v2485 = vsel %vm2395, %v2479, 0.0
      %v2486 = vadd.f32 %v2484, %v2485
      %v2487 = vsel %vm2395, %v2481, 0.0
      %v2488 = vadd.f32 %v2486, %v2487
      %v2489 = vsel %vm2395, %v2483, 0.0
      %v2490 = vadd.f32 %v2488, %v2489
      %v2491 = vrot.slane %v2490, 4
      %v2492 = vadd.f32 %v2490, %v2491
      %v2493 = vrot.slane %v2492, 2
      %v2494 = vadd.f32 %v2492, %v2493
      %v2495 = vrot.slane %v2494, 1
      %v2496 = vadd.f32 %v2494, %v2495
      %v2497 = vrcp.pop %v2496
      %v2498 = vmul.f32 %v2477, %v2497
      %v2499 = vmul.f32 %v2479, %v2497
      %v2500 = vmul.f32 %v2481, %v2497
      %v2501 = vmul.f32 %v2483, %v2497
      %v2502 = vsub.f32 %v2435, %v2498
      %v2503 = vsub.f32 %v2436, %v2499
      %v2504 = vsub.f32 %v2437, %v2500
      %v2505 = vsub.f32 %v2438, %v2501
      %2507 = vset.pattern.permute.xlu0 6
      %2508 = vperm.xlu0 %2507, %v2502
      %v2509 = vpop.permute.xlu0 %2508
      %2512 = vset.pattern.permute.xlu0 6
      %2513 = vperm.xlu0 %2512, %v2503
      %v2514 = vpop.permute.xlu0 %2513
      %2517 = vset.pattern.permute.xlu0 6
      %2518 = vperm.xlu0 %2517, %v2504
      %v2519 = vpop.permute.xlu0 %2518
      %2522 = vset.pattern.permute.xlu0 6
      %2523 = vperm.xlu0 %2522, %v2505
      %v2524 = vpop.permute.xlu0 %2523
      %v2526 = vmul.f32 %v2509, %v2281
      %v2527 = vmul.f32 %v2514, %v2282
      %v2528 = vmul.f32 %v2519, %v2283
      %v2529 = vmul.f32 %v2524, %v2284
      %v2530 = vadd.f32 %v2526, %v2527
      %v2531 = vadd.f32 %v2530, %v2528
      %v2532 = vadd.f32 %v2531, %v2529
      %v2533 = vrot.slane %v2532, 4
      %v2534 = vadd.f32 %v2532, %v2533
      %v2535 = vrot.slane %v2534, 2
      %v2536 = vadd.f32 %v2534, %v2535
      %v2537 = vrot.slane %v2536, 1
      %v2538 = vadd.f32 %v2536, %v2537
      %2540 = vset.pattern.permute.xlu0 98
      %2541 = vperm.xlu0 %2540, %v2374
      %v2542 = vpop.permute.xlu0 %2541
      %2544 = vset.pattern.permute.xlu0 99
      %2545 = vperm.xlu0 %2544, %v2374
      %v2546 = vpop.permute.xlu0 %2545
      %v2548 = vsel %vm383, %v2542, %v2546
      %2549 = vset.pattern.permute.xlu0 97
      %2550 = vperm.xlu0 %2549, %v2374
      %v2551 = vpop.permute.xlu0 %2550
      %v2553 = vsel %vm382, %v2551, %v2548
      %2554 = vset.pattern.permute.xlu0 96
      %2555 = vperm.xlu0 %2554, %v2374
      %v2556 = vpop.permute.xlu0 %2555
      %v2558 = vsel %vm381, %v2556, %v2553
      %v2559 = vxor.u32 %v2558, 2147483648
      %v2560 = vmul.f32 %v2559, 1.442695
      %v2561 = vpow.pop %v2560
      %v2562 = vadd.f32 %v2561, 1.0
      %v2563 = vrcp.pop %v2562
      %v2564 = vmul.f32 1.0, %v2563
      %v2565 = vmul.f32 %v2564, %v2538
      %2567 = vset.pattern.permute.xlu0 6
      %2568 = vperm.xlu0 %2567, %v2498
      %v2569 = vpop.permute.xlu0 %2568
      %2572 = vset.pattern.permute.xlu0 6
      %2573 = vperm.xlu0 %2572, %v2499
      %v2574 = vpop.permute.xlu0 %2573
      %2577 = vset.pattern.permute.xlu0 6
      %2578 = vperm.xlu0 %2577, %v2500
      %v2579 = vpop.permute.xlu0 %2578
      %2582 = vset.pattern.permute.xlu0 6
      %2583 = vperm.xlu0 %2582, %v2501
      %v2584 = vpop.permute.xlu0 %2583
      %v2586 = vmul.f32 %v2569, %v2565
      %v2587 = vmul.f32 %v2574, %v2565
      %v2588 = vmul.f32 %v2579, %v2565
      %v2589 = vmul.f32 %v2584, %v2565
      %v2590 = vadd.f32 %v2281, %v2586
      %v2591 = vadd.f32 %v2282, %v2587
      %v2592 = vadd.f32 %v2283, %v2588
      %v2593 = vadd.f32 %v2284, %v2589
      %2594 = vset.pattern.permute.xlu0 7
      %2595 = vperm.xlu0 %2594, %v495
      %v2596 = vpop.permute.xlu0 %2595
      %2598 = vset.pattern.permute.xlu0 7
      %2599 = vperm.xlu0 %2598, %v496
      %v2600 = vpop.permute.xlu0 %2599
      %2602 = vset.pattern.permute.xlu0 7
      %2603 = vperm.xlu0 %2602, %v497
      %v2604 = vpop.permute.xlu0 %2603
      %2606 = vset.pattern.permute.xlu0 7
      %2607 = vperm.xlu0 %2606, %v498
      %v2608 = vpop.permute.xlu0 %2607
      %v2610 = vmul.f32 %v2596, %v2590
      %v2611 = vmul.f32 %v2600, %v2591
      %v2612 = vmul.f32 %v2604, %v2592
      %v2613 = vmul.f32 %v2608, %v2593
      %v2614 = vadd.f32 %v2610, %v2611
      %v2615 = vadd.f32 %v2614, %v2612
      %v2616 = vadd.f32 %v2615, %v2613
      %v2617 = vrot.slane %v2616, 4
      %v2618 = vadd.f32 %v2616, %v2617
      %v2619 = vrot.slane %v2618, 2
      %v2620 = vadd.f32 %v2618, %v2619
      %v2621 = vrot.slane %v2620, 1
      %v2622 = vadd.f32 %v2620, %v2621
      %2624 = vset.pattern.permute.xlu0 0
      %2625 = vperm.xlu0 %2624, %v390
      %v2626 = vpop.permute.xlu0 %2625
      %2629 = vset.pattern.permute.xlu0 0
      %2630 = vperm.xlu0 %2629, %v391
      %v2631 = vpop.permute.xlu0 %2630
      %2634 = vset.pattern.permute.xlu0 0
      %2635 = vperm.xlu0 %2634, %v392
      %v2636 = vpop.permute.xlu0 %2635
      %2639 = vset.pattern.permute.xlu0 0
      %2640 = vperm.xlu0 %2639, %v393
      %v2641 = vpop.permute.xlu0 %2640
      %v2643 = vmul.f32 %v2626, %v469
      %v2644 = vmul.f32 %v2631, %v469
      %v2645 = vmul.f32 %v2636, %v469
      %v2646 = vmul.f32 %v2641, %v469
      %2648 = vset.pattern.permute.xlu0 0
      %2649 = vperm.xlu0 %2648, %v406
      %v2650 = vpop.permute.xlu0 %2649
      %2653 = vset.pattern.permute.xlu0 0
      %2654 = vperm.xlu0 %2653, %v407
      %v2655 = vpop.permute.xlu0 %2654
      %2658 = vset.pattern.permute.xlu0 0
      %2659 = vperm.xlu0 %2658, %v408
      %v2660 = vpop.permute.xlu0 %2659
      %2663 = vset.pattern.permute.xlu0 0
      %2664 = vperm.xlu0 %2663, %v409
      %v2665 = vpop.permute.xlu0 %2664
      %v2667 = vadd.f32 %v2643, %v2650
      %v2668 = vadd.f32 %v2644, %v2655
      %v2669 = vadd.f32 %v2645, %v2660
      %v2670 = vadd.f32 %v2646, %v2665
      %2675 = vrot.lane.b32.xlu0 %v422, 96
      %v2676 = vpop.permute.xlu0 %2675
      %2677 = vrot.lane.b32.xlu0 %v423, 96
      %v2678 = vpop.permute.xlu0 %2677
      %2679 = vrot.lane.b32.xlu0 %v424, 96
      %v2680 = vpop.permute.xlu0 %2679
      %2681 = vrot.lane.b32.xlu0 %v425, 96
      %v2682 = vpop.permute.xlu0 %2681
      %v2687 = vsel %vm515, %v2676, 0.0
      %2688 = vadd.xlane.f32.xlu0 %v2687
      %v2689 = vpop.xlane.xlu0 %2688
      %v2690 = vsel %vm515, %v2678, 0.0
      %2691 = vadd.xlane.f32.xlu0 %v2690
      %v2692 = vpop.xlane.xlu0 %2691
      %v2693 = vsel %vm515, %v2680, 0.0
      %2694 = vadd.xlane.f32.xlu0 %v2693
      %v2695 = vpop.xlane.xlu0 %2694
      %v2696 = vsel %vm515, %v2682, 0.0
      %2697 = vadd.xlane.f32.xlu0 %v2696
      %v2698 = vpop.xlane.xlu0 %2697
      %2699 = vrot.lane.b32.xlu0 %v422, 64
      %v2700 = vpop.permute.xlu0 %2699
      %2701 = vrot.lane.b32.xlu0 %v423, 64
      %v2702 = vpop.permute.xlu0 %2701
      %2703 = vrot.lane.b32.xlu0 %v424, 64
      %v2704 = vpop.permute.xlu0 %2703
      %2705 = vrot.lane.b32.xlu0 %v425, 64
      %v2706 = vpop.permute.xlu0 %2705
      %v2711 = vsel %vm515, %v2700, 0.0
      %2712 = vadd.xlane.f32.xlu0 %v2711
      %v2713 = vpop.xlane.xlu0 %2712
      %v2714 = vsel %vm515, %v2702, 0.0
      %2715 = vadd.xlane.f32.xlu0 %v2714
      %v2716 = vpop.xlane.xlu0 %2715
      %v2717 = vsel %vm515, %v2704, 0.0
      %2718 = vadd.xlane.f32.xlu0 %v2717
      %v2719 = vpop.xlane.xlu0 %2718
      %v2720 = vsel %vm515, %v2706, 0.0
      %2721 = vadd.xlane.f32.xlu0 %v2720
      %v2722 = vpop.xlane.xlu0 %2721
      %2724 = vset.pattern.permute.xlu0 0
      %2725 = vperm.xlu0 %2724, %v2667
      %v2726 = vpop.permute.xlu0 %2725
      %2729 = vset.pattern.permute.xlu0 0
      %2730 = vperm.xlu0 %2729, %v2668
      %v2731 = vpop.permute.xlu0 %2730
      %2734 = vset.pattern.permute.xlu0 0
      %2735 = vperm.xlu0 %2734, %v2669
      %v2736 = vpop.permute.xlu0 %2735
      %2739 = vset.pattern.permute.xlu0 0
      %2740 = vperm.xlu0 %2739, %v2670
      %v2741 = vpop.permute.xlu0 %2740
      %v2743 = vmul.f32 %v2726, %v422
      %v2744 = vmul.f32 %v2731, %v423
      %v2745 = vmul.f32 %v2736, %v424
      %v2746 = vmul.f32 %v2741, %v425
      %v2747 = vadd.f32 %v2743, %v2744
      %v2748 = vadd.f32 %v2747, %v2745
      %v2749 = vadd.f32 %v2748, %v2746
      %v2750 = vrot.slane %v2749, 4
      %v2751 = vadd.f32 %v2749, %v2750
      %v2752 = vrot.slane %v2751, 2
      %v2753 = vadd.f32 %v2751, %v2752
      %v2754 = vrot.slane %v2753, 1
      %v2755 = vadd.f32 %v2753, %v2754
      %v2756 = vmul.f32 %v2667, %v2689
      %v2757 = vmul.f32 %v2668, %v2692
      %v2758 = vmul.f32 %v2669, %v2695
      %v2759 = vmul.f32 %v2670, %v2698
      %v2760 = vsel %vm589, %v2756, -inf
      %v2761 = vsel %vm589, %v2757, -inf
      %v2762 = vsel %vm589, %v2758, -inf
      %v2763 = vsel %vm589, %v2759, -inf
      %v2764 = vmax.f32 %v2760, %v2761
      %v2765 = vmax.f32 %v2762, %v2763
      %v2766 = vmax.f32 %v2764, %v2765
      %v2767 = vrot.slane %v2766, 4
      %v2768 = vmax.f32 %v2766, %v2767
      %v2769 = vrot.slane %v2768, 2
      %v2770 = vmax.f32 %v2768, %v2769
      %v2771 = vrot.slane %v2770, 1
      %v2772 = vmax.f32 %v2770, %v2771
      %v2773 = vsub.f32 %v2756, %v2772
      %v2774 = vsub.f32 %v2757, %v2772
      %v2775 = vsub.f32 %v2758, %v2772
      %v2776 = vsub.f32 %v2759, %v2772
      %v2777 = vmul.f32 %v2773, 1.442695
      %v2778 = vpow.pop %v2777
      %v2779 = vmul.f32 %v2774, 1.442695
      %v2780 = vpow.pop %v2779
      %v2781 = vmul.f32 %v2775, 1.442695
      %v2782 = vpow.pop %v2781
      %v2783 = vmul.f32 %v2776, 1.442695
      %v2784 = vpow.pop %v2783
      %v2785 = vsel %vm589, %v2778, 0.0
      %v2786 = vsel %vm589, %v2780, 0.0
      %v2787 = vadd.f32 %v2785, %v2786
      %v2788 = vsel %vm589, %v2782, 0.0
      %v2789 = vadd.f32 %v2787, %v2788
      %v2790 = vsel %vm589, %v2784, 0.0
      %v2791 = vadd.f32 %v2789, %v2790
      %v2792 = vrot.slane %v2791, 4
      %v2793 = vadd.f32 %v2791, %v2792
      %v2794 = vrot.slane %v2793, 2
      %v2795 = vadd.f32 %v2793, %v2794
      %v2796 = vrot.slane %v2795, 1
      %v2797 = vadd.f32 %v2795, %v2796
      %v2798 = vrcp.pop %v2797
      %v2799 = vmul.f32 %v2778, %v2798
      %v2800 = vmul.f32 %v2780, %v2798
      %v2801 = vmul.f32 %v2782, %v2798
      %v2802 = vmul.f32 %v2784, %v2798
      %v2803 = vmul.f32 %v2667, %v2713
      %v2804 = vmul.f32 %v2668, %v2716
      %v2805 = vmul.f32 %v2669, %v2719
      %v2806 = vmul.f32 %v2670, %v2722
      %v2807 = vsel %vm589, %v2803, -inf
      %v2808 = vsel %vm589, %v2804, -inf
      %v2809 = vsel %vm589, %v2805, -inf
      %v2810 = vsel %vm589, %v2806, -inf
      %v2811 = vmax.f32 %v2807, %v2808
      %v2812 = vmax.f32 %v2809, %v2810
      %v2813 = vmax.f32 %v2811, %v2812
      %v2814 = vrot.slane %v2813, 4
      %v2815 = vmax.f32 %v2813, %v2814
      %v2816 = vrot.slane %v2815, 2
      %v2817 = vmax.f32 %v2815, %v2816
      %v2818 = vrot.slane %v2817, 1
      %v2819 = vmax.f32 %v2817, %v2818
      %v2820 = vsub.f32 %v2803, %v2819
      %v2821 = vsub.f32 %v2804, %v2819
      %v2822 = vsub.f32 %v2805, %v2819
      %v2823 = vsub.f32 %v2806, %v2819
      %v2824 = vmul.f32 %v2820, 1.442695
      %v2825 = vpow.pop %v2824
      %v2826 = vmul.f32 %v2821, 1.442695
      %v2827 = vpow.pop %v2826
      %v2828 = vmul.f32 %v2822, 1.442695
      %v2829 = vpow.pop %v2828
      %v2830 = vmul.f32 %v2823, 1.442695
      %v2831 = vpow.pop %v2830
      %v2832 = vsel %vm589, %v2825, 0.0
      %v2833 = vsel %vm589, %v2827, 0.0
      %v2834 = vadd.f32 %v2832, %v2833
      %v2835 = vsel %vm589, %v2829, 0.0
      %v2836 = vadd.f32 %v2834, %v2835
      %v2837 = vsel %vm589, %v2831, 0.0
      %v2838 = vadd.f32 %v2836, %v2837
      %v2839 = vrot.slane %v2838, 4
      %v2840 = vadd.f32 %v2838, %v2839
      %v2841 = vrot.slane %v2840, 2
      %v2842 = vadd.f32 %v2840, %v2841
      %v2843 = vrot.slane %v2842, 1
      %v2844 = vadd.f32 %v2842, %v2843
      %v2845 = vrcp.pop %v2844
      %v2846 = vmul.f32 %v2825, %v2845
      %v2847 = vmul.f32 %v2827, %v2845
      %v2848 = vmul.f32 %v2829, %v2845
      %v2849 = vmul.f32 %v2831, %v2845
      %v2850 = vsub.f32 %v2799, %v2846
      %v2851 = vsub.f32 %v2800, %v2847
      %v2852 = vsub.f32 %v2801, %v2848
      %v2853 = vsub.f32 %v2802, %v2849
      %2855 = vset.pattern.permute.xlu0 0
      %2856 = vperm.xlu0 %2855, %v2850
      %v2857 = vpop.permute.xlu0 %2856
      %2860 = vset.pattern.permute.xlu0 0
      %2861 = vperm.xlu0 %2860, %v2851
      %v2862 = vpop.permute.xlu0 %2861
      %2865 = vset.pattern.permute.xlu0 0
      %2866 = vperm.xlu0 %2865, %v2852
      %v2867 = vpop.permute.xlu0 %2866
      %2870 = vset.pattern.permute.xlu0 0
      %2871 = vperm.xlu0 %2870, %v2853
      %v2872 = vpop.permute.xlu0 %2871
      %v2874 = vmul.f32 %v2857, %v422
      %v2875 = vmul.f32 %v2862, %v423
      %v2876 = vmul.f32 %v2867, %v424
      %v2877 = vmul.f32 %v2872, %v425
      %v2878 = vadd.f32 %v2874, %v2875
      %v2879 = vadd.f32 %v2878, %v2876
      %v2880 = vadd.f32 %v2879, %v2877
      %v2881 = vrot.slane %v2880, 4
      %v2882 = vadd.f32 %v2880, %v2881
      %v2883 = vrot.slane %v2882, 2
      %v2884 = vadd.f32 %v2882, %v2883
      %v2885 = vrot.slane %v2884, 1
      %v2886 = vadd.f32 %v2884, %v2885
      %2888 = vset.pattern.permute.xlu0 98
      %2889 = vperm.xlu0 %2888, %v2755
      %v2890 = vpop.permute.xlu0 %2889
      %2892 = vset.pattern.permute.xlu0 99
      %2893 = vperm.xlu0 %2892, %v2755
      %v2894 = vpop.permute.xlu0 %2893
      %v2896 = vsel %vm383, %v2890, %v2894
      %2897 = vset.pattern.permute.xlu0 97
      %2898 = vperm.xlu0 %2897, %v2755
      %v2899 = vpop.permute.xlu0 %2898
      %v2901 = vsel %vm382, %v2899, %v2896
      %2902 = vset.pattern.permute.xlu0 96
      %2903 = vperm.xlu0 %2902, %v2755
      %v2904 = vpop.permute.xlu0 %2903
      %v2906 = vsel %vm381, %v2904, %v2901
      %v2907 = vxor.u32 %v2906, 2147483648
      %v2908 = vmul.f32 %v2907, 1.442695
      %v2909 = vpow.pop %v2908
      %v2910 = vadd.f32 %v2909, 1.0
      %v2911 = vrcp.pop %v2910
      %v2912 = vmul.f32 1.0, %v2911
      %v2913 = vmul.f32 %v2912, %v2886
      %2915 = vset.pattern.permute.xlu0 0
      %2916 = vperm.xlu0 %2915, %v2846
      %v2917 = vpop.permute.xlu0 %2916
      %2920 = vset.pattern.permute.xlu0 0
      %2921 = vperm.xlu0 %2920, %v2847
      %v2922 = vpop.permute.xlu0 %2921
      %2925 = vset.pattern.permute.xlu0 0
      %2926 = vperm.xlu0 %2925, %v2848
      %v2927 = vpop.permute.xlu0 %2926
      %2930 = vset.pattern.permute.xlu0 0
      %2931 = vperm.xlu0 %2930, %v2849
      %v2932 = vpop.permute.xlu0 %2931
      %v2934 = vmul.f32 %v2917, %v2913
      %v2935 = vmul.f32 %v2922, %v2913
      %v2936 = vmul.f32 %v2927, %v2913
      %v2937 = vmul.f32 %v2932, %v2913
      %v2938 = vadd.f32 %v422, %v2934
      %v2939 = vadd.f32 %v423, %v2935
      %v2940 = vadd.f32 %v424, %v2936
      %v2941 = vadd.f32 %v425, %v2937
      %2943 = vrot.lane.b32.xlu0 %v2913, 96
      %v2944 = vpop.permute.xlu0 %2943
      %v2946 = vsel %vm515, %v2944, 0.0
      %2947 = vadd.xlane.f32.xlu0 %v2946
      %v2948 = vpop.xlane.xlu0 %2947
      %v2949 = vmul.f32 %v2846, %v2948
      %v2950 = vmul.f32 %v2847, %v2948
      %v2951 = vmul.f32 %v2848, %v2948
      %v2952 = vmul.f32 %v2849, %v2948
      %v2953 = vadd.f32 %v2689, %v2949
      %v2954 = vadd.f32 %v2692, %v2950
      %v2955 = vadd.f32 %v2695, %v2951
      %v2956 = vadd.f32 %v2698, %v2952
      %2957 = vrot.lane.b32.xlu0 %v2913, 64
      %v2958 = vpop.permute.xlu0 %2957
      %v2960 = vsel %vm515, %v2958, 0.0
      %2961 = vadd.xlane.f32.xlu0 %v2960
      %v2962 = vpop.xlane.xlu0 %2961
      %v2963 = vmul.f32 %v2846, %v2962
      %v2964 = vmul.f32 %v2847, %v2962
      %v2965 = vmul.f32 %v2848, %v2962
      %v2966 = vmul.f32 %v2849, %v2962
      %v2967 = vadd.f32 %v2713, %v2963
      %v2968 = vadd.f32 %v2716, %v2964
      %v2969 = vadd.f32 %v2719, %v2965
      %v2970 = vadd.f32 %v2722, %v2966
      %2971 = vset.pattern.permute.xlu0 1
      %2972 = vperm.xlu0 %2971, %v2667
      %v2973 = vpop.permute.xlu0 %2972
      %2975 = vset.pattern.permute.xlu0 1
      %2976 = vperm.xlu0 %2975, %v2668
      %v2977 = vpop.permute.xlu0 %2976
      %2979 = vset.pattern.permute.xlu0 1
      %2980 = vperm.xlu0 %2979, %v2669
      %v2981 = vpop.permute.xlu0 %2980
      %2983 = vset.pattern.permute.xlu0 1
      %2984 = vperm.xlu0 %2983, %v2670
      %v2985 = vpop.permute.xlu0 %2984
      %v2987 = vmul.f32 %v2973, %v2938
      %v2988 = vmul.f32 %v2977, %v2939
      %v2989 = vmul.f32 %v2981, %v2940
      %v2990 = vmul.f32 %v2985, %v2941
      %v2991 = vadd.f32 %v2987, %v2988
      %v2992 = vadd.f32 %v2991, %v2989
      %v2993 = vadd.f32 %v2992, %v2990
      %v2994 = vrot.slane %v2993, 4
      %v2995 = vadd.f32 %v2993, %v2994
      %v2996 = vrot.slane %v2995, 2
      %v2997 = vadd.f32 %v2995, %v2996
      %v2998 = vrot.slane %v2997, 1
      %v2999 = vadd.f32 %v2997, %v2998
      %3004 = vrot.lane.b32.xlu0 %v2953, 1
      %v3005 = vpop.permute.xlu0 %3004
      %3006 = vrot.lane.b32.xlu0 %v2954, 1
      %v3007 = vpop.permute.xlu0 %3006
      %3008 = vrot.lane.b32.xlu0 %v2955, 1
      %v3009 = vpop.permute.xlu0 %3008
      %3010 = vrot.lane.b32.xlu0 %v2956, 1
      %v3011 = vpop.permute.xlu0 %3010
      %v3016 = vmul.f32 %v2667, %v3005
      %v3017 = vmul.f32 %v2668, %v3007
      %v3018 = vmul.f32 %v2669, %v3009
      %v3019 = vmul.f32 %v2670, %v3011
      %v3020 = vsel %vm850, %v3016, -inf
      %v3021 = vsel %vm850, %v3017, -inf
      %v3022 = vsel %vm850, %v3018, -inf
      %v3023 = vsel %vm850, %v3019, -inf
      %v3024 = vmax.f32 %v3020, %v3021
      %v3025 = vmax.f32 %v3022, %v3023
      %v3026 = vmax.f32 %v3024, %v3025
      %v3027 = vrot.slane %v3026, 4
      %v3028 = vmax.f32 %v3026, %v3027
      %v3029 = vrot.slane %v3028, 2
      %v3030 = vmax.f32 %v3028, %v3029
      %v3031 = vrot.slane %v3030, 1
      %v3032 = vmax.f32 %v3030, %v3031
      %v3033 = vsub.f32 %v3016, %v3032
      %v3034 = vsub.f32 %v3017, %v3032
      %v3035 = vsub.f32 %v3018, %v3032
      %v3036 = vsub.f32 %v3019, %v3032
      %v3037 = vmul.f32 %v3033, 1.442695
      %v3038 = vpow.pop %v3037
      %v3039 = vmul.f32 %v3034, 1.442695
      %v3040 = vpow.pop %v3039
      %v3041 = vmul.f32 %v3035, 1.442695
      %v3042 = vpow.pop %v3041
      %v3043 = vmul.f32 %v3036, 1.442695
      %v3044 = vpow.pop %v3043
      %v3045 = vsel %vm850, %v3038, 0.0
      %v3046 = vsel %vm850, %v3040, 0.0
      %v3047 = vadd.f32 %v3045, %v3046
      %v3048 = vsel %vm850, %v3042, 0.0
      %v3049 = vadd.f32 %v3047, %v3048
      %v3050 = vsel %vm850, %v3044, 0.0
      %v3051 = vadd.f32 %v3049, %v3050
      %v3052 = vrot.slane %v3051, 4
      %v3053 = vadd.f32 %v3051, %v3052
      %v3054 = vrot.slane %v3053, 2
      %v3055 = vadd.f32 %v3053, %v3054
      %v3056 = vrot.slane %v3055, 1
      %v3057 = vadd.f32 %v3055, %v3056
      %v3058 = vrcp.pop %v3057
      %v3059 = vmul.f32 %v3038, %v3058
      %v3060 = vmul.f32 %v3040, %v3058
      %v3061 = vmul.f32 %v3042, %v3058
      %v3062 = vmul.f32 %v3044, %v3058
      %3067 = vrot.lane.b32.xlu0 %v2967, 1
      %v3068 = vpop.permute.xlu0 %3067
      %3069 = vrot.lane.b32.xlu0 %v2968, 1
      %v3070 = vpop.permute.xlu0 %3069
      %3071 = vrot.lane.b32.xlu0 %v2969, 1
      %v3072 = vpop.permute.xlu0 %3071
      %3073 = vrot.lane.b32.xlu0 %v2970, 1
      %v3074 = vpop.permute.xlu0 %3073
      %v3079 = vmul.f32 %v2667, %v3068
      %v3080 = vmul.f32 %v2668, %v3070
      %v3081 = vmul.f32 %v2669, %v3072
      %v3082 = vmul.f32 %v2670, %v3074
      %v3083 = vsel %vm850, %v3079, -inf
      %v3084 = vsel %vm850, %v3080, -inf
      %v3085 = vsel %vm850, %v3081, -inf
      %v3086 = vsel %vm850, %v3082, -inf
      %v3087 = vmax.f32 %v3083, %v3084
      %v3088 = vmax.f32 %v3085, %v3086
      %v3089 = vmax.f32 %v3087, %v3088
      %v3090 = vrot.slane %v3089, 4
      %v3091 = vmax.f32 %v3089, %v3090
      %v3092 = vrot.slane %v3091, 2
      %v3093 = vmax.f32 %v3091, %v3092
      %v3094 = vrot.slane %v3093, 1
      %v3095 = vmax.f32 %v3093, %v3094
      %v3096 = vsub.f32 %v3079, %v3095
      %v3097 = vsub.f32 %v3080, %v3095
      %v3098 = vsub.f32 %v3081, %v3095
      %v3099 = vsub.f32 %v3082, %v3095
      %v3100 = vmul.f32 %v3096, 1.442695
      %v3101 = vpow.pop %v3100
      %v3102 = vmul.f32 %v3097, 1.442695
      %v3103 = vpow.pop %v3102
      %v3104 = vmul.f32 %v3098, 1.442695
      %v3105 = vpow.pop %v3104
      %v3106 = vmul.f32 %v3099, 1.442695
      %v3107 = vpow.pop %v3106
      %v3108 = vsel %vm850, %v3101, 0.0
      %v3109 = vsel %vm850, %v3103, 0.0
      %v3110 = vadd.f32 %v3108, %v3109
      %v3111 = vsel %vm850, %v3105, 0.0
      %v3112 = vadd.f32 %v3110, %v3111
      %v3113 = vsel %vm850, %v3107, 0.0
      %v3114 = vadd.f32 %v3112, %v3113
      %v3115 = vrot.slane %v3114, 4
      %v3116 = vadd.f32 %v3114, %v3115
      %v3117 = vrot.slane %v3116, 2
      %v3118 = vadd.f32 %v3116, %v3117
      %v3119 = vrot.slane %v3118, 1
      %v3120 = vadd.f32 %v3118, %v3119
      %v3121 = vrcp.pop %v3120
      %v3122 = vmul.f32 %v3101, %v3121
      %v3123 = vmul.f32 %v3103, %v3121
      %v3124 = vmul.f32 %v3105, %v3121
      %v3125 = vmul.f32 %v3107, %v3121
      %v3126 = vsub.f32 %v3059, %v3122
      %v3127 = vsub.f32 %v3060, %v3123
      %v3128 = vsub.f32 %v3061, %v3124
      %v3129 = vsub.f32 %v3062, %v3125
      %3131 = vset.pattern.permute.xlu0 1
      %3132 = vperm.xlu0 %3131, %v3126
      %v3133 = vpop.permute.xlu0 %3132
      %3136 = vset.pattern.permute.xlu0 1
      %3137 = vperm.xlu0 %3136, %v3127
      %v3138 = vpop.permute.xlu0 %3137
      %3141 = vset.pattern.permute.xlu0 1
      %3142 = vperm.xlu0 %3141, %v3128
      %v3143 = vpop.permute.xlu0 %3142
      %3146 = vset.pattern.permute.xlu0 1
      %3147 = vperm.xlu0 %3146, %v3129
      %v3148 = vpop.permute.xlu0 %3147
      %v3150 = vmul.f32 %v3133, %v2938
      %v3151 = vmul.f32 %v3138, %v2939
      %v3152 = vmul.f32 %v3143, %v2940
      %v3153 = vmul.f32 %v3148, %v2941
      %v3154 = vadd.f32 %v3150, %v3151
      %v3155 = vadd.f32 %v3154, %v3152
      %v3156 = vadd.f32 %v3155, %v3153
      %v3157 = vrot.slane %v3156, 4
      %v3158 = vadd.f32 %v3156, %v3157
      %v3159 = vrot.slane %v3158, 2
      %v3160 = vadd.f32 %v3158, %v3159
      %v3161 = vrot.slane %v3160, 1
      %v3162 = vadd.f32 %v3160, %v3161
      %3164 = vset.pattern.permute.xlu0 98
      %3165 = vperm.xlu0 %3164, %v2999
      %v3166 = vpop.permute.xlu0 %3165
      %3168 = vset.pattern.permute.xlu0 99
      %3169 = vperm.xlu0 %3168, %v2999
      %v3170 = vpop.permute.xlu0 %3169
      %v3172 = vsel %vm383, %v3166, %v3170
      %3173 = vset.pattern.permute.xlu0 97
      %3174 = vperm.xlu0 %3173, %v2999
      %v3175 = vpop.permute.xlu0 %3174
      %v3177 = vsel %vm382, %v3175, %v3172
      %3178 = vset.pattern.permute.xlu0 96
      %3179 = vperm.xlu0 %3178, %v2999
      %v3180 = vpop.permute.xlu0 %3179
      %v3182 = vsel %vm381, %v3180, %v3177
      %v3183 = vxor.u32 %v3182, 2147483648
      %v3184 = vmul.f32 %v3183, 1.442695
      %v3185 = vpow.pop %v3184
      %v3186 = vadd.f32 %v3185, 1.0
      %v3187 = vrcp.pop %v3186
      %v3188 = vmul.f32 1.0, %v3187
      %v3189 = vmul.f32 %v3188, %v3162
      %3191 = vset.pattern.permute.xlu0 1
      %3192 = vperm.xlu0 %3191, %v3122
      %v3193 = vpop.permute.xlu0 %3192
      %3196 = vset.pattern.permute.xlu0 1
      %3197 = vperm.xlu0 %3196, %v3123
      %v3198 = vpop.permute.xlu0 %3197
      %3201 = vset.pattern.permute.xlu0 1
      %3202 = vperm.xlu0 %3201, %v3124
      %v3203 = vpop.permute.xlu0 %3202
      %3206 = vset.pattern.permute.xlu0 1
      %3207 = vperm.xlu0 %3206, %v3125
      %v3208 = vpop.permute.xlu0 %3207
      %v3210 = vmul.f32 %v3193, %v3189
      %v3211 = vmul.f32 %v3198, %v3189
      %v3212 = vmul.f32 %v3203, %v3189
      %v3213 = vmul.f32 %v3208, %v3189
      %v3214 = vadd.f32 %v2938, %v3210
      %v3215 = vadd.f32 %v2939, %v3211
      %v3216 = vadd.f32 %v2940, %v3212
      %v3217 = vadd.f32 %v2941, %v3213
      %3219 = vrot.lane.b32.xlu0 %v3189, 96
      %v3220 = vpop.permute.xlu0 %3219
      %v3222 = vsel %vm515, %v3220, 0.0
      %3223 = vadd.xlane.f32.xlu0 %v3222
      %v3224 = vpop.xlane.xlu0 %3223
      %v3225 = vmul.f32 %v3122, %v3224
      %v3226 = vmul.f32 %v3123, %v3224
      %v3227 = vmul.f32 %v3124, %v3224
      %v3228 = vmul.f32 %v3125, %v3224
      %3233 = vrot.lane.b32.xlu0 %v3225, 127
      %v3234 = vpop.permute.xlu0 %3233
      %3235 = vrot.lane.b32.xlu0 %v3226, 127
      %v3236 = vpop.permute.xlu0 %3235
      %3237 = vrot.lane.b32.xlu0 %v3227, 127
      %v3238 = vpop.permute.xlu0 %3237
      %3239 = vrot.lane.b32.xlu0 %v3228, 127
      %v3240 = vpop.permute.xlu0 %3239
      %v3245 = vadd.f32 %v2953, %v3234
      %v3246 = vadd.f32 %v2954, %v3236
      %v3247 = vadd.f32 %v2955, %v3238
      %v3248 = vadd.f32 %v2956, %v3240
      %3249 = vrot.lane.b32.xlu0 %v3189, 64
      %v3250 = vpop.permute.xlu0 %3249
      %v3252 = vsel %vm515, %v3250, 0.0
      %3253 = vadd.xlane.f32.xlu0 %v3252
      %v3254 = vpop.xlane.xlu0 %3253
      %v3255 = vmul.f32 %v3122, %v3254
      %v3256 = vmul.f32 %v3123, %v3254
      %v3257 = vmul.f32 %v3124, %v3254
      %v3258 = vmul.f32 %v3125, %v3254
      %3263 = vrot.lane.b32.xlu0 %v3255, 127
      %v3264 = vpop.permute.xlu0 %3263
      %3265 = vrot.lane.b32.xlu0 %v3256, 127
      %v3266 = vpop.permute.xlu0 %3265
      %3267 = vrot.lane.b32.xlu0 %v3257, 127
      %v3268 = vpop.permute.xlu0 %3267
      %3269 = vrot.lane.b32.xlu0 %v3258, 127
      %v3270 = vpop.permute.xlu0 %3269
      %v3275 = vadd.f32 %v2967, %v3264
      %v3276 = vadd.f32 %v2968, %v3266
      %v3277 = vadd.f32 %v2969, %v3268
      %v3278 = vadd.f32 %v2970, %v3270
      %3279 = vset.pattern.permute.xlu0 2
      %3280 = vperm.xlu0 %3279, %v2667
      %v3281 = vpop.permute.xlu0 %3280
      %3283 = vset.pattern.permute.xlu0 2
      %3284 = vperm.xlu0 %3283, %v2668
      %v3285 = vpop.permute.xlu0 %3284
      %3287 = vset.pattern.permute.xlu0 2
      %3288 = vperm.xlu0 %3287, %v2669
      %v3289 = vpop.permute.xlu0 %3288
      %3291 = vset.pattern.permute.xlu0 2
      %3292 = vperm.xlu0 %3291, %v2670
      %v3293 = vpop.permute.xlu0 %3292
      %v3295 = vmul.f32 %v3281, %v3214
      %v3296 = vmul.f32 %v3285, %v3215
      %v3297 = vmul.f32 %v3289, %v3216
      %v3298 = vmul.f32 %v3293, %v3217
      %v3299 = vadd.f32 %v3295, %v3296
      %v3300 = vadd.f32 %v3299, %v3297
      %v3301 = vadd.f32 %v3300, %v3298
      %v3302 = vrot.slane %v3301, 4
      %v3303 = vadd.f32 %v3301, %v3302
      %v3304 = vrot.slane %v3303, 2
      %v3305 = vadd.f32 %v3303, %v3304
      %v3306 = vrot.slane %v3305, 1
      %v3307 = vadd.f32 %v3305, %v3306
      %3312 = vrot.lane.b32.xlu0 %v3245, 2
      %v3313 = vpop.permute.xlu0 %3312
      %3314 = vrot.lane.b32.xlu0 %v3246, 2
      %v3315 = vpop.permute.xlu0 %3314
      %3316 = vrot.lane.b32.xlu0 %v3247, 2
      %v3317 = vpop.permute.xlu0 %3316
      %3318 = vrot.lane.b32.xlu0 %v3248, 2
      %v3319 = vpop.permute.xlu0 %3318
      %v3324 = vmul.f32 %v2667, %v3313
      %v3325 = vmul.f32 %v2668, %v3315
      %v3326 = vmul.f32 %v2669, %v3317
      %v3327 = vmul.f32 %v2670, %v3319
      %v3328 = vsel %vm1159, %v3324, -inf
      %v3329 = vsel %vm1159, %v3325, -inf
      %v3330 = vsel %vm1159, %v3326, -inf
      %v3331 = vsel %vm1159, %v3327, -inf
      %v3332 = vmax.f32 %v3328, %v3329
      %v3333 = vmax.f32 %v3330, %v3331
      %v3334 = vmax.f32 %v3332, %v3333
      %v3335 = vrot.slane %v3334, 4
      %v3336 = vmax.f32 %v3334, %v3335
      %v3337 = vrot.slane %v3336, 2
      %v3338 = vmax.f32 %v3336, %v3337
      %v3339 = vrot.slane %v3338, 1
      %v3340 = vmax.f32 %v3338, %v3339
      %v3341 = vsub.f32 %v3324, %v3340
      %v3342 = vsub.f32 %v3325, %v3340
      %v3343 = vsub.f32 %v3326, %v3340
      %v3344 = vsub.f32 %v3327, %v3340
      %v3345 = vmul.f32 %v3341, 1.442695
      %v3346 = vpow.pop %v3345
      %v3347 = vmul.f32 %v3342, 1.442695
      %v3348 = vpow.pop %v3347
      %v3349 = vmul.f32 %v3343, 1.442695
      %v3350 = vpow.pop %v3349
      %v3351 = vmul.f32 %v3344, 1.442695
      %v3352 = vpow.pop %v3351
      %v3353 = vsel %vm1159, %v3346, 0.0
      %v3354 = vsel %vm1159, %v3348, 0.0
      %v3355 = vadd.f32 %v3353, %v3354
      %v3356 = vsel %vm1159, %v3350, 0.0
      %v3357 = vadd.f32 %v3355, %v3356
      %v3358 = vsel %vm1159, %v3352, 0.0
      %v3359 = vadd.f32 %v3357, %v3358
      %v3360 = vrot.slane %v3359, 4
      %v3361 = vadd.f32 %v3359, %v3360
      %v3362 = vrot.slane %v3361, 2
      %v3363 = vadd.f32 %v3361, %v3362
      %v3364 = vrot.slane %v3363, 1
      %v3365 = vadd.f32 %v3363, %v3364
      %v3366 = vrcp.pop %v3365
      %v3367 = vmul.f32 %v3346, %v3366
      %v3368 = vmul.f32 %v3348, %v3366
      %v3369 = vmul.f32 %v3350, %v3366
      %v3370 = vmul.f32 %v3352, %v3366
      %3375 = vrot.lane.b32.xlu0 %v3275, 2
      %v3376 = vpop.permute.xlu0 %3375
      %3377 = vrot.lane.b32.xlu0 %v3276, 2
      %v3378 = vpop.permute.xlu0 %3377
      %3379 = vrot.lane.b32.xlu0 %v3277, 2
      %v3380 = vpop.permute.xlu0 %3379
      %3381 = vrot.lane.b32.xlu0 %v3278, 2
      %v3382 = vpop.permute.xlu0 %3381
      %v3387 = vmul.f32 %v2667, %v3376
      %v3388 = vmul.f32 %v2668, %v3378
      %v3389 = vmul.f32 %v2669, %v3380
      %v3390 = vmul.f32 %v2670, %v3382
      %v3391 = vsel %vm1159, %v3387, -inf
      %v3392 = vsel %vm1159, %v3388, -inf
      %v3393 = vsel %vm1159, %v3389, -inf
      %v3394 = vsel %vm1159, %v3390, -inf
      %v3395 = vmax.f32 %v3391, %v3392
      %v3396 = vmax.f32 %v3393, %v3394
      %v3397 = vmax.f32 %v3395, %v3396
      %v3398 = vrot.slane %v3397, 4
      %v3399 = vmax.f32 %v3397, %v3398
      %v3400 = vrot.slane %v3399, 2
      %v3401 = vmax.f32 %v3399, %v3400
      %v3402 = vrot.slane %v3401, 1
      %v3403 = vmax.f32 %v3401, %v3402
      %v3404 = vsub.f32 %v3387, %v3403
      %v3405 = vsub.f32 %v3388, %v3403
      %v3406 = vsub.f32 %v3389, %v3403
      %v3407 = vsub.f32 %v3390, %v3403
      %v3408 = vmul.f32 %v3404, 1.442695
      %v3409 = vpow.pop %v3408
      %v3410 = vmul.f32 %v3405, 1.442695
      %v3411 = vpow.pop %v3410
      %v3412 = vmul.f32 %v3406, 1.442695
      %v3413 = vpow.pop %v3412
      %v3414 = vmul.f32 %v3407, 1.442695
      %v3415 = vpow.pop %v3414
      %v3416 = vsel %vm1159, %v3409, 0.0
      %v3417 = vsel %vm1159, %v3411, 0.0
      %v3418 = vadd.f32 %v3416, %v3417
      %v3419 = vsel %vm1159, %v3413, 0.0
      %v3420 = vadd.f32 %v3418, %v3419
      %v3421 = vsel %vm1159, %v3415, 0.0
      %v3422 = vadd.f32 %v3420, %v3421
      %v3423 = vrot.slane %v3422, 4
      %v3424 = vadd.f32 %v3422, %v3423
      %v3425 = vrot.slane %v3424, 2
      %v3426 = vadd.f32 %v3424, %v3425
      %v3427 = vrot.slane %v3426, 1
      %v3428 = vadd.f32 %v3426, %v3427
      %v3429 = vrcp.pop %v3428
      %v3430 = vmul.f32 %v3409, %v3429
      %v3431 = vmul.f32 %v3411, %v3429
      %v3432 = vmul.f32 %v3413, %v3429
      %v3433 = vmul.f32 %v3415, %v3429
      %v3434 = vsub.f32 %v3367, %v3430
      %v3435 = vsub.f32 %v3368, %v3431
      %v3436 = vsub.f32 %v3369, %v3432
      %v3437 = vsub.f32 %v3370, %v3433
      %3439 = vset.pattern.permute.xlu0 2
      %3440 = vperm.xlu0 %3439, %v3434
      %v3441 = vpop.permute.xlu0 %3440
      %3444 = vset.pattern.permute.xlu0 2
      %3445 = vperm.xlu0 %3444, %v3435
      %v3446 = vpop.permute.xlu0 %3445
      %3449 = vset.pattern.permute.xlu0 2
      %3450 = vperm.xlu0 %3449, %v3436
      %v3451 = vpop.permute.xlu0 %3450
      %3454 = vset.pattern.permute.xlu0 2
      %3455 = vperm.xlu0 %3454, %v3437
      %v3456 = vpop.permute.xlu0 %3455
      %v3458 = vmul.f32 %v3441, %v3214
      %v3459 = vmul.f32 %v3446, %v3215
      %v3460 = vmul.f32 %v3451, %v3216
      %v3461 = vmul.f32 %v3456, %v3217
      %v3462 = vadd.f32 %v3458, %v3459
      %v3463 = vadd.f32 %v3462, %v3460
      %v3464 = vadd.f32 %v3463, %v3461
      %v3465 = vrot.slane %v3464, 4
      %v3466 = vadd.f32 %v3464, %v3465
      %v3467 = vrot.slane %v3466, 2
      %v3468 = vadd.f32 %v3466, %v3467
      %v3469 = vrot.slane %v3468, 1
      %v3470 = vadd.f32 %v3468, %v3469
      %3472 = vset.pattern.permute.xlu0 98
      %3473 = vperm.xlu0 %3472, %v3307
      %v3474 = vpop.permute.xlu0 %3473
      %3476 = vset.pattern.permute.xlu0 99
      %3477 = vperm.xlu0 %3476, %v3307
      %v3478 = vpop.permute.xlu0 %3477
      %v3480 = vsel %vm383, %v3474, %v3478
      %3481 = vset.pattern.permute.xlu0 97
      %3482 = vperm.xlu0 %3481, %v3307
      %v3483 = vpop.permute.xlu0 %3482
      %v3485 = vsel %vm382, %v3483, %v3480
      %3486 = vset.pattern.permute.xlu0 96
      %3487 = vperm.xlu0 %3486, %v3307
      %v3488 = vpop.permute.xlu0 %3487
      %v3490 = vsel %vm381, %v3488, %v3485
      %v3491 = vxor.u32 %v3490, 2147483648
      %v3492 = vmul.f32 %v3491, 1.442695
      %v3493 = vpow.pop %v3492
      %v3494 = vadd.f32 %v3493, 1.0
      %v3495 = vrcp.pop %v3494
      %v3496 = vmul.f32 1.0, %v3495
      %v3497 = vmul.f32 %v3496, %v3470
      %3499 = vset.pattern.permute.xlu0 2
      %3500 = vperm.xlu0 %3499, %v3430
      %v3501 = vpop.permute.xlu0 %3500
      %3504 = vset.pattern.permute.xlu0 2
      %3505 = vperm.xlu0 %3504, %v3431
      %v3506 = vpop.permute.xlu0 %3505
      %3509 = vset.pattern.permute.xlu0 2
      %3510 = vperm.xlu0 %3509, %v3432
      %v3511 = vpop.permute.xlu0 %3510
      %3514 = vset.pattern.permute.xlu0 2
      %3515 = vperm.xlu0 %3514, %v3433
      %v3516 = vpop.permute.xlu0 %3515
      %v3518 = vmul.f32 %v3501, %v3497
      %v3519 = vmul.f32 %v3506, %v3497
      %v3520 = vmul.f32 %v3511, %v3497
      %v3521 = vmul.f32 %v3516, %v3497
      %v3522 = vadd.f32 %v3214, %v3518
      %v3523 = vadd.f32 %v3215, %v3519
      %v3524 = vadd.f32 %v3216, %v3520
      %v3525 = vadd.f32 %v3217, %v3521
      %3527 = vrot.lane.b32.xlu0 %v3497, 96
      %v3528 = vpop.permute.xlu0 %3527
      %v3530 = vsel %vm515, %v3528, 0.0
      %3531 = vadd.xlane.f32.xlu0 %v3530
      %v3532 = vpop.xlane.xlu0 %3531
      %v3533 = vmul.f32 %v3430, %v3532
      %v3534 = vmul.f32 %v3431, %v3532
      %v3535 = vmul.f32 %v3432, %v3532
      %v3536 = vmul.f32 %v3433, %v3532
      %3541 = vrot.lane.b32.xlu0 %v3533, 126
      %v3542 = vpop.permute.xlu0 %3541
      %3543 = vrot.lane.b32.xlu0 %v3534, 126
      %v3544 = vpop.permute.xlu0 %3543
      %3545 = vrot.lane.b32.xlu0 %v3535, 126
      %v3546 = vpop.permute.xlu0 %3545
      %3547 = vrot.lane.b32.xlu0 %v3536, 126
      %v3548 = vpop.permute.xlu0 %3547
      %v3553 = vadd.f32 %v3245, %v3542
      %v3554 = vadd.f32 %v3246, %v3544
      %v3555 = vadd.f32 %v3247, %v3546
      %v3556 = vadd.f32 %v3248, %v3548
      %3557 = vrot.lane.b32.xlu0 %v3497, 64
      %v3558 = vpop.permute.xlu0 %3557
      %v3560 = vsel %vm515, %v3558, 0.0
      %3561 = vadd.xlane.f32.xlu0 %v3560
      %v3562 = vpop.xlane.xlu0 %3561
      %v3563 = vmul.f32 %v3430, %v3562
      %v3564 = vmul.f32 %v3431, %v3562
      %v3565 = vmul.f32 %v3432, %v3562
      %v3566 = vmul.f32 %v3433, %v3562
      %3571 = vrot.lane.b32.xlu0 %v3563, 126
      %v3572 = vpop.permute.xlu0 %3571
      %3573 = vrot.lane.b32.xlu0 %v3564, 126
      %v3574 = vpop.permute.xlu0 %3573
      %3575 = vrot.lane.b32.xlu0 %v3565, 126
      %v3576 = vpop.permute.xlu0 %3575
      %3577 = vrot.lane.b32.xlu0 %v3566, 126
      %v3578 = vpop.permute.xlu0 %3577
      %v3583 = vadd.f32 %v3275, %v3572
      %v3584 = vadd.f32 %v3276, %v3574
      %v3585 = vadd.f32 %v3277, %v3576
      %v3586 = vadd.f32 %v3278, %v3578
      %3587 = vset.pattern.permute.xlu0 3
      %3588 = vperm.xlu0 %3587, %v2667
      %v3589 = vpop.permute.xlu0 %3588
      %3591 = vset.pattern.permute.xlu0 3
      %3592 = vperm.xlu0 %3591, %v2668
      %v3593 = vpop.permute.xlu0 %3592
      %3595 = vset.pattern.permute.xlu0 3
      %3596 = vperm.xlu0 %3595, %v2669
      %v3597 = vpop.permute.xlu0 %3596
      %3599 = vset.pattern.permute.xlu0 3
      %3600 = vperm.xlu0 %3599, %v2670
      %v3601 = vpop.permute.xlu0 %3600
      %v3603 = vmul.f32 %v3589, %v3522
      %v3604 = vmul.f32 %v3593, %v3523
      %v3605 = vmul.f32 %v3597, %v3524
      %v3606 = vmul.f32 %v3601, %v3525
      %v3607 = vadd.f32 %v3603, %v3604
      %v3608 = vadd.f32 %v3607, %v3605
      %v3609 = vadd.f32 %v3608, %v3606
      %v3610 = vrot.slane %v3609, 4
      %v3611 = vadd.f32 %v3609, %v3610
      %v3612 = vrot.slane %v3611, 2
      %v3613 = vadd.f32 %v3611, %v3612
      %v3614 = vrot.slane %v3613, 1
      %v3615 = vadd.f32 %v3613, %v3614
      %3620 = vrot.lane.b32.xlu0 %v3553, 3
      %v3621 = vpop.permute.xlu0 %3620
      %3622 = vrot.lane.b32.xlu0 %v3554, 3
      %v3623 = vpop.permute.xlu0 %3622
      %3624 = vrot.lane.b32.xlu0 %v3555, 3
      %v3625 = vpop.permute.xlu0 %3624
      %3626 = vrot.lane.b32.xlu0 %v3556, 3
      %v3627 = vpop.permute.xlu0 %3626
      %v3632 = vmul.f32 %v2667, %v3621
      %v3633 = vmul.f32 %v2668, %v3623
      %v3634 = vmul.f32 %v2669, %v3625
      %v3635 = vmul.f32 %v2670, %v3627
      %v3636 = vsel %vm1468, %v3632, -inf
      %v3637 = vsel %vm1468, %v3633, -inf
      %v3638 = vsel %vm1468, %v3634, -inf
      %v3639 = vsel %vm1468, %v3635, -inf
      %v3640 = vmax.f32 %v3636, %v3637
      %v3641 = vmax.f32 %v3638, %v3639
      %v3642 = vmax.f32 %v3640, %v3641
      %v3643 = vrot.slane %v3642, 4
      %v3644 = vmax.f32 %v3642, %v3643
      %v3645 = vrot.slane %v3644, 2
      %v3646 = vmax.f32 %v3644, %v3645
      %v3647 = vrot.slane %v3646, 1
      %v3648 = vmax.f32 %v3646, %v3647
      %v3649 = vsub.f32 %v3632, %v3648
      %v3650 = vsub.f32 %v3633, %v3648
      %v3651 = vsub.f32 %v3634, %v3648
      %v3652 = vsub.f32 %v3635, %v3648
      %v3653 = vmul.f32 %v3649, 1.442695
      %v3654 = vpow.pop %v3653
      %v3655 = vmul.f32 %v3650, 1.442695
      %v3656 = vpow.pop %v3655
      %v3657 = vmul.f32 %v3651, 1.442695
      %v3658 = vpow.pop %v3657
      %v3659 = vmul.f32 %v3652, 1.442695
      %v3660 = vpow.pop %v3659
      %v3661 = vsel %vm1468, %v3654, 0.0
      %v3662 = vsel %vm1468, %v3656, 0.0
      %v3663 = vadd.f32 %v3661, %v3662
      %v3664 = vsel %vm1468, %v3658, 0.0
      %v3665 = vadd.f32 %v3663, %v3664
      %v3666 = vsel %vm1468, %v3660, 0.0
      %v3667 = vadd.f32 %v3665, %v3666
      %v3668 = vrot.slane %v3667, 4
      %v3669 = vadd.f32 %v3667, %v3668
      %v3670 = vrot.slane %v3669, 2
      %v3671 = vadd.f32 %v3669, %v3670
      %v3672 = vrot.slane %v3671, 1
      %v3673 = vadd.f32 %v3671, %v3672
      %v3674 = vrcp.pop %v3673
      %v3675 = vmul.f32 %v3654, %v3674
      %v3676 = vmul.f32 %v3656, %v3674
      %v3677 = vmul.f32 %v3658, %v3674
      %v3678 = vmul.f32 %v3660, %v3674
      %3683 = vrot.lane.b32.xlu0 %v3583, 3
      %v3684 = vpop.permute.xlu0 %3683
      %3685 = vrot.lane.b32.xlu0 %v3584, 3
      %v3686 = vpop.permute.xlu0 %3685
      %3687 = vrot.lane.b32.xlu0 %v3585, 3
      %v3688 = vpop.permute.xlu0 %3687
      %3689 = vrot.lane.b32.xlu0 %v3586, 3
      %v3690 = vpop.permute.xlu0 %3689
      %v3695 = vmul.f32 %v2667, %v3684
      %v3696 = vmul.f32 %v2668, %v3686
      %v3697 = vmul.f32 %v2669, %v3688
      %v3698 = vmul.f32 %v2670, %v3690
      %v3699 = vsel %vm1468, %v3695, -inf
      %v3700 = vsel %vm1468, %v3696, -inf
      %v3701 = vsel %vm1468, %v3697, -inf
      %v3702 = vsel %vm1468, %v3698, -inf
      %v3703 = vmax.f32 %v3699, %v3700
      %v3704 = vmax.f32 %v3701, %v3702
      %v3705 = vmax.f32 %v3703, %v3704
      %v3706 = vrot.slane %v3705, 4
      %v3707 = vmax.f32 %v3705, %v3706
      %v3708 = vrot.slane %v3707, 2
      %v3709 = vmax.f32 %v3707, %v3708
      %v3710 = vrot.slane %v3709, 1
      %v3711 = vmax.f32 %v3709, %v3710
      %v3712 = vsub.f32 %v3695, %v3711
      %v3713 = vsub.f32 %v3696, %v3711
      %v3714 = vsub.f32 %v3697, %v3711
      %v3715 = vsub.f32 %v3698, %v3711
      %v3716 = vmul.f32 %v3712, 1.442695
      %v3717 = vpow.pop %v3716
      %v3718 = vmul.f32 %v3713, 1.442695
      %v3719 = vpow.pop %v3718
      %v3720 = vmul.f32 %v3714, 1.442695
      %v3721 = vpow.pop %v3720
      %v3722 = vmul.f32 %v3715, 1.442695
      %v3723 = vpow.pop %v3722
      %v3724 = vsel %vm1468, %v3717, 0.0
      %v3725 = vsel %vm1468, %v3719, 0.0
      %v3726 = vadd.f32 %v3724, %v3725
      %v3727 = vsel %vm1468, %v3721, 0.0
      %v3728 = vadd.f32 %v3726, %v3727
      %v3729 = vsel %vm1468, %v3723, 0.0
      %v3730 = vadd.f32 %v3728, %v3729
      %v3731 = vrot.slane %v3730, 4
      %v3732 = vadd.f32 %v3730, %v3731
      %v3733 = vrot.slane %v3732, 2
      %v3734 = vadd.f32 %v3732, %v3733
      %v3735 = vrot.slane %v3734, 1
      %v3736 = vadd.f32 %v3734, %v3735
      %v3737 = vrcp.pop %v3736
      %v3738 = vmul.f32 %v3717, %v3737
      %v3739 = vmul.f32 %v3719, %v3737
      %v3740 = vmul.f32 %v3721, %v3737
      %v3741 = vmul.f32 %v3723, %v3737
      %v3742 = vsub.f32 %v3675, %v3738
      %v3743 = vsub.f32 %v3676, %v3739
      %v3744 = vsub.f32 %v3677, %v3740
      %v3745 = vsub.f32 %v3678, %v3741
      %3747 = vset.pattern.permute.xlu0 3
      %3748 = vperm.xlu0 %3747, %v3742
      %v3749 = vpop.permute.xlu0 %3748
      %3752 = vset.pattern.permute.xlu0 3
      %3753 = vperm.xlu0 %3752, %v3743
      %v3754 = vpop.permute.xlu0 %3753
      %3757 = vset.pattern.permute.xlu0 3
      %3758 = vperm.xlu0 %3757, %v3744
      %v3759 = vpop.permute.xlu0 %3758
      %3762 = vset.pattern.permute.xlu0 3
      %3763 = vperm.xlu0 %3762, %v3745
      %v3764 = vpop.permute.xlu0 %3763
      %v3766 = vmul.f32 %v3749, %v3522
      %v3767 = vmul.f32 %v3754, %v3523
      %v3768 = vmul.f32 %v3759, %v3524
      %v3769 = vmul.f32 %v3764, %v3525
      %v3770 = vadd.f32 %v3766, %v3767
      %v3771 = vadd.f32 %v3770, %v3768
      %v3772 = vadd.f32 %v3771, %v3769
      %v3773 = vrot.slane %v3772, 4
      %v3774 = vadd.f32 %v3772, %v3773
      %v3775 = vrot.slane %v3774, 2
      %v3776 = vadd.f32 %v3774, %v3775
      %v3777 = vrot.slane %v3776, 1
      %v3778 = vadd.f32 %v3776, %v3777
      %3780 = vset.pattern.permute.xlu0 98
      %3781 = vperm.xlu0 %3780, %v3615
      %v3782 = vpop.permute.xlu0 %3781
      %3784 = vset.pattern.permute.xlu0 99
      %3785 = vperm.xlu0 %3784, %v3615
      %v3786 = vpop.permute.xlu0 %3785
      %v3788 = vsel %vm383, %v3782, %v3786
      %3789 = vset.pattern.permute.xlu0 97
      %3790 = vperm.xlu0 %3789, %v3615
      %v3791 = vpop.permute.xlu0 %3790
      %v3793 = vsel %vm382, %v3791, %v3788
      %3794 = vset.pattern.permute.xlu0 96
      %3795 = vperm.xlu0 %3794, %v3615
      %v3796 = vpop.permute.xlu0 %3795
      %v3798 = vsel %vm381, %v3796, %v3793
      %v3799 = vxor.u32 %v3798, 2147483648
      %v3800 = vmul.f32 %v3799, 1.442695
      %v3801 = vpow.pop %v3800
      %v3802 = vadd.f32 %v3801, 1.0
      %v3803 = vrcp.pop %v3802
      %v3804 = vmul.f32 1.0, %v3803
      %v3805 = vmul.f32 %v3804, %v3778
      %3807 = vset.pattern.permute.xlu0 3
      %3808 = vperm.xlu0 %3807, %v3738
      %v3809 = vpop.permute.xlu0 %3808
      %3812 = vset.pattern.permute.xlu0 3
      %3813 = vperm.xlu0 %3812, %v3739
      %v3814 = vpop.permute.xlu0 %3813
      %3817 = vset.pattern.permute.xlu0 3
      %3818 = vperm.xlu0 %3817, %v3740
      %v3819 = vpop.permute.xlu0 %3818
      %3822 = vset.pattern.permute.xlu0 3
      %3823 = vperm.xlu0 %3822, %v3741
      %v3824 = vpop.permute.xlu0 %3823
      %v3826 = vmul.f32 %v3809, %v3805
      %v3827 = vmul.f32 %v3814, %v3805
      %v3828 = vmul.f32 %v3819, %v3805
      %v3829 = vmul.f32 %v3824, %v3805
      %v3830 = vadd.f32 %v3522, %v3826
      %v3831 = vadd.f32 %v3523, %v3827
      %v3832 = vadd.f32 %v3524, %v3828
      %v3833 = vadd.f32 %v3525, %v3829
      %3835 = vrot.lane.b32.xlu0 %v3805, 96
      %v3836 = vpop.permute.xlu0 %3835
      %v3838 = vsel %vm515, %v3836, 0.0
      %3839 = vadd.xlane.f32.xlu0 %v3838
      %v3840 = vpop.xlane.xlu0 %3839
      %v3841 = vmul.f32 %v3738, %v3840
      %v3842 = vmul.f32 %v3739, %v3840
      %v3843 = vmul.f32 %v3740, %v3840
      %v3844 = vmul.f32 %v3741, %v3840
      %3849 = vrot.lane.b32.xlu0 %v3841, 125
      %v3850 = vpop.permute.xlu0 %3849
      %3851 = vrot.lane.b32.xlu0 %v3842, 125
      %v3852 = vpop.permute.xlu0 %3851
      %3853 = vrot.lane.b32.xlu0 %v3843, 125
      %v3854 = vpop.permute.xlu0 %3853
      %3855 = vrot.lane.b32.xlu0 %v3844, 125
      %v3856 = vpop.permute.xlu0 %3855
      %v3861 = vadd.f32 %v3553, %v3850
      %v3862 = vadd.f32 %v3554, %v3852
      %v3863 = vadd.f32 %v3555, %v3854
      %v3864 = vadd.f32 %v3556, %v3856
      %3865 = vrot.lane.b32.xlu0 %v3805, 64
      %v3866 = vpop.permute.xlu0 %3865
      %v3868 = vsel %vm515, %v3866, 0.0
      %3869 = vadd.xlane.f32.xlu0 %v3868
      %v3870 = vpop.xlane.xlu0 %3869
      %v3871 = vmul.f32 %v3738, %v3870
      %v3872 = vmul.f32 %v3739, %v3870
      %v3873 = vmul.f32 %v3740, %v3870
      %v3874 = vmul.f32 %v3741, %v3870
      %3879 = vrot.lane.b32.xlu0 %v3871, 125
      %v3880 = vpop.permute.xlu0 %3879
      %3881 = vrot.lane.b32.xlu0 %v3872, 125
      %v3882 = vpop.permute.xlu0 %3881
      %3883 = vrot.lane.b32.xlu0 %v3873, 125
      %v3884 = vpop.permute.xlu0 %3883
      %3885 = vrot.lane.b32.xlu0 %v3874, 125
      %v3886 = vpop.permute.xlu0 %3885
      %v3891 = vadd.f32 %v3583, %v3880
      %v3892 = vadd.f32 %v3584, %v3882
      %v3893 = vadd.f32 %v3585, %v3884
      %v3894 = vadd.f32 %v3586, %v3886
      %3895 = vset.pattern.permute.xlu0 4
      %3896 = vperm.xlu0 %3895, %v2667
      %v3897 = vpop.permute.xlu0 %3896
      %3899 = vset.pattern.permute.xlu0 4
      %3900 = vperm.xlu0 %3899, %v2668
      %v3901 = vpop.permute.xlu0 %3900
      %3903 = vset.pattern.permute.xlu0 4
      %3904 = vperm.xlu0 %3903, %v2669
      %v3905 = vpop.permute.xlu0 %3904
      %3907 = vset.pattern.permute.xlu0 4
      %3908 = vperm.xlu0 %3907, %v2670
      %v3909 = vpop.permute.xlu0 %3908
      %v3911 = vmul.f32 %v3897, %v3830
      %v3912 = vmul.f32 %v3901, %v3831
      %v3913 = vmul.f32 %v3905, %v3832
      %v3914 = vmul.f32 %v3909, %v3833
      %v3915 = vadd.f32 %v3911, %v3912
      %v3916 = vadd.f32 %v3915, %v3913
      %v3917 = vadd.f32 %v3916, %v3914
      %v3918 = vrot.slane %v3917, 4
      %v3919 = vadd.f32 %v3917, %v3918
      %v3920 = vrot.slane %v3919, 2
      %v3921 = vadd.f32 %v3919, %v3920
      %v3922 = vrot.slane %v3921, 1
      %v3923 = vadd.f32 %v3921, %v3922
      %3928 = vrot.lane.b32.xlu0 %v3861, 4
      %v3929 = vpop.permute.xlu0 %3928
      %3930 = vrot.lane.b32.xlu0 %v3862, 4
      %v3931 = vpop.permute.xlu0 %3930
      %3932 = vrot.lane.b32.xlu0 %v3863, 4
      %v3933 = vpop.permute.xlu0 %3932
      %3934 = vrot.lane.b32.xlu0 %v3864, 4
      %v3935 = vpop.permute.xlu0 %3934
      %v3940 = vmul.f32 %v2667, %v3929
      %v3941 = vmul.f32 %v2668, %v3931
      %v3942 = vmul.f32 %v2669, %v3933
      %v3943 = vmul.f32 %v2670, %v3935
      %v3944 = vsel %vm1777, %v3940, -inf
      %v3945 = vsel %vm1777, %v3941, -inf
      %v3946 = vsel %vm1777, %v3942, -inf
      %v3947 = vsel %vm1777, %v3943, -inf
      %v3948 = vmax.f32 %v3944, %v3945
      %v3949 = vmax.f32 %v3946, %v3947
      %v3950 = vmax.f32 %v3948, %v3949
      %v3951 = vrot.slane %v3950, 4
      %v3952 = vmax.f32 %v3950, %v3951
      %v3953 = vrot.slane %v3952, 2
      %v3954 = vmax.f32 %v3952, %v3953
      %v3955 = vrot.slane %v3954, 1
      %v3956 = vmax.f32 %v3954, %v3955
      %v3957 = vsub.f32 %v3940, %v3956
      %v3958 = vsub.f32 %v3941, %v3956
      %v3959 = vsub.f32 %v3942, %v3956
      %v3960 = vsub.f32 %v3943, %v3956
      %v3961 = vmul.f32 %v3957, 1.442695
      %v3962 = vpow.pop %v3961
      %v3963 = vmul.f32 %v3958, 1.442695
      %v3964 = vpow.pop %v3963
      %v3965 = vmul.f32 %v3959, 1.442695
      %v3966 = vpow.pop %v3965
      %v3967 = vmul.f32 %v3960, 1.442695
      %v3968 = vpow.pop %v3967
      %v3969 = vsel %vm1777, %v3962, 0.0
      %v3970 = vsel %vm1777, %v3964, 0.0
      %v3971 = vadd.f32 %v3969, %v3970
      %v3972 = vsel %vm1777, %v3966, 0.0
      %v3973 = vadd.f32 %v3971, %v3972
      %v3974 = vsel %vm1777, %v3968, 0.0
      %v3975 = vadd.f32 %v3973, %v3974
      %v3976 = vrot.slane %v3975, 4
      %v3977 = vadd.f32 %v3975, %v3976
      %v3978 = vrot.slane %v3977, 2
      %v3979 = vadd.f32 %v3977, %v3978
      %v3980 = vrot.slane %v3979, 1
      %v3981 = vadd.f32 %v3979, %v3980
      %v3982 = vrcp.pop %v3981
      %v3983 = vmul.f32 %v3962, %v3982
      %v3984 = vmul.f32 %v3964, %v3982
      %v3985 = vmul.f32 %v3966, %v3982
      %v3986 = vmul.f32 %v3968, %v3982
      %3991 = vrot.lane.b32.xlu0 %v3891, 4
      %v3992 = vpop.permute.xlu0 %3991
      %3993 = vrot.lane.b32.xlu0 %v3892, 4
      %v3994 = vpop.permute.xlu0 %3993
      %3995 = vrot.lane.b32.xlu0 %v3893, 4
      %v3996 = vpop.permute.xlu0 %3995
      %3997 = vrot.lane.b32.xlu0 %v3894, 4
      %v3998 = vpop.permute.xlu0 %3997
      %v4003 = vmul.f32 %v2667, %v3992
      %v4004 = vmul.f32 %v2668, %v3994
      %v4005 = vmul.f32 %v2669, %v3996
      %v4006 = vmul.f32 %v2670, %v3998
      %v4007 = vsel %vm1777, %v4003, -inf
      %v4008 = vsel %vm1777, %v4004, -inf
      %v4009 = vsel %vm1777, %v4005, -inf
      %v4010 = vsel %vm1777, %v4006, -inf
      %v4011 = vmax.f32 %v4007, %v4008
      %v4012 = vmax.f32 %v4009, %v4010
      %v4013 = vmax.f32 %v4011, %v4012
      %v4014 = vrot.slane %v4013, 4
      %v4015 = vmax.f32 %v4013, %v4014
      %v4016 = vrot.slane %v4015, 2
      %v4017 = vmax.f32 %v4015, %v4016
      %v4018 = vrot.slane %v4017, 1
      %v4019 = vmax.f32 %v4017, %v4018
      %v4020 = vsub.f32 %v4003, %v4019
      %v4021 = vsub.f32 %v4004, %v4019
      %v4022 = vsub.f32 %v4005, %v4019
      %v4023 = vsub.f32 %v4006, %v4019
      %v4024 = vmul.f32 %v4020, 1.442695
      %v4025 = vpow.pop %v4024
      %v4026 = vmul.f32 %v4021, 1.442695
      %v4027 = vpow.pop %v4026
      %v4028 = vmul.f32 %v4022, 1.442695
      %v4029 = vpow.pop %v4028
      %v4030 = vmul.f32 %v4023, 1.442695
      %v4031 = vpow.pop %v4030
      %v4032 = vsel %vm1777, %v4025, 0.0
      %v4033 = vsel %vm1777, %v4027, 0.0
      %v4034 = vadd.f32 %v4032, %v4033
      %v4035 = vsel %vm1777, %v4029, 0.0
      %v4036 = vadd.f32 %v4034, %v4035
      %v4037 = vsel %vm1777, %v4031, 0.0
      %v4038 = vadd.f32 %v4036, %v4037
      %v4039 = vrot.slane %v4038, 4
      %v4040 = vadd.f32 %v4038, %v4039
      %v4041 = vrot.slane %v4040, 2
      %v4042 = vadd.f32 %v4040, %v4041
      %v4043 = vrot.slane %v4042, 1
      %v4044 = vadd.f32 %v4042, %v4043
      %v4045 = vrcp.pop %v4044
      %v4046 = vmul.f32 %v4025, %v4045
      %v4047 = vmul.f32 %v4027, %v4045
      %v4048 = vmul.f32 %v4029, %v4045
      %v4049 = vmul.f32 %v4031, %v4045
      %v4050 = vsub.f32 %v3983, %v4046
      %v4051 = vsub.f32 %v3984, %v4047
      %v4052 = vsub.f32 %v3985, %v4048
      %v4053 = vsub.f32 %v3986, %v4049
      %4055 = vset.pattern.permute.xlu0 4
      %4056 = vperm.xlu0 %4055, %v4050
      %v4057 = vpop.permute.xlu0 %4056
      %4060 = vset.pattern.permute.xlu0 4
      %4061 = vperm.xlu0 %4060, %v4051
      %v4062 = vpop.permute.xlu0 %4061
      %4065 = vset.pattern.permute.xlu0 4
      %4066 = vperm.xlu0 %4065, %v4052
      %v4067 = vpop.permute.xlu0 %4066
      %4070 = vset.pattern.permute.xlu0 4
      %4071 = vperm.xlu0 %4070, %v4053
      %v4072 = vpop.permute.xlu0 %4071
      %v4074 = vmul.f32 %v4057, %v3830
      %v4075 = vmul.f32 %v4062, %v3831
      %v4076 = vmul.f32 %v4067, %v3832
      %v4077 = vmul.f32 %v4072, %v3833
      %v4078 = vadd.f32 %v4074, %v4075
      %v4079 = vadd.f32 %v4078, %v4076
      %v4080 = vadd.f32 %v4079, %v4077
      %v4081 = vrot.slane %v4080, 4
      %v4082 = vadd.f32 %v4080, %v4081
      %v4083 = vrot.slane %v4082, 2
      %v4084 = vadd.f32 %v4082, %v4083
      %v4085 = vrot.slane %v4084, 1
      %v4086 = vadd.f32 %v4084, %v4085
      %4088 = vset.pattern.permute.xlu0 98
      %4089 = vperm.xlu0 %4088, %v3923
      %v4090 = vpop.permute.xlu0 %4089
      %4092 = vset.pattern.permute.xlu0 99
      %4093 = vperm.xlu0 %4092, %v3923
      %v4094 = vpop.permute.xlu0 %4093
      %v4096 = vsel %vm383, %v4090, %v4094
      %4097 = vset.pattern.permute.xlu0 97
      %4098 = vperm.xlu0 %4097, %v3923
      %v4099 = vpop.permute.xlu0 %4098
      %v4101 = vsel %vm382, %v4099, %v4096
      %4102 = vset.pattern.permute.xlu0 96
      %4103 = vperm.xlu0 %4102, %v3923
      %v4104 = vpop.permute.xlu0 %4103
      %v4106 = vsel %vm381, %v4104, %v4101
      %v4107 = vxor.u32 %v4106, 2147483648
      %v4108 = vmul.f32 %v4107, 1.442695
      %v4109 = vpow.pop %v4108
      %v4110 = vadd.f32 %v4109, 1.0
      %v4111 = vrcp.pop %v4110
      %v4112 = vmul.f32 1.0, %v4111
      %v4113 = vmul.f32 %v4112, %v4086
      %4115 = vset.pattern.permute.xlu0 4
      %4116 = vperm.xlu0 %4115, %v4046
      %v4117 = vpop.permute.xlu0 %4116
      %4120 = vset.pattern.permute.xlu0 4
      %4121 = vperm.xlu0 %4120, %v4047
      %v4122 = vpop.permute.xlu0 %4121
      %4125 = vset.pattern.permute.xlu0 4
      %4126 = vperm.xlu0 %4125, %v4048
      %v4127 = vpop.permute.xlu0 %4126
      %4130 = vset.pattern.permute.xlu0 4
      %4131 = vperm.xlu0 %4130, %v4049
      %v4132 = vpop.permute.xlu0 %4131
      %v4134 = vmul.f32 %v4117, %v4113
      %v4135 = vmul.f32 %v4122, %v4113
      %v4136 = vmul.f32 %v4127, %v4113
      %v4137 = vmul.f32 %v4132, %v4113
      %v4138 = vadd.f32 %v3830, %v4134
      %v4139 = vadd.f32 %v3831, %v4135
      %v4140 = vadd.f32 %v3832, %v4136
      %v4141 = vadd.f32 %v3833, %v4137
      %4143 = vrot.lane.b32.xlu0 %v4113, 96
      %v4144 = vpop.permute.xlu0 %4143
      %v4146 = vsel %vm515, %v4144, 0.0
      %4147 = vadd.xlane.f32.xlu0 %v4146
      %v4148 = vpop.xlane.xlu0 %4147
      %v4149 = vmul.f32 %v4046, %v4148
      %v4150 = vmul.f32 %v4047, %v4148
      %v4151 = vmul.f32 %v4048, %v4148
      %v4152 = vmul.f32 %v4049, %v4148
      %4157 = vrot.lane.b32.xlu0 %v4149, 124
      %v4158 = vpop.permute.xlu0 %4157
      %4159 = vrot.lane.b32.xlu0 %v4150, 124
      %v4160 = vpop.permute.xlu0 %4159
      %4161 = vrot.lane.b32.xlu0 %v4151, 124
      %v4162 = vpop.permute.xlu0 %4161
      %4163 = vrot.lane.b32.xlu0 %v4152, 124
      %v4164 = vpop.permute.xlu0 %4163
      %v4169 = vadd.f32 %v3861, %v4158
      %v4170 = vadd.f32 %v3862, %v4160
      %v4171 = vadd.f32 %v3863, %v4162
      %v4172 = vadd.f32 %v3864, %v4164
      %4173 = vrot.lane.b32.xlu0 %v4113, 64
      %v4174 = vpop.permute.xlu0 %4173
      %v4176 = vsel %vm515, %v4174, 0.0
      %4177 = vadd.xlane.f32.xlu0 %v4176
      %v4178 = vpop.xlane.xlu0 %4177
      %v4179 = vmul.f32 %v4046, %v4178
      %v4180 = vmul.f32 %v4047, %v4178
      %v4181 = vmul.f32 %v4048, %v4178
      %v4182 = vmul.f32 %v4049, %v4178
      %4187 = vrot.lane.b32.xlu0 %v4179, 124
      %v4188 = vpop.permute.xlu0 %4187
      %4189 = vrot.lane.b32.xlu0 %v4180, 124
      %v4190 = vpop.permute.xlu0 %4189
      %4191 = vrot.lane.b32.xlu0 %v4181, 124
      %v4192 = vpop.permute.xlu0 %4191
      %4193 = vrot.lane.b32.xlu0 %v4182, 124
      %v4194 = vpop.permute.xlu0 %4193
      %v4199 = vadd.f32 %v3891, %v4188
      %v4200 = vadd.f32 %v3892, %v4190
      %v4201 = vadd.f32 %v3893, %v4192
      %v4202 = vadd.f32 %v3894, %v4194
      %4203 = vset.pattern.permute.xlu0 5
      %4204 = vperm.xlu0 %4203, %v2667
      %v4205 = vpop.permute.xlu0 %4204
      %4207 = vset.pattern.permute.xlu0 5
      %4208 = vperm.xlu0 %4207, %v2668
      %v4209 = vpop.permute.xlu0 %4208
      %4211 = vset.pattern.permute.xlu0 5
      %4212 = vperm.xlu0 %4211, %v2669
      %v4213 = vpop.permute.xlu0 %4212
      %4215 = vset.pattern.permute.xlu0 5
      %4216 = vperm.xlu0 %4215, %v2670
      %v4217 = vpop.permute.xlu0 %4216
      %v4219 = vmul.f32 %v4205, %v4138
      %v4220 = vmul.f32 %v4209, %v4139
      %v4221 = vmul.f32 %v4213, %v4140
      %v4222 = vmul.f32 %v4217, %v4141
      %v4223 = vadd.f32 %v4219, %v4220
      %v4224 = vadd.f32 %v4223, %v4221
      %v4225 = vadd.f32 %v4224, %v4222
      %v4226 = vrot.slane %v4225, 4
      %v4227 = vadd.f32 %v4225, %v4226
      %v4228 = vrot.slane %v4227, 2
      %v4229 = vadd.f32 %v4227, %v4228
      %v4230 = vrot.slane %v4229, 1
      %v4231 = vadd.f32 %v4229, %v4230
      %4236 = vrot.lane.b32.xlu0 %v4169, 5
      %v4237 = vpop.permute.xlu0 %4236
      %4238 = vrot.lane.b32.xlu0 %v4170, 5
      %v4239 = vpop.permute.xlu0 %4238
      %4240 = vrot.lane.b32.xlu0 %v4171, 5
      %v4241 = vpop.permute.xlu0 %4240
      %4242 = vrot.lane.b32.xlu0 %v4172, 5
      %v4243 = vpop.permute.xlu0 %4242
      %v4248 = vmul.f32 %v2667, %v4237
      %v4249 = vmul.f32 %v2668, %v4239
      %v4250 = vmul.f32 %v2669, %v4241
      %v4251 = vmul.f32 %v2670, %v4243
      %v4252 = vsel %vm2086, %v4248, -inf
      %v4253 = vsel %vm2086, %v4249, -inf
      %v4254 = vsel %vm2086, %v4250, -inf
      %v4255 = vsel %vm2086, %v4251, -inf
      %v4256 = vmax.f32 %v4252, %v4253
      %v4257 = vmax.f32 %v4254, %v4255
      %v4258 = vmax.f32 %v4256, %v4257
      %v4259 = vrot.slane %v4258, 4
      %v4260 = vmax.f32 %v4258, %v4259
      %v4261 = vrot.slane %v4260, 2
      %v4262 = vmax.f32 %v4260, %v4261
      %v4263 = vrot.slane %v4262, 1
      %v4264 = vmax.f32 %v4262, %v4263
      %v4265 = vsub.f32 %v4248, %v4264
      %v4266 = vsub.f32 %v4249, %v4264
      %v4267 = vsub.f32 %v4250, %v4264
      %v4268 = vsub.f32 %v4251, %v4264
      %v4269 = vmul.f32 %v4265, 1.442695
      %v4270 = vpow.pop %v4269
      %v4271 = vmul.f32 %v4266, 1.442695
      %v4272 = vpow.pop %v4271
      %v4273 = vmul.f32 %v4267, 1.442695
      %v4274 = vpow.pop %v4273
      %v4275 = vmul.f32 %v4268, 1.442695
      %v4276 = vpow.pop %v4275
      %v4277 = vsel %vm2086, %v4270, 0.0
      %v4278 = vsel %vm2086, %v4272, 0.0
      %v4279 = vadd.f32 %v4277, %v4278
      %v4280 = vsel %vm2086, %v4274, 0.0
      %v4281 = vadd.f32 %v4279, %v4280
      %v4282 = vsel %vm2086, %v4276, 0.0
      %v4283 = vadd.f32 %v4281, %v4282
      %v4284 = vrot.slane %v4283, 4
      %v4285 = vadd.f32 %v4283, %v4284
      %v4286 = vrot.slane %v4285, 2
      %v4287 = vadd.f32 %v4285, %v4286
      %v4288 = vrot.slane %v4287, 1
      %v4289 = vadd.f32 %v4287, %v4288
      %v4290 = vrcp.pop %v4289
      %v4291 = vmul.f32 %v4270, %v4290
      %v4292 = vmul.f32 %v4272, %v4290
      %v4293 = vmul.f32 %v4274, %v4290
      %v4294 = vmul.f32 %v4276, %v4290
      %4299 = vrot.lane.b32.xlu0 %v4199, 5
      %v4300 = vpop.permute.xlu0 %4299
      %4301 = vrot.lane.b32.xlu0 %v4200, 5
      %v4302 = vpop.permute.xlu0 %4301
      %4303 = vrot.lane.b32.xlu0 %v4201, 5
      %v4304 = vpop.permute.xlu0 %4303
      %4305 = vrot.lane.b32.xlu0 %v4202, 5
      %v4306 = vpop.permute.xlu0 %4305
      %v4311 = vmul.f32 %v2667, %v4300
      %v4312 = vmul.f32 %v2668, %v4302
      %v4313 = vmul.f32 %v2669, %v4304
      %v4314 = vmul.f32 %v2670, %v4306
      %v4315 = vsel %vm2086, %v4311, -inf
      %v4316 = vsel %vm2086, %v4312, -inf
      %v4317 = vsel %vm2086, %v4313, -inf
      %v4318 = vsel %vm2086, %v4314, -inf
      %v4319 = vmax.f32 %v4315, %v4316
      %v4320 = vmax.f32 %v4317, %v4318
      %v4321 = vmax.f32 %v4319, %v4320
      %v4322 = vrot.slane %v4321, 4
      %v4323 = vmax.f32 %v4321, %v4322
      %v4324 = vrot.slane %v4323, 2
      %v4325 = vmax.f32 %v4323, %v4324
      %v4326 = vrot.slane %v4325, 1
      %v4327 = vmax.f32 %v4325, %v4326
      %v4328 = vsub.f32 %v4311, %v4327
      %v4329 = vsub.f32 %v4312, %v4327
      %v4330 = vsub.f32 %v4313, %v4327
      %v4331 = vsub.f32 %v4314, %v4327
      %v4332 = vmul.f32 %v4328, 1.442695
      %v4333 = vpow.pop %v4332
      %v4334 = vmul.f32 %v4329, 1.442695
      %v4335 = vpow.pop %v4334
      %v4336 = vmul.f32 %v4330, 1.442695
      %v4337 = vpow.pop %v4336
      %v4338 = vmul.f32 %v4331, 1.442695
      %v4339 = vpow.pop %v4338
      %v4340 = vsel %vm2086, %v4333, 0.0
      %v4341 = vsel %vm2086, %v4335, 0.0
      %v4342 = vadd.f32 %v4340, %v4341
      %v4343 = vsel %vm2086, %v4337, 0.0
      %v4344 = vadd.f32 %v4342, %v4343
      %v4345 = vsel %vm2086, %v4339, 0.0
      %v4346 = vadd.f32 %v4344, %v4345
      %v4347 = vrot.slane %v4346, 4
      %v4348 = vadd.f32 %v4346, %v4347
      %v4349 = vrot.slane %v4348, 2
      %v4350 = vadd.f32 %v4348, %v4349
      %v4351 = vrot.slane %v4350, 1
      %v4352 = vadd.f32 %v4350, %v4351
      %v4353 = vrcp.pop %v4352
      %v4354 = vmul.f32 %v4333, %v4353
      %v4355 = vmul.f32 %v4335, %v4353
      %v4356 = vmul.f32 %v4337, %v4353
      %v4357 = vmul.f32 %v4339, %v4353
      %v4358 = vsub.f32 %v4291, %v4354
      %v4359 = vsub.f32 %v4292, %v4355
      %v4360 = vsub.f32 %v4293, %v4356
      %v4361 = vsub.f32 %v4294, %v4357
      %4363 = vset.pattern.permute.xlu0 5
      %4364 = vperm.xlu0 %4363, %v4358
      %v4365 = vpop.permute.xlu0 %4364
      %4368 = vset.pattern.permute.xlu0 5
      %4369 = vperm.xlu0 %4368, %v4359
      %v4370 = vpop.permute.xlu0 %4369
      %4373 = vset.pattern.permute.xlu0 5
      %4374 = vperm.xlu0 %4373, %v4360
      %v4375 = vpop.permute.xlu0 %4374
      %4378 = vset.pattern.permute.xlu0 5
      %4379 = vperm.xlu0 %4378, %v4361
      %v4380 = vpop.permute.xlu0 %4379
      %v4382 = vmul.f32 %v4365, %v4138
      %v4383 = vmul.f32 %v4370, %v4139
      %v4384 = vmul.f32 %v4375, %v4140
      %v4385 = vmul.f32 %v4380, %v4141
      %v4386 = vadd.f32 %v4382, %v4383
      %v4387 = vadd.f32 %v4386, %v4384
      %v4388 = vadd.f32 %v4387, %v4385
      %v4389 = vrot.slane %v4388, 4
      %v4390 = vadd.f32 %v4388, %v4389
      %v4391 = vrot.slane %v4390, 2
      %v4392 = vadd.f32 %v4390, %v4391
      %v4393 = vrot.slane %v4392, 1
      %v4394 = vadd.f32 %v4392, %v4393
      %4396 = vset.pattern.permute.xlu0 98
      %4397 = vperm.xlu0 %4396, %v4231
      %v4398 = vpop.permute.xlu0 %4397
      %4400 = vset.pattern.permute.xlu0 99
      %4401 = vperm.xlu0 %4400, %v4231
      %v4402 = vpop.permute.xlu0 %4401
      %v4404 = vsel %vm383, %v4398, %v4402
      %4405 = vset.pattern.permute.xlu0 97
      %4406 = vperm.xlu0 %4405, %v4231
      %v4407 = vpop.permute.xlu0 %4406
      %v4409 = vsel %vm382, %v4407, %v4404
      %4410 = vset.pattern.permute.xlu0 96
      %4411 = vperm.xlu0 %4410, %v4231
      %v4412 = vpop.permute.xlu0 %4411
      %v4414 = vsel %vm381, %v4412, %v4409
      %v4415 = vxor.u32 %v4414, 2147483648
      %v4416 = vmul.f32 %v4415, 1.442695
      %v4417 = vpow.pop %v4416
      %v4418 = vadd.f32 %v4417, 1.0
      %v4419 = vrcp.pop %v4418
      %v4420 = vmul.f32 1.0, %v4419
      %v4421 = vmul.f32 %v4420, %v4394
      %4423 = vset.pattern.permute.xlu0 5
      %4424 = vperm.xlu0 %4423, %v4354
      %v4425 = vpop.permute.xlu0 %4424
      %4428 = vset.pattern.permute.xlu0 5
      %4429 = vperm.xlu0 %4428, %v4355
      %v4430 = vpop.permute.xlu0 %4429
      %4433 = vset.pattern.permute.xlu0 5
      %4434 = vperm.xlu0 %4433, %v4356
      %v4435 = vpop.permute.xlu0 %4434
      %4438 = vset.pattern.permute.xlu0 5
      %4439 = vperm.xlu0 %4438, %v4357
      %v4440 = vpop.permute.xlu0 %4439
      %v4442 = vmul.f32 %v4425, %v4421
      %v4443 = vmul.f32 %v4430, %v4421
      %v4444 = vmul.f32 %v4435, %v4421
      %v4445 = vmul.f32 %v4440, %v4421
      %v4446 = vadd.f32 %v4138, %v4442
      %v4447 = vadd.f32 %v4139, %v4443
      %v4448 = vadd.f32 %v4140, %v4444
      %v4449 = vadd.f32 %v4141, %v4445
      %4451 = vrot.lane.b32.xlu0 %v4421, 96
      %v4452 = vpop.permute.xlu0 %4451
      %v4454 = vsel %vm515, %v4452, 0.0
      %4455 = vadd.xlane.f32.xlu0 %v4454
      %v4456 = vpop.xlane.xlu0 %4455
      %v4457 = vmul.f32 %v4354, %v4456
      %v4458 = vmul.f32 %v4355, %v4456
      %v4459 = vmul.f32 %v4356, %v4456
      %v4460 = vmul.f32 %v4357, %v4456
      %4465 = vrot.lane.b32.xlu0 %v4457, 123
      %v4466 = vpop.permute.xlu0 %4465
      %4467 = vrot.lane.b32.xlu0 %v4458, 123
      %v4468 = vpop.permute.xlu0 %4467
      %4469 = vrot.lane.b32.xlu0 %v4459, 123
      %v4470 = vpop.permute.xlu0 %4469
      %4471 = vrot.lane.b32.xlu0 %v4460, 123
      %v4472 = vpop.permute.xlu0 %4471
      %v4477 = vadd.f32 %v4169, %v4466
      %v4478 = vadd.f32 %v4170, %v4468
      %v4479 = vadd.f32 %v4171, %v4470
      %v4480 = vadd.f32 %v4172, %v4472
      %4481 = vrot.lane.b32.xlu0 %v4421, 64
      %v4482 = vpop.permute.xlu0 %4481
      %v4484 = vsel %vm515, %v4482, 0.0
      %4485 = vadd.xlane.f32.xlu0 %v4484
      %v4486 = vpop.xlane.xlu0 %4485
      %v4487 = vmul.f32 %v4354, %v4486
      %v4488 = vmul.f32 %v4355, %v4486
      %v4489 = vmul.f32 %v4356, %v4486
      %v4490 = vmul.f32 %v4357, %v4486
      %4495 = vrot.lane.b32.xlu0 %v4487, 123
      %v4496 = vpop.permute.xlu0 %4495
      %4497 = vrot.lane.b32.xlu0 %v4488, 123
      %v4498 = vpop.permute.xlu0 %4497
      %4499 = vrot.lane.b32.xlu0 %v4489, 123
      %v4500 = vpop.permute.xlu0 %4499
      %4501 = vrot.lane.b32.xlu0 %v4490, 123
      %v4502 = vpop.permute.xlu0 %4501
      %v4507 = vadd.f32 %v4199, %v4496
      %v4508 = vadd.f32 %v4200, %v4498
      %v4509 = vadd.f32 %v4201, %v4500
      %v4510 = vadd.f32 %v4202, %v4502
      %4511 = vset.pattern.permute.xlu0 6
      %4512 = vperm.xlu0 %4511, %v2667
      %v4513 = vpop.permute.xlu0 %4512
      %4515 = vset.pattern.permute.xlu0 6
      %4516 = vperm.xlu0 %4515, %v2668
      %v4517 = vpop.permute.xlu0 %4516
      %4519 = vset.pattern.permute.xlu0 6
      %4520 = vperm.xlu0 %4519, %v2669
      %v4521 = vpop.permute.xlu0 %4520
      %4523 = vset.pattern.permute.xlu0 6
      %4524 = vperm.xlu0 %4523, %v2670
      %v4525 = vpop.permute.xlu0 %4524
      %v4527 = vmul.f32 %v4513, %v4446
      %v4528 = vmul.f32 %v4517, %v4447
      %v4529 = vmul.f32 %v4521, %v4448
      %v4530 = vmul.f32 %v4525, %v4449
      %v4531 = vadd.f32 %v4527, %v4528
      %v4532 = vadd.f32 %v4531, %v4529
      %v4533 = vadd.f32 %v4532, %v4530
      %v4534 = vrot.slane %v4533, 4
      %v4535 = vadd.f32 %v4533, %v4534
      %v4536 = vrot.slane %v4535, 2
      %v4537 = vadd.f32 %v4535, %v4536
      %v4538 = vrot.slane %v4537, 1
      %v4539 = vadd.f32 %v4537, %v4538
      %4544 = vrot.lane.b32.xlu0 %v4477, 6
      %v4545 = vpop.permute.xlu0 %4544
      %4546 = vrot.lane.b32.xlu0 %v4478, 6
      %v4547 = vpop.permute.xlu0 %4546
      %4548 = vrot.lane.b32.xlu0 %v4479, 6
      %v4549 = vpop.permute.xlu0 %4548
      %4550 = vrot.lane.b32.xlu0 %v4480, 6
      %v4551 = vpop.permute.xlu0 %4550
      %v4556 = vmul.f32 %v2667, %v4545
      %v4557 = vmul.f32 %v2668, %v4547
      %v4558 = vmul.f32 %v2669, %v4549
      %v4559 = vmul.f32 %v2670, %v4551
      %v4560 = vsel %vm2395, %v4556, -inf
      %v4561 = vsel %vm2395, %v4557, -inf
      %v4562 = vsel %vm2395, %v4558, -inf
      %v4563 = vsel %vm2395, %v4559, -inf
      %v4564 = vmax.f32 %v4560, %v4561
      %v4565 = vmax.f32 %v4562, %v4563
      %v4566 = vmax.f32 %v4564, %v4565
      %v4567 = vrot.slane %v4566, 4
      %v4568 = vmax.f32 %v4566, %v4567
      %v4569 = vrot.slane %v4568, 2
      %v4570 = vmax.f32 %v4568, %v4569
      %v4571 = vrot.slane %v4570, 1
      %v4572 = vmax.f32 %v4570, %v4571
      %v4573 = vsub.f32 %v4556, %v4572
      %v4574 = vsub.f32 %v4557, %v4572
      %v4575 = vsub.f32 %v4558, %v4572
      %v4576 = vsub.f32 %v4559, %v4572
      %v4577 = vmul.f32 %v4573, 1.442695
      %v4578 = vpow.pop %v4577
      %v4579 = vmul.f32 %v4574, 1.442695
      %v4580 = vpow.pop %v4579
      %v4581 = vmul.f32 %v4575, 1.442695
      %v4582 = vpow.pop %v4581
      %v4583 = vmul.f32 %v4576, 1.442695
      %v4584 = vpow.pop %v4583
      %v4585 = vsel %vm2395, %v4578, 0.0
      %v4586 = vsel %vm2395, %v4580, 0.0
      %v4587 = vadd.f32 %v4585, %v4586
      %v4588 = vsel %vm2395, %v4582, 0.0
      %v4589 = vadd.f32 %v4587, %v4588
      %v4590 = vsel %vm2395, %v4584, 0.0
      %v4591 = vadd.f32 %v4589, %v4590
      %v4592 = vrot.slane %v4591, 4
      %v4593 = vadd.f32 %v4591, %v4592
      %v4594 = vrot.slane %v4593, 2
      %v4595 = vadd.f32 %v4593, %v4594
      %v4596 = vrot.slane %v4595, 1
      %v4597 = vadd.f32 %v4595, %v4596
      %v4598 = vrcp.pop %v4597
      %v4599 = vmul.f32 %v4578, %v4598
      %v4600 = vmul.f32 %v4580, %v4598
      %v4601 = vmul.f32 %v4582, %v4598
      %v4602 = vmul.f32 %v4584, %v4598
      %4607 = vrot.lane.b32.xlu0 %v4507, 6
      %v4608 = vpop.permute.xlu0 %4607
      %4609 = vrot.lane.b32.xlu0 %v4508, 6
      %v4610 = vpop.permute.xlu0 %4609
      %4611 = vrot.lane.b32.xlu0 %v4509, 6
      %v4612 = vpop.permute.xlu0 %4611
      %4613 = vrot.lane.b32.xlu0 %v4510, 6
      %v4614 = vpop.permute.xlu0 %4613
      %v4619 = vmul.f32 %v2667, %v4608
      %v4620 = vmul.f32 %v2668, %v4610
      %v4621 = vmul.f32 %v2669, %v4612
      %v4622 = vmul.f32 %v2670, %v4614
      %v4623 = vsel %vm2395, %v4619, -inf
      %v4624 = vsel %vm2395, %v4620, -inf
      %v4625 = vsel %vm2395, %v4621, -inf
      %v4626 = vsel %vm2395, %v4622, -inf
      %v4627 = vmax.f32 %v4623, %v4624
      %v4628 = vmax.f32 %v4625, %v4626
      %v4629 = vmax.f32 %v4627, %v4628
      %v4630 = vrot.slane %v4629, 4
      %v4631 = vmax.f32 %v4629, %v4630
      %v4632 = vrot.slane %v4631, 2
      %v4633 = vmax.f32 %v4631, %v4632
      %v4634 = vrot.slane %v4633, 1
      %v4635 = vmax.f32 %v4633, %v4634
      %v4636 = vsub.f32 %v4619, %v4635
      %v4637 = vsub.f32 %v4620, %v4635
      %v4638 = vsub.f32 %v4621, %v4635
      %v4639 = vsub.f32 %v4622, %v4635
      %v4640 = vmul.f32 %v4636, 1.442695
      %v4641 = vpow.pop %v4640
      %v4642 = vmul.f32 %v4637, 1.442695
      %v4643 = vpow.pop %v4642
      %v4644 = vmul.f32 %v4638, 1.442695
      %v4645 = vpow.pop %v4644
      %v4646 = vmul.f32 %v4639, 1.442695
      %v4647 = vpow.pop %v4646
      %v4648 = vsel %vm2395, %v4641, 0.0
      %v4649 = vsel %vm2395, %v4643, 0.0
      %v4650 = vadd.f32 %v4648, %v4649
      %v4651 = vsel %vm2395, %v4645, 0.0
      %v4652 = vadd.f32 %v4650, %v4651
      %v4653 = vsel %vm2395, %v4647, 0.0
      %v4654 = vadd.f32 %v4652, %v4653
      %v4655 = vrot.slane %v4654, 4
      %v4656 = vadd.f32 %v4654, %v4655
      %v4657 = vrot.slane %v4656, 2
      %v4658 = vadd.f32 %v4656, %v4657
      %v4659 = vrot.slane %v4658, 1
      %v4660 = vadd.f32 %v4658, %v4659
      %v4661 = vrcp.pop %v4660
      %v4662 = vmul.f32 %v4641, %v4661
      %v4663 = vmul.f32 %v4643, %v4661
      %v4664 = vmul.f32 %v4645, %v4661
      %v4665 = vmul.f32 %v4647, %v4661
      %v4666 = vsub.f32 %v4599, %v4662
      %v4667 = vsub.f32 %v4600, %v4663
      %v4668 = vsub.f32 %v4601, %v4664
      %v4669 = vsub.f32 %v4602, %v4665
      %4671 = vset.pattern.permute.xlu0 6
      %4672 = vperm.xlu0 %4671, %v4666
      %v4673 = vpop.permute.xlu0 %4672
      %4676 = vset.pattern.permute.xlu0 6
      %4677 = vperm.xlu0 %4676, %v4667
      %v4678 = vpop.permute.xlu0 %4677
      %4681 = vset.pattern.permute.xlu0 6
      %4682 = vperm.xlu0 %4681, %v4668
      %v4683 = vpop.permute.xlu0 %4682
      %4686 = vset.pattern.permute.xlu0 6
      %4687 = vperm.xlu0 %4686, %v4669
      %v4688 = vpop.permute.xlu0 %4687
      %v4690 = vmul.f32 %v4673, %v4446
      %v4691 = vmul.f32 %v4678, %v4447
      %v4692 = vmul.f32 %v4683, %v4448
      %v4693 = vmul.f32 %v4688, %v4449
      %v4694 = vadd.f32 %v4690, %v4691
      %v4695 = vadd.f32 %v4694, %v4692
      %v4696 = vadd.f32 %v4695, %v4693
      %v4697 = vrot.slane %v4696, 4
      %v4698 = vadd.f32 %v4696, %v4697
      %v4699 = vrot.slane %v4698, 2
      %v4700 = vadd.f32 %v4698, %v4699
      %v4701 = vrot.slane %v4700, 1
      %v4702 = vadd.f32 %v4700, %v4701
      %4704 = vset.pattern.permute.xlu0 98
      %4705 = vperm.xlu0 %4704, %v4539
      %v4706 = vpop.permute.xlu0 %4705
      %4708 = vset.pattern.permute.xlu0 99
      %4709 = vperm.xlu0 %4708, %v4539
      %v4710 = vpop.permute.xlu0 %4709
      %v4712 = vsel %vm383, %v4706, %v4710
      %4713 = vset.pattern.permute.xlu0 97
      %4714 = vperm.xlu0 %4713, %v4539
      %v4715 = vpop.permute.xlu0 %4714
      %v4717 = vsel %vm382, %v4715, %v4712
      %4718 = vset.pattern.permute.xlu0 96
      %4719 = vperm.xlu0 %4718, %v4539
      %v4720 = vpop.permute.xlu0 %4719
      %v4722 = vsel %vm381, %v4720, %v4717
      %v4723 = vxor.u32 %v4722, 2147483648
      %v4724 = vmul.f32 %v4723, 1.442695
      %v4725 = vpow.pop %v4724
      %v4726 = vadd.f32 %v4725, 1.0
      %v4727 = vrcp.pop %v4726
      %v4728 = vmul.f32 1.0, %v4727
      %v4729 = vmul.f32 %v4728, %v4702
      %4731 = vset.pattern.permute.xlu0 6
      %4732 = vperm.xlu0 %4731, %v4662
      %v4733 = vpop.permute.xlu0 %4732
      %4736 = vset.pattern.permute.xlu0 6
      %4737 = vperm.xlu0 %4736, %v4663
      %v4738 = vpop.permute.xlu0 %4737
      %4741 = vset.pattern.permute.xlu0 6
      %4742 = vperm.xlu0 %4741, %v4664
      %v4743 = vpop.permute.xlu0 %4742
      %4746 = vset.pattern.permute.xlu0 6
      %4747 = vperm.xlu0 %4746, %v4665
      %v4748 = vpop.permute.xlu0 %4747
      %v4750 = vmul.f32 %v4733, %v4729
      %v4751 = vmul.f32 %v4738, %v4729
      %v4752 = vmul.f32 %v4743, %v4729
      %v4753 = vmul.f32 %v4748, %v4729
      %v4754 = vadd.f32 %v4446, %v4750
      %v4755 = vadd.f32 %v4447, %v4751
      %v4756 = vadd.f32 %v4448, %v4752
      %v4757 = vadd.f32 %v4449, %v4753
      %4758 = vset.pattern.permute.xlu0 7
      %4759 = vperm.xlu0 %4758, %v2667
      %v4760 = vpop.permute.xlu0 %4759
      %4762 = vset.pattern.permute.xlu0 7
      %4763 = vperm.xlu0 %4762, %v2668
      %v4764 = vpop.permute.xlu0 %4763
      %4766 = vset.pattern.permute.xlu0 7
      %4767 = vperm.xlu0 %4766, %v2669
      %v4768 = vpop.permute.xlu0 %4767
      %4770 = vset.pattern.permute.xlu0 7
      %4771 = vperm.xlu0 %4770, %v2670
      %v4772 = vpop.permute.xlu0 %4771
      %v4774 = vmul.f32 %v4760, %v4754
      %v4775 = vmul.f32 %v4764, %v4755
      %v4776 = vmul.f32 %v4768, %v4756
      %v4777 = vmul.f32 %v4772, %v4757
      %v4778 = vadd.f32 %v4774, %v4775
      %v4779 = vadd.f32 %v4778, %v4776
      %v4780 = vadd.f32 %v4779, %v4777
      %v4781 = vrot.slane %v4780, 4
      %v4782 = vadd.f32 %v4780, %v4781
      %v4783 = vrot.slane %v4782, 2
      %v4784 = vadd.f32 %v4782, %v4783
      %v4785 = vrot.slane %v4784, 1
      %v4786 = vadd.f32 %v4784, %v4785
      %4788 = vset.pattern.permute.xlu0 0
      %4789 = vperm.xlu0 %4788, %v394
      %v4790 = vpop.permute.xlu0 %4789
      %4793 = vset.pattern.permute.xlu0 0
      %4794 = vperm.xlu0 %4793, %v395
      %v4795 = vpop.permute.xlu0 %4794
      %4798 = vset.pattern.permute.xlu0 0
      %4799 = vperm.xlu0 %4798, %v396
      %v4800 = vpop.permute.xlu0 %4799
      %4803 = vset.pattern.permute.xlu0 0
      %4804 = vperm.xlu0 %4803, %v397
      %v4805 = vpop.permute.xlu0 %4804
      %v4807 = vmul.f32 %v4790, %v469
      %v4808 = vmul.f32 %v4795, %v469
      %v4809 = vmul.f32 %v4800, %v469
      %v4810 = vmul.f32 %v4805, %v469
      %4812 = vset.pattern.permute.xlu0 0
      %4813 = vperm.xlu0 %4812, %v410
      %v4814 = vpop.permute.xlu0 %4813
      %4817 = vset.pattern.permute.xlu0 0
      %4818 = vperm.xlu0 %4817, %v411
      %v4819 = vpop.permute.xlu0 %4818
      %4822 = vset.pattern.permute.xlu0 0
      %4823 = vperm.xlu0 %4822, %v412
      %v4824 = vpop.permute.xlu0 %4823
      %4827 = vset.pattern.permute.xlu0 0
      %4828 = vperm.xlu0 %4827, %v413
      %v4829 = vpop.permute.xlu0 %4828
      %v4831 = vadd.f32 %v4807, %v4814
      %v4832 = vadd.f32 %v4808, %v4819
      %v4833 = vadd.f32 %v4809, %v4824
      %v4834 = vadd.f32 %v4810, %v4829
      %4839 = vrot.lane.b32.xlu0 %v426, 96
      %v4840 = vpop.permute.xlu0 %4839
      %4841 = vrot.lane.b32.xlu0 %v427, 96
      %v4842 = vpop.permute.xlu0 %4841
      %4843 = vrot.lane.b32.xlu0 %v428, 96
      %v4844 = vpop.permute.xlu0 %4843
      %4845 = vrot.lane.b32.xlu0 %v429, 96
      %v4846 = vpop.permute.xlu0 %4845
      %v4851 = vsel %vm515, %v4840, 0.0
      %4852 = vadd.xlane.f32.xlu0 %v4851
      %v4853 = vpop.xlane.xlu0 %4852
      %v4854 = vsel %vm515, %v4842, 0.0
      %4855 = vadd.xlane.f32.xlu0 %v4854
      %v4856 = vpop.xlane.xlu0 %4855
      %v4857 = vsel %vm515, %v4844, 0.0
      %4858 = vadd.xlane.f32.xlu0 %v4857
      %v4859 = vpop.xlane.xlu0 %4858
      %v4860 = vsel %vm515, %v4846, 0.0
      %4861 = vadd.xlane.f32.xlu0 %v4860
      %v4862 = vpop.xlane.xlu0 %4861
      %4863 = vrot.lane.b32.xlu0 %v426, 64
      %v4864 = vpop.permute.xlu0 %4863
      %4865 = vrot.lane.b32.xlu0 %v427, 64
      %v4866 = vpop.permute.xlu0 %4865
      %4867 = vrot.lane.b32.xlu0 %v428, 64
      %v4868 = vpop.permute.xlu0 %4867
      %4869 = vrot.lane.b32.xlu0 %v429, 64
      %v4870 = vpop.permute.xlu0 %4869
      %v4875 = vsel %vm515, %v4864, 0.0
      %4876 = vadd.xlane.f32.xlu0 %v4875
      %v4877 = vpop.xlane.xlu0 %4876
      %v4878 = vsel %vm515, %v4866, 0.0
      %4879 = vadd.xlane.f32.xlu0 %v4878
      %v4880 = vpop.xlane.xlu0 %4879
      %v4881 = vsel %vm515, %v4868, 0.0
      %4882 = vadd.xlane.f32.xlu0 %v4881
      %v4883 = vpop.xlane.xlu0 %4882
      %v4884 = vsel %vm515, %v4870, 0.0
      %4885 = vadd.xlane.f32.xlu0 %v4884
      %v4886 = vpop.xlane.xlu0 %4885
      %4888 = vset.pattern.permute.xlu0 0
      %4889 = vperm.xlu0 %4888, %v4831
      %v4890 = vpop.permute.xlu0 %4889
      %4893 = vset.pattern.permute.xlu0 0
      %4894 = vperm.xlu0 %4893, %v4832
      %v4895 = vpop.permute.xlu0 %4894
      %4898 = vset.pattern.permute.xlu0 0
      %4899 = vperm.xlu0 %4898, %v4833
      %v4900 = vpop.permute.xlu0 %4899
      %4903 = vset.pattern.permute.xlu0 0
      %4904 = vperm.xlu0 %4903, %v4834
      %v4905 = vpop.permute.xlu0 %4904
      %v4907 = vmul.f32 %v4890, %v426
      %v4908 = vmul.f32 %v4895, %v427
      %v4909 = vmul.f32 %v4900, %v428
      %v4910 = vmul.f32 %v4905, %v429
      %v4911 = vadd.f32 %v4907, %v4908
      %v4912 = vadd.f32 %v4911, %v4909
      %v4913 = vadd.f32 %v4912, %v4910
      %v4914 = vrot.slane %v4913, 4
      %v4915 = vadd.f32 %v4913, %v4914
      %v4916 = vrot.slane %v4915, 2
      %v4917 = vadd.f32 %v4915, %v4916
      %v4918 = vrot.slane %v4917, 1
      %v4919 = vadd.f32 %v4917, %v4918
      %v4920 = vmul.f32 %v4831, %v4853
      %v4921 = vmul.f32 %v4832, %v4856
      %v4922 = vmul.f32 %v4833, %v4859
      %v4923 = vmul.f32 %v4834, %v4862
      %v4924 = vsel %vm589, %v4920, -inf
      %v4925 = vsel %vm589, %v4921, -inf
      %v4926 = vsel %vm589, %v4922, -inf
      %v4927 = vsel %vm589, %v4923, -inf
      %v4928 = vmax.f32 %v4924, %v4925
      %v4929 = vmax.f32 %v4926, %v4927
      %v4930 = vmax.f32 %v4928, %v4929
      %v4931 = vrot.slane %v4930, 4
      %v4932 = vmax.f32 %v4930, %v4931
      %v4933 = vrot.slane %v4932, 2
      %v4934 = vmax.f32 %v4932, %v4933
      %v4935 = vrot.slane %v4934, 1
      %v4936 = vmax.f32 %v4934, %v4935
      %v4937 = vsub.f32 %v4920, %v4936
      %v4938 = vsub.f32 %v4921, %v4936
      %v4939 = vsub.f32 %v4922, %v4936
      %v4940 = vsub.f32 %v4923, %v4936
      %v4941 = vmul.f32 %v4937, 1.442695
      %v4942 = vpow.pop %v4941
      %v4943 = vmul.f32 %v4938, 1.442695
      %v4944 = vpow.pop %v4943
      %v4945 = vmul.f32 %v4939, 1.442695
      %v4946 = vpow.pop %v4945
      %v4947 = vmul.f32 %v4940, 1.442695
      %v4948 = vpow.pop %v4947
      %v4949 = vsel %vm589, %v4942, 0.0
      %v4950 = vsel %vm589, %v4944, 0.0
      %v4951 = vadd.f32 %v4949, %v4950
      %v4952 = vsel %vm589, %v4946, 0.0
      %v4953 = vadd.f32 %v4951, %v4952
      %v4954 = vsel %vm589, %v4948, 0.0
      %v4955 = vadd.f32 %v4953, %v4954
      %v4956 = vrot.slane %v4955, 4
      %v4957 = vadd.f32 %v4955, %v4956
      %v4958 = vrot.slane %v4957, 2
      %v4959 = vadd.f32 %v4957, %v4958
      %v4960 = vrot.slane %v4959, 1
      %v4961 = vadd.f32 %v4959, %v4960
      %v4962 = vrcp.pop %v4961
      %v4963 = vmul.f32 %v4942, %v4962
      %v4964 = vmul.f32 %v4944, %v4962
      %v4965 = vmul.f32 %v4946, %v4962
      %v4966 = vmul.f32 %v4948, %v4962
      %v4967 = vmul.f32 %v4831, %v4877
      %v4968 = vmul.f32 %v4832, %v4880
      %v4969 = vmul.f32 %v4833, %v4883
      %v4970 = vmul.f32 %v4834, %v4886
      %v4971 = vsel %vm589, %v4967, -inf
      %v4972 = vsel %vm589, %v4968, -inf
      %v4973 = vsel %vm589, %v4969, -inf
      %v4974 = vsel %vm589, %v4970, -inf
      %v4975 = vmax.f32 %v4971, %v4972
      %v4976 = vmax.f32 %v4973, %v4974
      %v4977 = vmax.f32 %v4975, %v4976
      %v4978 = vrot.slane %v4977, 4
      %v4979 = vmax.f32 %v4977, %v4978
      %v4980 = vrot.slane %v4979, 2
      %v4981 = vmax.f32 %v4979, %v4980
      %v4982 = vrot.slane %v4981, 1
      %v4983 = vmax.f32 %v4981, %v4982
      %v4984 = vsub.f32 %v4967, %v4983
      %v4985 = vsub.f32 %v4968, %v4983
      %v4986 = vsub.f32 %v4969, %v4983
      %v4987 = vsub.f32 %v4970, %v4983
      %v4988 = vmul.f32 %v4984, 1.442695
      %v4989 = vpow.pop %v4988
      %v4990 = vmul.f32 %v4985, 1.442695
      %v4991 = vpow.pop %v4990
      %v4992 = vmul.f32 %v4986, 1.442695
      %v4993 = vpow.pop %v4992
      %v4994 = vmul.f32 %v4987, 1.442695
      %v4995 = vpow.pop %v4994
      %v4996 = vsel %vm589, %v4989, 0.0
      %v4997 = vsel %vm589, %v4991, 0.0
      %v4998 = vadd.f32 %v4996, %v4997
      %v4999 = vsel %vm589, %v4993, 0.0
      %v5000 = vadd.f32 %v4998, %v4999
      %v5001 = vsel %vm589, %v4995, 0.0
      %v5002 = vadd.f32 %v5000, %v5001
      %v5003 = vrot.slane %v5002, 4
      %v5004 = vadd.f32 %v5002, %v5003
      %v5005 = vrot.slane %v5004, 2
      %v5006 = vadd.f32 %v5004, %v5005
      %v5007 = vrot.slane %v5006, 1
      %v5008 = vadd.f32 %v5006, %v5007
      %v5009 = vrcp.pop %v5008
      %v5010 = vmul.f32 %v4989, %v5009
      %v5011 = vmul.f32 %v4991, %v5009
      %v5012 = vmul.f32 %v4993, %v5009
      %v5013 = vmul.f32 %v4995, %v5009
      %v5014 = vsub.f32 %v4963, %v5010
      %v5015 = vsub.f32 %v4964, %v5011
      %v5016 = vsub.f32 %v4965, %v5012
      %v5017 = vsub.f32 %v4966, %v5013
      %5019 = vset.pattern.permute.xlu0 0
      %5020 = vperm.xlu0 %5019, %v5014
      %v5021 = vpop.permute.xlu0 %5020
      %5024 = vset.pattern.permute.xlu0 0
      %5025 = vperm.xlu0 %5024, %v5015
      %v5026 = vpop.permute.xlu0 %5025
      %5029 = vset.pattern.permute.xlu0 0
      %5030 = vperm.xlu0 %5029, %v5016
      %v5031 = vpop.permute.xlu0 %5030
      %5034 = vset.pattern.permute.xlu0 0
      %5035 = vperm.xlu0 %5034, %v5017
      %v5036 = vpop.permute.xlu0 %5035
      %v5038 = vmul.f32 %v5021, %v426
      %v5039 = vmul.f32 %v5026, %v427
      %v5040 = vmul.f32 %v5031, %v428
      %v5041 = vmul.f32 %v5036, %v429
      %v5042 = vadd.f32 %v5038, %v5039
      %v5043 = vadd.f32 %v5042, %v5040
      %v5044 = vadd.f32 %v5043, %v5041
      %v5045 = vrot.slane %v5044, 4
      %v5046 = vadd.f32 %v5044, %v5045
      %v5047 = vrot.slane %v5046, 2
      %v5048 = vadd.f32 %v5046, %v5047
      %v5049 = vrot.slane %v5048, 1
      %v5050 = vadd.f32 %v5048, %v5049
      %5052 = vset.pattern.permute.xlu0 98
      %5053 = vperm.xlu0 %5052, %v4919
      %v5054 = vpop.permute.xlu0 %5053
      %5056 = vset.pattern.permute.xlu0 99
      %5057 = vperm.xlu0 %5056, %v4919
      %v5058 = vpop.permute.xlu0 %5057
      %v5060 = vsel %vm383, %v5054, %v5058
      %5061 = vset.pattern.permute.xlu0 97
      %5062 = vperm.xlu0 %5061, %v4919
      %v5063 = vpop.permute.xlu0 %5062
      %v5065 = vsel %vm382, %v5063, %v5060
      %5066 = vset.pattern.permute.xlu0 96
      %5067 = vperm.xlu0 %5066, %v4919
      %v5068 = vpop.permute.xlu0 %5067
      %v5070 = vsel %vm381, %v5068, %v5065
      %v5071 = vxor.u32 %v5070, 2147483648
      %v5072 = vmul.f32 %v5071, 1.442695
      %v5073 = vpow.pop %v5072
      %v5074 = vadd.f32 %v5073, 1.0
      %v5075 = vrcp.pop %v5074
      %v5076 = vmul.f32 1.0, %v5075
      %v5077 = vmul.f32 %v5076, %v5050
      %5079 = vset.pattern.permute.xlu0 0
      %5080 = vperm.xlu0 %5079, %v5010
      %v5081 = vpop.permute.xlu0 %5080
      %5084 = vset.pattern.permute.xlu0 0
      %5085 = vperm.xlu0 %5084, %v5011
      %v5086 = vpop.permute.xlu0 %5085
      %5089 = vset.pattern.permute.xlu0 0
      %5090 = vperm.xlu0 %5089, %v5012
      %v5091 = vpop.permute.xlu0 %5090
      %5094 = vset.pattern.permute.xlu0 0
      %5095 = vperm.xlu0 %5094, %v5013
      %v5096 = vpop.permute.xlu0 %5095
      %v5098 = vmul.f32 %v5081, %v5077
      %v5099 = vmul.f32 %v5086, %v5077
      %v5100 = vmul.f32 %v5091, %v5077
      %v5101 = vmul.f32 %v5096, %v5077
      %v5102 = vadd.f32 %v426, %v5098
      %v5103 = vadd.f32 %v427, %v5099
      %v5104 = vadd.f32 %v428, %v5100
      %v5105 = vadd.f32 %v429, %v5101
      %5107 = vrot.lane.b32.xlu0 %v5077, 96
      %v5108 = vpop.permute.xlu0 %5107
      %v5110 = vsel %vm515, %v5108, 0.0
      %5111 = vadd.xlane.f32.xlu0 %v5110
      %v5112 = vpop.xlane.xlu0 %5111
      %v5113 = vmul.f32 %v5010, %v5112
      %v5114 = vmul.f32 %v5011, %v5112
      %v5115 = vmul.f32 %v5012, %v5112
      %v5116 = vmul.f32 %v5013, %v5112
      %v5117 = vadd.f32 %v4853, %v5113
      %v5118 = vadd.f32 %v4856, %v5114
      %v5119 = vadd.f32 %v4859, %v5115
      %v5120 = vadd.f32 %v4862, %v5116
      %5121 = vrot.lane.b32.xlu0 %v5077, 64
      %v5122 = vpop.permute.xlu0 %5121
      %v5124 = vsel %vm515, %v5122, 0.0
      %5125 = vadd.xlane.f32.xlu0 %v5124
      %v5126 = vpop.xlane.xlu0 %5125
      %v5127 = vmul.f32 %v5010, %v5126
      %v5128 = vmul.f32 %v5011, %v5126
      %v5129 = vmul.f32 %v5012, %v5126
      %v5130 = vmul.f32 %v5013, %v5126
      %v5131 = vadd.f32 %v4877, %v5127
      %v5132 = vadd.f32 %v4880, %v5128
      %v5133 = vadd.f32 %v4883, %v5129
      %v5134 = vadd.f32 %v4886, %v5130
      %5135 = vset.pattern.permute.xlu0 1
      %5136 = vperm.xlu0 %5135, %v4831
      %v5137 = vpop.permute.xlu0 %5136
      %5139 = vset.pattern.permute.xlu0 1
      %5140 = vperm.xlu0 %5139, %v4832
      %v5141 = vpop.permute.xlu0 %5140
      %5143 = vset.pattern.permute.xlu0 1
      %5144 = vperm.xlu0 %5143, %v4833
      %v5145 = vpop.permute.xlu0 %5144
      %5147 = vset.pattern.permute.xlu0 1
      %5148 = vperm.xlu0 %5147, %v4834
      %v5149 = vpop.permute.xlu0 %5148
      %v5151 = vmul.f32 %v5137, %v5102
      %v5152 = vmul.f32 %v5141, %v5103
      %v5153 = vmul.f32 %v5145, %v5104
      %v5154 = vmul.f32 %v5149, %v5105
      %v5155 = vadd.f32 %v5151, %v5152
      %v5156 = vadd.f32 %v5155, %v5153
      %v5157 = vadd.f32 %v5156, %v5154
      %v5158 = vrot.slane %v5157, 4
      %v5159 = vadd.f32 %v5157, %v5158
      %v5160 = vrot.slane %v5159, 2
      %v5161 = vadd.f32 %v5159, %v5160
      %v5162 = vrot.slane %v5161, 1
      %v5163 = vadd.f32 %v5161, %v5162
      %5168 = vrot.lane.b32.xlu0 %v5117, 1
      %v5169 = vpop.permute.xlu0 %5168
      %5170 = vrot.lane.b32.xlu0 %v5118, 1
      %v5171 = vpop.permute.xlu0 %5170
      %5172 = vrot.lane.b32.xlu0 %v5119, 1
      %v5173 = vpop.permute.xlu0 %5172
      %5174 = vrot.lane.b32.xlu0 %v5120, 1
      %v5175 = vpop.permute.xlu0 %5174
      %v5180 = vmul.f32 %v4831, %v5169
      %v5181 = vmul.f32 %v4832, %v5171
      %v5182 = vmul.f32 %v4833, %v5173
      %v5183 = vmul.f32 %v4834, %v5175
      %v5184 = vsel %vm850, %v5180, -inf
      %v5185 = vsel %vm850, %v5181, -inf
      %v5186 = vsel %vm850, %v5182, -inf
      %v5187 = vsel %vm850, %v5183, -inf
      %v5188 = vmax.f32 %v5184, %v5185
      %v5189 = vmax.f32 %v5186, %v5187
      %v5190 = vmax.f32 %v5188, %v5189
      %v5191 = vrot.slane %v5190, 4
      %v5192 = vmax.f32 %v5190, %v5191
      %v5193 = vrot.slane %v5192, 2
      %v5194 = vmax.f32 %v5192, %v5193
      %v5195 = vrot.slane %v5194, 1
      %v5196 = vmax.f32 %v5194, %v5195
      %v5197 = vsub.f32 %v5180, %v5196
      %v5198 = vsub.f32 %v5181, %v5196
      %v5199 = vsub.f32 %v5182, %v5196
      %v5200 = vsub.f32 %v5183, %v5196
      %v5201 = vmul.f32 %v5197, 1.442695
      %v5202 = vpow.pop %v5201
      %v5203 = vmul.f32 %v5198, 1.442695
      %v5204 = vpow.pop %v5203
      %v5205 = vmul.f32 %v5199, 1.442695
      %v5206 = vpow.pop %v5205
      %v5207 = vmul.f32 %v5200, 1.442695
      %v5208 = vpow.pop %v5207
      %v5209 = vsel %vm850, %v5202, 0.0
      %v5210 = vsel %vm850, %v5204, 0.0
      %v5211 = vadd.f32 %v5209, %v5210
      %v5212 = vsel %vm850, %v5206, 0.0
      %v5213 = vadd.f32 %v5211, %v5212
      %v5214 = vsel %vm850, %v5208, 0.0
      %v5215 = vadd.f32 %v5213, %v5214
      %v5216 = vrot.slane %v5215, 4
      %v5217 = vadd.f32 %v5215, %v5216
      %v5218 = vrot.slane %v5217, 2
      %v5219 = vadd.f32 %v5217, %v5218
      %v5220 = vrot.slane %v5219, 1
      %v5221 = vadd.f32 %v5219, %v5220
      %v5222 = vrcp.pop %v5221
      %v5223 = vmul.f32 %v5202, %v5222
      %v5224 = vmul.f32 %v5204, %v5222
      %v5225 = vmul.f32 %v5206, %v5222
      %v5226 = vmul.f32 %v5208, %v5222
      %5231 = vrot.lane.b32.xlu0 %v5131, 1
      %v5232 = vpop.permute.xlu0 %5231
      %5233 = vrot.lane.b32.xlu0 %v5132, 1
      %v5234 = vpop.permute.xlu0 %5233
      %5235 = vrot.lane.b32.xlu0 %v5133, 1
      %v5236 = vpop.permute.xlu0 %5235
      %5237 = vrot.lane.b32.xlu0 %v5134, 1
      %v5238 = vpop.permute.xlu0 %5237
      %v5243 = vmul.f32 %v4831, %v5232
      %v5244 = vmul.f32 %v4832, %v5234
      %v5245 = vmul.f32 %v4833, %v5236
      %v5246 = vmul.f32 %v4834, %v5238
      %v5247 = vsel %vm850, %v5243, -inf
      %v5248 = vsel %vm850, %v5244, -inf
      %v5249 = vsel %vm850, %v5245, -inf
      %v5250 = vsel %vm850, %v5246, -inf
      %v5251 = vmax.f32 %v5247, %v5248
      %v5252 = vmax.f32 %v5249, %v5250
      %v5253 = vmax.f32 %v5251, %v5252
      %v5254 = vrot.slane %v5253, 4
      %v5255 = vmax.f32 %v5253, %v5254
      %v5256 = vrot.slane %v5255, 2
      %v5257 = vmax.f32 %v5255, %v5256
      %v5258 = vrot.slane %v5257, 1
      %v5259 = vmax.f32 %v5257, %v5258
      %v5260 = vsub.f32 %v5243, %v5259
      %v5261 = vsub.f32 %v5244, %v5259
      %v5262 = vsub.f32 %v5245, %v5259
      %v5263 = vsub.f32 %v5246, %v5259
      %v5264 = vmul.f32 %v5260, 1.442695
      %v5265 = vpow.pop %v5264
      %v5266 = vmul.f32 %v5261, 1.442695
      %v5267 = vpow.pop %v5266
      %v5268 = vmul.f32 %v5262, 1.442695
      %v5269 = vpow.pop %v5268
      %v5270 = vmul.f32 %v5263, 1.442695
      %v5271 = vpow.pop %v5270
      %v5272 = vsel %vm850, %v5265, 0.0
      %v5273 = vsel %vm850, %v5267, 0.0
      %v5274 = vadd.f32 %v5272, %v5273
      %v5275 = vsel %vm850, %v5269, 0.0
      %v5276 = vadd.f32 %v5274, %v5275
      %v5277 = vsel %vm850, %v5271, 0.0
      %v5278 = vadd.f32 %v5276, %v5277
      %v5279 = vrot.slane %v5278, 4
      %v5280 = vadd.f32 %v5278, %v5279
      %v5281 = vrot.slane %v5280, 2
      %v5282 = vadd.f32 %v5280, %v5281
      %v5283 = vrot.slane %v5282, 1
      %v5284 = vadd.f32 %v5282, %v5283
      %v5285 = vrcp.pop %v5284
      %v5286 = vmul.f32 %v5265, %v5285
      %v5287 = vmul.f32 %v5267, %v5285
      %v5288 = vmul.f32 %v5269, %v5285
      %v5289 = vmul.f32 %v5271, %v5285
      %v5290 = vsub.f32 %v5223, %v5286
      %v5291 = vsub.f32 %v5224, %v5287
      %v5292 = vsub.f32 %v5225, %v5288
      %v5293 = vsub.f32 %v5226, %v5289
      %5295 = vset.pattern.permute.xlu0 1
      %5296 = vperm.xlu0 %5295, %v5290
      %v5297 = vpop.permute.xlu0 %5296
      %5300 = vset.pattern.permute.xlu0 1
      %5301 = vperm.xlu0 %5300, %v5291
      %v5302 = vpop.permute.xlu0 %5301
      %5305 = vset.pattern.permute.xlu0 1
      %5306 = vperm.xlu0 %5305, %v5292
      %v5307 = vpop.permute.xlu0 %5306
      %5310 = vset.pattern.permute.xlu0 1
      %5311 = vperm.xlu0 %5310, %v5293
      %v5312 = vpop.permute.xlu0 %5311
      %v5314 = vmul.f32 %v5297, %v5102
      %v5315 = vmul.f32 %v5302, %v5103
      %v5316 = vmul.f32 %v5307, %v5104
      %v5317 = vmul.f32 %v5312, %v5105
      %v5318 = vadd.f32 %v5314, %v5315
      %v5319 = vadd.f32 %v5318, %v5316
      %v5320 = vadd.f32 %v5319, %v5317
      %v5321 = vrot.slane %v5320, 4
      %v5322 = vadd.f32 %v5320, %v5321
      %v5323 = vrot.slane %v5322, 2
      %v5324 = vadd.f32 %v5322, %v5323
      %v5325 = vrot.slane %v5324, 1
      %v5326 = vadd.f32 %v5324, %v5325
      %5328 = vset.pattern.permute.xlu0 98
      %5329 = vperm.xlu0 %5328, %v5163
      %v5330 = vpop.permute.xlu0 %5329
      %5332 = vset.pattern.permute.xlu0 99
      %5333 = vperm.xlu0 %5332, %v5163
      %v5334 = vpop.permute.xlu0 %5333
      %v5336 = vsel %vm383, %v5330, %v5334
      %5337 = vset.pattern.permute.xlu0 97
      %5338 = vperm.xlu0 %5337, %v5163
      %v5339 = vpop.permute.xlu0 %5338
      %v5341 = vsel %vm382, %v5339, %v5336
      %5342 = vset.pattern.permute.xlu0 96
      %5343 = vperm.xlu0 %5342, %v5163
      %v5344 = vpop.permute.xlu0 %5343
      %v5346 = vsel %vm381, %v5344, %v5341
      %v5347 = vxor.u32 %v5346, 2147483648
      %v5348 = vmul.f32 %v5347, 1.442695
      %v5349 = vpow.pop %v5348
      %v5350 = vadd.f32 %v5349, 1.0
      %v5351 = vrcp.pop %v5350
      %v5352 = vmul.f32 1.0, %v5351
      %v5353 = vmul.f32 %v5352, %v5326
      %5355 = vset.pattern.permute.xlu0 1
      %5356 = vperm.xlu0 %5355, %v5286
      %v5357 = vpop.permute.xlu0 %5356
      %5360 = vset.pattern.permute.xlu0 1
      %5361 = vperm.xlu0 %5360, %v5287
      %v5362 = vpop.permute.xlu0 %5361
      %5365 = vset.pattern.permute.xlu0 1
      %5366 = vperm.xlu0 %5365, %v5288
      %v5367 = vpop.permute.xlu0 %5366
      %5370 = vset.pattern.permute.xlu0 1
      %5371 = vperm.xlu0 %5370, %v5289
      %v5372 = vpop.permute.xlu0 %5371
      %v5374 = vmul.f32 %v5357, %v5353
      %v5375 = vmul.f32 %v5362, %v5353
      %v5376 = vmul.f32 %v5367, %v5353
      %v5377 = vmul.f32 %v5372, %v5353
      %v5378 = vadd.f32 %v5102, %v5374
      %v5379 = vadd.f32 %v5103, %v5375
      %v5380 = vadd.f32 %v5104, %v5376
      %v5381 = vadd.f32 %v5105, %v5377
      %5383 = vrot.lane.b32.xlu0 %v5353, 96
      %v5384 = vpop.permute.xlu0 %5383
      %v5386 = vsel %vm515, %v5384, 0.0
      %5387 = vadd.xlane.f32.xlu0 %v5386
      %v5388 = vpop.xlane.xlu0 %5387
      %v5389 = vmul.f32 %v5286, %v5388
      %v5390 = vmul.f32 %v5287, %v5388
      %v5391 = vmul.f32 %v5288, %v5388
      %v5392 = vmul.f32 %v5289, %v5388
      %5397 = vrot.lane.b32.xlu0 %v5389, 127
      %v5398 = vpop.permute.xlu0 %5397
      %5399 = vrot.lane.b32.xlu0 %v5390, 127
      %v5400 = vpop.permute.xlu0 %5399
      %5401 = vrot.lane.b32.xlu0 %v5391, 127
      %v5402 = vpop.permute.xlu0 %5401
      %5403 = vrot.lane.b32.xlu0 %v5392, 127
      %v5404 = vpop.permute.xlu0 %5403
      %v5409 = vadd.f32 %v5117, %v5398
      %v5410 = vadd.f32 %v5118, %v5400
      %v5411 = vadd.f32 %v5119, %v5402
      %v5412 = vadd.f32 %v5120, %v5404
      %5413 = vrot.lane.b32.xlu0 %v5353, 64
      %v5414 = vpop.permute.xlu0 %5413
      %v5416 = vsel %vm515, %v5414, 0.0
      %5417 = vadd.xlane.f32.xlu0 %v5416
      %v5418 = vpop.xlane.xlu0 %5417
      %v5419 = vmul.f32 %v5286, %v5418
      %v5420 = vmul.f32 %v5287, %v5418
      %v5421 = vmul.f32 %v5288, %v5418
      %v5422 = vmul.f32 %v5289, %v5418
      %5427 = vrot.lane.b32.xlu0 %v5419, 127
      %v5428 = vpop.permute.xlu0 %5427
      %5429 = vrot.lane.b32.xlu0 %v5420, 127
      %v5430 = vpop.permute.xlu0 %5429
      %5431 = vrot.lane.b32.xlu0 %v5421, 127
      %v5432 = vpop.permute.xlu0 %5431
      %5433 = vrot.lane.b32.xlu0 %v5422, 127
      %v5434 = vpop.permute.xlu0 %5433
      %v5439 = vadd.f32 %v5131, %v5428
      %v5440 = vadd.f32 %v5132, %v5430
      %v5441 = vadd.f32 %v5133, %v5432
      %v5442 = vadd.f32 %v5134, %v5434
      %5443 = vset.pattern.permute.xlu0 2
      %5444 = vperm.xlu0 %5443, %v4831
      %v5445 = vpop.permute.xlu0 %5444
      %5447 = vset.pattern.permute.xlu0 2
      %5448 = vperm.xlu0 %5447, %v4832
      %v5449 = vpop.permute.xlu0 %5448
      %5451 = vset.pattern.permute.xlu0 2
      %5452 = vperm.xlu0 %5451, %v4833
      %v5453 = vpop.permute.xlu0 %5452
      %5455 = vset.pattern.permute.xlu0 2
      %5456 = vperm.xlu0 %5455, %v4834
      %v5457 = vpop.permute.xlu0 %5456
      %v5459 = vmul.f32 %v5445, %v5378
      %v5460 = vmul.f32 %v5449, %v5379
      %v5461 = vmul.f32 %v5453, %v5380
      %v5462 = vmul.f32 %v5457, %v5381
      %v5463 = vadd.f32 %v5459, %v5460
      %v5464 = vadd.f32 %v5463, %v5461
      %v5465 = vadd.f32 %v5464, %v5462
      %v5466 = vrot.slane %v5465, 4
      %v5467 = vadd.f32 %v5465, %v5466
      %v5468 = vrot.slane %v5467, 2
      %v5469 = vadd.f32 %v5467, %v5468
      %v5470 = vrot.slane %v5469, 1
      %v5471 = vadd.f32 %v5469, %v5470
      %5476 = vrot.lane.b32.xlu0 %v5409, 2
      %v5477 = vpop.permute.xlu0 %5476
      %5478 = vrot.lane.b32.xlu0 %v5410, 2
      %v5479 = vpop.permute.xlu0 %5478
      %5480 = vrot.lane.b32.xlu0 %v5411, 2
      %v5481 = vpop.permute.xlu0 %5480
      %5482 = vrot.lane.b32.xlu0 %v5412, 2
      %v5483 = vpop.permute.xlu0 %5482
      %v5488 = vmul.f32 %v4831, %v5477
      %v5489 = vmul.f32 %v4832, %v5479
      %v5490 = vmul.f32 %v4833, %v5481
      %v5491 = vmul.f32 %v4834, %v5483
      %v5492 = vsel %vm1159, %v5488, -inf
      %v5493 = vsel %vm1159, %v5489, -inf
      %v5494 = vsel %vm1159, %v5490, -inf
      %v5495 = vsel %vm1159, %v5491, -inf
      %v5496 = vmax.f32 %v5492, %v5493
      %v5497 = vmax.f32 %v5494, %v5495
      %v5498 = vmax.f32 %v5496, %v5497
      %v5499 = vrot.slane %v5498, 4
      %v5500 = vmax.f32 %v5498, %v5499
      %v5501 = vrot.slane %v5500, 2
      %v5502 = vmax.f32 %v5500, %v5501
      %v5503 = vrot.slane %v5502, 1
      %v5504 = vmax.f32 %v5502, %v5503
      %v5505 = vsub.f32 %v5488, %v5504
      %v5506 = vsub.f32 %v5489, %v5504
      %v5507 = vsub.f32 %v5490, %v5504
      %v5508 = vsub.f32 %v5491, %v5504
      %v5509 = vmul.f32 %v5505, 1.442695
      %v5510 = vpow.pop %v5509
      %v5511 = vmul.f32 %v5506, 1.442695
      %v5512 = vpow.pop %v5511
      %v5513 = vmul.f32 %v5507, 1.442695
      %v5514 = vpow.pop %v5513
      %v5515 = vmul.f32 %v5508, 1.442695
      %v5516 = vpow.pop %v5515
      %v5517 = vsel %vm1159, %v5510, 0.0
      %v5518 = vsel %vm1159, %v5512, 0.0
      %v5519 = vadd.f32 %v5517, %v5518
      %v5520 = vsel %vm1159, %v5514, 0.0
      %v5521 = vadd.f32 %v5519, %v5520
      %v5522 = vsel %vm1159, %v5516, 0.0
      %v5523 = vadd.f32 %v5521, %v5522
      %v5524 = vrot.slane %v5523, 4
      %v5525 = vadd.f32 %v5523, %v5524
      %v5526 = vrot.slane %v5525, 2
      %v5527 = vadd.f32 %v5525, %v5526
      %v5528 = vrot.slane %v5527, 1
      %v5529 = vadd.f32 %v5527, %v5528
      %v5530 = vrcp.pop %v5529
      %v5531 = vmul.f32 %v5510, %v5530
      %v5532 = vmul.f32 %v5512, %v5530
      %v5533 = vmul.f32 %v5514, %v5530
      %v5534 = vmul.f32 %v5516, %v5530
      %5539 = vrot.lane.b32.xlu0 %v5439, 2
      %v5540 = vpop.permute.xlu0 %5539
      %5541 = vrot.lane.b32.xlu0 %v5440, 2
      %v5542 = vpop.permute.xlu0 %5541
      %5543 = vrot.lane.b32.xlu0 %v5441, 2
      %v5544 = vpop.permute.xlu0 %5543
      %5545 = vrot.lane.b32.xlu0 %v5442, 2
      %v5546 = vpop.permute.xlu0 %5545
      %v5551 = vmul.f32 %v4831, %v5540
      %v5552 = vmul.f32 %v4832, %v5542
      %v5553 = vmul.f32 %v4833, %v5544
      %v5554 = vmul.f32 %v4834, %v5546
      %v5555 = vsel %vm1159, %v5551, -inf
      %v5556 = vsel %vm1159, %v5552, -inf
      %v5557 = vsel %vm1159, %v5553, -inf
      %v5558 = vsel %vm1159, %v5554, -inf
      %v5559 = vmax.f32 %v5555, %v5556
      %v5560 = vmax.f32 %v5557, %v5558
      %v5561 = vmax.f32 %v5559, %v5560
      %v5562 = vrot.slane %v5561, 4
      %v5563 = vmax.f32 %v5561, %v5562
      %v5564 = vrot.slane %v5563, 2
      %v5565 = vmax.f32 %v5563, %v5564
      %v5566 = vrot.slane %v5565, 1
      %v5567 = vmax.f32 %v5565, %v5566
      %v5568 = vsub.f32 %v5551, %v5567
      %v5569 = vsub.f32 %v5552, %v5567
      %v5570 = vsub.f32 %v5553, %v5567
      %v5571 = vsub.f32 %v5554, %v5567
      %v5572 = vmul.f32 %v5568, 1.442695
      %v5573 = vpow.pop %v5572
      %v5574 = vmul.f32 %v5569, 1.442695
      %v5575 = vpow.pop %v5574
      %v5576 = vmul.f32 %v5570, 1.442695
      %v5577 = vpow.pop %v5576
      %v5578 = vmul.f32 %v5571, 1.442695
      %v5579 = vpow.pop %v5578
      %v5580 = vsel %vm1159, %v5573, 0.0
      %v5581 = vsel %vm1159, %v5575, 0.0
      %v5582 = vadd.f32 %v5580, %v5581
      %v5583 = vsel %vm1159, %v5577, 0.0
      %v5584 = vadd.f32 %v5582, %v5583
      %v5585 = vsel %vm1159, %v5579, 0.0
      %v5586 = vadd.f32 %v5584, %v5585
      %v5587 = vrot.slane %v5586, 4
      %v5588 = vadd.f32 %v5586, %v5587
      %v5589 = vrot.slane %v5588, 2
      %v5590 = vadd.f32 %v5588, %v5589
      %v5591 = vrot.slane %v5590, 1
      %v5592 = vadd.f32 %v5590, %v5591
      %v5593 = vrcp.pop %v5592
      %v5594 = vmul.f32 %v5573, %v5593
      %v5595 = vmul.f32 %v5575, %v5593
      %v5596 = vmul.f32 %v5577, %v5593
      %v5597 = vmul.f32 %v5579, %v5593
      %v5598 = vsub.f32 %v5531, %v5594
      %v5599 = vsub.f32 %v5532, %v5595
      %v5600 = vsub.f32 %v5533, %v5596
      %v5601 = vsub.f32 %v5534, %v5597
      %5603 = vset.pattern.permute.xlu0 2
      %5604 = vperm.xlu0 %5603, %v5598
      %v5605 = vpop.permute.xlu0 %5604
      %5608 = vset.pattern.permute.xlu0 2
      %5609 = vperm.xlu0 %5608, %v5599
      %v5610 = vpop.permute.xlu0 %5609
      %5613 = vset.pattern.permute.xlu0 2
      %5614 = vperm.xlu0 %5613, %v5600
      %v5615 = vpop.permute.xlu0 %5614
      %5618 = vset.pattern.permute.xlu0 2
      %5619 = vperm.xlu0 %5618, %v5601
      %v5620 = vpop.permute.xlu0 %5619
      %v5622 = vmul.f32 %v5605, %v5378
      %v5623 = vmul.f32 %v5610, %v5379
      %v5624 = vmul.f32 %v5615, %v5380
      %v5625 = vmul.f32 %v5620, %v5381
      %v5626 = vadd.f32 %v5622, %v5623
      %v5627 = vadd.f32 %v5626, %v5624
      %v5628 = vadd.f32 %v5627, %v5625
      %v5629 = vrot.slane %v5628, 4
      %v5630 = vadd.f32 %v5628, %v5629
      %v5631 = vrot.slane %v5630, 2
      %v5632 = vadd.f32 %v5630, %v5631
      %v5633 = vrot.slane %v5632, 1
      %v5634 = vadd.f32 %v5632, %v5633
      %5636 = vset.pattern.permute.xlu0 98
      %5637 = vperm.xlu0 %5636, %v5471
      %v5638 = vpop.permute.xlu0 %5637
      %5640 = vset.pattern.permute.xlu0 99
      %5641 = vperm.xlu0 %5640, %v5471
      %v5642 = vpop.permute.xlu0 %5641
      %v5644 = vsel %vm383, %v5638, %v5642
      %5645 = vset.pattern.permute.xlu0 97
      %5646 = vperm.xlu0 %5645, %v5471
      %v5647 = vpop.permute.xlu0 %5646
      %v5649 = vsel %vm382, %v5647, %v5644
      %5650 = vset.pattern.permute.xlu0 96
      %5651 = vperm.xlu0 %5650, %v5471
      %v5652 = vpop.permute.xlu0 %5651
      %v5654 = vsel %vm381, %v5652, %v5649
      %v5655 = vxor.u32 %v5654, 2147483648
      %v5656 = vmul.f32 %v5655, 1.442695
      %v5657 = vpow.pop %v5656
      %v5658 = vadd.f32 %v5657, 1.0
      %v5659 = vrcp.pop %v5658
      %v5660 = vmul.f32 1.0, %v5659
      %v5661 = vmul.f32 %v5660, %v5634
      %5663 = vset.pattern.permute.xlu0 2
      %5664 = vperm.xlu0 %5663, %v5594
      %v5665 = vpop.permute.xlu0 %5664
      %5668 = vset.pattern.permute.xlu0 2
      %5669 = vperm.xlu0 %5668, %v5595
      %v5670 = vpop.permute.xlu0 %5669
      %5673 = vset.pattern.permute.xlu0 2
      %5674 = vperm.xlu0 %5673, %v5596
      %v5675 = vpop.permute.xlu0 %5674
      %5678 = vset.pattern.permute.xlu0 2
      %5679 = vperm.xlu0 %5678, %v5597
      %v5680 = vpop.permute.xlu0 %5679
      %v5682 = vmul.f32 %v5665, %v5661
      %v5683 = vmul.f32 %v5670, %v5661
      %v5684 = vmul.f32 %v5675, %v5661
      %v5685 = vmul.f32 %v5680, %v5661
      %v5686 = vadd.f32 %v5378, %v5682
      %v5687 = vadd.f32 %v5379, %v5683
      %v5688 = vadd.f32 %v5380, %v5684
      %v5689 = vadd.f32 %v5381, %v5685
      %5691 = vrot.lane.b32.xlu0 %v5661, 96
      %v5692 = vpop.permute.xlu0 %5691
      %v5694 = vsel %vm515, %v5692, 0.0
      %5695 = vadd.xlane.f32.xlu0 %v5694
      %v5696 = vpop.xlane.xlu0 %5695
      %v5697 = vmul.f32 %v5594, %v5696
      %v5698 = vmul.f32 %v5595, %v5696
      %v5699 = vmul.f32 %v5596, %v5696
      %v5700 = vmul.f32 %v5597, %v5696
      %5705 = vrot.lane.b32.xlu0 %v5697, 126
      %v5706 = vpop.permute.xlu0 %5705
      %5707 = vrot.lane.b32.xlu0 %v5698, 126
      %v5708 = vpop.permute.xlu0 %5707
      %5709 = vrot.lane.b32.xlu0 %v5699, 126
      %v5710 = vpop.permute.xlu0 %5709
      %5711 = vrot.lane.b32.xlu0 %v5700, 126
      %v5712 = vpop.permute.xlu0 %5711
      %v5717 = vadd.f32 %v5409, %v5706
      %v5718 = vadd.f32 %v5410, %v5708
      %v5719 = vadd.f32 %v5411, %v5710
      %v5720 = vadd.f32 %v5412, %v5712
      %5721 = vrot.lane.b32.xlu0 %v5661, 64
      %v5722 = vpop.permute.xlu0 %5721
      %v5724 = vsel %vm515, %v5722, 0.0
      %5725 = vadd.xlane.f32.xlu0 %v5724
      %v5726 = vpop.xlane.xlu0 %5725
      %v5727 = vmul.f32 %v5594, %v5726
      %v5728 = vmul.f32 %v5595, %v5726
      %v5729 = vmul.f32 %v5596, %v5726
      %v5730 = vmul.f32 %v5597, %v5726
      %5735 = vrot.lane.b32.xlu0 %v5727, 126
      %v5736 = vpop.permute.xlu0 %5735
      %5737 = vrot.lane.b32.xlu0 %v5728, 126
      %v5738 = vpop.permute.xlu0 %5737
      %5739 = vrot.lane.b32.xlu0 %v5729, 126
      %v5740 = vpop.permute.xlu0 %5739
      %5741 = vrot.lane.b32.xlu0 %v5730, 126
      %v5742 = vpop.permute.xlu0 %5741
      %v5747 = vadd.f32 %v5439, %v5736
      %v5748 = vadd.f32 %v5440, %v5738
      %v5749 = vadd.f32 %v5441, %v5740
      %v5750 = vadd.f32 %v5442, %v5742
      %5751 = vset.pattern.permute.xlu0 3
      %5752 = vperm.xlu0 %5751, %v4831
      %v5753 = vpop.permute.xlu0 %5752
      %5755 = vset.pattern.permute.xlu0 3
      %5756 = vperm.xlu0 %5755, %v4832
      %v5757 = vpop.permute.xlu0 %5756
      %5759 = vset.pattern.permute.xlu0 3
      %5760 = vperm.xlu0 %5759, %v4833
      %v5761 = vpop.permute.xlu0 %5760
      %5763 = vset.pattern.permute.xlu0 3
      %5764 = vperm.xlu0 %5763, %v4834
      %v5765 = vpop.permute.xlu0 %5764
      %v5767 = vmul.f32 %v5753, %v5686
      %v5768 = vmul.f32 %v5757, %v5687
      %v5769 = vmul.f32 %v5761, %v5688
      %v5770 = vmul.f32 %v5765, %v5689
      %v5771 = vadd.f32 %v5767, %v5768
      %v5772 = vadd.f32 %v5771, %v5769
      %v5773 = vadd.f32 %v5772, %v5770
      %v5774 = vrot.slane %v5773, 4
      %v5775 = vadd.f32 %v5773, %v5774
      %v5776 = vrot.slane %v5775, 2
      %v5777 = vadd.f32 %v5775, %v5776
      %v5778 = vrot.slane %v5777, 1
      %v5779 = vadd.f32 %v5777, %v5778
      %5784 = vrot.lane.b32.xlu0 %v5717, 3
      %v5785 = vpop.permute.xlu0 %5784
      %5786 = vrot.lane.b32.xlu0 %v5718, 3
      %v5787 = vpop.permute.xlu0 %5786
      %5788 = vrot.lane.b32.xlu0 %v5719, 3
      %v5789 = vpop.permute.xlu0 %5788
      %5790 = vrot.lane.b32.xlu0 %v5720, 3
      %v5791 = vpop.permute.xlu0 %5790
      %v5796 = vmul.f32 %v4831, %v5785
      %v5797 = vmul.f32 %v4832, %v5787
      %v5798 = vmul.f32 %v4833, %v5789
      %v5799 = vmul.f32 %v4834, %v5791
      %v5800 = vsel %vm1468, %v5796, -inf
      %v5801 = vsel %vm1468, %v5797, -inf
      %v5802 = vsel %vm1468, %v5798, -inf
      %v5803 = vsel %vm1468, %v5799, -inf
      %v5804 = vmax.f32 %v5800, %v5801
      %v5805 = vmax.f32 %v5802, %v5803
      %v5806 = vmax.f32 %v5804, %v5805
      %v5807 = vrot.slane %v5806, 4
      %v5808 = vmax.f32 %v5806, %v5807
      %v5809 = vrot.slane %v5808, 2
      %v5810 = vmax.f32 %v5808, %v5809
      %v5811 = vrot.slane %v5810, 1
      %v5812 = vmax.f32 %v5810, %v5811
      %v5813 = vsub.f32 %v5796, %v5812
      %v5814 = vsub.f32 %v5797, %v5812
      %v5815 = vsub.f32 %v5798, %v5812
      %v5816 = vsub.f32 %v5799, %v5812
      %v5817 = vmul.f32 %v5813, 1.442695
      %v5818 = vpow.pop %v5817
      %v5819 = vmul.f32 %v5814, 1.442695
      %v5820 = vpow.pop %v5819
      %v5821 = vmul.f32 %v5815, 1.442695
      %v5822 = vpow.pop %v5821
      %v5823 = vmul.f32 %v5816, 1.442695
      %v5824 = vpow.pop %v5823
      %v5825 = vsel %vm1468, %v5818, 0.0
      %v5826 = vsel %vm1468, %v5820, 0.0
      %v5827 = vadd.f32 %v5825, %v5826
      %v5828 = vsel %vm1468, %v5822, 0.0
      %v5829 = vadd.f32 %v5827, %v5828
      %v5830 = vsel %vm1468, %v5824, 0.0
      %v5831 = vadd.f32 %v5829, %v5830
      %v5832 = vrot.slane %v5831, 4
      %v5833 = vadd.f32 %v5831, %v5832
      %v5834 = vrot.slane %v5833, 2
      %v5835 = vadd.f32 %v5833, %v5834
      %v5836 = vrot.slane %v5835, 1
      %v5837 = vadd.f32 %v5835, %v5836
      %v5838 = vrcp.pop %v5837
      %v5839 = vmul.f32 %v5818, %v5838
      %v5840 = vmul.f32 %v5820, %v5838
      %v5841 = vmul.f32 %v5822, %v5838
      %v5842 = vmul.f32 %v5824, %v5838
      %5847 = vrot.lane.b32.xlu0 %v5747, 3
      %v5848 = vpop.permute.xlu0 %5847
      %5849 = vrot.lane.b32.xlu0 %v5748, 3
      %v5850 = vpop.permute.xlu0 %5849
      %5851 = vrot.lane.b32.xlu0 %v5749, 3
      %v5852 = vpop.permute.xlu0 %5851
      %5853 = vrot.lane.b32.xlu0 %v5750, 3
      %v5854 = vpop.permute.xlu0 %5853
      %v5859 = vmul.f32 %v4831, %v5848
      %v5860 = vmul.f32 %v4832, %v5850
      %v5861 = vmul.f32 %v4833, %v5852
      %v5862 = vmul.f32 %v4834, %v5854
      %v5863 = vsel %vm1468, %v5859, -inf
      %v5864 = vsel %vm1468, %v5860, -inf
      %v5865 = vsel %vm1468, %v5861, -inf
      %v5866 = vsel %vm1468, %v5862, -inf
      %v5867 = vmax.f32 %v5863, %v5864
      %v5868 = vmax.f32 %v5865, %v5866
      %v5869 = vmax.f32 %v5867, %v5868
      %v5870 = vrot.slane %v5869, 4
      %v5871 = vmax.f32 %v5869, %v5870
      %v5872 = vrot.slane %v5871, 2
      %v5873 = vmax.f32 %v5871, %v5872
      %v5874 = vrot.slane %v5873, 1
      %v5875 = vmax.f32 %v5873, %v5874
      %v5876 = vsub.f32 %v5859, %v5875
      %v5877 = vsub.f32 %v5860, %v5875
      %v5878 = vsub.f32 %v5861, %v5875
      %v5879 = vsub.f32 %v5862, %v5875
      %v5880 = vmul.f32 %v5876, 1.442695
      %v5881 = vpow.pop %v5880
      %v5882 = vmul.f32 %v5877, 1.442695
      %v5883 = vpow.pop %v5882
      %v5884 = vmul.f32 %v5878, 1.442695
      %v5885 = vpow.pop %v5884
      %v5886 = vmul.f32 %v5879, 1.442695
      %v5887 = vpow.pop %v5886
      %v5888 = vsel %vm1468, %v5881, 0.0
      %v5889 = vsel %vm1468, %v5883, 0.0
      %v5890 = vadd.f32 %v5888, %v5889
      %v5891 = vsel %vm1468, %v5885, 0.0
      %v5892 = vadd.f32 %v5890, %v5891
      %v5893 = vsel %vm1468, %v5887, 0.0
      %v5894 = vadd.f32 %v5892, %v5893
      %v5895 = vrot.slane %v5894, 4
      %v5896 = vadd.f32 %v5894, %v5895
      %v5897 = vrot.slane %v5896, 2
      %v5898 = vadd.f32 %v5896, %v5897
      %v5899 = vrot.slane %v5898, 1
      %v5900 = vadd.f32 %v5898, %v5899
      %v5901 = vrcp.pop %v5900
      %v5902 = vmul.f32 %v5881, %v5901
      %v5903 = vmul.f32 %v5883, %v5901
      %v5904 = vmul.f32 %v5885, %v5901
      %v5905 = vmul.f32 %v5887, %v5901
      %v5906 = vsub.f32 %v5839, %v5902
      %v5907 = vsub.f32 %v5840, %v5903
      %v5908 = vsub.f32 %v5841, %v5904
      %v5909 = vsub.f32 %v5842, %v5905
      %5911 = vset.pattern.permute.xlu0 3
      %5912 = vperm.xlu0 %5911, %v5906
      %v5913 = vpop.permute.xlu0 %5912
      %5916 = vset.pattern.permute.xlu0 3
      %5917 = vperm.xlu0 %5916, %v5907
      %v5918 = vpop.permute.xlu0 %5917
      %5921 = vset.pattern.permute.xlu0 3
      %5922 = vperm.xlu0 %5921, %v5908
      %v5923 = vpop.permute.xlu0 %5922
      %5926 = vset.pattern.permute.xlu0 3
      %5927 = vperm.xlu0 %5926, %v5909
      %v5928 = vpop.permute.xlu0 %5927
      %v5930 = vmul.f32 %v5913, %v5686
      %v5931 = vmul.f32 %v5918, %v5687
      %v5932 = vmul.f32 %v5923, %v5688
      %v5933 = vmul.f32 %v5928, %v5689
      %v5934 = vadd.f32 %v5930, %v5931
      %v5935 = vadd.f32 %v5934, %v5932
      %v5936 = vadd.f32 %v5935, %v5933
      %v5937 = vrot.slane %v5936, 4
      %v5938 = vadd.f32 %v5936, %v5937
      %v5939 = vrot.slane %v5938, 2
      %v5940 = vadd.f32 %v5938, %v5939
      %v5941 = vrot.slane %v5940, 1
      %v5942 = vadd.f32 %v5940, %v5941
      %5944 = vset.pattern.permute.xlu0 98
      %5945 = vperm.xlu0 %5944, %v5779
      %v5946 = vpop.permute.xlu0 %5945
      %5948 = vset.pattern.permute.xlu0 99
      %5949 = vperm.xlu0 %5948, %v5779
      %v5950 = vpop.permute.xlu0 %5949
      %v5952 = vsel %vm383, %v5946, %v5950
      %5953 = vset.pattern.permute.xlu0 97
      %5954 = vperm.xlu0 %5953, %v5779
      %v5955 = vpop.permute.xlu0 %5954
      %v5957 = vsel %vm382, %v5955, %v5952
      %5958 = vset.pattern.permute.xlu0 96
      %5959 = vperm.xlu0 %5958, %v5779
      %v5960 = vpop.permute.xlu0 %5959
      %v5962 = vsel %vm381, %v5960, %v5957
      %v5963 = vxor.u32 %v5962, 2147483648
      %v5964 = vmul.f32 %v5963, 1.442695
      %v5965 = vpow.pop %v5964
      %v5966 = vadd.f32 %v5965, 1.0
      %v5967 = vrcp.pop %v5966
      %v5968 = vmul.f32 1.0, %v5967
      %v5969 = vmul.f32 %v5968, %v5942
      %5971 = vset.pattern.permute.xlu0 3
      %5972 = vperm.xlu0 %5971, %v5902
      %v5973 = vpop.permute.xlu0 %5972
      %5976 = vset.pattern.permute.xlu0 3
      %5977 = vperm.xlu0 %5976, %v5903
      %v5978 = vpop.permute.xlu0 %5977
      %5981 = vset.pattern.permute.xlu0 3
      %5982 = vperm.xlu0 %5981, %v5904
      %v5983 = vpop.permute.xlu0 %5982
      %5986 = vset.pattern.permute.xlu0 3
      %5987 = vperm.xlu0 %5986, %v5905
      %v5988 = vpop.permute.xlu0 %5987
      %v5990 = vmul.f32 %v5973, %v5969
      %v5991 = vmul.f32 %v5978, %v5969
      %v5992 = vmul.f32 %v5983, %v5969
      %v5993 = vmul.f32 %v5988, %v5969
      %v5994 = vadd.f32 %v5686, %v5990
      %v5995 = vadd.f32 %v5687, %v5991
      %v5996 = vadd.f32 %v5688, %v5992
      %v5997 = vadd.f32 %v5689, %v5993
      %5999 = vrot.lane.b32.xlu0 %v5969, 96
      %v6000 = vpop.permute.xlu0 %5999
      %v6002 = vsel %vm515, %v6000, 0.0
      %6003 = vadd.xlane.f32.xlu0 %v6002
      %v6004 = vpop.xlane.xlu0 %6003
      %v6005 = vmul.f32 %v5902, %v6004
      %v6006 = vmul.f32 %v5903, %v6004
      %v6007 = vmul.f32 %v5904, %v6004
      %v6008 = vmul.f32 %v5905, %v6004
      %6013 = vrot.lane.b32.xlu0 %v6005, 125
      %v6014 = vpop.permute.xlu0 %6013
      %6015 = vrot.lane.b32.xlu0 %v6006, 125
      %v6016 = vpop.permute.xlu0 %6015
      %6017 = vrot.lane.b32.xlu0 %v6007, 125
      %v6018 = vpop.permute.xlu0 %6017
      %6019 = vrot.lane.b32.xlu0 %v6008, 125
      %v6020 = vpop.permute.xlu0 %6019
      %v6025 = vadd.f32 %v5717, %v6014
      %v6026 = vadd.f32 %v5718, %v6016
      %v6027 = vadd.f32 %v5719, %v6018
      %v6028 = vadd.f32 %v5720, %v6020
      %6029 = vrot.lane.b32.xlu0 %v5969, 64
      %v6030 = vpop.permute.xlu0 %6029
      %v6032 = vsel %vm515, %v6030, 0.0
      %6033 = vadd.xlane.f32.xlu0 %v6032
      %v6034 = vpop.xlane.xlu0 %6033
      %v6035 = vmul.f32 %v5902, %v6034
      %v6036 = vmul.f32 %v5903, %v6034
      %v6037 = vmul.f32 %v5904, %v6034
      %v6038 = vmul.f32 %v5905, %v6034
      %6043 = vrot.lane.b32.xlu0 %v6035, 125
      %v6044 = vpop.permute.xlu0 %6043
      %6045 = vrot.lane.b32.xlu0 %v6036, 125
      %v6046 = vpop.permute.xlu0 %6045
      %6047 = vrot.lane.b32.xlu0 %v6037, 125
      %v6048 = vpop.permute.xlu0 %6047
      %6049 = vrot.lane.b32.xlu0 %v6038, 125
      %v6050 = vpop.permute.xlu0 %6049
      %v6055 = vadd.f32 %v5747, %v6044
      %v6056 = vadd.f32 %v5748, %v6046
      %v6057 = vadd.f32 %v5749, %v6048
      %v6058 = vadd.f32 %v5750, %v6050
      %6059 = vset.pattern.permute.xlu0 4
      %6060 = vperm.xlu0 %6059, %v4831
      %v6061 = vpop.permute.xlu0 %6060
      %6063 = vset.pattern.permute.xlu0 4
      %6064 = vperm.xlu0 %6063, %v4832
      %v6065 = vpop.permute.xlu0 %6064
      %6067 = vset.pattern.permute.xlu0 4
      %6068 = vperm.xlu0 %6067, %v4833
      %v6069 = vpop.permute.xlu0 %6068
      %6071 = vset.pattern.permute.xlu0 4
      %6072 = vperm.xlu0 %6071, %v4834
      %v6073 = vpop.permute.xlu0 %6072
      %v6075 = vmul.f32 %v6061, %v5994
      %v6076 = vmul.f32 %v6065, %v5995
      %v6077 = vmul.f32 %v6069, %v5996
      %v6078 = vmul.f32 %v6073, %v5997
      %v6079 = vadd.f32 %v6075, %v6076
      %v6080 = vadd.f32 %v6079, %v6077
      %v6081 = vadd.f32 %v6080, %v6078
      %v6082 = vrot.slane %v6081, 4
      %v6083 = vadd.f32 %v6081, %v6082
      %v6084 = vrot.slane %v6083, 2
      %v6085 = vadd.f32 %v6083, %v6084
      %v6086 = vrot.slane %v6085, 1
      %v6087 = vadd.f32 %v6085, %v6086
      %6092 = vrot.lane.b32.xlu0 %v6025, 4
      %v6093 = vpop.permute.xlu0 %6092
      %6094 = vrot.lane.b32.xlu0 %v6026, 4
      %v6095 = vpop.permute.xlu0 %6094
      %6096 = vrot.lane.b32.xlu0 %v6027, 4
      %v6097 = vpop.permute.xlu0 %6096
      %6098 = vrot.lane.b32.xlu0 %v6028, 4
      %v6099 = vpop.permute.xlu0 %6098
      %v6104 = vmul.f32 %v4831, %v6093
      %v6105 = vmul.f32 %v4832, %v6095
      %v6106 = vmul.f32 %v4833, %v6097
      %v6107 = vmul.f32 %v4834, %v6099
      %v6108 = vsel %vm1777, %v6104, -inf
      %v6109 = vsel %vm1777, %v6105, -inf
      %v6110 = vsel %vm1777, %v6106, -inf
      %v6111 = vsel %vm1777, %v6107, -inf
      %v6112 = vmax.f32 %v6108, %v6109
      %v6113 = vmax.f32 %v6110, %v6111
      %v6114 = vmax.f32 %v6112, %v6113
      %v6115 = vrot.slane %v6114, 4
      %v6116 = vmax.f32 %v6114, %v6115
      %v6117 = vrot.slane %v6116, 2
      %v6118 = vmax.f32 %v6116, %v6117
      %v6119 = vrot.slane %v6118, 1
      %v6120 = vmax.f32 %v6118, %v6119
      %v6121 = vsub.f32 %v6104, %v6120
      %v6122 = vsub.f32 %v6105, %v6120
      %v6123 = vsub.f32 %v6106, %v6120
      %v6124 = vsub.f32 %v6107, %v6120
      %v6125 = vmul.f32 %v6121, 1.442695
      %v6126 = vpow.pop %v6125
      %v6127 = vmul.f32 %v6122, 1.442695
      %v6128 = vpow.pop %v6127
      %v6129 = vmul.f32 %v6123, 1.442695
      %v6130 = vpow.pop %v6129
      %v6131 = vmul.f32 %v6124, 1.442695
      %v6132 = vpow.pop %v6131
      %v6133 = vsel %vm1777, %v6126, 0.0
      %v6134 = vsel %vm1777, %v6128, 0.0
      %v6135 = vadd.f32 %v6133, %v6134
      %v6136 = vsel %vm1777, %v6130, 0.0
      %v6137 = vadd.f32 %v6135, %v6136
      %v6138 = vsel %vm1777, %v6132, 0.0
      %v6139 = vadd.f32 %v6137, %v6138
      %v6140 = vrot.slane %v6139, 4
      %v6141 = vadd.f32 %v6139, %v6140
      %v6142 = vrot.slane %v6141, 2
      %v6143 = vadd.f32 %v6141, %v6142
      %v6144 = vrot.slane %v6143, 1
      %v6145 = vadd.f32 %v6143, %v6144
      %v6146 = vrcp.pop %v6145
      %v6147 = vmul.f32 %v6126, %v6146
      %v6148 = vmul.f32 %v6128, %v6146
      %v6149 = vmul.f32 %v6130, %v6146
      %v6150 = vmul.f32 %v6132, %v6146
      %6155 = vrot.lane.b32.xlu0 %v6055, 4
      %v6156 = vpop.permute.xlu0 %6155
      %6157 = vrot.lane.b32.xlu0 %v6056, 4
      %v6158 = vpop.permute.xlu0 %6157
      %6159 = vrot.lane.b32.xlu0 %v6057, 4
      %v6160 = vpop.permute.xlu0 %6159
      %6161 = vrot.lane.b32.xlu0 %v6058, 4
      %v6162 = vpop.permute.xlu0 %6161
      %v6167 = vmul.f32 %v4831, %v6156
      %v6168 = vmul.f32 %v4832, %v6158
      %v6169 = vmul.f32 %v4833, %v6160
      %v6170 = vmul.f32 %v4834, %v6162
      %v6171 = vsel %vm1777, %v6167, -inf
      %v6172 = vsel %vm1777, %v6168, -inf
      %v6173 = vsel %vm1777, %v6169, -inf
      %v6174 = vsel %vm1777, %v6170, -inf
      %v6175 = vmax.f32 %v6171, %v6172
      %v6176 = vmax.f32 %v6173, %v6174
      %v6177 = vmax.f32 %v6175, %v6176
      %v6178 = vrot.slane %v6177, 4
      %v6179 = vmax.f32 %v6177, %v6178
      %v6180 = vrot.slane %v6179, 2
      %v6181 = vmax.f32 %v6179, %v6180
      %v6182 = vrot.slane %v6181, 1
      %v6183 = vmax.f32 %v6181, %v6182
      %v6184 = vsub.f32 %v6167, %v6183
      %v6185 = vsub.f32 %v6168, %v6183
      %v6186 = vsub.f32 %v6169, %v6183
      %v6187 = vsub.f32 %v6170, %v6183
      %v6188 = vmul.f32 %v6184, 1.442695
      %v6189 = vpow.pop %v6188
      %v6190 = vmul.f32 %v6185, 1.442695
      %v6191 = vpow.pop %v6190
      %v6192 = vmul.f32 %v6186, 1.442695
      %v6193 = vpow.pop %v6192
      %v6194 = vmul.f32 %v6187, 1.442695
      %v6195 = vpow.pop %v6194
      %v6196 = vsel %vm1777, %v6189, 0.0
      %v6197 = vsel %vm1777, %v6191, 0.0
      %v6198 = vadd.f32 %v6196, %v6197
      %v6199 = vsel %vm1777, %v6193, 0.0
      %v6200 = vadd.f32 %v6198, %v6199
      %v6201 = vsel %vm1777, %v6195, 0.0
      %v6202 = vadd.f32 %v6200, %v6201
      %v6203 = vrot.slane %v6202, 4
      %v6204 = vadd.f32 %v6202, %v6203
      %v6205 = vrot.slane %v6204, 2
      %v6206 = vadd.f32 %v6204, %v6205
      %v6207 = vrot.slane %v6206, 1
      %v6208 = vadd.f32 %v6206, %v6207
      %v6209 = vrcp.pop %v6208
      %v6210 = vmul.f32 %v6189, %v6209
      %v6211 = vmul.f32 %v6191, %v6209
      %v6212 = vmul.f32 %v6193, %v6209
      %v6213 = vmul.f32 %v6195, %v6209
      %v6214 = vsub.f32 %v6147, %v6210
      %v6215 = vsub.f32 %v6148, %v6211
      %v6216 = vsub.f32 %v6149, %v6212
      %v6217 = vsub.f32 %v6150, %v6213
      %6219 = vset.pattern.permute.xlu0 4
      %6220 = vperm.xlu0 %6219, %v6214
      %v6221 = vpop.permute.xlu0 %6220
      %6224 = vset.pattern.permute.xlu0 4
      %6225 = vperm.xlu0 %6224, %v6215
      %v6226 = vpop.permute.xlu0 %6225
      %6229 = vset.pattern.permute.xlu0 4
      %6230 = vperm.xlu0 %6229, %v6216
      %v6231 = vpop.permute.xlu0 %6230
      %6234 = vset.pattern.permute.xlu0 4
      %6235 = vperm.xlu0 %6234, %v6217
      %v6236 = vpop.permute.xlu0 %6235
      %v6238 = vmul.f32 %v6221, %v5994
      %v6239 = vmul.f32 %v6226, %v5995
      %v6240 = vmul.f32 %v6231, %v5996
      %v6241 = vmul.f32 %v6236, %v5997
      %v6242 = vadd.f32 %v6238, %v6239
      %v6243 = vadd.f32 %v6242, %v6240
      %v6244 = vadd.f32 %v6243, %v6241
      %v6245 = vrot.slane %v6244, 4
      %v6246 = vadd.f32 %v6244, %v6245
      %v6247 = vrot.slane %v6246, 2
      %v6248 = vadd.f32 %v6246, %v6247
      %v6249 = vrot.slane %v6248, 1
      %v6250 = vadd.f32 %v6248, %v6249
      %6252 = vset.pattern.permute.xlu0 98
      %6253 = vperm.xlu0 %6252, %v6087
      %v6254 = vpop.permute.xlu0 %6253
      %6256 = vset.pattern.permute.xlu0 99
      %6257 = vperm.xlu0 %6256, %v6087
      %v6258 = vpop.permute.xlu0 %6257
      %v6260 = vsel %vm383, %v6254, %v6258
      %6261 = vset.pattern.permute.xlu0 97
      %6262 = vperm.xlu0 %6261, %v6087
      %v6263 = vpop.permute.xlu0 %6262
      %v6265 = vsel %vm382, %v6263, %v6260
      %6266 = vset.pattern.permute.xlu0 96
      %6267 = vperm.xlu0 %6266, %v6087
      %v6268 = vpop.permute.xlu0 %6267
      %v6270 = vsel %vm381, %v6268, %v6265
      %v6271 = vxor.u32 %v6270, 2147483648
      %v6272 = vmul.f32 %v6271, 1.442695
      %v6273 = vpow.pop %v6272
      %v6274 = vadd.f32 %v6273, 1.0
      %v6275 = vrcp.pop %v6274
      %v6276 = vmul.f32 1.0, %v6275
      %v6277 = vmul.f32 %v6276, %v6250
      %6279 = vset.pattern.permute.xlu0 4
      %6280 = vperm.xlu0 %6279, %v6210
      %v6281 = vpop.permute.xlu0 %6280
      %6284 = vset.pattern.permute.xlu0 4
      %6285 = vperm.xlu0 %6284, %v6211
      %v6286 = vpop.permute.xlu0 %6285
      %6289 = vset.pattern.permute.xlu0 4
      %6290 = vperm.xlu0 %6289, %v6212
      %v6291 = vpop.permute.xlu0 %6290
      %6294 = vset.pattern.permute.xlu0 4
      %6295 = vperm.xlu0 %6294, %v6213
      %v6296 = vpop.permute.xlu0 %6295
      %v6298 = vmul.f32 %v6281, %v6277
      %v6299 = vmul.f32 %v6286, %v6277
      %v6300 = vmul.f32 %v6291, %v6277
      %v6301 = vmul.f32 %v6296, %v6277
      %v6302 = vadd.f32 %v5994, %v6298
      %v6303 = vadd.f32 %v5995, %v6299
      %v6304 = vadd.f32 %v5996, %v6300
      %v6305 = vadd.f32 %v5997, %v6301
      %6307 = vrot.lane.b32.xlu0 %v6277, 96
      %v6308 = vpop.permute.xlu0 %6307
      %v6310 = vsel %vm515, %v6308, 0.0
      %6311 = vadd.xlane.f32.xlu0 %v6310
      %v6312 = vpop.xlane.xlu0 %6311
      %v6313 = vmul.f32 %v6210, %v6312
      %v6314 = vmul.f32 %v6211, %v6312
      %v6315 = vmul.f32 %v6212, %v6312
      %v6316 = vmul.f32 %v6213, %v6312
      %6321 = vrot.lane.b32.xlu0 %v6313, 124
      %v6322 = vpop.permute.xlu0 %6321
      %6323 = vrot.lane.b32.xlu0 %v6314, 124
      %v6324 = vpop.permute.xlu0 %6323
      %6325 = vrot.lane.b32.xlu0 %v6315, 124
      %v6326 = vpop.permute.xlu0 %6325
      %6327 = vrot.lane.b32.xlu0 %v6316, 124
      %v6328 = vpop.permute.xlu0 %6327
      %v6333 = vadd.f32 %v6025, %v6322
      %v6334 = vadd.f32 %v6026, %v6324
      %v6335 = vadd.f32 %v6027, %v6326
      %v6336 = vadd.f32 %v6028, %v6328
      %6337 = vrot.lane.b32.xlu0 %v6277, 64
      %v6338 = vpop.permute.xlu0 %6337
      %v6340 = vsel %vm515, %v6338, 0.0
      %6341 = vadd.xlane.f32.xlu0 %v6340
      %v6342 = vpop.xlane.xlu0 %6341
      %v6343 = vmul.f32 %v6210, %v6342
      %v6344 = vmul.f32 %v6211, %v6342
      %v6345 = vmul.f32 %v6212, %v6342
      %v6346 = vmul.f32 %v6213, %v6342
      %6351 = vrot.lane.b32.xlu0 %v6343, 124
      %v6352 = vpop.permute.xlu0 %6351
      %6353 = vrot.lane.b32.xlu0 %v6344, 124
      %v6354 = vpop.permute.xlu0 %6353
      %6355 = vrot.lane.b32.xlu0 %v6345, 124
      %v6356 = vpop.permute.xlu0 %6355
      %6357 = vrot.lane.b32.xlu0 %v6346, 124
      %v6358 = vpop.permute.xlu0 %6357
      %v6363 = vadd.f32 %v6055, %v6352
      %v6364 = vadd.f32 %v6056, %v6354
      %v6365 = vadd.f32 %v6057, %v6356
      %v6366 = vadd.f32 %v6058, %v6358
      %6367 = vset.pattern.permute.xlu0 5
      %6368 = vperm.xlu0 %6367, %v4831
      %v6369 = vpop.permute.xlu0 %6368
      %6371 = vset.pattern.permute.xlu0 5
      %6372 = vperm.xlu0 %6371, %v4832
      %v6373 = vpop.permute.xlu0 %6372
      %6375 = vset.pattern.permute.xlu0 5
      %6376 = vperm.xlu0 %6375, %v4833
      %v6377 = vpop.permute.xlu0 %6376
      %6379 = vset.pattern.permute.xlu0 5
      %6380 = vperm.xlu0 %6379, %v4834
      %v6381 = vpop.permute.xlu0 %6380
      %v6383 = vmul.f32 %v6369, %v6302
      %v6384 = vmul.f32 %v6373, %v6303
      %v6385 = vmul.f32 %v6377, %v6304
      %v6386 = vmul.f32 %v6381, %v6305
      %v6387 = vadd.f32 %v6383, %v6384
      %v6388 = vadd.f32 %v6387, %v6385
      %v6389 = vadd.f32 %v6388, %v6386
      %v6390 = vrot.slane %v6389, 4
      %v6391 = vadd.f32 %v6389, %v6390
      %v6392 = vrot.slane %v6391, 2
      %v6393 = vadd.f32 %v6391, %v6392
      %v6394 = vrot.slane %v6393, 1
      %v6395 = vadd.f32 %v6393, %v6394
      %6400 = vrot.lane.b32.xlu0 %v6333, 5
      %v6401 = vpop.permute.xlu0 %6400
      %6402 = vrot.lane.b32.xlu0 %v6334, 5
      %v6403 = vpop.permute.xlu0 %6402
      %6404 = vrot.lane.b32.xlu0 %v6335, 5
      %v6405 = vpop.permute.xlu0 %6404
      %6406 = vrot.lane.b32.xlu0 %v6336, 5
      %v6407 = vpop.permute.xlu0 %6406
      %v6412 = vmul.f32 %v4831, %v6401
      %v6413 = vmul.f32 %v4832, %v6403
      %v6414 = vmul.f32 %v4833, %v6405
      %v6415 = vmul.f32 %v4834, %v6407
      %v6416 = vsel %vm2086, %v6412, -inf
      %v6417 = vsel %vm2086, %v6413, -inf
      %v6418 = vsel %vm2086, %v6414, -inf
      %v6419 = vsel %vm2086, %v6415, -inf
      %v6420 = vmax.f32 %v6416, %v6417
      %v6421 = vmax.f32 %v6418, %v6419
      %v6422 = vmax.f32 %v6420, %v6421
      %v6423 = vrot.slane %v6422, 4
      %v6424 = vmax.f32 %v6422, %v6423
      %v6425 = vrot.slane %v6424, 2
      %v6426 = vmax.f32 %v6424, %v6425
      %v6427 = vrot.slane %v6426, 1
      %v6428 = vmax.f32 %v6426, %v6427
      %v6429 = vsub.f32 %v6412, %v6428
      %v6430 = vsub.f32 %v6413, %v6428
      %v6431 = vsub.f32 %v6414, %v6428
      %v6432 = vsub.f32 %v6415, %v6428
      %v6433 = vmul.f32 %v6429, 1.442695
      %v6434 = vpow.pop %v6433
      %v6435 = vmul.f32 %v6430, 1.442695
      %v6436 = vpow.pop %v6435
      %v6437 = vmul.f32 %v6431, 1.442695
      %v6438 = vpow.pop %v6437
      %v6439 = vmul.f32 %v6432, 1.442695
      %v6440 = vpow.pop %v6439
      %v6441 = vsel %vm2086, %v6434, 0.0
      %v6442 = vsel %vm2086, %v6436, 0.0
      %v6443 = vadd.f32 %v6441, %v6442
      %v6444 = vsel %vm2086, %v6438, 0.0
      %v6445 = vadd.f32 %v6443, %v6444
      %v6446 = vsel %vm2086, %v6440, 0.0
      %v6447 = vadd.f32 %v6445, %v6446
      %v6448 = vrot.slane %v6447, 4
      %v6449 = vadd.f32 %v6447, %v6448
      %v6450 = vrot.slane %v6449, 2
      %v6451 = vadd.f32 %v6449, %v6450
      %v6452 = vrot.slane %v6451, 1
      %v6453 = vadd.f32 %v6451, %v6452
      %v6454 = vrcp.pop %v6453
      %v6455 = vmul.f32 %v6434, %v6454
      %v6456 = vmul.f32 %v6436, %v6454
      %v6457 = vmul.f32 %v6438, %v6454
      %v6458 = vmul.f32 %v6440, %v6454
      %6463 = vrot.lane.b32.xlu0 %v6363, 5
      %v6464 = vpop.permute.xlu0 %6463
      %6465 = vrot.lane.b32.xlu0 %v6364, 5
      %v6466 = vpop.permute.xlu0 %6465
      %6467 = vrot.lane.b32.xlu0 %v6365, 5
      %v6468 = vpop.permute.xlu0 %6467
      %6469 = vrot.lane.b32.xlu0 %v6366, 5
      %v6470 = vpop.permute.xlu0 %6469
      %v6475 = vmul.f32 %v4831, %v6464
      %v6476 = vmul.f32 %v4832, %v6466
      %v6477 = vmul.f32 %v4833, %v6468
      %v6478 = vmul.f32 %v4834, %v6470
      %v6479 = vsel %vm2086, %v6475, -inf
      %v6480 = vsel %vm2086, %v6476, -inf
      %v6481 = vsel %vm2086, %v6477, -inf
      %v6482 = vsel %vm2086, %v6478, -inf
      %v6483 = vmax.f32 %v6479, %v6480
      %v6484 = vmax.f32 %v6481, %v6482
      %v6485 = vmax.f32 %v6483, %v6484
      %v6486 = vrot.slane %v6485, 4
      %v6487 = vmax.f32 %v6485, %v6486
      %v6488 = vrot.slane %v6487, 2
      %v6489 = vmax.f32 %v6487, %v6488
      %v6490 = vrot.slane %v6489, 1
      %v6491 = vmax.f32 %v6489, %v6490
      %v6492 = vsub.f32 %v6475, %v6491
      %v6493 = vsub.f32 %v6476, %v6491
      %v6494 = vsub.f32 %v6477, %v6491
      %v6495 = vsub.f32 %v6478, %v6491
      %v6496 = vmul.f32 %v6492, 1.442695
      %v6497 = vpow.pop %v6496
      %v6498 = vmul.f32 %v6493, 1.442695
      %v6499 = vpow.pop %v6498
      %v6500 = vmul.f32 %v6494, 1.442695
      %v6501 = vpow.pop %v6500
      %v6502 = vmul.f32 %v6495, 1.442695
      %v6503 = vpow.pop %v6502
      %v6504 = vsel %vm2086, %v6497, 0.0
      %v6505 = vsel %vm2086, %v6499, 0.0
      %v6506 = vadd.f32 %v6504, %v6505
      %v6507 = vsel %vm2086, %v6501, 0.0
      %v6508 = vadd.f32 %v6506, %v6507
      %v6509 = vsel %vm2086, %v6503, 0.0
      %v6510 = vadd.f32 %v6508, %v6509
      %v6511 = vrot.slane %v6510, 4
      %v6512 = vadd.f32 %v6510, %v6511
      %v6513 = vrot.slane %v6512, 2
      %v6514 = vadd.f32 %v6512, %v6513
      %v6515 = vrot.slane %v6514, 1
      %v6516 = vadd.f32 %v6514, %v6515
      %v6517 = vrcp.pop %v6516
      %v6518 = vmul.f32 %v6497, %v6517
      %v6519 = vmul.f32 %v6499, %v6517
      %v6520 = vmul.f32 %v6501, %v6517
      %v6521 = vmul.f32 %v6503, %v6517
      %v6522 = vsub.f32 %v6455, %v6518
      %v6523 = vsub.f32 %v6456, %v6519
      %v6524 = vsub.f32 %v6457, %v6520
      %v6525 = vsub.f32 %v6458, %v6521
      %6527 = vset.pattern.permute.xlu0 5
      %6528 = vperm.xlu0 %6527, %v6522
      %v6529 = vpop.permute.xlu0 %6528
      %6532 = vset.pattern.permute.xlu0 5
      %6533 = vperm.xlu0 %6532, %v6523
      %v6534 = vpop.permute.xlu0 %6533
      %6537 = vset.pattern.permute.xlu0 5
      %6538 = vperm.xlu0 %6537, %v6524
      %v6539 = vpop.permute.xlu0 %6538
      %6542 = vset.pattern.permute.xlu0 5
      %6543 = vperm.xlu0 %6542, %v6525
      %v6544 = vpop.permute.xlu0 %6543
      %v6546 = vmul.f32 %v6529, %v6302
      %v6547 = vmul.f32 %v6534, %v6303
      %v6548 = vmul.f32 %v6539, %v6304
      %v6549 = vmul.f32 %v6544, %v6305
      %v6550 = vadd.f32 %v6546, %v6547
      %v6551 = vadd.f32 %v6550, %v6548
      %v6552 = vadd.f32 %v6551, %v6549
      %v6553 = vrot.slane %v6552, 4
      %v6554 = vadd.f32 %v6552, %v6553
      %v6555 = vrot.slane %v6554, 2
      %v6556 = vadd.f32 %v6554, %v6555
      %v6557 = vrot.slane %v6556, 1
      %v6558 = vadd.f32 %v6556, %v6557
      %6560 = vset.pattern.permute.xlu0 98
      %6561 = vperm.xlu0 %6560, %v6395
      %v6562 = vpop.permute.xlu0 %6561
      %6564 = vset.pattern.permute.xlu0 99
      %6565 = vperm.xlu0 %6564, %v6395
      %v6566 = vpop.permute.xlu0 %6565
      %v6568 = vsel %vm383, %v6562, %v6566
      %6569 = vset.pattern.permute.xlu0 97
      %6570 = vperm.xlu0 %6569, %v6395
      %v6571 = vpop.permute.xlu0 %6570
      %v6573 = vsel %vm382, %v6571, %v6568
      %6574 = vset.pattern.permute.xlu0 96
      %6575 = vperm.xlu0 %6574, %v6395
      %v6576 = vpop.permute.xlu0 %6575
      %v6578 = vsel %vm381, %v6576, %v6573
      %v6579 = vxor.u32 %v6578, 2147483648
      %v6580 = vmul.f32 %v6579, 1.442695
      %v6581 = vpow.pop %v6580
      %v6582 = vadd.f32 %v6581, 1.0
      %v6583 = vrcp.pop %v6582
      %v6584 = vmul.f32 1.0, %v6583
      %v6585 = vmul.f32 %v6584, %v6558
      %6587 = vset.pattern.permute.xlu0 5
      %6588 = vperm.xlu0 %6587, %v6518
      %v6589 = vpop.permute.xlu0 %6588
      %6592 = vset.pattern.permute.xlu0 5
      %6593 = vperm.xlu0 %6592, %v6519
      %v6594 = vpop.permute.xlu0 %6593
      %6597 = vset.pattern.permute.xlu0 5
      %6598 = vperm.xlu0 %6597, %v6520
      %v6599 = vpop.permute.xlu0 %6598
      %6602 = vset.pattern.permute.xlu0 5
      %6603 = vperm.xlu0 %6602, %v6521
      %v6604 = vpop.permute.xlu0 %6603
      %v6606 = vmul.f32 %v6589, %v6585
      %v6607 = vmul.f32 %v6594, %v6585
      %v6608 = vmul.f32 %v6599, %v6585
      %v6609 = vmul.f32 %v6604, %v6585
      %v6610 = vadd.f32 %v6302, %v6606
      %v6611 = vadd.f32 %v6303, %v6607
      %v6612 = vadd.f32 %v6304, %v6608
      %v6613 = vadd.f32 %v6305, %v6609
      %6615 = vrot.lane.b32.xlu0 %v6585, 96
      %v6616 = vpop.permute.xlu0 %6615
      %v6618 = vsel %vm515, %v6616, 0.0
      %6619 = vadd.xlane.f32.xlu0 %v6618
      %v6620 = vpop.xlane.xlu0 %6619
      %v6621 = vmul.f32 %v6518, %v6620
      %v6622 = vmul.f32 %v6519, %v6620
      %v6623 = vmul.f32 %v6520, %v6620
      %v6624 = vmul.f32 %v6521, %v6620
      %6629 = vrot.lane.b32.xlu0 %v6621, 123
      %v6630 = vpop.permute.xlu0 %6629
      %6631 = vrot.lane.b32.xlu0 %v6622, 123
      %v6632 = vpop.permute.xlu0 %6631
      %6633 = vrot.lane.b32.xlu0 %v6623, 123
      %v6634 = vpop.permute.xlu0 %6633
      %6635 = vrot.lane.b32.xlu0 %v6624, 123
      %v6636 = vpop.permute.xlu0 %6635
      %v6641 = vadd.f32 %v6333, %v6630
      %v6642 = vadd.f32 %v6334, %v6632
      %v6643 = vadd.f32 %v6335, %v6634
      %v6644 = vadd.f32 %v6336, %v6636
      %6645 = vrot.lane.b32.xlu0 %v6585, 64
      %v6646 = vpop.permute.xlu0 %6645
      %v6648 = vsel %vm515, %v6646, 0.0
      %6649 = vadd.xlane.f32.xlu0 %v6648
      %v6650 = vpop.xlane.xlu0 %6649
      %v6651 = vmul.f32 %v6518, %v6650
      %v6652 = vmul.f32 %v6519, %v6650
      %v6653 = vmul.f32 %v6520, %v6650
      %v6654 = vmul.f32 %v6521, %v6650
      %6659 = vrot.lane.b32.xlu0 %v6651, 123
      %v6660 = vpop.permute.xlu0 %6659
      %6661 = vrot.lane.b32.xlu0 %v6652, 123
      %v6662 = vpop.permute.xlu0 %6661
      %6663 = vrot.lane.b32.xlu0 %v6653, 123
      %v6664 = vpop.permute.xlu0 %6663
      %6665 = vrot.lane.b32.xlu0 %v6654, 123
      %v6666 = vpop.permute.xlu0 %6665
      %v6671 = vadd.f32 %v6363, %v6660
      %v6672 = vadd.f32 %v6364, %v6662
      %v6673 = vadd.f32 %v6365, %v6664
      %v6674 = vadd.f32 %v6366, %v6666
      %6675 = vset.pattern.permute.xlu0 6
      %6676 = vperm.xlu0 %6675, %v4831
      %v6677 = vpop.permute.xlu0 %6676
      %6679 = vset.pattern.permute.xlu0 6
      %6680 = vperm.xlu0 %6679, %v4832
      %v6681 = vpop.permute.xlu0 %6680
      %6683 = vset.pattern.permute.xlu0 6
      %6684 = vperm.xlu0 %6683, %v4833
      %v6685 = vpop.permute.xlu0 %6684
      %6687 = vset.pattern.permute.xlu0 6
      %6688 = vperm.xlu0 %6687, %v4834
      %v6689 = vpop.permute.xlu0 %6688
      %v6691 = vmul.f32 %v6677, %v6610
      %v6692 = vmul.f32 %v6681, %v6611
      %v6693 = vmul.f32 %v6685, %v6612
      %v6694 = vmul.f32 %v6689, %v6613
      %v6695 = vadd.f32 %v6691, %v6692
      %v6696 = vadd.f32 %v6695, %v6693
      %v6697 = vadd.f32 %v6696, %v6694
      %v6698 = vrot.slane %v6697, 4
      %v6699 = vadd.f32 %v6697, %v6698
      %v6700 = vrot.slane %v6699, 2
      %v6701 = vadd.f32 %v6699, %v6700
      %v6702 = vrot.slane %v6701, 1
      %v6703 = vadd.f32 %v6701, %v6702
      %6708 = vrot.lane.b32.xlu0 %v6641, 6
      %v6709 = vpop.permute.xlu0 %6708
      %6710 = vrot.lane.b32.xlu0 %v6642, 6
      %v6711 = vpop.permute.xlu0 %6710
      %6712 = vrot.lane.b32.xlu0 %v6643, 6
      %v6713 = vpop.permute.xlu0 %6712
      %6714 = vrot.lane.b32.xlu0 %v6644, 6
      %v6715 = vpop.permute.xlu0 %6714
      %v6720 = vmul.f32 %v4831, %v6709
      %v6721 = vmul.f32 %v4832, %v6711
      %v6722 = vmul.f32 %v4833, %v6713
      %v6723 = vmul.f32 %v4834, %v6715
      %v6724 = vsel %vm2395, %v6720, -inf
      %v6725 = vsel %vm2395, %v6721, -inf
      %v6726 = vsel %vm2395, %v6722, -inf
      %v6727 = vsel %vm2395, %v6723, -inf
      %v6728 = vmax.f32 %v6724, %v6725
      %v6729 = vmax.f32 %v6726, %v6727
      %v6730 = vmax.f32 %v6728, %v6729
      %v6731 = vrot.slane %v6730, 4
      %v6732 = vmax.f32 %v6730, %v6731
      %v6733 = vrot.slane %v6732, 2
      %v6734 = vmax.f32 %v6732, %v6733
      %v6735 = vrot.slane %v6734, 1
      %v6736 = vmax.f32 %v6734, %v6735
      %v6737 = vsub.f32 %v6720, %v6736
      %v6738 = vsub.f32 %v6721, %v6736
      %v6739 = vsub.f32 %v6722, %v6736
      %v6740 = vsub.f32 %v6723, %v6736
      %v6741 = vmul.f32 %v6737, 1.442695
      %v6742 = vpow.pop %v6741
      %v6743 = vmul.f32 %v6738, 1.442695
      %v6744 = vpow.pop %v6743
      %v6745 = vmul.f32 %v6739, 1.442695
      %v6746 = vpow.pop %v6745
      %v6747 = vmul.f32 %v6740, 1.442695
      %v6748 = vpow.pop %v6747
      %v6749 = vsel %vm2395, %v6742, 0.0
      %v6750 = vsel %vm2395, %v6744, 0.0
      %v6751 = vadd.f32 %v6749, %v6750
      %v6752 = vsel %vm2395, %v6746, 0.0
      %v6753 = vadd.f32 %v6751, %v6752
      %v6754 = vsel %vm2395, %v6748, 0.0
      %v6755 = vadd.f32 %v6753, %v6754
      %v6756 = vrot.slane %v6755, 4
      %v6757 = vadd.f32 %v6755, %v6756
      %v6758 = vrot.slane %v6757, 2
      %v6759 = vadd.f32 %v6757, %v6758
      %v6760 = vrot.slane %v6759, 1
      %v6761 = vadd.f32 %v6759, %v6760
      %v6762 = vrcp.pop %v6761
      %v6763 = vmul.f32 %v6742, %v6762
      %v6764 = vmul.f32 %v6744, %v6762
      %v6765 = vmul.f32 %v6746, %v6762
      %v6766 = vmul.f32 %v6748, %v6762
      %6771 = vrot.lane.b32.xlu0 %v6671, 6
      %v6772 = vpop.permute.xlu0 %6771
      %6773 = vrot.lane.b32.xlu0 %v6672, 6
      %v6774 = vpop.permute.xlu0 %6773
      %6775 = vrot.lane.b32.xlu0 %v6673, 6
      %v6776 = vpop.permute.xlu0 %6775
      %6777 = vrot.lane.b32.xlu0 %v6674, 6
      %v6778 = vpop.permute.xlu0 %6777
      %v6783 = vmul.f32 %v4831, %v6772
      %v6784 = vmul.f32 %v4832, %v6774
      %v6785 = vmul.f32 %v4833, %v6776
      %v6786 = vmul.f32 %v4834, %v6778
      %v6787 = vsel %vm2395, %v6783, -inf
      %v6788 = vsel %vm2395, %v6784, -inf
      %v6789 = vsel %vm2395, %v6785, -inf
      %v6790 = vsel %vm2395, %v6786, -inf
      %v6791 = vmax.f32 %v6787, %v6788
      %v6792 = vmax.f32 %v6789, %v6790
      %v6793 = vmax.f32 %v6791, %v6792
      %v6794 = vrot.slane %v6793, 4
      %v6795 = vmax.f32 %v6793, %v6794
      %v6796 = vrot.slane %v6795, 2
      %v6797 = vmax.f32 %v6795, %v6796
      %v6798 = vrot.slane %v6797, 1
      %v6799 = vmax.f32 %v6797, %v6798
      %v6800 = vsub.f32 %v6783, %v6799
      %v6801 = vsub.f32 %v6784, %v6799
      %v6802 = vsub.f32 %v6785, %v6799
      %v6803 = vsub.f32 %v6786, %v6799
      %v6804 = vmul.f32 %v6800, 1.442695
      %v6805 = vpow.pop %v6804
      %v6806 = vmul.f32 %v6801, 1.442695
      %v6807 = vpow.pop %v6806
      %v6808 = vmul.f32 %v6802, 1.442695
      %v6809 = vpow.pop %v6808
      %v6810 = vmul.f32 %v6803, 1.442695
      %v6811 = vpow.pop %v6810
      %v6812 = vsel %vm2395, %v6805, 0.0
      %v6813 = vsel %vm2395, %v6807, 0.0
      %v6814 = vadd.f32 %v6812, %v6813
      %v6815 = vsel %vm2395, %v6809, 0.0
      %v6816 = vadd.f32 %v6814, %v6815
      %v6817 = vsel %vm2395, %v6811, 0.0
      %v6818 = vadd.f32 %v6816, %v6817
      %v6819 = vrot.slane %v6818, 4
      %v6820 = vadd.f32 %v6818, %v6819
      %v6821 = vrot.slane %v6820, 2
      %v6822 = vadd.f32 %v6820, %v6821
      %v6823 = vrot.slane %v6822, 1
      %v6824 = vadd.f32 %v6822, %v6823
      %v6825 = vrcp.pop %v6824
      %v6826 = vmul.f32 %v6805, %v6825
      %v6827 = vmul.f32 %v6807, %v6825
      %v6828 = vmul.f32 %v6809, %v6825
      %v6829 = vmul.f32 %v6811, %v6825
      %v6830 = vsub.f32 %v6763, %v6826
      %v6831 = vsub.f32 %v6764, %v6827
      %v6832 = vsub.f32 %v6765, %v6828
      %v6833 = vsub.f32 %v6766, %v6829
      %6835 = vset.pattern.permute.xlu0 6
      %6836 = vperm.xlu0 %6835, %v6830
      %v6837 = vpop.permute.xlu0 %6836
      %6840 = vset.pattern.permute.xlu0 6
      %6841 = vperm.xlu0 %6840, %v6831
      %v6842 = vpop.permute.xlu0 %6841
      %6845 = vset.pattern.permute.xlu0 6
      %6846 = vperm.xlu0 %6845, %v6832
      %v6847 = vpop.permute.xlu0 %6846
      %6850 = vset.pattern.permute.xlu0 6
      %6851 = vperm.xlu0 %6850, %v6833
      %v6852 = vpop.permute.xlu0 %6851
      %v6854 = vmul.f32 %v6837, %v6610
      %v6855 = vmul.f32 %v6842, %v6611
      %v6856 = vmul.f32 %v6847, %v6612
      %v6857 = vmul.f32 %v6852, %v6613
      %v6858 = vadd.f32 %v6854, %v6855
      %v6859 = vadd.f32 %v6858, %v6856
      %v6860 = vadd.f32 %v6859, %v6857
      %v6861 = vrot.slane %v6860, 4
      %v6862 = vadd.f32 %v6860, %v6861
      %v6863 = vrot.slane %v6862, 2
      %v6864 = vadd.f32 %v6862, %v6863
      %v6865 = vrot.slane %v6864, 1
      %v6866 = vadd.f32 %v6864, %v6865
      %6868 = vset.pattern.permute.xlu0 98
      %6869 = vperm.xlu0 %6868, %v6703
      %v6870 = vpop.permute.xlu0 %6869
      %6872 = vset.pattern.permute.xlu0 99
      %6873 = vperm.xlu0 %6872, %v6703
      %v6874 = vpop.permute.xlu0 %6873
      %v6876 = vsel %vm383, %v6870, %v6874
      %6877 = vset.pattern.permute.xlu0 97
      %6878 = vperm.xlu0 %6877, %v6703
      %v6879 = vpop.permute.xlu0 %6878
      %v6881 = vsel %vm382, %v6879, %v6876
      %6882 = vset.pattern.permute.xlu0 96
      %6883 = vperm.xlu0 %6882, %v6703
      %v6884 = vpop.permute.xlu0 %6883
      %v6886 = vsel %vm381, %v6884, %v6881
      %v6887 = vxor.u32 %v6886, 2147483648
      %v6888 = vmul.f32 %v6887, 1.442695
      %v6889 = vpow.pop %v6888
      %v6890 = vadd.f32 %v6889, 1.0
      %v6891 = vrcp.pop %v6890
      %v6892 = vmul.f32 1.0, %v6891
      %v6893 = vmul.f32 %v6892, %v6866
      %6895 = vset.pattern.permute.xlu0 6
      %6896 = vperm.xlu0 %6895, %v6826
      %v6897 = vpop.permute.xlu0 %6896
      %6900 = vset.pattern.permute.xlu0 6
      %6901 = vperm.xlu0 %6900, %v6827
      %v6902 = vpop.permute.xlu0 %6901
      %6905 = vset.pattern.permute.xlu0 6
      %6906 = vperm.xlu0 %6905, %v6828
      %v6907 = vpop.permute.xlu0 %6906
      %6910 = vset.pattern.permute.xlu0 6
      %6911 = vperm.xlu0 %6910, %v6829
      %v6912 = vpop.permute.xlu0 %6911
      %v6914 = vmul.f32 %v6897, %v6893
      %v6915 = vmul.f32 %v6902, %v6893
      %v6916 = vmul.f32 %v6907, %v6893
      %v6917 = vmul.f32 %v6912, %v6893
      %v6918 = vadd.f32 %v6610, %v6914
      %v6919 = vadd.f32 %v6611, %v6915
      %v6920 = vadd.f32 %v6612, %v6916
      %v6921 = vadd.f32 %v6613, %v6917
      %6922 = vset.pattern.permute.xlu0 7
      %6923 = vperm.xlu0 %6922, %v4831
      %v6924 = vpop.permute.xlu0 %6923
      %6926 = vset.pattern.permute.xlu0 7
      %6927 = vperm.xlu0 %6926, %v4832
      %v6928 = vpop.permute.xlu0 %6927
      %6930 = vset.pattern.permute.xlu0 7
      %6931 = vperm.xlu0 %6930, %v4833
      %v6932 = vpop.permute.xlu0 %6931
      %6934 = vset.pattern.permute.xlu0 7
      %6935 = vperm.xlu0 %6934, %v4834
      %v6936 = vpop.permute.xlu0 %6935
      %v6938 = vmul.f32 %v6924, %v6918
      %v6939 = vmul.f32 %v6928, %v6919
      %v6940 = vmul.f32 %v6932, %v6920
      %v6941 = vmul.f32 %v6936, %v6921
      %v6942 = vadd.f32 %v6938, %v6939
      %v6943 = vadd.f32 %v6942, %v6940
      %v6944 = vadd.f32 %v6943, %v6941
      %v6945 = vrot.slane %v6944, 4
      %v6946 = vadd.f32 %v6944, %v6945
      %v6947 = vrot.slane %v6946, 2
      %v6948 = vadd.f32 %v6946, %v6947
      %v6949 = vrot.slane %v6948, 1
      %v6950 = vadd.f32 %v6948, %v6949
      %6952 = vset.pattern.permute.xlu0 0
      %6953 = vperm.xlu0 %6952, %v398
      %v6954 = vpop.permute.xlu0 %6953
      %6957 = vset.pattern.permute.xlu0 0
      %6958 = vperm.xlu0 %6957, %v399
      %v6959 = vpop.permute.xlu0 %6958
      %6962 = vset.pattern.permute.xlu0 0
      %6963 = vperm.xlu0 %6962, %v400
      %v6964 = vpop.permute.xlu0 %6963
      %6967 = vset.pattern.permute.xlu0 0
      %6968 = vperm.xlu0 %6967, %v401
      %v6969 = vpop.permute.xlu0 %6968
      %v6971 = vmul.f32 %v6954, %v469
      %v6972 = vmul.f32 %v6959, %v469
      %v6973 = vmul.f32 %v6964, %v469
      %v6974 = vmul.f32 %v6969, %v469
      %6976 = vset.pattern.permute.xlu0 0
      %6977 = vperm.xlu0 %6976, %v414
      %v6978 = vpop.permute.xlu0 %6977
      %6981 = vset.pattern.permute.xlu0 0
      %6982 = vperm.xlu0 %6981, %v415
      %v6983 = vpop.permute.xlu0 %6982
      %6986 = vset.pattern.permute.xlu0 0
      %6987 = vperm.xlu0 %6986, %v416
      %v6988 = vpop.permute.xlu0 %6987
      %6991 = vset.pattern.permute.xlu0 0
      %6992 = vperm.xlu0 %6991, %v417
      %v6993 = vpop.permute.xlu0 %6992
      %v6995 = vadd.f32 %v6971, %v6978
      %v6996 = vadd.f32 %v6972, %v6983
      %v6997 = vadd.f32 %v6973, %v6988
      %v6998 = vadd.f32 %v6974, %v6993
      %7003 = vrot.lane.b32.xlu0 %v430, 96
      %v7004 = vpop.permute.xlu0 %7003
      %7005 = vrot.lane.b32.xlu0 %v431, 96
      %v7006 = vpop.permute.xlu0 %7005
      %7007 = vrot.lane.b32.xlu0 %v432, 96
      %v7008 = vpop.permute.xlu0 %7007
      %7009 = vrot.lane.b32.xlu0 %v433, 96
      %v7010 = vpop.permute.xlu0 %7009
      %v7015 = vsel %vm515, %v7004, 0.0
      %7016 = vadd.xlane.f32.xlu0 %v7015
      %v7017 = vpop.xlane.xlu0 %7016
      %v7018 = vsel %vm515, %v7006, 0.0
      %7019 = vadd.xlane.f32.xlu0 %v7018
      %v7020 = vpop.xlane.xlu0 %7019
      %v7021 = vsel %vm515, %v7008, 0.0
      %7022 = vadd.xlane.f32.xlu0 %v7021
      %v7023 = vpop.xlane.xlu0 %7022
      %v7024 = vsel %vm515, %v7010, 0.0
      %7025 = vadd.xlane.f32.xlu0 %v7024
      %v7026 = vpop.xlane.xlu0 %7025
      %7027 = vrot.lane.b32.xlu0 %v430, 64
      %v7028 = vpop.permute.xlu0 %7027
      %7029 = vrot.lane.b32.xlu0 %v431, 64
      %v7030 = vpop.permute.xlu0 %7029
      %7031 = vrot.lane.b32.xlu0 %v432, 64
      %v7032 = vpop.permute.xlu0 %7031
      %7033 = vrot.lane.b32.xlu0 %v433, 64
      %v7034 = vpop.permute.xlu0 %7033
      %v7039 = vsel %vm515, %v7028, 0.0
      %7040 = vadd.xlane.f32.xlu0 %v7039
      %v7041 = vpop.xlane.xlu0 %7040
      %v7042 = vsel %vm515, %v7030, 0.0
      %7043 = vadd.xlane.f32.xlu0 %v7042
      %v7044 = vpop.xlane.xlu0 %7043
      %v7045 = vsel %vm515, %v7032, 0.0
      %7046 = vadd.xlane.f32.xlu0 %v7045
      %v7047 = vpop.xlane.xlu0 %7046
      %v7048 = vsel %vm515, %v7034, 0.0
      %7049 = vadd.xlane.f32.xlu0 %v7048
      %v7050 = vpop.xlane.xlu0 %7049
      %7052 = vset.pattern.permute.xlu0 0
      %7053 = vperm.xlu0 %7052, %v6995
      %v7054 = vpop.permute.xlu0 %7053
      %7057 = vset.pattern.permute.xlu0 0
      %7058 = vperm.xlu0 %7057, %v6996
      %v7059 = vpop.permute.xlu0 %7058
      %7062 = vset.pattern.permute.xlu0 0
      %7063 = vperm.xlu0 %7062, %v6997
      %v7064 = vpop.permute.xlu0 %7063
      %7067 = vset.pattern.permute.xlu0 0
      %7068 = vperm.xlu0 %7067, %v6998
      %v7069 = vpop.permute.xlu0 %7068
      %v7071 = vmul.f32 %v7054, %v430
      %v7072 = vmul.f32 %v7059, %v431
      %v7073 = vmul.f32 %v7064, %v432
      %v7074 = vmul.f32 %v7069, %v433
      %v7075 = vadd.f32 %v7071, %v7072
      %v7076 = vadd.f32 %v7075, %v7073
      %v7077 = vadd.f32 %v7076, %v7074
      %v7078 = vrot.slane %v7077, 4
      %v7079 = vadd.f32 %v7077, %v7078
      %v7080 = vrot.slane %v7079, 2
      %v7081 = vadd.f32 %v7079, %v7080
      %v7082 = vrot.slane %v7081, 1
      %v7083 = vadd.f32 %v7081, %v7082
      %v7084 = vmul.f32 %v6995, %v7017
      %v7085 = vmul.f32 %v6996, %v7020
      %v7086 = vmul.f32 %v6997, %v7023
      %v7087 = vmul.f32 %v6998, %v7026
      %v7088 = vsel %vm589, %v7084, -inf
      %v7089 = vsel %vm589, %v7085, -inf
      %v7090 = vsel %vm589, %v7086, -inf
      %v7091 = vsel %vm589, %v7087, -inf
      %v7092 = vmax.f32 %v7088, %v7089
      %v7093 = vmax.f32 %v7090, %v7091
      %v7094 = vmax.f32 %v7092, %v7093
      %v7095 = vrot.slane %v7094, 4
      %v7096 = vmax.f32 %v7094, %v7095
      %v7097 = vrot.slane %v7096, 2
      %v7098 = vmax.f32 %v7096, %v7097
      %v7099 = vrot.slane %v7098, 1
      %v7100 = vmax.f32 %v7098, %v7099
      %v7101 = vsub.f32 %v7084, %v7100
      %v7102 = vsub.f32 %v7085, %v7100
      %v7103 = vsub.f32 %v7086, %v7100
      %v7104 = vsub.f32 %v7087, %v7100
      %v7105 = vmul.f32 %v7101, 1.442695
      %v7106 = vpow.pop %v7105
      %v7107 = vmul.f32 %v7102, 1.442695
      %v7108 = vpow.pop %v7107
      %v7109 = vmul.f32 %v7103, 1.442695
      %v7110 = vpow.pop %v7109
      %v7111 = vmul.f32 %v7104, 1.442695
      %v7112 = vpow.pop %v7111
      %v7113 = vsel %vm589, %v7106, 0.0
      %v7114 = vsel %vm589, %v7108, 0.0
      %v7115 = vadd.f32 %v7113, %v7114
      %v7116 = vsel %vm589, %v7110, 0.0
      %v7117 = vadd.f32 %v7115, %v7116
      %v7118 = vsel %vm589, %v7112, 0.0
      %v7119 = vadd.f32 %v7117, %v7118
      %v7120 = vrot.slane %v7119, 4
      %v7121 = vadd.f32 %v7119, %v7120
      %v7122 = vrot.slane %v7121, 2
      %v7123 = vadd.f32 %v7121, %v7122
      %v7124 = vrot.slane %v7123, 1
      %v7125 = vadd.f32 %v7123, %v7124
      %v7126 = vrcp.pop %v7125
      %v7127 = vmul.f32 %v7106, %v7126
      %v7128 = vmul.f32 %v7108, %v7126
      %v7129 = vmul.f32 %v7110, %v7126
      %v7130 = vmul.f32 %v7112, %v7126
      %v7131 = vmul.f32 %v6995, %v7041
      %v7132 = vmul.f32 %v6996, %v7044
      %v7133 = vmul.f32 %v6997, %v7047
      %v7134 = vmul.f32 %v6998, %v7050
      %v7135 = vsel %vm589, %v7131, -inf
      %v7136 = vsel %vm589, %v7132, -inf
      %v7137 = vsel %vm589, %v7133, -inf
      %v7138 = vsel %vm589, %v7134, -inf
      %v7139 = vmax.f32 %v7135, %v7136
      %v7140 = vmax.f32 %v7137, %v7138
      %v7141 = vmax.f32 %v7139, %v7140
      %v7142 = vrot.slane %v7141, 4
      %v7143 = vmax.f32 %v7141, %v7142
      %v7144 = vrot.slane %v7143, 2
      %v7145 = vmax.f32 %v7143, %v7144
      %v7146 = vrot.slane %v7145, 1
      %v7147 = vmax.f32 %v7145, %v7146
      %v7148 = vsub.f32 %v7131, %v7147
      %v7149 = vsub.f32 %v7132, %v7147
      %v7150 = vsub.f32 %v7133, %v7147
      %v7151 = vsub.f32 %v7134, %v7147
      %v7152 = vmul.f32 %v7148, 1.442695
      %v7153 = vpow.pop %v7152
      %v7154 = vmul.f32 %v7149, 1.442695
      %v7155 = vpow.pop %v7154
      %v7156 = vmul.f32 %v7150, 1.442695
      %v7157 = vpow.pop %v7156
      %v7158 = vmul.f32 %v7151, 1.442695
      %v7159 = vpow.pop %v7158
      %v7160 = vsel %vm589, %v7153, 0.0
      %v7161 = vsel %vm589, %v7155, 0.0
      %v7162 = vadd.f32 %v7160, %v7161
      %v7163 = vsel %vm589, %v7157, 0.0
      %v7164 = vadd.f32 %v7162, %v7163
      %v7165 = vsel %vm589, %v7159, 0.0
      %v7166 = vadd.f32 %v7164, %v7165
      %v7167 = vrot.slane %v7166, 4
      %v7168 = vadd.f32 %v7166, %v7167
      %v7169 = vrot.slane %v7168, 2
      %v7170 = vadd.f32 %v7168, %v7169
      %v7171 = vrot.slane %v7170, 1
      %v7172 = vadd.f32 %v7170, %v7171
      %v7173 = vrcp.pop %v7172
      %v7174 = vmul.f32 %v7153, %v7173
      %v7175 = vmul.f32 %v7155, %v7173
      %v7176 = vmul.f32 %v7157, %v7173
      %v7177 = vmul.f32 %v7159, %v7173
      %v7178 = vsub.f32 %v7127, %v7174
      %v7179 = vsub.f32 %v7128, %v7175
      %v7180 = vsub.f32 %v7129, %v7176
      %v7181 = vsub.f32 %v7130, %v7177
      %7183 = vset.pattern.permute.xlu0 0
      %7184 = vperm.xlu0 %7183, %v7178
      %v7185 = vpop.permute.xlu0 %7184
      %7188 = vset.pattern.permute.xlu0 0
      %7189 = vperm.xlu0 %7188, %v7179
      %v7190 = vpop.permute.xlu0 %7189
      %7193 = vset.pattern.permute.xlu0 0
      %7194 = vperm.xlu0 %7193, %v7180
      %v7195 = vpop.permute.xlu0 %7194
      %7198 = vset.pattern.permute.xlu0 0
      %7199 = vperm.xlu0 %7198, %v7181
      %v7200 = vpop.permute.xlu0 %7199
      %v7202 = vmul.f32 %v7185, %v430
      %v7203 = vmul.f32 %v7190, %v431
      %v7204 = vmul.f32 %v7195, %v432
      %v7205 = vmul.f32 %v7200, %v433
      %v7206 = vadd.f32 %v7202, %v7203
      %v7207 = vadd.f32 %v7206, %v7204
      %v7208 = vadd.f32 %v7207, %v7205
      %v7209 = vrot.slane %v7208, 4
      %v7210 = vadd.f32 %v7208, %v7209
      %v7211 = vrot.slane %v7210, 2
      %v7212 = vadd.f32 %v7210, %v7211
      %v7213 = vrot.slane %v7212, 1
      %v7214 = vadd.f32 %v7212, %v7213
      %7216 = vset.pattern.permute.xlu0 98
      %7217 = vperm.xlu0 %7216, %v7083
      %v7218 = vpop.permute.xlu0 %7217
      %7220 = vset.pattern.permute.xlu0 99
      %7221 = vperm.xlu0 %7220, %v7083
      %v7222 = vpop.permute.xlu0 %7221
      %v7224 = vsel %vm383, %v7218, %v7222
      %7225 = vset.pattern.permute.xlu0 97
      %7226 = vperm.xlu0 %7225, %v7083
      %v7227 = vpop.permute.xlu0 %7226
      %v7229 = vsel %vm382, %v7227, %v7224
      %7230 = vset.pattern.permute.xlu0 96
      %7231 = vperm.xlu0 %7230, %v7083
      %v7232 = vpop.permute.xlu0 %7231
      %v7234 = vsel %vm381, %v7232, %v7229
      %v7235 = vxor.u32 %v7234, 2147483648
      %v7236 = vmul.f32 %v7235, 1.442695
      %v7237 = vpow.pop %v7236
      %v7238 = vadd.f32 %v7237, 1.0
      %v7239 = vrcp.pop %v7238
      %v7240 = vmul.f32 1.0, %v7239
      %v7241 = vmul.f32 %v7240, %v7214
      %7243 = vset.pattern.permute.xlu0 0
      %7244 = vperm.xlu0 %7243, %v7174
      %v7245 = vpop.permute.xlu0 %7244
      %7248 = vset.pattern.permute.xlu0 0
      %7249 = vperm.xlu0 %7248, %v7175
      %v7250 = vpop.permute.xlu0 %7249
      %7253 = vset.pattern.permute.xlu0 0
      %7254 = vperm.xlu0 %7253, %v7176
      %v7255 = vpop.permute.xlu0 %7254
      %7258 = vset.pattern.permute.xlu0 0
      %7259 = vperm.xlu0 %7258, %v7177
      %v7260 = vpop.permute.xlu0 %7259
      %v7262 = vmul.f32 %v7245, %v7241
      %v7263 = vmul.f32 %v7250, %v7241
      %v7264 = vmul.f32 %v7255, %v7241
      %v7265 = vmul.f32 %v7260, %v7241
      %v7266 = vadd.f32 %v430, %v7262
      %v7267 = vadd.f32 %v431, %v7263
      %v7268 = vadd.f32 %v432, %v7264
      %v7269 = vadd.f32 %v433, %v7265
      %7271 = vrot.lane.b32.xlu0 %v7241, 96
      %v7272 = vpop.permute.xlu0 %7271
      %v7274 = vsel %vm515, %v7272, 0.0
      %7275 = vadd.xlane.f32.xlu0 %v7274
      %v7276 = vpop.xlane.xlu0 %7275
      %v7277 = vmul.f32 %v7174, %v7276
      %v7278 = vmul.f32 %v7175, %v7276
      %v7279 = vmul.f32 %v7176, %v7276
      %v7280 = vmul.f32 %v7177, %v7276
      %v7281 = vadd.f32 %v7017, %v7277
      %v7282 = vadd.f32 %v7020, %v7278
      %v7283 = vadd.f32 %v7023, %v7279
      %v7284 = vadd.f32 %v7026, %v7280
      %7285 = vrot.lane.b32.xlu0 %v7241, 64
      %v7286 = vpop.permute.xlu0 %7285
      %v7288 = vsel %vm515, %v7286, 0.0
      %7289 = vadd.xlane.f32.xlu0 %v7288
      %v7290 = vpop.xlane.xlu0 %7289
      %v7291 = vmul.f32 %v7174, %v7290
      %v7292 = vmul.f32 %v7175, %v7290
      %v7293 = vmul.f32 %v7176, %v7290
      %v7294 = vmul.f32 %v7177, %v7290
      %v7295 = vadd.f32 %v7041, %v7291
      %v7296 = vadd.f32 %v7044, %v7292
      %v7297 = vadd.f32 %v7047, %v7293
      %v7298 = vadd.f32 %v7050, %v7294
      %7299 = vset.pattern.permute.xlu0 1
      %7300 = vperm.xlu0 %7299, %v6995
      %v7301 = vpop.permute.xlu0 %7300
      %7303 = vset.pattern.permute.xlu0 1
      %7304 = vperm.xlu0 %7303, %v6996
      %v7305 = vpop.permute.xlu0 %7304
      %7307 = vset.pattern.permute.xlu0 1
      %7308 = vperm.xlu0 %7307, %v6997
      %v7309 = vpop.permute.xlu0 %7308
      %7311 = vset.pattern.permute.xlu0 1
      %7312 = vperm.xlu0 %7311, %v6998
      %v7313 = vpop.permute.xlu0 %7312
      %v7315 = vmul.f32 %v7301, %v7266
      %v7316 = vmul.f32 %v7305, %v7267
      %v7317 = vmul.f32 %v7309, %v7268
      %v7318 = vmul.f32 %v7313, %v7269
      %v7319 = vadd.f32 %v7315, %v7316
      %v7320 = vadd.f32 %v7319, %v7317
      %v7321 = vadd.f32 %v7320, %v7318
      %v7322 = vrot.slane %v7321, 4
      %v7323 = vadd.f32 %v7321, %v7322
      %v7324 = vrot.slane %v7323, 2
      %v7325 = vadd.f32 %v7323, %v7324
      %v7326 = vrot.slane %v7325, 1
      %v7327 = vadd.f32 %v7325, %v7326
      %7332 = vrot.lane.b32.xlu0 %v7281, 1
      %v7333 = vpop.permute.xlu0 %7332
      %7334 = vrot.lane.b32.xlu0 %v7282, 1
      %v7335 = vpop.permute.xlu0 %7334
      %7336 = vrot.lane.b32.xlu0 %v7283, 1
      %v7337 = vpop.permute.xlu0 %7336
      %7338 = vrot.lane.b32.xlu0 %v7284, 1
      %v7339 = vpop.permute.xlu0 %7338
      %v7344 = vmul.f32 %v6995, %v7333
      %v7345 = vmul.f32 %v6996, %v7335
      %v7346 = vmul.f32 %v6997, %v7337
      %v7347 = vmul.f32 %v6998, %v7339
      %v7348 = vsel %vm850, %v7344, -inf
      %v7349 = vsel %vm850, %v7345, -inf
      %v7350 = vsel %vm850, %v7346, -inf
      %v7351 = vsel %vm850, %v7347, -inf
      %v7352 = vmax.f32 %v7348, %v7349
      %v7353 = vmax.f32 %v7350, %v7351
      %v7354 = vmax.f32 %v7352, %v7353
      %v7355 = vrot.slane %v7354, 4
      %v7356 = vmax.f32 %v7354, %v7355
      %v7357 = vrot.slane %v7356, 2
      %v7358 = vmax.f32 %v7356, %v7357
      %v7359 = vrot.slane %v7358, 1
      %v7360 = vmax.f32 %v7358, %v7359
      %v7361 = vsub.f32 %v7344, %v7360
      %v7362 = vsub.f32 %v7345, %v7360
      %v7363 = vsub.f32 %v7346, %v7360
      %v7364 = vsub.f32 %v7347, %v7360
      %v7365 = vmul.f32 %v7361, 1.442695
      %v7366 = vpow.pop %v7365
      %v7367 = vmul.f32 %v7362, 1.442695
      %v7368 = vpow.pop %v7367
      %v7369 = vmul.f32 %v7363, 1.442695
      %v7370 = vpow.pop %v7369
      %v7371 = vmul.f32 %v7364, 1.442695
      %v7372 = vpow.pop %v7371
      %v7373 = vsel %vm850, %v7366, 0.0
      %v7374 = vsel %vm850, %v7368, 0.0
      %v7375 = vadd.f32 %v7373, %v7374
      %v7376 = vsel %vm850, %v7370, 0.0
      %v7377 = vadd.f32 %v7375, %v7376
      %v7378 = vsel %vm850, %v7372, 0.0
      %v7379 = vadd.f32 %v7377, %v7378
      %v7380 = vrot.slane %v7379, 4
      %v7381 = vadd.f32 %v7379, %v7380
      %v7382 = vrot.slane %v7381, 2
      %v7383 = vadd.f32 %v7381, %v7382
      %v7384 = vrot.slane %v7383, 1
      %v7385 = vadd.f32 %v7383, %v7384
      %v7386 = vrcp.pop %v7385
      %v7387 = vmul.f32 %v7366, %v7386
      %v7388 = vmul.f32 %v7368, %v7386
      %v7389 = vmul.f32 %v7370, %v7386
      %v7390 = vmul.f32 %v7372, %v7386
      %7395 = vrot.lane.b32.xlu0 %v7295, 1
      %v7396 = vpop.permute.xlu0 %7395
      %7397 = vrot.lane.b32.xlu0 %v7296, 1
      %v7398 = vpop.permute.xlu0 %7397
      %7399 = vrot.lane.b32.xlu0 %v7297, 1
      %v7400 = vpop.permute.xlu0 %7399
      %7401 = vrot.lane.b32.xlu0 %v7298, 1
      %v7402 = vpop.permute.xlu0 %7401
      %v7407 = vmul.f32 %v6995, %v7396
      %v7408 = vmul.f32 %v6996, %v7398
      %v7409 = vmul.f32 %v6997, %v7400
      %v7410 = vmul.f32 %v6998, %v7402
      %v7411 = vsel %vm850, %v7407, -inf
      %v7412 = vsel %vm850, %v7408, -inf
      %v7413 = vsel %vm850, %v7409, -inf
      %v7414 = vsel %vm850, %v7410, -inf
      %v7415 = vmax.f32 %v7411, %v7412
      %v7416 = vmax.f32 %v7413, %v7414
      %v7417 = vmax.f32 %v7415, %v7416
      %v7418 = vrot.slane %v7417, 4
      %v7419 = vmax.f32 %v7417, %v7418
      %v7420 = vrot.slane %v7419, 2
      %v7421 = vmax.f32 %v7419, %v7420
      %v7422 = vrot.slane %v7421, 1
      %v7423 = vmax.f32 %v7421, %v7422
      %v7424 = vsub.f32 %v7407, %v7423
      %v7425 = vsub.f32 %v7408, %v7423
      %v7426 = vsub.f32 %v7409, %v7423
      %v7427 = vsub.f32 %v7410, %v7423
      %v7428 = vmul.f32 %v7424, 1.442695
      %v7429 = vpow.pop %v7428
      %v7430 = vmul.f32 %v7425, 1.442695
      %v7431 = vpow.pop %v7430
      %v7432 = vmul.f32 %v7426, 1.442695
      %v7433 = vpow.pop %v7432
      %v7434 = vmul.f32 %v7427, 1.442695
      %v7435 = vpow.pop %v7434
      %v7436 = vsel %vm850, %v7429, 0.0
      %v7437 = vsel %vm850, %v7431, 0.0
      %v7438 = vadd.f32 %v7436, %v7437
      %v7439 = vsel %vm850, %v7433, 0.0
      %v7440 = vadd.f32 %v7438, %v7439
      %v7441 = vsel %vm850, %v7435, 0.0
      %v7442 = vadd.f32 %v7440, %v7441
      %v7443 = vrot.slane %v7442, 4
      %v7444 = vadd.f32 %v7442, %v7443
      %v7445 = vrot.slane %v7444, 2
      %v7446 = vadd.f32 %v7444, %v7445
      %v7447 = vrot.slane %v7446, 1
      %v7448 = vadd.f32 %v7446, %v7447
      %v7449 = vrcp.pop %v7448
      %v7450 = vmul.f32 %v7429, %v7449
      %v7451 = vmul.f32 %v7431, %v7449
      %v7452 = vmul.f32 %v7433, %v7449
      %v7453 = vmul.f32 %v7435, %v7449
      %v7454 = vsub.f32 %v7387, %v7450
      %v7455 = vsub.f32 %v7388, %v7451
      %v7456 = vsub.f32 %v7389, %v7452
      %v7457 = vsub.f32 %v7390, %v7453
      %7459 = vset.pattern.permute.xlu0 1
      %7460 = vperm.xlu0 %7459, %v7454
      %v7461 = vpop.permute.xlu0 %7460
      %7464 = vset.pattern.permute.xlu0 1
      %7465 = vperm.xlu0 %7464, %v7455
      %v7466 = vpop.permute.xlu0 %7465
      %7469 = vset.pattern.permute.xlu0 1
      %7470 = vperm.xlu0 %7469, %v7456
      %v7471 = vpop.permute.xlu0 %7470
      %7474 = vset.pattern.permute.xlu0 1
      %7475 = vperm.xlu0 %7474, %v7457
      %v7476 = vpop.permute.xlu0 %7475
      %v7478 = vmul.f32 %v7461, %v7266
      %v7479 = vmul.f32 %v7466, %v7267
      %v7480 = vmul.f32 %v7471, %v7268
      %v7481 = vmul.f32 %v7476, %v7269
      %v7482 = vadd.f32 %v7478, %v7479
      %v7483 = vadd.f32 %v7482, %v7480
      %v7484 = vadd.f32 %v7483, %v7481
      %v7485 = vrot.slane %v7484, 4
      %v7486 = vadd.f32 %v7484, %v7485
      %v7487 = vrot.slane %v7486, 2
      %v7488 = vadd.f32 %v7486, %v7487
      %v7489 = vrot.slane %v7488, 1
      %v7490 = vadd.f32 %v7488, %v7489
      %7492 = vset.pattern.permute.xlu0 98
      %7493 = vperm.xlu0 %7492, %v7327
      %v7494 = vpop.permute.xlu0 %7493
      %7496 = vset.pattern.permute.xlu0 99
      %7497 = vperm.xlu0 %7496, %v7327
      %v7498 = vpop.permute.xlu0 %7497
      %v7500 = vsel %vm383, %v7494, %v7498
      %7501 = vset.pattern.permute.xlu0 97
      %7502 = vperm.xlu0 %7501, %v7327
      %v7503 = vpop.permute.xlu0 %7502
      %v7505 = vsel %vm382, %v7503, %v7500
      %7506 = vset.pattern.permute.xlu0 96
      %7507 = vperm.xlu0 %7506, %v7327
      %v7508 = vpop.permute.xlu0 %7507
      %v7510 = vsel %vm381, %v7508, %v7505
      %v7511 = vxor.u32 %v7510, 2147483648
      %v7512 = vmul.f32 %v7511, 1.442695
      %v7513 = vpow.pop %v7512
      %v7514 = vadd.f32 %v7513, 1.0
      %v7515 = vrcp.pop %v7514
      %v7516 = vmul.f32 1.0, %v7515
      %v7517 = vmul.f32 %v7516, %v7490
      %7519 = vset.pattern.permute.xlu0 1
      %7520 = vperm.xlu0 %7519, %v7450
      %v7521 = vpop.permute.xlu0 %7520
      %7524 = vset.pattern.permute.xlu0 1
      %7525 = vperm.xlu0 %7524, %v7451
      %v7526 = vpop.permute.xlu0 %7525
      %7529 = vset.pattern.permute.xlu0 1
      %7530 = vperm.xlu0 %7529, %v7452
      %v7531 = vpop.permute.xlu0 %7530
      %7534 = vset.pattern.permute.xlu0 1
      %7535 = vperm.xlu0 %7534, %v7453
      %v7536 = vpop.permute.xlu0 %7535
      %v7538 = vmul.f32 %v7521, %v7517
      %v7539 = vmul.f32 %v7526, %v7517
      %v7540 = vmul.f32 %v7531, %v7517
      %v7541 = vmul.f32 %v7536, %v7517
      %v7542 = vadd.f32 %v7266, %v7538
      %v7543 = vadd.f32 %v7267, %v7539
      %v7544 = vadd.f32 %v7268, %v7540
      %v7545 = vadd.f32 %v7269, %v7541
      %7547 = vrot.lane.b32.xlu0 %v7517, 96
      %v7548 = vpop.permute.xlu0 %7547
      %v7550 = vsel %vm515, %v7548, 0.0
      %7551 = vadd.xlane.f32.xlu0 %v7550
      %v7552 = vpop.xlane.xlu0 %7551
      %v7553 = vmul.f32 %v7450, %v7552
      %v7554 = vmul.f32 %v7451, %v7552
      %v7555 = vmul.f32 %v7452, %v7552
      %v7556 = vmul.f32 %v7453, %v7552
      %7561 = vrot.lane.b32.xlu0 %v7553, 127
      %v7562 = vpop.permute.xlu0 %7561
      %7563 = vrot.lane.b32.xlu0 %v7554, 127
      %v7564 = vpop.permute.xlu0 %7563
      %7565 = vrot.lane.b32.xlu0 %v7555, 127
      %v7566 = vpop.permute.xlu0 %7565
      %7567 = vrot.lane.b32.xlu0 %v7556, 127
      %v7568 = vpop.permute.xlu0 %7567
      %v7573 = vadd.f32 %v7281, %v7562
      %v7574 = vadd.f32 %v7282, %v7564
      %v7575 = vadd.f32 %v7283, %v7566
      %v7576 = vadd.f32 %v7284, %v7568
      %7577 = vrot.lane.b32.xlu0 %v7517, 64
      %v7578 = vpop.permute.xlu0 %7577
      %v7580 = vsel %vm515, %v7578, 0.0
      %7581 = vadd.xlane.f32.xlu0 %v7580
      %v7582 = vpop.xlane.xlu0 %7581
      %v7583 = vmul.f32 %v7450, %v7582
      %v7584 = vmul.f32 %v7451, %v7582
      %v7585 = vmul.f32 %v7452, %v7582
      %v7586 = vmul.f32 %v7453, %v7582
      %7591 = vrot.lane.b32.xlu0 %v7583, 127
      %v7592 = vpop.permute.xlu0 %7591
      %7593 = vrot.lane.b32.xlu0 %v7584, 127
      %v7594 = vpop.permute.xlu0 %7593
      %7595 = vrot.lane.b32.xlu0 %v7585, 127
      %v7596 = vpop.permute.xlu0 %7595
      %7597 = vrot.lane.b32.xlu0 %v7586, 127
      %v7598 = vpop.permute.xlu0 %7597
      %v7603 = vadd.f32 %v7295, %v7592
      %v7604 = vadd.f32 %v7296, %v7594
      %v7605 = vadd.f32 %v7297, %v7596
      %v7606 = vadd.f32 %v7298, %v7598
      %7607 = vset.pattern.permute.xlu0 2
      %7608 = vperm.xlu0 %7607, %v6995
      %v7609 = vpop.permute.xlu0 %7608
      %7611 = vset.pattern.permute.xlu0 2
      %7612 = vperm.xlu0 %7611, %v6996
      %v7613 = vpop.permute.xlu0 %7612
      %7615 = vset.pattern.permute.xlu0 2
      %7616 = vperm.xlu0 %7615, %v6997
      %v7617 = vpop.permute.xlu0 %7616
      %7619 = vset.pattern.permute.xlu0 2
      %7620 = vperm.xlu0 %7619, %v6998
      %v7621 = vpop.permute.xlu0 %7620
      %v7623 = vmul.f32 %v7609, %v7542
      %v7624 = vmul.f32 %v7613, %v7543
      %v7625 = vmul.f32 %v7617, %v7544
      %v7626 = vmul.f32 %v7621, %v7545
      %v7627 = vadd.f32 %v7623, %v7624
      %v7628 = vadd.f32 %v7627, %v7625
      %v7629 = vadd.f32 %v7628, %v7626
      %v7630 = vrot.slane %v7629, 4
      %v7631 = vadd.f32 %v7629, %v7630
      %v7632 = vrot.slane %v7631, 2
      %v7633 = vadd.f32 %v7631, %v7632
      %v7634 = vrot.slane %v7633, 1
      %v7635 = vadd.f32 %v7633, %v7634
      %7640 = vrot.lane.b32.xlu0 %v7573, 2
      %v7641 = vpop.permute.xlu0 %7640
      %7642 = vrot.lane.b32.xlu0 %v7574, 2
      %v7643 = vpop.permute.xlu0 %7642
      %7644 = vrot.lane.b32.xlu0 %v7575, 2
      %v7645 = vpop.permute.xlu0 %7644
      %7646 = vrot.lane.b32.xlu0 %v7576, 2
      %v7647 = vpop.permute.xlu0 %7646
      %v7652 = vmul.f32 %v6995, %v7641
      %v7653 = vmul.f32 %v6996, %v7643
      %v7654 = vmul.f32 %v6997, %v7645
      %v7655 = vmul.f32 %v6998, %v7647
      %v7656 = vsel %vm1159, %v7652, -inf
      %v7657 = vsel %vm1159, %v7653, -inf
      %v7658 = vsel %vm1159, %v7654, -inf
      %v7659 = vsel %vm1159, %v7655, -inf
      %v7660 = vmax.f32 %v7656, %v7657
      %v7661 = vmax.f32 %v7658, %v7659
      %v7662 = vmax.f32 %v7660, %v7661
      %v7663 = vrot.slane %v7662, 4
      %v7664 = vmax.f32 %v7662, %v7663
      %v7665 = vrot.slane %v7664, 2
      %v7666 = vmax.f32 %v7664, %v7665
      %v7667 = vrot.slane %v7666, 1
      %v7668 = vmax.f32 %v7666, %v7667
      %v7669 = vsub.f32 %v7652, %v7668
      %v7670 = vsub.f32 %v7653, %v7668
      %v7671 = vsub.f32 %v7654, %v7668
      %v7672 = vsub.f32 %v7655, %v7668
      %v7673 = vmul.f32 %v7669, 1.442695
      %v7674 = vpow.pop %v7673
      %v7675 = vmul.f32 %v7670, 1.442695
      %v7676 = vpow.pop %v7675
      %v7677 = vmul.f32 %v7671, 1.442695
      %v7678 = vpow.pop %v7677
      %v7679 = vmul.f32 %v7672, 1.442695
      %v7680 = vpow.pop %v7679
      %v7681 = vsel %vm1159, %v7674, 0.0
      %v7682 = vsel %vm1159, %v7676, 0.0
      %v7683 = vadd.f32 %v7681, %v7682
      %v7684 = vsel %vm1159, %v7678, 0.0
      %v7685 = vadd.f32 %v7683, %v7684
      %v7686 = vsel %vm1159, %v7680, 0.0
      %v7687 = vadd.f32 %v7685, %v7686
      %v7688 = vrot.slane %v7687, 4
      %v7689 = vadd.f32 %v7687, %v7688
      %v7690 = vrot.slane %v7689, 2
      %v7691 = vadd.f32 %v7689, %v7690
      %v7692 = vrot.slane %v7691, 1
      %v7693 = vadd.f32 %v7691, %v7692
      %v7694 = vrcp.pop %v7693
      %v7695 = vmul.f32 %v7674, %v7694
      %v7696 = vmul.f32 %v7676, %v7694
      %v7697 = vmul.f32 %v7678, %v7694
      %v7698 = vmul.f32 %v7680, %v7694
      %7703 = vrot.lane.b32.xlu0 %v7603, 2
      %v7704 = vpop.permute.xlu0 %7703
      %7705 = vrot.lane.b32.xlu0 %v7604, 2
      %v7706 = vpop.permute.xlu0 %7705
      %7707 = vrot.lane.b32.xlu0 %v7605, 2
      %v7708 = vpop.permute.xlu0 %7707
      %7709 = vrot.lane.b32.xlu0 %v7606, 2
      %v7710 = vpop.permute.xlu0 %7709
      %v7715 = vmul.f32 %v6995, %v7704
      %v7716 = vmul.f32 %v6996, %v7706
      %v7717 = vmul.f32 %v6997, %v7708
      %v7718 = vmul.f32 %v6998, %v7710
      %v7719 = vsel %vm1159, %v7715, -inf
      %v7720 = vsel %vm1159, %v7716, -inf
      %v7721 = vsel %vm1159, %v7717, -inf
      %v7722 = vsel %vm1159, %v7718, -inf
      %v7723 = vmax.f32 %v7719, %v7720
      %v7724 = vmax.f32 %v7721, %v7722
      %v7725 = vmax.f32 %v7723, %v7724
      %v7726 = vrot.slane %v7725, 4
      %v7727 = vmax.f32 %v7725, %v7726
      %v7728 = vrot.slane %v7727, 2
      %v7729 = vmax.f32 %v7727, %v7728
      %v7730 = vrot.slane %v7729, 1
      %v7731 = vmax.f32 %v7729, %v7730
      %v7732 = vsub.f32 %v7715, %v7731
      %v7733 = vsub.f32 %v7716, %v7731
      %v7734 = vsub.f32 %v7717, %v7731
      %v7735 = vsub.f32 %v7718, %v7731
      %v7736 = vmul.f32 %v7732, 1.442695
      %v7737 = vpow.pop %v7736
      %v7738 = vmul.f32 %v7733, 1.442695
      %v7739 = vpow.pop %v7738
      %v7740 = vmul.f32 %v7734, 1.442695
      %v7741 = vpow.pop %v7740
      %v7742 = vmul.f32 %v7735, 1.442695
      %v7743 = vpow.pop %v7742
      %v7744 = vsel %vm1159, %v7737, 0.0
      %v7745 = vsel %vm1159, %v7739, 0.0
      %v7746 = vadd.f32 %v7744, %v7745
      %v7747 = vsel %vm1159, %v7741, 0.0
      %v7748 = vadd.f32 %v7746, %v7747
      %v7749 = vsel %vm1159, %v7743, 0.0
      %v7750 = vadd.f32 %v7748, %v7749
      %v7751 = vrot.slane %v7750, 4
      %v7752 = vadd.f32 %v7750, %v7751
      %v7753 = vrot.slane %v7752, 2
      %v7754 = vadd.f32 %v7752, %v7753
      %v7755 = vrot.slane %v7754, 1
      %v7756 = vadd.f32 %v7754, %v7755
      %v7757 = vrcp.pop %v7756
      %v7758 = vmul.f32 %v7737, %v7757
      %v7759 = vmul.f32 %v7739, %v7757
      %v7760 = vmul.f32 %v7741, %v7757
      %v7761 = vmul.f32 %v7743, %v7757
      %v7762 = vsub.f32 %v7695, %v7758
      %v7763 = vsub.f32 %v7696, %v7759
      %v7764 = vsub.f32 %v7697, %v7760
      %v7765 = vsub.f32 %v7698, %v7761
      %7767 = vset.pattern.permute.xlu0 2
      %7768 = vperm.xlu0 %7767, %v7762
      %v7769 = vpop.permute.xlu0 %7768
      %7772 = vset.pattern.permute.xlu0 2
      %7773 = vperm.xlu0 %7772, %v7763
      %v7774 = vpop.permute.xlu0 %7773
      %7777 = vset.pattern.permute.xlu0 2
      %7778 = vperm.xlu0 %7777, %v7764
      %v7779 = vpop.permute.xlu0 %7778
      %7782 = vset.pattern.permute.xlu0 2
      %7783 = vperm.xlu0 %7782, %v7765
      %v7784 = vpop.permute.xlu0 %7783
      %v7786 = vmul.f32 %v7769, %v7542
      %v7787 = vmul.f32 %v7774, %v7543
      %v7788 = vmul.f32 %v7779, %v7544
      %v7789 = vmul.f32 %v7784, %v7545
      %v7790 = vadd.f32 %v7786, %v7787
      %v7791 = vadd.f32 %v7790, %v7788
      %v7792 = vadd.f32 %v7791, %v7789
      %v7793 = vrot.slane %v7792, 4
      %v7794 = vadd.f32 %v7792, %v7793
      %v7795 = vrot.slane %v7794, 2
      %v7796 = vadd.f32 %v7794, %v7795
      %v7797 = vrot.slane %v7796, 1
      %v7798 = vadd.f32 %v7796, %v7797
      %7800 = vset.pattern.permute.xlu0 98
      %7801 = vperm.xlu0 %7800, %v7635
      %v7802 = vpop.permute.xlu0 %7801
      %7804 = vset.pattern.permute.xlu0 99
      %7805 = vperm.xlu0 %7804, %v7635
      %v7806 = vpop.permute.xlu0 %7805
      %v7808 = vsel %vm383, %v7802, %v7806
      %7809 = vset.pattern.permute.xlu0 97
      %7810 = vperm.xlu0 %7809, %v7635
      %v7811 = vpop.permute.xlu0 %7810
      %v7813 = vsel %vm382, %v7811, %v7808
      %7814 = vset.pattern.permute.xlu0 96
      %7815 = vperm.xlu0 %7814, %v7635
      %v7816 = vpop.permute.xlu0 %7815
      %v7818 = vsel %vm381, %v7816, %v7813
      %v7819 = vxor.u32 %v7818, 2147483648
      %v7820 = vmul.f32 %v7819, 1.442695
      %v7821 = vpow.pop %v7820
      %v7822 = vadd.f32 %v7821, 1.0
      %v7823 = vrcp.pop %v7822
      %v7824 = vmul.f32 1.0, %v7823
      %v7825 = vmul.f32 %v7824, %v7798
      %7827 = vset.pattern.permute.xlu0 2
      %7828 = vperm.xlu0 %7827, %v7758
      %v7829 = vpop.permute.xlu0 %7828
      %7832 = vset.pattern.permute.xlu0 2
      %7833 = vperm.xlu0 %7832, %v7759
      %v7834 = vpop.permute.xlu0 %7833
      %7837 = vset.pattern.permute.xlu0 2
      %7838 = vperm.xlu0 %7837, %v7760
      %v7839 = vpop.permute.xlu0 %7838
      %7842 = vset.pattern.permute.xlu0 2
      %7843 = vperm.xlu0 %7842, %v7761
      %v7844 = vpop.permute.xlu0 %7843
      %v7846 = vmul.f32 %v7829, %v7825
      %v7847 = vmul.f32 %v7834, %v7825
      %v7848 = vmul.f32 %v7839, %v7825
      %v7849 = vmul.f32 %v7844, %v7825
      %v7850 = vadd.f32 %v7542, %v7846
      %v7851 = vadd.f32 %v7543, %v7847
      %v7852 = vadd.f32 %v7544, %v7848
      %v7853 = vadd.f32 %v7545, %v7849
      %7855 = vrot.lane.b32.xlu0 %v7825, 96
      %v7856 = vpop.permute.xlu0 %7855
      %v7858 = vsel %vm515, %v7856, 0.0
      %7859 = vadd.xlane.f32.xlu0 %v7858
      %v7860 = vpop.xlane.xlu0 %7859
      %v7861 = vmul.f32 %v7758, %v7860
      %v7862 = vmul.f32 %v7759, %v7860
      %v7863 = vmul.f32 %v7760, %v7860
      %v7864 = vmul.f32 %v7761, %v7860
      %7869 = vrot.lane.b32.xlu0 %v7861, 126
      %v7870 = vpop.permute.xlu0 %7869
      %7871 = vrot.lane.b32.xlu0 %v7862, 126
      %v7872 = vpop.permute.xlu0 %7871
      %7873 = vrot.lane.b32.xlu0 %v7863, 126
      %v7874 = vpop.permute.xlu0 %7873
      %7875 = vrot.lane.b32.xlu0 %v7864, 126
      %v7876 = vpop.permute.xlu0 %7875
      %v7881 = vadd.f32 %v7573, %v7870
      %v7882 = vadd.f32 %v7574, %v7872
      %v7883 = vadd.f32 %v7575, %v7874
      %v7884 = vadd.f32 %v7576, %v7876
      %7885 = vrot.lane.b32.xlu0 %v7825, 64
      %v7886 = vpop.permute.xlu0 %7885
      %v7888 = vsel %vm515, %v7886, 0.0
      %7889 = vadd.xlane.f32.xlu0 %v7888
      %v7890 = vpop.xlane.xlu0 %7889
      %v7891 = vmul.f32 %v7758, %v7890
      %v7892 = vmul.f32 %v7759, %v7890
      %v7893 = vmul.f32 %v7760, %v7890
      %v7894 = vmul.f32 %v7761, %v7890
      %7899 = vrot.lane.b32.xlu0 %v7891, 126
      %v7900 = vpop.permute.xlu0 %7899
      %7901 = vrot.lane.b32.xlu0 %v7892, 126
      %v7902 = vpop.permute.xlu0 %7901
      %7903 = vrot.lane.b32.xlu0 %v7893, 126
      %v7904 = vpop.permute.xlu0 %7903
      %7905 = vrot.lane.b32.xlu0 %v7894, 126
      %v7906 = vpop.permute.xlu0 %7905
      %v7911 = vadd.f32 %v7603, %v7900
      %v7912 = vadd.f32 %v7604, %v7902
      %v7913 = vadd.f32 %v7605, %v7904
      %v7914 = vadd.f32 %v7606, %v7906
      %7915 = vset.pattern.permute.xlu0 3
      %7916 = vperm.xlu0 %7915, %v6995
      %v7917 = vpop.permute.xlu0 %7916
      %7919 = vset.pattern.permute.xlu0 3
      %7920 = vperm.xlu0 %7919, %v6996
      %v7921 = vpop.permute.xlu0 %7920
      %7923 = vset.pattern.permute.xlu0 3
      %7924 = vperm.xlu0 %7923, %v6997
      %v7925 = vpop.permute.xlu0 %7924
      %7927 = vset.pattern.permute.xlu0 3
      %7928 = vperm.xlu0 %7927, %v6998
      %v7929 = vpop.permute.xlu0 %7928
      %v7931 = vmul.f32 %v7917, %v7850
      %v7932 = vmul.f32 %v7921, %v7851
      %v7933 = vmul.f32 %v7925, %v7852
      %v7934 = vmul.f32 %v7929, %v7853
      %v7935 = vadd.f32 %v7931, %v7932
      %v7936 = vadd.f32 %v7935, %v7933
      %v7937 = vadd.f32 %v7936, %v7934
      %v7938 = vrot.slane %v7937, 4
      %v7939 = vadd.f32 %v7937, %v7938
      %v7940 = vrot.slane %v7939, 2
      %v7941 = vadd.f32 %v7939, %v7940
      %v7942 = vrot.slane %v7941, 1
      %v7943 = vadd.f32 %v7941, %v7942
      %7948 = vrot.lane.b32.xlu0 %v7881, 3
      %v7949 = vpop.permute.xlu0 %7948
      %7950 = vrot.lane.b32.xlu0 %v7882, 3
      %v7951 = vpop.permute.xlu0 %7950
      %7952 = vrot.lane.b32.xlu0 %v7883, 3
      %v7953 = vpop.permute.xlu0 %7952
      %7954 = vrot.lane.b32.xlu0 %v7884, 3
      %v7955 = vpop.permute.xlu0 %7954
      %v7960 = vmul.f32 %v6995, %v7949
      %v7961 = vmul.f32 %v6996, %v7951
      %v7962 = vmul.f32 %v6997, %v7953
      %v7963 = vmul.f32 %v6998, %v7955
      %v7964 = vsel %vm1468, %v7960, -inf
      %v7965 = vsel %vm1468, %v7961, -inf
      %v7966 = vsel %vm1468, %v7962, -inf
      %v7967 = vsel %vm1468, %v7963, -inf
      %v7968 = vmax.f32 %v7964, %v7965
      %v7969 = vmax.f32 %v7966, %v7967
      %v7970 = vmax.f32 %v7968, %v7969
      %v7971 = vrot.slane %v7970, 4
      %v7972 = vmax.f32 %v7970, %v7971
      %v7973 = vrot.slane %v7972, 2
      %v7974 = vmax.f32 %v7972, %v7973
      %v7975 = vrot.slane %v7974, 1
      %v7976 = vmax.f32 %v7974, %v7975
      %v7977 = vsub.f32 %v7960, %v7976
      %v7978 = vsub.f32 %v7961, %v7976
      %v7979 = vsub.f32 %v7962, %v7976
      %v7980 = vsub.f32 %v7963, %v7976
      %v7981 = vmul.f32 %v7977, 1.442695
      %v7982 = vpow.pop %v7981
      %v7983 = vmul.f32 %v7978, 1.442695
      %v7984 = vpow.pop %v7983
      %v7985 = vmul.f32 %v7979, 1.442695
      %v7986 = vpow.pop %v7985
      %v7987 = vmul.f32 %v7980, 1.442695
      %v7988 = vpow.pop %v7987
      %v7989 = vsel %vm1468, %v7982, 0.0
      %v7990 = vsel %vm1468, %v7984, 0.0
      %v7991 = vadd.f32 %v7989, %v7990
      %v7992 = vsel %vm1468, %v7986, 0.0
      %v7993 = vadd.f32 %v7991, %v7992
      %v7994 = vsel %vm1468, %v7988, 0.0
      %v7995 = vadd.f32 %v7993, %v7994
      %v7996 = vrot.slane %v7995, 4
      %v7997 = vadd.f32 %v7995, %v7996
      %v7998 = vrot.slane %v7997, 2
      %v7999 = vadd.f32 %v7997, %v7998
      %v8000 = vrot.slane %v7999, 1
      %v8001 = vadd.f32 %v7999, %v8000
      %v8002 = vrcp.pop %v8001
      %v8003 = vmul.f32 %v7982, %v8002
      %v8004 = vmul.f32 %v7984, %v8002
      %v8005 = vmul.f32 %v7986, %v8002
      %v8006 = vmul.f32 %v7988, %v8002
      %8011 = vrot.lane.b32.xlu0 %v7911, 3
      %v8012 = vpop.permute.xlu0 %8011
      %8013 = vrot.lane.b32.xlu0 %v7912, 3
      %v8014 = vpop.permute.xlu0 %8013
      %8015 = vrot.lane.b32.xlu0 %v7913, 3
      %v8016 = vpop.permute.xlu0 %8015
      %8017 = vrot.lane.b32.xlu0 %v7914, 3
      %v8018 = vpop.permute.xlu0 %8017
      %v8023 = vmul.f32 %v6995, %v8012
      %v8024 = vmul.f32 %v6996, %v8014
      %v8025 = vmul.f32 %v6997, %v8016
      %v8026 = vmul.f32 %v6998, %v8018
      %v8027 = vsel %vm1468, %v8023, -inf
      %v8028 = vsel %vm1468, %v8024, -inf
      %v8029 = vsel %vm1468, %v8025, -inf
      %v8030 = vsel %vm1468, %v8026, -inf
      %v8031 = vmax.f32 %v8027, %v8028
      %v8032 = vmax.f32 %v8029, %v8030
      %v8033 = vmax.f32 %v8031, %v8032
      %v8034 = vrot.slane %v8033, 4
      %v8035 = vmax.f32 %v8033, %v8034
      %v8036 = vrot.slane %v8035, 2
      %v8037 = vmax.f32 %v8035, %v8036
      %v8038 = vrot.slane %v8037, 1
      %v8039 = vmax.f32 %v8037, %v8038
      %v8040 = vsub.f32 %v8023, %v8039
      %v8041 = vsub.f32 %v8024, %v8039
      %v8042 = vsub.f32 %v8025, %v8039
      %v8043 = vsub.f32 %v8026, %v8039
      %v8044 = vmul.f32 %v8040, 1.442695
      %v8045 = vpow.pop %v8044
      %v8046 = vmul.f32 %v8041, 1.442695
      %v8047 = vpow.pop %v8046
      %v8048 = vmul.f32 %v8042, 1.442695
      %v8049 = vpow.pop %v8048
      %v8050 = vmul.f32 %v8043, 1.442695
      %v8051 = vpow.pop %v8050
      %v8052 = vsel %vm1468, %v8045, 0.0
      %v8053 = vsel %vm1468, %v8047, 0.0
      %v8054 = vadd.f32 %v8052, %v8053
      %v8055 = vsel %vm1468, %v8049, 0.0
      %v8056 = vadd.f32 %v8054, %v8055
      %v8057 = vsel %vm1468, %v8051, 0.0
      %v8058 = vadd.f32 %v8056, %v8057
      %v8059 = vrot.slane %v8058, 4
      %v8060 = vadd.f32 %v8058, %v8059
      %v8061 = vrot.slane %v8060, 2
      %v8062 = vadd.f32 %v8060, %v8061
      %v8063 = vrot.slane %v8062, 1
      %v8064 = vadd.f32 %v8062, %v8063
      %v8065 = vrcp.pop %v8064
      %v8066 = vmul.f32 %v8045, %v8065
      %v8067 = vmul.f32 %v8047, %v8065
      %v8068 = vmul.f32 %v8049, %v8065
      %v8069 = vmul.f32 %v8051, %v8065
      %v8070 = vsub.f32 %v8003, %v8066
      %v8071 = vsub.f32 %v8004, %v8067
      %v8072 = vsub.f32 %v8005, %v8068
      %v8073 = vsub.f32 %v8006, %v8069
      %8075 = vset.pattern.permute.xlu0 3
      %8076 = vperm.xlu0 %8075, %v8070
      %v8077 = vpop.permute.xlu0 %8076
      %8080 = vset.pattern.permute.xlu0 3
      %8081 = vperm.xlu0 %8080, %v8071
      %v8082 = vpop.permute.xlu0 %8081
      %8085 = vset.pattern.permute.xlu0 3
      %8086 = vperm.xlu0 %8085, %v8072
      %v8087 = vpop.permute.xlu0 %8086
      %8090 = vset.pattern.permute.xlu0 3
      %8091 = vperm.xlu0 %8090, %v8073
      %v8092 = vpop.permute.xlu0 %8091
      %v8094 = vmul.f32 %v8077, %v7850
      %v8095 = vmul.f32 %v8082, %v7851
      %v8096 = vmul.f32 %v8087, %v7852
      %v8097 = vmul.f32 %v8092, %v7853
      %v8098 = vadd.f32 %v8094, %v8095
      %v8099 = vadd.f32 %v8098, %v8096
      %v8100 = vadd.f32 %v8099, %v8097
      %v8101 = vrot.slane %v8100, 4
      %v8102 = vadd.f32 %v8100, %v8101
      %v8103 = vrot.slane %v8102, 2
      %v8104 = vadd.f32 %v8102, %v8103
      %v8105 = vrot.slane %v8104, 1
      %v8106 = vadd.f32 %v8104, %v8105
      %8108 = vset.pattern.permute.xlu0 98
      %8109 = vperm.xlu0 %8108, %v7943
      %v8110 = vpop.permute.xlu0 %8109
      %8112 = vset.pattern.permute.xlu0 99
      %8113 = vperm.xlu0 %8112, %v7943
      %v8114 = vpop.permute.xlu0 %8113
      %v8116 = vsel %vm383, %v8110, %v8114
      %8117 = vset.pattern.permute.xlu0 97
      %8118 = vperm.xlu0 %8117, %v7943
      %v8119 = vpop.permute.xlu0 %8118
      %v8121 = vsel %vm382, %v8119, %v8116
      %8122 = vset.pattern.permute.xlu0 96
      %8123 = vperm.xlu0 %8122, %v7943
      %v8124 = vpop.permute.xlu0 %8123
      %v8126 = vsel %vm381, %v8124, %v8121
      %v8127 = vxor.u32 %v8126, 2147483648
      %v8128 = vmul.f32 %v8127, 1.442695
      %v8129 = vpow.pop %v8128
      %v8130 = vadd.f32 %v8129, 1.0
      %v8131 = vrcp.pop %v8130
      %v8132 = vmul.f32 1.0, %v8131
      %v8133 = vmul.f32 %v8132, %v8106
      %8135 = vset.pattern.permute.xlu0 3
      %8136 = vperm.xlu0 %8135, %v8066
      %v8137 = vpop.permute.xlu0 %8136
      %8140 = vset.pattern.permute.xlu0 3
      %8141 = vperm.xlu0 %8140, %v8067
      %v8142 = vpop.permute.xlu0 %8141
      %8145 = vset.pattern.permute.xlu0 3
      %8146 = vperm.xlu0 %8145, %v8068
      %v8147 = vpop.permute.xlu0 %8146
      %8150 = vset.pattern.permute.xlu0 3
      %8151 = vperm.xlu0 %8150, %v8069
      %v8152 = vpop.permute.xlu0 %8151
      %v8154 = vmul.f32 %v8137, %v8133
      %v8155 = vmul.f32 %v8142, %v8133
      %v8156 = vmul.f32 %v8147, %v8133
      %v8157 = vmul.f32 %v8152, %v8133
      %v8158 = vadd.f32 %v7850, %v8154
      %v8159 = vadd.f32 %v7851, %v8155
      %v8160 = vadd.f32 %v7852, %v8156
      %v8161 = vadd.f32 %v7853, %v8157
      %8163 = vrot.lane.b32.xlu0 %v8133, 96
      %v8164 = vpop.permute.xlu0 %8163
      %v8166 = vsel %vm515, %v8164, 0.0
      %8167 = vadd.xlane.f32.xlu0 %v8166
      %v8168 = vpop.xlane.xlu0 %8167
      %v8169 = vmul.f32 %v8066, %v8168
      %v8170 = vmul.f32 %v8067, %v8168
      %v8171 = vmul.f32 %v8068, %v8168
      %v8172 = vmul.f32 %v8069, %v8168
      %8177 = vrot.lane.b32.xlu0 %v8169, 125
      %v8178 = vpop.permute.xlu0 %8177
      %8179 = vrot.lane.b32.xlu0 %v8170, 125
      %v8180 = vpop.permute.xlu0 %8179
      %8181 = vrot.lane.b32.xlu0 %v8171, 125
      %v8182 = vpop.permute.xlu0 %8181
      %8183 = vrot.lane.b32.xlu0 %v8172, 125
      %v8184 = vpop.permute.xlu0 %8183
      %v8189 = vadd.f32 %v7881, %v8178
      %v8190 = vadd.f32 %v7882, %v8180
      %v8191 = vadd.f32 %v7883, %v8182
      %v8192 = vadd.f32 %v7884, %v8184
      %8193 = vrot.lane.b32.xlu0 %v8133, 64
      %v8194 = vpop.permute.xlu0 %8193
      %v8196 = vsel %vm515, %v8194, 0.0
      %8197 = vadd.xlane.f32.xlu0 %v8196
      %v8198 = vpop.xlane.xlu0 %8197
      %v8199 = vmul.f32 %v8066, %v8198
      %v8200 = vmul.f32 %v8067, %v8198
      %v8201 = vmul.f32 %v8068, %v8198
      %v8202 = vmul.f32 %v8069, %v8198
      %8207 = vrot.lane.b32.xlu0 %v8199, 125
      %v8208 = vpop.permute.xlu0 %8207
      %8209 = vrot.lane.b32.xlu0 %v8200, 125
      %v8210 = vpop.permute.xlu0 %8209
      %8211 = vrot.lane.b32.xlu0 %v8201, 125
      %v8212 = vpop.permute.xlu0 %8211
      %8213 = vrot.lane.b32.xlu0 %v8202, 125
      %v8214 = vpop.permute.xlu0 %8213
      %v8219 = vadd.f32 %v7911, %v8208
      %v8220 = vadd.f32 %v7912, %v8210
      %v8221 = vadd.f32 %v7913, %v8212
      %v8222 = vadd.f32 %v7914, %v8214
      %8223 = vset.pattern.permute.xlu0 4
      %8224 = vperm.xlu0 %8223, %v6995
      %v8225 = vpop.permute.xlu0 %8224
      %8227 = vset.pattern.permute.xlu0 4
      %8228 = vperm.xlu0 %8227, %v6996
      %v8229 = vpop.permute.xlu0 %8228
      %8231 = vset.pattern.permute.xlu0 4
      %8232 = vperm.xlu0 %8231, %v6997
      %v8233 = vpop.permute.xlu0 %8232
      %8235 = vset.pattern.permute.xlu0 4
      %8236 = vperm.xlu0 %8235, %v6998
      %v8237 = vpop.permute.xlu0 %8236
      %v8239 = vmul.f32 %v8225, %v8158
      %v8240 = vmul.f32 %v8229, %v8159
      %v8241 = vmul.f32 %v8233, %v8160
      %v8242 = vmul.f32 %v8237, %v8161
      %v8243 = vadd.f32 %v8239, %v8240
      %v8244 = vadd.f32 %v8243, %v8241
      %v8245 = vadd.f32 %v8244, %v8242
      %v8246 = vrot.slane %v8245, 4
      %v8247 = vadd.f32 %v8245, %v8246
      %v8248 = vrot.slane %v8247, 2
      %v8249 = vadd.f32 %v8247, %v8248
      %v8250 = vrot.slane %v8249, 1
      %v8251 = vadd.f32 %v8249, %v8250
      %8256 = vrot.lane.b32.xlu0 %v8189, 4
      %v8257 = vpop.permute.xlu0 %8256
      %8258 = vrot.lane.b32.xlu0 %v8190, 4
      %v8259 = vpop.permute.xlu0 %8258
      %8260 = vrot.lane.b32.xlu0 %v8191, 4
      %v8261 = vpop.permute.xlu0 %8260
      %8262 = vrot.lane.b32.xlu0 %v8192, 4
      %v8263 = vpop.permute.xlu0 %8262
      %v8268 = vmul.f32 %v6995, %v8257
      %v8269 = vmul.f32 %v6996, %v8259
      %v8270 = vmul.f32 %v6997, %v8261
      %v8271 = vmul.f32 %v6998, %v8263
      %v8272 = vsel %vm1777, %v8268, -inf
      %v8273 = vsel %vm1777, %v8269, -inf
      %v8274 = vsel %vm1777, %v8270, -inf
      %v8275 = vsel %vm1777, %v8271, -inf
      %v8276 = vmax.f32 %v8272, %v8273
      %v8277 = vmax.f32 %v8274, %v8275
      %v8278 = vmax.f32 %v8276, %v8277
      %v8279 = vrot.slane %v8278, 4
      %v8280 = vmax.f32 %v8278, %v8279
      %v8281 = vrot.slane %v8280, 2
      %v8282 = vmax.f32 %v8280, %v8281
      %v8283 = vrot.slane %v8282, 1
      %v8284 = vmax.f32 %v8282, %v8283
      %v8285 = vsub.f32 %v8268, %v8284
      %v8286 = vsub.f32 %v8269, %v8284
      %v8287 = vsub.f32 %v8270, %v8284
      %v8288 = vsub.f32 %v8271, %v8284
      %v8289 = vmul.f32 %v8285, 1.442695
      %v8290 = vpow.pop %v8289
      %v8291 = vmul.f32 %v8286, 1.442695
      %v8292 = vpow.pop %v8291
      %v8293 = vmul.f32 %v8287, 1.442695
      %v8294 = vpow.pop %v8293
      %v8295 = vmul.f32 %v8288, 1.442695
      %v8296 = vpow.pop %v8295
      %v8297 = vsel %vm1777, %v8290, 0.0
      %v8298 = vsel %vm1777, %v8292, 0.0
      %v8299 = vadd.f32 %v8297, %v8298
      %v8300 = vsel %vm1777, %v8294, 0.0
      %v8301 = vadd.f32 %v8299, %v8300
      %v8302 = vsel %vm1777, %v8296, 0.0
      %v8303 = vadd.f32 %v8301, %v8302
      %v8304 = vrot.slane %v8303, 4
      %v8305 = vadd.f32 %v8303, %v8304
      %v8306 = vrot.slane %v8305, 2
      %v8307 = vadd.f32 %v8305, %v8306
      %v8308 = vrot.slane %v8307, 1
      %v8309 = vadd.f32 %v8307, %v8308
      %v8310 = vrcp.pop %v8309
      %v8311 = vmul.f32 %v8290, %v8310
      %v8312 = vmul.f32 %v8292, %v8310
      %v8313 = vmul.f32 %v8294, %v8310
      %v8314 = vmul.f32 %v8296, %v8310
      %8319 = vrot.lane.b32.xlu0 %v8219, 4
      %v8320 = vpop.permute.xlu0 %8319
      %8321 = vrot.lane.b32.xlu0 %v8220, 4
      %v8322 = vpop.permute.xlu0 %8321
      %8323 = vrot.lane.b32.xlu0 %v8221, 4
      %v8324 = vpop.permute.xlu0 %8323
      %8325 = vrot.lane.b32.xlu0 %v8222, 4
      %v8326 = vpop.permute.xlu0 %8325
      %v8331 = vmul.f32 %v6995, %v8320
      %v8332 = vmul.f32 %v6996, %v8322
      %v8333 = vmul.f32 %v6997, %v8324
      %v8334 = vmul.f32 %v6998, %v8326
      %v8335 = vsel %vm1777, %v8331, -inf
      %v8336 = vsel %vm1777, %v8332, -inf
      %v8337 = vsel %vm1777, %v8333, -inf
      %v8338 = vsel %vm1777, %v8334, -inf
      %v8339 = vmax.f32 %v8335, %v8336
      %v8340 = vmax.f32 %v8337, %v8338
      %v8341 = vmax.f32 %v8339, %v8340
      %v8342 = vrot.slane %v8341, 4
      %v8343 = vmax.f32 %v8341, %v8342
      %v8344 = vrot.slane %v8343, 2
      %v8345 = vmax.f32 %v8343, %v8344
      %v8346 = vrot.slane %v8345, 1
      %v8347 = vmax.f32 %v8345, %v8346
      %v8348 = vsub.f32 %v8331, %v8347
      %v8349 = vsub.f32 %v8332, %v8347
      %v8350 = vsub.f32 %v8333, %v8347
      %v8351 = vsub.f32 %v8334, %v8347
      %v8352 = vmul.f32 %v8348, 1.442695
      %v8353 = vpow.pop %v8352
      %v8354 = vmul.f32 %v8349, 1.442695
      %v8355 = vpow.pop %v8354
      %v8356 = vmul.f32 %v8350, 1.442695
      %v8357 = vpow.pop %v8356
      %v8358 = vmul.f32 %v8351, 1.442695
      %v8359 = vpow.pop %v8358
      %v8360 = vsel %vm1777, %v8353, 0.0
      %v8361 = vsel %vm1777, %v8355, 0.0
      %v8362 = vadd.f32 %v8360, %v8361
      %v8363 = vsel %vm1777, %v8357, 0.0
      %v8364 = vadd.f32 %v8362, %v8363
      %v8365 = vsel %vm1777, %v8359, 0.0
      %v8366 = vadd.f32 %v8364, %v8365
      %v8367 = vrot.slane %v8366, 4
      %v8368 = vadd.f32 %v8366, %v8367
      %v8369 = vrot.slane %v8368, 2
      %v8370 = vadd.f32 %v8368, %v8369
      %v8371 = vrot.slane %v8370, 1
      %v8372 = vadd.f32 %v8370, %v8371
      %v8373 = vrcp.pop %v8372
      %v8374 = vmul.f32 %v8353, %v8373
      %v8375 = vmul.f32 %v8355, %v8373
      %v8376 = vmul.f32 %v8357, %v8373
      %v8377 = vmul.f32 %v8359, %v8373
      %v8378 = vsub.f32 %v8311, %v8374
      %v8379 = vsub.f32 %v8312, %v8375
      %v8380 = vsub.f32 %v8313, %v8376
      %v8381 = vsub.f32 %v8314, %v8377
      %8383 = vset.pattern.permute.xlu0 4
      %8384 = vperm.xlu0 %8383, %v8378
      %v8385 = vpop.permute.xlu0 %8384
      %8388 = vset.pattern.permute.xlu0 4
      %8389 = vperm.xlu0 %8388, %v8379
      %v8390 = vpop.permute.xlu0 %8389
      %8393 = vset.pattern.permute.xlu0 4
      %8394 = vperm.xlu0 %8393, %v8380
      %v8395 = vpop.permute.xlu0 %8394
      %8398 = vset.pattern.permute.xlu0 4
      %8399 = vperm.xlu0 %8398, %v8381
      %v8400 = vpop.permute.xlu0 %8399
      %v8402 = vmul.f32 %v8385, %v8158
      %v8403 = vmul.f32 %v8390, %v8159
      %v8404 = vmul.f32 %v8395, %v8160
      %v8405 = vmul.f32 %v8400, %v8161
      %v8406 = vadd.f32 %v8402, %v8403
      %v8407 = vadd.f32 %v8406, %v8404
      %v8408 = vadd.f32 %v8407, %v8405
      %v8409 = vrot.slane %v8408, 4
      %v8410 = vadd.f32 %v8408, %v8409
      %v8411 = vrot.slane %v8410, 2
      %v8412 = vadd.f32 %v8410, %v8411
      %v8413 = vrot.slane %v8412, 1
      %v8414 = vadd.f32 %v8412, %v8413
      %8416 = vset.pattern.permute.xlu0 98
      %8417 = vperm.xlu0 %8416, %v8251
      %v8418 = vpop.permute.xlu0 %8417
      %8420 = vset.pattern.permute.xlu0 99
      %8421 = vperm.xlu0 %8420, %v8251
      %v8422 = vpop.permute.xlu0 %8421
      %v8424 = vsel %vm383, %v8418, %v8422
      %8425 = vset.pattern.permute.xlu0 97
      %8426 = vperm.xlu0 %8425, %v8251
      %v8427 = vpop.permute.xlu0 %8426
      %v8429 = vsel %vm382, %v8427, %v8424
      %8430 = vset.pattern.permute.xlu0 96
      %8431 = vperm.xlu0 %8430, %v8251
      %v8432 = vpop.permute.xlu0 %8431
      %v8434 = vsel %vm381, %v8432, %v8429
      %v8435 = vxor.u32 %v8434, 2147483648
      %v8436 = vmul.f32 %v8435, 1.442695
      %v8437 = vpow.pop %v8436
      %v8438 = vadd.f32 %v8437, 1.0
      %v8439 = vrcp.pop %v8438
      %v8440 = vmul.f32 1.0, %v8439
      %v8441 = vmul.f32 %v8440, %v8414
      %8443 = vset.pattern.permute.xlu0 4
      %8444 = vperm.xlu0 %8443, %v8374
      %v8445 = vpop.permute.xlu0 %8444
      %8448 = vset.pattern.permute.xlu0 4
      %8449 = vperm.xlu0 %8448, %v8375
      %v8450 = vpop.permute.xlu0 %8449
      %8453 = vset.pattern.permute.xlu0 4
      %8454 = vperm.xlu0 %8453, %v8376
      %v8455 = vpop.permute.xlu0 %8454
      %8458 = vset.pattern.permute.xlu0 4
      %8459 = vperm.xlu0 %8458, %v8377
      %v8460 = vpop.permute.xlu0 %8459
      %v8462 = vmul.f32 %v8445, %v8441
      %v8463 = vmul.f32 %v8450, %v8441
      %v8464 = vmul.f32 %v8455, %v8441
      %v8465 = vmul.f32 %v8460, %v8441
      %v8466 = vadd.f32 %v8158, %v8462
      %v8467 = vadd.f32 %v8159, %v8463
      %v8468 = vadd.f32 %v8160, %v8464
      %v8469 = vadd.f32 %v8161, %v8465
      %8471 = vrot.lane.b32.xlu0 %v8441, 96
      %v8472 = vpop.permute.xlu0 %8471
      %v8474 = vsel %vm515, %v8472, 0.0
      %8475 = vadd.xlane.f32.xlu0 %v8474
      %v8476 = vpop.xlane.xlu0 %8475
      %v8477 = vmul.f32 %v8374, %v8476
      %v8478 = vmul.f32 %v8375, %v8476
      %v8479 = vmul.f32 %v8376, %v8476
      %v8480 = vmul.f32 %v8377, %v8476
      %8485 = vrot.lane.b32.xlu0 %v8477, 124
      %v8486 = vpop.permute.xlu0 %8485
      %8487 = vrot.lane.b32.xlu0 %v8478, 124
      %v8488 = vpop.permute.xlu0 %8487
      %8489 = vrot.lane.b32.xlu0 %v8479, 124
      %v8490 = vpop.permute.xlu0 %8489
      %8491 = vrot.lane.b32.xlu0 %v8480, 124
      %v8492 = vpop.permute.xlu0 %8491
      %v8497 = vadd.f32 %v8189, %v8486
      %v8498 = vadd.f32 %v8190, %v8488
      %v8499 = vadd.f32 %v8191, %v8490
      %v8500 = vadd.f32 %v8192, %v8492
      %8501 = vrot.lane.b32.xlu0 %v8441, 64
      %v8502 = vpop.permute.xlu0 %8501
      %v8504 = vsel %vm515, %v8502, 0.0
      %8505 = vadd.xlane.f32.xlu0 %v8504
      %v8506 = vpop.xlane.xlu0 %8505
      %v8507 = vmul.f32 %v8374, %v8506
      %v8508 = vmul.f32 %v8375, %v8506
      %v8509 = vmul.f32 %v8376, %v8506
      %v8510 = vmul.f32 %v8377, %v8506
      %8515 = vrot.lane.b32.xlu0 %v8507, 124
      %v8516 = vpop.permute.xlu0 %8515
      %8517 = vrot.lane.b32.xlu0 %v8508, 124
      %v8518 = vpop.permute.xlu0 %8517
      %8519 = vrot.lane.b32.xlu0 %v8509, 124
      %v8520 = vpop.permute.xlu0 %8519
      %8521 = vrot.lane.b32.xlu0 %v8510, 124
      %v8522 = vpop.permute.xlu0 %8521
      %v8527 = vadd.f32 %v8219, %v8516
      %v8528 = vadd.f32 %v8220, %v8518
      %v8529 = vadd.f32 %v8221, %v8520
      %v8530 = vadd.f32 %v8222, %v8522
      %8531 = vset.pattern.permute.xlu0 5
      %8532 = vperm.xlu0 %8531, %v6995
      %v8533 = vpop.permute.xlu0 %8532
      %8535 = vset.pattern.permute.xlu0 5
      %8536 = vperm.xlu0 %8535, %v6996
      %v8537 = vpop.permute.xlu0 %8536
      %8539 = vset.pattern.permute.xlu0 5
      %8540 = vperm.xlu0 %8539, %v6997
      %v8541 = vpop.permute.xlu0 %8540
      %8543 = vset.pattern.permute.xlu0 5
      %8544 = vperm.xlu0 %8543, %v6998
      %v8545 = vpop.permute.xlu0 %8544
      %v8547 = vmul.f32 %v8533, %v8466
      %v8548 = vmul.f32 %v8537, %v8467
      %v8549 = vmul.f32 %v8541, %v8468
      %v8550 = vmul.f32 %v8545, %v8469
      %v8551 = vadd.f32 %v8547, %v8548
      %v8552 = vadd.f32 %v8551, %v8549
      %v8553 = vadd.f32 %v8552, %v8550
      %v8554 = vrot.slane %v8553, 4
      %v8555 = vadd.f32 %v8553, %v8554
      %v8556 = vrot.slane %v8555, 2
      %v8557 = vadd.f32 %v8555, %v8556
      %v8558 = vrot.slane %v8557, 1
      %v8559 = vadd.f32 %v8557, %v8558
      %8564 = vrot.lane.b32.xlu0 %v8497, 5
      %v8565 = vpop.permute.xlu0 %8564
      %8566 = vrot.lane.b32.xlu0 %v8498, 5
      %v8567 = vpop.permute.xlu0 %8566
      %8568 = vrot.lane.b32.xlu0 %v8499, 5
      %v8569 = vpop.permute.xlu0 %8568
      %8570 = vrot.lane.b32.xlu0 %v8500, 5
      %v8571 = vpop.permute.xlu0 %8570
      %v8576 = vmul.f32 %v6995, %v8565
      %v8577 = vmul.f32 %v6996, %v8567
      %v8578 = vmul.f32 %v6997, %v8569
      %v8579 = vmul.f32 %v6998, %v8571
      %v8580 = vsel %vm2086, %v8576, -inf
      %v8581 = vsel %vm2086, %v8577, -inf
      %v8582 = vsel %vm2086, %v8578, -inf
      %v8583 = vsel %vm2086, %v8579, -inf
      %v8584 = vmax.f32 %v8580, %v8581
      %v8585 = vmax.f32 %v8582, %v8583
      %v8586 = vmax.f32 %v8584, %v8585
      %v8587 = vrot.slane %v8586, 4
      %v8588 = vmax.f32 %v8586, %v8587
      %v8589 = vrot.slane %v8588, 2
      %v8590 = vmax.f32 %v8588, %v8589
      %v8591 = vrot.slane %v8590, 1
      %v8592 = vmax.f32 %v8590, %v8591
      %v8593 = vsub.f32 %v8576, %v8592
      %v8594 = vsub.f32 %v8577, %v8592
      %v8595 = vsub.f32 %v8578, %v8592
      %v8596 = vsub.f32 %v8579, %v8592
      %v8597 = vmul.f32 %v8593, 1.442695
      %v8598 = vpow.pop %v8597
      %v8599 = vmul.f32 %v8594, 1.442695
      %v8600 = vpow.pop %v8599
      %v8601 = vmul.f32 %v8595, 1.442695
      %v8602 = vpow.pop %v8601
      %v8603 = vmul.f32 %v8596, 1.442695
      %v8604 = vpow.pop %v8603
      %v8605 = vsel %vm2086, %v8598, 0.0
      %v8606 = vsel %vm2086, %v8600, 0.0
      %v8607 = vadd.f32 %v8605, %v8606
      %v8608 = vsel %vm2086, %v8602, 0.0
      %v8609 = vadd.f32 %v8607, %v8608
      %v8610 = vsel %vm2086, %v8604, 0.0
      %v8611 = vadd.f32 %v8609, %v8610
      %v8612 = vrot.slane %v8611, 4
      %v8613 = vadd.f32 %v8611, %v8612
      %v8614 = vrot.slane %v8613, 2
      %v8615 = vadd.f32 %v8613, %v8614
      %v8616 = vrot.slane %v8615, 1
      %v8617 = vadd.f32 %v8615, %v8616
      %v8618 = vrcp.pop %v8617
      %v8619 = vmul.f32 %v8598, %v8618
      %v8620 = vmul.f32 %v8600, %v8618
      %v8621 = vmul.f32 %v8602, %v8618
      %v8622 = vmul.f32 %v8604, %v8618
      %8627 = vrot.lane.b32.xlu0 %v8527, 5
      %v8628 = vpop.permute.xlu0 %8627
      %8629 = vrot.lane.b32.xlu0 %v8528, 5
      %v8630 = vpop.permute.xlu0 %8629
      %8631 = vrot.lane.b32.xlu0 %v8529, 5
      %v8632 = vpop.permute.xlu0 %8631
      %8633 = vrot.lane.b32.xlu0 %v8530, 5
      %v8634 = vpop.permute.xlu0 %8633
      %v8639 = vmul.f32 %v6995, %v8628
      %v8640 = vmul.f32 %v6996, %v8630
      %v8641 = vmul.f32 %v6997, %v8632
      %v8642 = vmul.f32 %v6998, %v8634
      %v8643 = vsel %vm2086, %v8639, -inf
      %v8644 = vsel %vm2086, %v8640, -inf
      %v8645 = vsel %vm2086, %v8641, -inf
      %v8646 = vsel %vm2086, %v8642, -inf
      %v8647 = vmax.f32 %v8643, %v8644
      %v8648 = vmax.f32 %v8645, %v8646
      %v8649 = vmax.f32 %v8647, %v8648
      %v8650 = vrot.slane %v8649, 4
      %v8651 = vmax.f32 %v8649, %v8650
      %v8652 = vrot.slane %v8651, 2
      %v8653 = vmax.f32 %v8651, %v8652
      %v8654 = vrot.slane %v8653, 1
      %v8655 = vmax.f32 %v8653, %v8654
      %v8656 = vsub.f32 %v8639, %v8655
      %v8657 = vsub.f32 %v8640, %v8655
      %v8658 = vsub.f32 %v8641, %v8655
      %v8659 = vsub.f32 %v8642, %v8655
      %v8660 = vmul.f32 %v8656, 1.442695
      %v8661 = vpow.pop %v8660
      %v8662 = vmul.f32 %v8657, 1.442695
      %v8663 = vpow.pop %v8662
      %v8664 = vmul.f32 %v8658, 1.442695
      %v8665 = vpow.pop %v8664
      %v8666 = vmul.f32 %v8659, 1.442695
      %v8667 = vpow.pop %v8666
      %v8668 = vsel %vm2086, %v8661, 0.0
      %v8669 = vsel %vm2086, %v8663, 0.0
      %v8670 = vadd.f32 %v8668, %v8669
      %v8671 = vsel %vm2086, %v8665, 0.0
      %v8672 = vadd.f32 %v8670, %v8671
      %v8673 = vsel %vm2086, %v8667, 0.0
      %v8674 = vadd.f32 %v8672, %v8673
      %v8675 = vrot.slane %v8674, 4
      %v8676 = vadd.f32 %v8674, %v8675
      %v8677 = vrot.slane %v8676, 2
      %v8678 = vadd.f32 %v8676, %v8677
      %v8679 = vrot.slane %v8678, 1
      %v8680 = vadd.f32 %v8678, %v8679
      %v8681 = vrcp.pop %v8680
      %v8682 = vmul.f32 %v8661, %v8681
      %v8683 = vmul.f32 %v8663, %v8681
      %v8684 = vmul.f32 %v8665, %v8681
      %v8685 = vmul.f32 %v8667, %v8681
      %v8686 = vsub.f32 %v8619, %v8682
      %v8687 = vsub.f32 %v8620, %v8683
      %v8688 = vsub.f32 %v8621, %v8684
      %v8689 = vsub.f32 %v8622, %v8685
      %8691 = vset.pattern.permute.xlu0 5
      %8692 = vperm.xlu0 %8691, %v8686
      %v8693 = vpop.permute.xlu0 %8692
      %8696 = vset.pattern.permute.xlu0 5
      %8697 = vperm.xlu0 %8696, %v8687
      %v8698 = vpop.permute.xlu0 %8697
      %8701 = vset.pattern.permute.xlu0 5
      %8702 = vperm.xlu0 %8701, %v8688
      %v8703 = vpop.permute.xlu0 %8702
      %8706 = vset.pattern.permute.xlu0 5
      %8707 = vperm.xlu0 %8706, %v8689
      %v8708 = vpop.permute.xlu0 %8707
      %v8710 = vmul.f32 %v8693, %v8466
      %v8711 = vmul.f32 %v8698, %v8467
      %v8712 = vmul.f32 %v8703, %v8468
      %v8713 = vmul.f32 %v8708, %v8469
      %v8714 = vadd.f32 %v8710, %v8711
      %v8715 = vadd.f32 %v8714, %v8712
      %v8716 = vadd.f32 %v8715, %v8713
      %v8717 = vrot.slane %v8716, 4
      %v8718 = vadd.f32 %v8716, %v8717
      %v8719 = vrot.slane %v8718, 2
      %v8720 = vadd.f32 %v8718, %v8719
      %v8721 = vrot.slane %v8720, 1
      %v8722 = vadd.f32 %v8720, %v8721
      %8724 = vset.pattern.permute.xlu0 98
      %8725 = vperm.xlu0 %8724, %v8559
      %v8726 = vpop.permute.xlu0 %8725
      %8728 = vset.pattern.permute.xlu0 99
      %8729 = vperm.xlu0 %8728, %v8559
      %v8730 = vpop.permute.xlu0 %8729
      %v8732 = vsel %vm383, %v8726, %v8730
      %8733 = vset.pattern.permute.xlu0 97
      %8734 = vperm.xlu0 %8733, %v8559
      %v8735 = vpop.permute.xlu0 %8734
      %v8737 = vsel %vm382, %v8735, %v8732
      %8738 = vset.pattern.permute.xlu0 96
      %8739 = vperm.xlu0 %8738, %v8559
      %v8740 = vpop.permute.xlu0 %8739
      %v8742 = vsel %vm381, %v8740, %v8737
      %v8743 = vxor.u32 %v8742, 2147483648
      %v8744 = vmul.f32 %v8743, 1.442695
      %v8745 = vpow.pop %v8744
      %v8746 = vadd.f32 %v8745, 1.0
      %v8747 = vrcp.pop %v8746
      %v8748 = vmul.f32 1.0, %v8747
      %v8749 = vmul.f32 %v8748, %v8722
      %8751 = vset.pattern.permute.xlu0 5
      %8752 = vperm.xlu0 %8751, %v8682
      %v8753 = vpop.permute.xlu0 %8752
      %8756 = vset.pattern.permute.xlu0 5
      %8757 = vperm.xlu0 %8756, %v8683
      %v8758 = vpop.permute.xlu0 %8757
      %8761 = vset.pattern.permute.xlu0 5
      %8762 = vperm.xlu0 %8761, %v8684
      %v8763 = vpop.permute.xlu0 %8762
      %8766 = vset.pattern.permute.xlu0 5
      %8767 = vperm.xlu0 %8766, %v8685
      %v8768 = vpop.permute.xlu0 %8767
      %v8770 = vmul.f32 %v8753, %v8749
      %v8771 = vmul.f32 %v8758, %v8749
      %v8772 = vmul.f32 %v8763, %v8749
      %v8773 = vmul.f32 %v8768, %v8749
      %v8774 = vadd.f32 %v8466, %v8770
      %v8775 = vadd.f32 %v8467, %v8771
      %v8776 = vadd.f32 %v8468, %v8772
      %v8777 = vadd.f32 %v8469, %v8773
      %8779 = vrot.lane.b32.xlu0 %v8749, 96
      %v8780 = vpop.permute.xlu0 %8779
      %v8782 = vsel %vm515, %v8780, 0.0
      %8783 = vadd.xlane.f32.xlu0 %v8782
      %v8784 = vpop.xlane.xlu0 %8783
      %v8785 = vmul.f32 %v8682, %v8784
      %v8786 = vmul.f32 %v8683, %v8784
      %v8787 = vmul.f32 %v8684, %v8784
      %v8788 = vmul.f32 %v8685, %v8784
      %8793 = vrot.lane.b32.xlu0 %v8785, 123
      %v8794 = vpop.permute.xlu0 %8793
      %8795 = vrot.lane.b32.xlu0 %v8786, 123
      %v8796 = vpop.permute.xlu0 %8795
      %8797 = vrot.lane.b32.xlu0 %v8787, 123
      %v8798 = vpop.permute.xlu0 %8797
      %8799 = vrot.lane.b32.xlu0 %v8788, 123
      %v8800 = vpop.permute.xlu0 %8799
      %v8805 = vadd.f32 %v8497, %v8794
      %v8806 = vadd.f32 %v8498, %v8796
      %v8807 = vadd.f32 %v8499, %v8798
      %v8808 = vadd.f32 %v8500, %v8800
      %8809 = vrot.lane.b32.xlu0 %v8749, 64
      %v8810 = vpop.permute.xlu0 %8809
      %v8812 = vsel %vm515, %v8810, 0.0
      %8813 = vadd.xlane.f32.xlu0 %v8812
      %v8814 = vpop.xlane.xlu0 %8813
      %v8815 = vmul.f32 %v8682, %v8814
      %v8816 = vmul.f32 %v8683, %v8814
      %v8817 = vmul.f32 %v8684, %v8814
      %v8818 = vmul.f32 %v8685, %v8814
      %8823 = vrot.lane.b32.xlu0 %v8815, 123
      %v8824 = vpop.permute.xlu0 %8823
      %8825 = vrot.lane.b32.xlu0 %v8816, 123
      %v8826 = vpop.permute.xlu0 %8825
      %8827 = vrot.lane.b32.xlu0 %v8817, 123
      %v8828 = vpop.permute.xlu0 %8827
      %8829 = vrot.lane.b32.xlu0 %v8818, 123
      %v8830 = vpop.permute.xlu0 %8829
      %v8835 = vadd.f32 %v8527, %v8824
      %v8836 = vadd.f32 %v8528, %v8826
      %v8837 = vadd.f32 %v8529, %v8828
      %v8838 = vadd.f32 %v8530, %v8830
      %8839 = vset.pattern.permute.xlu0 6
      %8840 = vperm.xlu0 %8839, %v6995
      %v8841 = vpop.permute.xlu0 %8840
      %8843 = vset.pattern.permute.xlu0 6
      %8844 = vperm.xlu0 %8843, %v6996
      %v8845 = vpop.permute.xlu0 %8844
      %8847 = vset.pattern.permute.xlu0 6
      %8848 = vperm.xlu0 %8847, %v6997
      %v8849 = vpop.permute.xlu0 %8848
      %8851 = vset.pattern.permute.xlu0 6
      %8852 = vperm.xlu0 %8851, %v6998
      %v8853 = vpop.permute.xlu0 %8852
      %v8855 = vmul.f32 %v8841, %v8774
      %v8856 = vmul.f32 %v8845, %v8775
      %v8857 = vmul.f32 %v8849, %v8776
      %v8858 = vmul.f32 %v8853, %v8777
      %v8859 = vadd.f32 %v8855, %v8856
      %v8860 = vadd.f32 %v8859, %v8857
      %v8861 = vadd.f32 %v8860, %v8858
      %v8862 = vrot.slane %v8861, 4
      %v8863 = vadd.f32 %v8861, %v8862
      %v8864 = vrot.slane %v8863, 2
      %v8865 = vadd.f32 %v8863, %v8864
      %v8866 = vrot.slane %v8865, 1
      %v8867 = vadd.f32 %v8865, %v8866
      %8872 = vrot.lane.b32.xlu0 %v8805, 6
      %v8873 = vpop.permute.xlu0 %8872
      %8874 = vrot.lane.b32.xlu0 %v8806, 6
      %v8875 = vpop.permute.xlu0 %8874
      %8876 = vrot.lane.b32.xlu0 %v8807, 6
      %v8877 = vpop.permute.xlu0 %8876
      %8878 = vrot.lane.b32.xlu0 %v8808, 6
      %v8879 = vpop.permute.xlu0 %8878
      %v8884 = vmul.f32 %v6995, %v8873
      %v8885 = vmul.f32 %v6996, %v8875
      %v8886 = vmul.f32 %v6997, %v8877
      %v8887 = vmul.f32 %v6998, %v8879
      %v8888 = vsel %vm2395, %v8884, -inf
      %v8889 = vsel %vm2395, %v8885, -inf
      %v8890 = vsel %vm2395, %v8886, -inf
      %v8891 = vsel %vm2395, %v8887, -inf
      %v8892 = vmax.f32 %v8888, %v8889
      %v8893 = vmax.f32 %v8890, %v8891
      %v8894 = vmax.f32 %v8892, %v8893
      %v8895 = vrot.slane %v8894, 4
      %v8896 = vmax.f32 %v8894, %v8895
      %v8897 = vrot.slane %v8896, 2
      %v8898 = vmax.f32 %v8896, %v8897
      %v8899 = vrot.slane %v8898, 1
      %v8900 = vmax.f32 %v8898, %v8899
      %v8901 = vsub.f32 %v8884, %v8900
      %v8902 = vsub.f32 %v8885, %v8900
      %v8903 = vsub.f32 %v8886, %v8900
      %v8904 = vsub.f32 %v8887, %v8900
      %v8905 = vmul.f32 %v8901, 1.442695
      %v8906 = vpow.pop %v8905
      %v8907 = vmul.f32 %v8902, 1.442695
      %v8908 = vpow.pop %v8907
      %v8909 = vmul.f32 %v8903, 1.442695
      %v8910 = vpow.pop %v8909
      %v8911 = vmul.f32 %v8904, 1.442695
      %v8912 = vpow.pop %v8911
      %v8913 = vsel %vm2395, %v8906, 0.0
      %v8914 = vsel %vm2395, %v8908, 0.0
      %v8915 = vadd.f32 %v8913, %v8914
      %v8916 = vsel %vm2395, %v8910, 0.0
      %v8917 = vadd.f32 %v8915, %v8916
      %v8918 = vsel %vm2395, %v8912, 0.0
      %v8919 = vadd.f32 %v8917, %v8918
      %v8920 = vrot.slane %v8919, 4
      %v8921 = vadd.f32 %v8919, %v8920
      %v8922 = vrot.slane %v8921, 2
      %v8923 = vadd.f32 %v8921, %v8922
      %v8924 = vrot.slane %v8923, 1
      %v8925 = vadd.f32 %v8923, %v8924
      %v8926 = vrcp.pop %v8925
      %v8927 = vmul.f32 %v8906, %v8926
      %v8928 = vmul.f32 %v8908, %v8926
      %v8929 = vmul.f32 %v8910, %v8926
      %v8930 = vmul.f32 %v8912, %v8926
      %8935 = vrot.lane.b32.xlu0 %v8835, 6
      %v8936 = vpop.permute.xlu0 %8935
      %8937 = vrot.lane.b32.xlu0 %v8836, 6
      %v8938 = vpop.permute.xlu0 %8937
      %8939 = vrot.lane.b32.xlu0 %v8837, 6
      %v8940 = vpop.permute.xlu0 %8939
      %8941 = vrot.lane.b32.xlu0 %v8838, 6
      %v8942 = vpop.permute.xlu0 %8941
      %v8947 = vmul.f32 %v6995, %v8936
      %v8948 = vmul.f32 %v6996, %v8938
      %v8949 = vmul.f32 %v6997, %v8940
      %v8950 = vmul.f32 %v6998, %v8942
      %v8951 = vsel %vm2395, %v8947, -inf
      %v8952 = vsel %vm2395, %v8948, -inf
      %v8953 = vsel %vm2395, %v8949, -inf
      %v8954 = vsel %vm2395, %v8950, -inf
      %v8955 = vmax.f32 %v8951, %v8952
      %v8956 = vmax.f32 %v8953, %v8954
      %v8957 = vmax.f32 %v8955, %v8956
      %v8958 = vrot.slane %v8957, 4
      %v8959 = vmax.f32 %v8957, %v8958
      %v8960 = vrot.slane %v8959, 2
      %v8961 = vmax.f32 %v8959, %v8960
      %v8962 = vrot.slane %v8961, 1
      %v8963 = vmax.f32 %v8961, %v8962
      %v8964 = vsub.f32 %v8947, %v8963
      %v8965 = vsub.f32 %v8948, %v8963
      %v8966 = vsub.f32 %v8949, %v8963
      %v8967 = vsub.f32 %v8950, %v8963
      %v8968 = vmul.f32 %v8964, 1.442695
      %v8969 = vpow.pop %v8968
      %v8970 = vmul.f32 %v8965, 1.442695
      %v8971 = vpow.pop %v8970
      %v8972 = vmul.f32 %v8966, 1.442695
      %v8973 = vpow.pop %v8972
      %v8974 = vmul.f32 %v8967, 1.442695
      %v8975 = vpow.pop %v8974
      %v8976 = vsel %vm2395, %v8969, 0.0
      %v8977 = vsel %vm2395, %v8971, 0.0
      %v8978 = vadd.f32 %v8976, %v8977
      %v8979 = vsel %vm2395, %v8973, 0.0
      %v8980 = vadd.f32 %v8978, %v8979
      %v8981 = vsel %vm2395, %v8975, 0.0
      %v8982 = vadd.f32 %v8980, %v8981
      %v8983 = vrot.slane %v8982, 4
      %v8984 = vadd.f32 %v8982, %v8983
      %v8985 = vrot.slane %v8984, 2
      %v8986 = vadd.f32 %v8984, %v8985
      %v8987 = vrot.slane %v8986, 1
      %v8988 = vadd.f32 %v8986, %v8987
      %v8989 = vrcp.pop %v8988
      %v8990 = vmul.f32 %v8969, %v8989
      %v8991 = vmul.f32 %v8971, %v8989
      %v8992 = vmul.f32 %v8973, %v8989
      %v8993 = vmul.f32 %v8975, %v8989
      %v8994 = vsub.f32 %v8927, %v8990
      %v8995 = vsub.f32 %v8928, %v8991
      %v8996 = vsub.f32 %v8929, %v8992
      %v8997 = vsub.f32 %v8930, %v8993
      %8999 = vset.pattern.permute.xlu0 6
      %9000 = vperm.xlu0 %8999, %v8994
      %v9001 = vpop.permute.xlu0 %9000
      %9004 = vset.pattern.permute.xlu0 6
      %9005 = vperm.xlu0 %9004, %v8995
      %v9006 = vpop.permute.xlu0 %9005
      %9009 = vset.pattern.permute.xlu0 6
      %9010 = vperm.xlu0 %9009, %v8996
      %v9011 = vpop.permute.xlu0 %9010
      %9014 = vset.pattern.permute.xlu0 6
      %9015 = vperm.xlu0 %9014, %v8997
      %v9016 = vpop.permute.xlu0 %9015
      %v9018 = vmul.f32 %v9001, %v8774
      %v9019 = vmul.f32 %v9006, %v8775
      %v9020 = vmul.f32 %v9011, %v8776
      %v9021 = vmul.f32 %v9016, %v8777
      %v9022 = vadd.f32 %v9018, %v9019
      %v9023 = vadd.f32 %v9022, %v9020
      %v9024 = vadd.f32 %v9023, %v9021
      %v9025 = vrot.slane %v9024, 4
      %v9026 = vadd.f32 %v9024, %v9025
      %v9027 = vrot.slane %v9026, 2
      %v9028 = vadd.f32 %v9026, %v9027
      %v9029 = vrot.slane %v9028, 1
      %v9030 = vadd.f32 %v9028, %v9029
      %9032 = vset.pattern.permute.xlu0 98
      %9033 = vperm.xlu0 %9032, %v8867
      %v9034 = vpop.permute.xlu0 %9033
      %9036 = vset.pattern.permute.xlu0 99
      %9037 = vperm.xlu0 %9036, %v8867
      %v9038 = vpop.permute.xlu0 %9037
      %v9040 = vsel %vm383, %v9034, %v9038
      %9041 = vset.pattern.permute.xlu0 97
      %9042 = vperm.xlu0 %9041, %v8867
      %v9043 = vpop.permute.xlu0 %9042
      %v9045 = vsel %vm382, %v9043, %v9040
      %9046 = vset.pattern.permute.xlu0 96
      %9047 = vperm.xlu0 %9046, %v8867
      %v9048 = vpop.permute.xlu0 %9047
      %v9050 = vsel %vm381, %v9048, %v9045
      %v9051 = vxor.u32 %v9050, 2147483648
      %v9052 = vmul.f32 %v9051, 1.442695
      %v9053 = vpow.pop %v9052
      %v9054 = vadd.f32 %v9053, 1.0
      %v9055 = vrcp.pop %v9054
      %v9056 = vmul.f32 1.0, %v9055
      %v9057 = vmul.f32 %v9056, %v9030
      %9059 = vset.pattern.permute.xlu0 6
      %9060 = vperm.xlu0 %9059, %v8990
      %v9061 = vpop.permute.xlu0 %9060
      %9064 = vset.pattern.permute.xlu0 6
      %9065 = vperm.xlu0 %9064, %v8991
      %v9066 = vpop.permute.xlu0 %9065
      %9069 = vset.pattern.permute.xlu0 6
      %9070 = vperm.xlu0 %9069, %v8992
      %v9071 = vpop.permute.xlu0 %9070
      %9074 = vset.pattern.permute.xlu0 6
      %9075 = vperm.xlu0 %9074, %v8993
      %v9076 = vpop.permute.xlu0 %9075
      %v9078 = vmul.f32 %v9061, %v9057
      %v9079 = vmul.f32 %v9066, %v9057
      %v9080 = vmul.f32 %v9071, %v9057
      %v9081 = vmul.f32 %v9076, %v9057
      %v9082 = vadd.f32 %v8774, %v9078
      %v9083 = vadd.f32 %v8775, %v9079
      %v9084 = vadd.f32 %v8776, %v9080
      %v9085 = vadd.f32 %v8777, %v9081
      %9086 = vset.pattern.permute.xlu0 7
      %9087 = vperm.xlu0 %9086, %v6995
      %v9088 = vpop.permute.xlu0 %9087
      %9090 = vset.pattern.permute.xlu0 7
      %9091 = vperm.xlu0 %9090, %v6996
      %v9092 = vpop.permute.xlu0 %9091
      %9094 = vset.pattern.permute.xlu0 7
      %9095 = vperm.xlu0 %9094, %v6997
      %v9096 = vpop.permute.xlu0 %9095
      %9098 = vset.pattern.permute.xlu0 7
      %9099 = vperm.xlu0 %9098, %v6998
      %v9100 = vpop.permute.xlu0 %9099
      %v9102 = vmul.f32 %v9088, %v9082
      %v9103 = vmul.f32 %v9092, %v9083
      %v9104 = vmul.f32 %v9096, %v9084
      %v9105 = vmul.f32 %v9100, %v9085
      %v9106 = vadd.f32 %v9102, %v9103
      %v9107 = vadd.f32 %v9106, %v9104
      %v9108 = vadd.f32 %v9107, %v9105
      %v9109 = vrot.slane %v9108, 4
      %v9110 = vadd.f32 %v9108, %v9109
      %v9111 = vrot.slane %v9110, 2
      %v9112 = vadd.f32 %v9110, %v9111
      %v9113 = vrot.slane %v9112, 1
      %v9114 = vadd.f32 %v9112, %v9113
      %9116 = vrot.lane.b32.xlu0 %v4786, 32
      %v9117 = vpop.permute.xlu0 %9116
      %9120 = vrot.lane.b32.xlu0 %v6950, 64
      %v9121 = vpop.permute.xlu0 %9120
      %9124 = vrot.lane.b32.xlu0 %v9114, 96
      %v9125 = vpop.permute.xlu0 %9124
      %v9127 = vsel %vm515, %v2622, %v9117
      %vm9128 = vcmask 523264
      %v9129 = vsel %vm9128, %v9127, %v9121
      %vm9130 = vcmask 785408
      %v9131 = vsel %vm9130, %v9129, %v9125
      %v9132 = vld [vmem:[%s6] sm:$0xff]
      %v9133 = vld [vmem:[%s6 + $0x8] sm:$0xff]
      %v9134 = vld [vmem:[%s6 + $0x10] sm:$0xff]
      %v9135 = vld [vmem:[%s6 + $0x18] sm:$0xff]
      %v9136 = vld [vmem:[%s6 + $0x20] sm:$0xff]
      %v9137 = vld [vmem:[%s6 + $0x28] sm:$0xff]
      %v9138 = vld [vmem:[%s6 + $0x30] sm:$0xff]
      %v9139 = vld [vmem:[%s6 + $0x38] sm:$0xff]
      %v9140 = vld [vmem:[%s6 + $0x40] sm:$0xff]
      %v9141 = vld [vmem:[%s6 + $0x48] sm:$0xff]
      %v9142 = vld [vmem:[%s6 + $0x50] sm:$0xff]
      %v9143 = vld [vmem:[%s6 + $0x58] sm:$0xff]
      %v9144 = vld [vmem:[%s6 + $0x60] sm:$0xff]
      %v9145 = vld [vmem:[%s6 + $0x68] sm:$0xff]
      %v9146 = vld [vmem:[%s6 + $0x70] sm:$0xff]
      %v9147 = vld [vmem:[%s6 + $0x78] sm:$0xff]
      %9148 = vmatprep.subr.mxu0 0.0
      %9149 = vmatpush1.msra.mxu0 %v9147
      %9150 = vmatprep.subr.mxu0 0.0
      %9151 = vmatpush1.msra.mxu0 %v9146
      %9152 = vmatprep.subr.mxu0 0.0
      %9153 = vmatpush1.msra.mxu0 %v9145
      %9154 = vmatprep.subr.mxu0 0.0
      %9155 = vmatpush1.msra.mxu0 %v9144
      %9156 = vmatprep.subr.mxu0 0.0
      %9157 = vmatpush1.msra.mxu0 %v9143
      %9158 = vmatprep.subr.mxu0 0.0
      %9159 = vmatpush1.msra.mxu0 %v9142
      %9160 = vmatprep.subr.mxu0 0.0
      %9161 = vmatpush1.msra.mxu0 %v9141
      %9162 = vmatprep.subr.mxu0 0.0
      %9163 = vmatpush1.msra.mxu0 %v9140
      %9164 = vmatprep.subr.mxu0 0.0
      %9165 = vmatpush1.msra.mxu0 %v9139
      %9166 = vmatprep.subr.mxu0 0.0
      %9167 = vmatpush1.msra.mxu0 %v9138
      %9168 = vmatprep.subr.mxu0 0.0
      %9169 = vmatpush1.msra.mxu0 %v9137
      %9170 = vmatprep.subr.mxu0 0.0
      %9171 = vmatpush1.msra.mxu0 %v9136
      %9172 = vmatprep.subr.mxu0 0.0
      %9173 = vmatpush1.msra.mxu0 %v9135
      %9174 = vmatprep.subr.mxu0 0.0
      %9175 = vmatpush1.msra.mxu0 %v9134
      %9176 = vmatprep.subr.mxu0 0.0
      %9177 = vmatpush1.msra.mxu0 %v9133
      %9178 = vmatprep.subr.mxu0 0.0
      %9179 = vmatpush1.msra.mxu0 %v9132
      %9180 = vmatprep.subr.mxu0 0.0
      %9181 = vmatpush2.msra.mxu0 0.0
      %9182 = vmatprep.subr.mxu0 0.0
      %9183 = vmatpush2.msra.mxu0 0.0
      %9184 = vmatprep.subr.mxu0 0.0
      %9185 = vmatpush2.msra.mxu0 0.0
      %9186 = vmatprep.subr.mxu0 0.0
      %9187 = vmatpush2.msra.mxu0 0.0
      %9188 = vmatprep.subr.mxu0 0.0
      %9189 = vmatpush2.msra.mxu0 0.0
      %9190 = vmatprep.subr.mxu0 0.0
      %9191 = vmatpush2.msra.mxu0 0.0
      %9192 = vmatprep.subr.mxu0 0.0
      %9193 = vmatpush2.msra.mxu0 0.0
      %9194 = vmatprep.subr.mxu0 0.0
      %9195 = vmatpush2.msra.mxu0 0.0
      %9196 = vmatprep.subr.mxu0 0.0
      %9197 = vmatpush2.msra.mxu0 0.0
      %9198 = vmatprep.subr.mxu0 0.0
      %9199 = vmatpush2.msra.mxu0 0.0
      %9200 = vmatprep.subr.mxu0 0.0
      %9201 = vmatpush2.msra.mxu0 0.0
      %9202 = vmatprep.subr.mxu0 0.0
      %9203 = vmatpush2.msra.mxu0 0.0
      %9204 = vmatprep.subr.mxu0 0.0
      %9205 = vmatpush2.msra.mxu0 0.0
      %9206 = vmatprep.subr.mxu0 0.0
      %9207 = vmatpush2.msra.mxu0 0.0
      %9208 = vmatprep.subr.mxu0 0.0
      %9209 = vmatpush2.msra.mxu0 0.0
      %9210 = vmatprep.subr.mxu0 0.0
      %9211 = vmatpush2.msra.mxu0 0.0
      %9212 = vmatprep.mubr.f32.mxu0 0.0
      %9213 = vmatmul.mubr.f32.gmra.mxu0 %v9131
      %v9214 = vpop.f32.mrf.mxu0
      %v9215 = vadd.f32 0.0, %v9214
      %v9216 = vpop.f32.mrf.mxu0
      %9217 = vdwg.mxu0
      %v9218 = vld [vmem:[%s7] sm:$0x1]
      %v9219 = vld [vmem:[%s8] sm:$0x1]
      %v9220 = vld [vmem:[%s9] sm:$0x1]
      %v9221 = vld [vmem:[#allocation2] sm:$0x1]
      %v9222 = vadd.f32 %v445, %v9215
      %vm9223 = vcmask 1040384
      %v9224 = vsel %vm9223, %v9222, 0.0
      %9225 = vadd.xlane.f32.xlu0 %v9224
      %v9226 = vpop.xlane.xlu0 %9225
      %v9227 = vrcp.pop 128.0
      %v9228 = vmul.f32 %v9226, %v9227
      %v9229 = vsub.f32 %v9222, %v9228
      %v9230 = vmul.f32 %v9229, %v9229
      %v9231 = vsel %vm9223, %v9230, 0.0
      %9232 = vadd.xlane.f32.xlu0 %v9231
      %v9233 = vpop.xlane.xlu0 %9232
      %v9234 = vmul.f32 %v9233, %v9227
      %v9235 = vadd.f32 %v9234, 1e-05
      %v9236 = vrsqrt.pop %v9235
      %v9237 = vmul.f32 %v9229, %v9236
      %v9238 = vmul.f32 %v9237, %v9218
      %v9239 = vadd.f32 %v9238, %v9219
      %v9240 = vmul.f32 %v9239, %v9220
      %v9241 = vsel %vm9223, %v9240, 0.0
      %9242 = vadd.xlane.f32.xlu0 %v9241
      %v9243 = vpop.xlane.xlu0 %9242
      %v9244 = vadd.f32 %v9243, %v9221
      %vm9245 = vcmask 0
      %9246 = vst.msk [vmem:[%s378] sm:$0x1] %vm9245, %v9244
      %p9247 = scmp.lt.s32.totalorder %s24, 1
      %s9248 = scalar_select %p9247, %s24, 1
      %s9249 = scalar_lea.vmem %s11, %s9248
      // Predicated region
      $region65: #{srwm_predictor_forward.1} parent=63 // pred_check
        %p9250 = pneg %p278
      $region66: #{srwm_predictor_forward.1} parent=63 // pred_check_branch
        %9252 = sbr.rel (%p9250) target = $region68
      $region67: #{srwm_predictor_forward.1} parent=63 // pred_region
        _
      $region68: #{srwm_predictor_forward.1} parent=63 // pred_fallthru
        _
    $region64: #{srwm_predictor_forward.1} parent=5 // pred_fallthru
      _
    %p9253 = scmp.le.s32.totalorder 2, %s19
    // Predicated region
    $region69: #{srwm_predictor_forward.1} parent=5 // pred_check
      %p9254 = pneg %p9253
    $region70: #{srwm_predictor_forward.1} parent=5 // pred_check_branch
      %9256 = sbr.rel (%p9254) target = $region72
    $region71: #{srwm_predictor_forward.1} parent=5 // pred_region
      %s9257 = ssub.s32 %s19, 2
      // Predicated region
      $region73: #{srwm_predictor_forward.1} parent=71 // pred_check
        %p9258 = pneg %p284
      $region74: #{srwm_predictor_forward.1} parent=71 // pred_check_branch
        %9260 = sbr.rel (%p9258) target = $region76
      $region75: #{srwm_predictor_forward.1} parent=71 // pred_region
        %p9261 = scmp.lt.s32.totalorder %s25, 1
        %s9262 = scalar_select %p9261, %s25, 1
        %s9263 = scalar_lea.vmem %s11, %s9262
      $region76: #{srwm_predictor_forward.1} parent=71 // pred_fallthru
        _
    $region72: #{srwm_predictor_forward.1} parent=5 // pred_fallthru
      _
  $region6: #{srwm_predictor_forward.1} parent=0 // loop_footer
    %s23 = sadd.s32 1, %s19
  $region7: #{srwm_predictor_forward.1} parent=0 // loop_footer_branch
    %18 = sbr.rel target = $region3
  $region8: #{srwm_predictor_forward.1} parent=0 // loop_exit
    _

</llo_original>
